<compile_context>
chip_gen: v7x
topology: tpu7x:2x2x1
jax: 0.10.0
libtpu: 0.0.40
codegen_flags: <defaults>
</compile_context>

<pallas_src>
import functools

import jax
import jax.numpy as jnp
from jax.experimental import pallas as pl
from jax.experimental.pallas import tpu as pltpu


def _round_up(x, m):
    return (x + m - 1) // m * m


def _vmem_capacity_bytes():
    """Per-TensorCore VMEM capacity; conservative (v7x) fallback."""
    try:
        info = pltpu.get_tpu_info()
        cap = getattr(info, "vmem_capacity_bytes", None)
        if cap:
            return int(cap)
    except Exception:
        pass
    return 64 * 1024 * 1024


def _resident_spec(shape, index_map, single_buffer):
    """BlockSpec for a weight that never changes block index.

    Single-buffered when supported (reclaims the wasted second VMEM copy)."""
    if single_buffer and hasattr(pl, "Buffered"):
        try:
            return pl.BlockSpec(shape, index_map, pipeline_mode=pl.Buffered(1))
        except TypeError:
            pass
    return pl.BlockSpec(shape, index_map)


# ----------------------------------------------------------------------------
# Pallas kernel: one LSTM layer, one (batch-block, time-chunk) grid cell.
# ----------------------------------------------------------------------------
def _lstm_layer_kernel(x_ref, wih_ref, whh_ref, b_ref,
                       y_ref, h_out_ref, c_out_ref,
                       h_sc, c_sc, gx_sc,
                       *, hidden_dim, time_chunk, last_chunk_steps, unroll):
    t_chunk = pl.program_id(1)
    n_chunks = pl.num_programs(1)

    # (Re)initialize the carried state at the first time chunk of each batch
    # block (time is the innermost grid axis).
    @pl.when(t_chunk == 0)
    def _():
        h_sc[...] = jnp.zeros_like(h_sc)
        c_sc[...] = jnp.zeros_like(c_sc)

    H = hidden_dim
    TC = time_chunk
    TB = h_sc.shape[0]
    E = x_ref.shape[-1]
    mm_dtype = whh_ref.dtype  # bf16 (or f32) matmul operands, f32 accumulate

    # ---- Hoisted input projection for the whole chunk -----------------------
    # One MXU matmul with M = TC*TB rows (instead of M = TB per timestep).
    # Bias is folded in exactly once here (NOT added again in the recurrence).
    x2d = x_ref[...].reshape(TC * TB, E)
    gx = jnp.dot(x2d, wih_ref[...], preferred_element_type=jnp.float32)
    gx = gx + b_ref[...]
    gx_sc[...] = gx.reshape(TC, TB, 4 * H).astype(gx_sc.dtype)

    # ---- Serial recurrence over the chunk: only h @ W_hh^T remains ----------
    def run_steps(n_steps):
        def step(s, carry):
            h_prev = h_sc[...]
            c_prev = c_sc[...]
            gates = gx_sc[s].astype(jnp.float32) + jnp.dot(
                h_prev.astype(mm_dtype), whh_ref[...],
                preferred_element_type=jnp.float32)
            # PyTorch gate order: i, f, g, o.
            # TODO(synk): for H % 128 != 0 these slices are sub-lane selects;
            # real configs should pad H to 128 or lay gates out as (4, H).
            i_g = jax.nn.sigmoid(gates[:, 0 * H:1 * H])
            f_g = jax.nn.sigmoid(gates[:, 1 * H:2 * H])
            g_g = jnp.tanh(gates[:, 2 * H:3 * H])
            o_g = jax.nn.sigmoid(gates[:, 3 * H:4 * H])
            c_new = f_g * c_prev + i_g * g_g
            h_new = o_g * jnp.tanh(c_new)
            h_sc[...] = h_new
            c_sc[...] = c_new
            y_ref[s] = h_new.astype(y_ref.dtype)
            return carry

        u = max(1, min(unroll, n_steps))
        jax.lax.fori_loop(0, n_steps, step, 0, unroll=u)

    if last_chunk_steps == TC:
        # TC divides T: every chunk is fully valid; no masking anywhere.
        run_steps(TC)
    else:
        # Only the last chunk can contain padded timesteps; run exactly the
        # valid steps there (compile-time constant) -- no per-step selects.
        is_last = t_chunk == n_chunks - 1

        @pl.when(jnp.logical_not(is_last))
        def _():
            run_steps(TC)

        @pl.when(is_last)
        def _():
            run_steps(last_chunk_steps)
            # Keep the padded tail rows of y well-defined; they are never
            # consumed by the recurrence of following layers and are sliced
            # away after the last layer.
            y_ref[pl.ds(last_chunk_steps, TC - last_chunk_steps), :, :] = (
                jnp.zeros((TC - last_chunk_steps, TB, H), y_ref.dtype))

    # Emit the final hidden / cell state at the last time chunk.
    @pl.when(t_chunk == n_chunks - 1)
    def _():
        h_out_ref[...] = h_sc[...].astype(h_out_ref.dtype)
        c_out_ref[...] = c_sc[...].astype(c_out_ref.dtype)


# ----------------------------------------------------------------------------
# Tiling / VMEM budgeting shared by all layers of one encoder call.
# ----------------------------------------------------------------------------
def _choose_tiling(T, B, E_max, H, mm_itemsize, out_itemsize, time_chunk_req,
                   use_bf16):
    sub = 16 if use_bf16 else 8           # sublane alignment of padded batch
    cap = _vmem_capacity_bytes()
    budget = int(cap * 0.70)              # headroom for runtime / internals

    # Batch block: as large as the batch allows, capped at the MXU height.
    # NOTE(megacore/v7x): for B <= 256 we deliberately keep a SINGLE batch
    # block -- the recurrence is W_hh-streaming bound, and splitting the rows
    # across the two TensorCores would double total weight-push traffic.
    # Larger batches yield multiple independent blocks on the "parallel" axis.
    tb_cap = 256
    if B <= tb_cap:
        B_pad = _round_up(B, sub)
        tb = B_pad
    else:
        B_pad = _round_up(B, tb_cap)
        tb = tb_cap

    def need(tc, tb_, gx_itemsize):
        w = (E_max * 4 * H + H * 4 * H) * mm_itemsize + 4 * H * 4  # resident
        return (w
                + tc * tb_ * 4 * H * gx_itemsize        # gx scratch
                + 2 * tc * tb_ * E_max * mm_itemsize    # x chunk (2 buffers)
                + 2 * tc * tb_ * H * out_itemsize       # y chunk (2 buffers)
                + 2 * tb_ * H * 4                       # h/c carry
                + 2 * 2 * tb_ * H * 4)                  # h_out/c_out buffers

    gx_itemsize = 4                     # f32 hoisted projection by default
    while True:
        tc = max(1, min(time_chunk_req, T))
        while tc > 1 and need(tc, tb, gx_itemsize) > budget:
            tc //= 2
        if need(tc, tb, gx_itemsize) <= budget:
            break
        if gx_itemsize == 4 and mm_itemsize < 4:
            gx_itemsize = mm_itemsize   # store hoisted projection in bf16
        elif tb > sub:
            tb = max(sub, (tb // 2 + 7) // 8 * 8)
            B_pad = _round_up(B, tb)
        else:
            break                       # smallest config; let compiler try

    gx_dtype = jnp.float32 if gx_itemsize == 4 else jnp.bfloat16
    T_pad = _round_up(T, tc)

    needed = need(tc, tb, gx_itemsize)
    vmem_limit = min(cap - (4 << 20), needed + (16 << 20))
    vmem_limit = max(vmem_limit, 32 << 20)
    vmem_limit = min(vmem_limit, cap)

    # Partial unroll: full unroll only if the per-step f32 gates tile is small
    # (<= 16 vregs); otherwise 4 or 2 to keep spills under control.
    gate_bytes = tb * 4 * H * 4
    unroll = tc if gate_bytes <= 16 * 4096 else (4 if gate_bytes <= 64 * 4096
                                                 else 2)
    unroll = max(1, min(unroll, tc))

    return int(tb), int(B_pad), int(tc), int(T_pad), gx_dtype, int(vmem_limit), int(unroll)


# ----------------------------------------------------------------------------
# One LSTM layer over an already-padded (T_pad, B_pad, E) sequence.
# ----------------------------------------------------------------------------
def _lstm_layer_padded(x_p, w_ih, w_hh, b_ih, b_hh, *, seq_len, out_dtype,
                       tb, tc, gx_dtype, vmem_limit_bytes, unroll,
                       single_buffer_weights):
    T_pad, B_pad, E = x_p.shape
    H = w_hh.shape[1]
    mm_dtype = x_p.dtype
    assert T_pad % tc == 0 and B_pad % tb == 0

    wih_t = jnp.transpose(w_ih).astype(mm_dtype)            # (E, 4H)
    whh_t = jnp.transpose(w_hh).astype(mm_dtype)            # (H, 4H)
    bias = (b_ih + b_hh).astype(jnp.float32).reshape(1, 4 * H)

    n_chunks = T_pad // tc
    last_chunk_steps = seq_len - (n_chunks - 1) * tc

    kernel = functools.partial(
        _lstm_layer_kernel, hidden_dim=H, time_chunk=tc,
        last_chunk_steps=last_chunk_steps, unroll=unroll)

    grid = (B_pad // tb, n_chunks)

    grid_spec = pltpu.PrefetchScalarGridSpec(
        num_scalar_prefetch=0,
        grid=grid,
        in_specs=[
            pl.BlockSpec((tc, tb, E), lambda b, t: (t, b, 0)),            # x
            _resident_spec((E, 4 * H), lambda b, t: (0, 0),
                           single_buffer_weights),                       # W_ih^T
            _resident_spec((H, 4 * H), lambda b, t: (0, 0),
                           single_buffer_weights),                       # W_hh^T
            _resident_spec((1, 4 * H), lambda b, t: (0, 0),
                           single_buffer_weights),                       # bias
        ],
        out_specs=[
            pl.BlockSpec((tc, tb, H), lambda b, t: (t, b, 0)),            # y
            pl.BlockSpec((tb, H), lambda b, t: (b, 0)),                   # h_T
            pl.BlockSpec((tb, H), lambda b, t: (b, 0)),                   # c_T
        ],
        scratch_shapes=[
            pltpu.VMEM((tb, H), jnp.float32),            # h state carry
            pltpu.VMEM((tb, H), jnp.float32),            # c state carry
            pltpu.VMEM((tc, tb, 4 * H), gx_dtype),       # hoisted x-projection
        ],
    )

    flops = 2 * T_pad * B_pad * (E + H) * 4 * H
    transcendentals = 5 * T_pad * B_pad * H
    bytes_accessed = (T_pad * B_pad * E * x_p.dtype.itemsize
                      + T_pad * B_pad * H * jnp.dtype(out_dtype).itemsize
                      + (E + H) * 4 * H * jnp.dtype(mm_dtype).itemsize)

    y, h_T, c_T = pl.pallas_call(
        kernel,
        out_shape=(
            jax.ShapeDtypeStruct((T_pad, B_pad, H), out_dtype),
            jax.ShapeDtypeStruct((B_pad, H), jnp.float32),
            jax.ShapeDtypeStruct((B_pad, H), jnp.float32),
        ),
        grid_spec=grid_spec,
        compiler_params=pltpu.CompilerParams(
            # Batch blocks are independent (megacore); time is serial.
            dimension_semantics=("parallel", "arbitrary"),
            vmem_limit_bytes=vmem_limit_bytes),
        cost_estimate=pl.CostEstimate(flops=int(flops),
                                      transcendentals=int(transcendentals),
                                      bytes_accessed=int(bytes_accessed)),
    )(x_p, wih_t, whh_t, bias)

    return y, h_T, c_T


# ----------------------------------------------------------------------------
# Encoder: parameters + forward (plain-JAX glue around the Pallas LSTM kernel)
# ----------------------------------------------------------------------------
def init_encoder_params(key, vocab_size, embedding_dim, hidden_dim, n_layers):
    """Deterministic init matching the PyTorch module's parameter shapes."""
    params = {}
    key, k_emb = jax.random.split(key)
    params["embedding"] = jax.random.normal(
        k_emb, (vocab_size, embedding_dim), dtype=jnp.float32)

    bound = 1.0 / jnp.sqrt(hidden_dim)
    lstm_layers = []
    for layer in range(n_layers):
        in_dim = embedding_dim if layer == 0 else hidden_dim
        key, k1, k2, k3, k4 = jax.random.split(key, 5)
        lstm_layers.append({
            "w_ih": jax.random.uniform(k1, (4 * hidden_dim, in_dim),
                                       minval=-bound, maxval=bound,
                                       dtype=jnp.float32),
            "w_hh": jax.random.uniform(k2, (4 * hidden_dim, hidden_dim),
                                       minval=-bound, maxval=bound,
                                       dtype=jnp.float32),
            "b_ih": jax.random.uniform(k3, (4 * hidden_dim,),
                                       minval=-bound, maxval=bound,
                                       dtype=jnp.float32),
            "b_hh": jax.random.uniform(k4, (4 * hidden_dim,),
                                       minval=-bound, maxval=bound,
                                       dtype=jnp.float32),
        })
    params["lstm"] = lstm_layers
    return params


def encoder_forward(params, input_sequence, *, use_bf16=True, time_chunk=16,
                    single_buffer_weights=True):
    """Equivalent to Encoder.forward(input_sequence) (non-packed path), eval mode.

    input_sequence: (T, B) int32 token ids.
    Returns (outputs, hidden, cell):
      outputs (T,B,H) f32, hidden (n_layers,B,H) f32, cell (n_layers,B,H) f32.
    """
    embedding = params["embedding"]
    lstm_params = params["lstm"]
    n_layers = len(lstm_params)
    E = embedding.shape[1]
    H = lstm_params[0]["w_hh"].shape[1]
    T, B = input_sequence.shape

    mm_dtype = jnp.bfloat16 if use_bf16 else jnp.float32

    # TODO(synk): the embedding gather + cast could be fused into the first
    # layer's kernel via scalar-prefetched token ids; left as an XLA gather.
    embedded = jnp.take(embedding, input_sequence, axis=0)          # (T,B,E)
    # TODO(synk): nn.Dropout is identity in eval mode; training-mode dropout
    # (embedded input and between LSTM layers) is not implemented.

    tb, B_pad, tc, T_pad, gx_dtype, vmem_limit, unroll = _choose_tiling(
        T, B, max(E, H), H, jnp.dtype(mm_dtype).itemsize, 4, time_chunk,
        use_bf16)

    # Pad once; activations stay padded (T_pad, B_pad, .) across all layers.
    x = embedded.astype(mm_dtype)
    if (T_pad, B_pad) != (T, B):
        x = jnp.pad(x, ((0, T_pad - T), (0, B_pad - B), (0, 0)))

    hiddens, cells = [], []
    for li, lp in enumerate(lstm_params):
        is_last = li == n_layers - 1
        # Inter-layer activations travel in bf16 (halves HBM traffic); the
        # final layer's output stays f32 to match the module interface.
        out_dtype = jnp.float32 if is_last else mm_dtype
        y, h_T, c_T = _lstm_layer_padded(
            x, lp["w_ih"], lp["w_hh"], lp["b_ih"], lp["b_hh"],
            seq_len=T, out_dtype=out_dtype, tb=tb, tc=tc, gx_dtype=gx_dtype,
            vmem_limit_bytes=vmem_limit, unroll=unroll,
            single_buffer_weights=single_buffer_weights)
        hiddens.append(h_T[:B])
        cells.append(c_T[:B])
        x = y  # inter-layer dropout is identity in eval mode

    outputs = x[:T, :B]
    hidden = jnp.stack(hiddens, axis=0)
    cell = jnp.stack(cells, axis=0)
    return outputs, hidden, cell


# ----------------------------------------------------------------------------
# Pure-JAX reference LSTM (for correctness checks).
# ----------------------------------------------------------------------------
def _ref_lstm_layer(x, w_ih, w_hh, b_ih, b_hh, mm_dtype):
    _, B, _ = x.shape
    H = w_hh.shape[1]
    h0 = jnp.zeros((B, H), jnp.float32)
    c0 = jnp.zeros((B, H), jnp.float32)
    wih_t = w_ih.T.astype(mm_dtype)
    whh_t = w_hh.T.astype(mm_dtype)
    bias = (b_ih + b_hh).astype(jnp.float32)
    xq = x.astype(mm_dtype)

    def step(carry, x_t):
        h, c = carry
        gates = (jnp.dot(x_t, wih_t, preferred_element_type=jnp.float32)
                 + jnp.dot(h.astype(mm_dtype), whh_t,
                           preferred_element_type=jnp.float32)
                 + bias)
        i = jax.nn.sigmoid(gates[:, 0 * H:1 * H])
        f = jax.nn.sigmoid(gates[:, 1 * H:2 * H])
        g = jnp.tanh(gates[:, 2 * H:3 * H])
        o = jax.nn.sigmoid(gates[:, 3 * H:4 * H])
        c = f * c + i * g
        h = o * jnp.tanh(c)
        return (h, c), h

    (h, c), ys = jax.lax.scan(step, (h0, c0), xq)
    return ys, h, c


def _ref_forward(params, tokens, mm_dtype=jnp.float32):
    x = jnp.take(params["embedding"], tokens, axis=0)
    hs, cs = [], []
    for lp in params["lstm"]:
        x, h, c = _ref_lstm_layer(x, lp["w_ih"], lp["w_hh"],
                                  lp["b_ih"], lp["b_hh"], mm_dtype)
        hs.append(h)
        cs.append(c)
    return x, jnp.stack(hs, 0), jnp.stack(cs, 0)


if __name__ == "__main__":
    # Small config consistent with the module's __init__.
    config = dict(embedding_dim=16, hidden_dim=32, num_layers=2,
                  dropout_rate=0.1)
    vocab_size = 50
    seq_len, batch = 8, 2

    key = jax.random.PRNGKey(0)
    key, k_tok, k_par = jax.random.split(key, 3)
    params = init_encoder_params(k_par, vocab_size,
                                 config["embedding_dim"],
                                 config["hidden_dim"],
                                 config["num_layers"])
    tokens = jax.random.randint(k_tok, (seq_len, batch), 0, vocab_size,
                                dtype=jnp.int32)

    def run(use_bf16, time_chunk, single_buffer_weights):
        fwd = jax.jit(functools.partial(
            encoder_forward, use_bf16=use_bf16, time_chunk=time_chunk,
            single_buffer_weights=single_buffer_weights))
        return jax.block_until_ready(fwd(params, tokens))

    # Single-buffered resident weights when the installed Pallas supports it;
    # fall back to default double-buffering otherwise.
    sbw = True
    try:
        outputs, hidden, cell = run(True, 16, sbw)
    except Exception:
        sbw = False
        outputs, hidden, cell = run(True, 16, sbw)

    assert outputs.shape == (seq_len, batch, config["hidden_dim"])
    assert hidden.shape == (config["num_layers"], batch, config["hidden_dim"])
    assert cell.shape == (config["num_layers"], batch, config["hidden_dim"])

    # Tight check against a reference that mirrors the kernel's bf16-matmul /
    # f32-accumulate scheme.
    m_out, m_h, m_c = _ref_forward(params, tokens, mm_dtype=jnp.bfloat16)
    assert jnp.allclose(outputs, m_out, atol=2e-3, rtol=2e-3)
    assert jnp.allclose(hidden, m_h, atol=2e-3, rtol=2e-3)
    assert jnp.allclose(cell, m_c, atol=2e-3, rtol=2e-3)

    # Looser check against the exact full-f32 semantics of the module.
    f_out, f_h, f_c = _ref_forward(params, tokens, mm_dtype=jnp.float32)
    assert jnp.allclose(outputs, f_out, atol=3e-2, rtol=3e-2)
    assert jnp.allclose(hidden, f_h, atol=3e-2, rtol=3e-2)
    assert jnp.allclose(cell, f_c, atol=3e-2, rtol=3e-2)

    # Exercise the time-padding path (TC does not divide T: last chunk runs
    # only its valid steps).
    o2, h2, c2 = run(True, 5, sbw)
    assert jnp.allclose(o2, m_out, atol=2e-3, rtol=2e-3)
    assert jnp.allclose(h2, m_h, atol=2e-3, rtol=2e-3)
    assert jnp.allclose(c2, m_c, atol=2e-3, rtol=2e-3)

    # Exercise the use_bf16=False escape hatch.
    o32, h32, c32 = run(False, 16, sbw)
    assert jnp.allclose(o32, f_out, atol=2e-3, rtol=2e-3)
    assert jnp.allclose(h32, f_h, atol=2e-3, rtol=2e-3)
    assert jnp.allclose(c32, f_c, atol=2e-3, rtol=2e-3)

    print("KERNEL_OK")
</pallas_src>

<mosaic_0001>
module attributes {stable_mosaic.version = 11 : i64} {
  func.func @_lstm_layer_kernel(%arg0: i32, %arg1: i32, %arg2: memref<8x16x16xbf16, #tpu.memory_space<vmem>>, %arg3: memref<16x128xbf16, #tpu.memory_space<vmem>>, %arg4: memref<32x128xbf16, #tpu.memory_space<vmem>>, %arg5: memref<1x128xf32, #tpu.memory_space<vmem>>, %arg6: memref<8x16x32xbf16, #tpu.memory_space<vmem>>, %arg7: memref<16x32xf32, #tpu.memory_space<vmem>>, %arg8: memref<16x32xf32, #tpu.memory_space<vmem>>, %arg9: memref<16x32xf32, #tpu.memory_space<vmem>>, %arg10: memref<16x32xf32, #tpu.memory_space<vmem>>, %arg11: memref<8x16x128xf32, #tpu.memory_space<vmem>>) attributes {dimension_semantics = [#tpu.dimension_semantics<parallel>, #tpu.dimension_semantics<arbitrary>], iteration_bounds = array<i64: 1, 1>, scalar_prefetch = 0 : i64, scratch_operands = 3 : i64, tpu.core_type = #tpu.core_type<tc>, window_params = [{transform_indices = @transform_0, window_bounds = array<i64: 8, 16, 16>}, {pipeline_mode = #tpu.pipeline_mode<synchronous>, transform_indices = @transform_1, window_bounds = array<i64: 16, 128>}, {pipeline_mode = #tpu.pipeline_mode<synchronous>, transform_indices = @transform_2, window_bounds = array<i64: 32, 128>}, {pipeline_mode = #tpu.pipeline_mode<synchronous>, transform_indices = @transform_3, window_bounds = array<i64: 1, 128>}, {transform_indices = @transform_4, window_bounds = array<i64: 8, 16, 32>}, {transform_indices = @transform_5, window_bounds = array<i64: 16, 32>}, {transform_indices = @transform_6, window_bounds = array<i64: 16, 32>}]} {
    %c0_i32 = arith.constant 0 : i32
    %0 = arith.cmpi eq, %arg1, %c0_i32 : i32
    %1 = arith.extui %0 : i1 to i32
    %c0_i32_0 = arith.constant 0 : i32
    %2 = arith.cmpi ne, %1, %c0_i32_0 : i32
    scf.if %2 {
      %cst_157 = arith.constant 0.000000e+00 : f32
      %343 = vector.broadcast %cst_157 : f32 to vector<16x32xf32>
      %c0_158 = arith.constant 0 : index
      %c0_159 = arith.constant 0 : index
      %344 = vector.load %arg9[%c0_158, %c0_159] : memref<16x32xf32, #tpu.memory_space<vmem>>, vector<16x32xf32>
      tpu.vector_store %arg9[%c0_158, %c0_159], %343 {strides = array<i32>} : memref<16x32xf32, #tpu.memory_space<vmem>>, vector<16x32xf32>,
      %cst_160 = arith.constant 0.000000e+00 : f32
      %345 = vector.broadcast %cst_160 : f32 to vector<16x32xf32>
      %c0_161 = arith.constant 0 : index
      %c0_162 = arith.constant 0 : index
      %346 = vector.load %arg10[%c0_161, %c0_162] : memref<16x32xf32, #tpu.memory_space<vmem>>, vector<16x32xf32>
      tpu.vector_store %arg10[%c0_161, %c0_162], %345 {strides = array<i32>} : memref<16x32xf32, #tpu.memory_space<vmem>>, vector<16x32xf32>,
    } else {
    }
    %c0 = arith.constant 0 : index
    %c0_1 = arith.constant 0 : index
    %c0_2 = arith.constant 0 : index
    %3 = vector.load %arg2[%c0, %c0_1, %c0_2] : memref<8x16x16xbf16, #tpu.memory_space<vmem>>, vector<8x16x16xbf16>
    %4 = vector.shape_cast %3 : vector<8x16x16xbf16> to vector<128x16xbf16>
    %c0_3 = arith.constant 0 : index
    %c0_4 = arith.constant 0 : index
    %5 = vector.load %arg3[%c0_3, %c0_4] : memref<16x128xbf16, #tpu.memory_space<vmem>>, vector<16x128xbf16>
    %cst = arith.constant dense<0.000000e+00> : vector<128x128xf32>
    %6 = tpu.matmul %4, %5, %cst {dimension_numbers = #tpu.dot_dimension_numbers<[1], [0], [0], [1], [0, 0, 1, 1], [], []>} : vector<128x16xbf16>, vector<16x128xbf16>, vector<128x128xf32> -> vector<128x128xf32>
    %c0_5 = arith.constant 0 : index
    %c0_6 = arith.constant 0 : index
    %7 = vector.load %arg5[%c0_5, %c0_6] : memref<1x128xf32, #tpu.memory_space<vmem>>, vector<1x128xf32>
    %8 = vector.broadcast %7 : vector<1x128xf32> to vector<128x128xf32>
    %9 = arith.addf %6, %8 : vector<128x128xf32>
    %10 = vector.shape_cast %9 : vector<128x128xf32> to vector<8x16x128xf32>
    %c0_7 = arith.constant 0 : index
    %c0_8 = arith.constant 0 : index
    %c0_9 = arith.constant 0 : index
    %11 = vector.load %arg11[%c0_7, %c0_8, %c0_9] : memref<8x16x128xf32, #tpu.memory_space<vmem>>, vector<8x16x128xf32>
    tpu.vector_store %arg11[%c0_7, %c0_8, %c0_9], %10 {strides = array<i32>} : memref<8x16x128xf32, #tpu.memory_space<vmem>>, vector<8x16x128xf32>,
    %c0_i32_10 = arith.constant 0 : i32
    %c0_11 = arith.constant 0 : index
    %c0_12 = arith.constant 0 : index
    %12 = vector.load %arg9[%c0_11, %c0_12] : memref<16x32xf32, #tpu.memory_space<vmem>>, vector<16x32xf32>
    %c0_13 = arith.constant 0 : index
    %c0_14 = arith.constant 0 : index
    %13 = vector.load %arg10[%c0_13, %c0_14] : memref<16x32xf32, #tpu.memory_space<vmem>>, vector<16x32xf32>
    %14 = arith.index_cast %c0_i32_10 : i32 to index
    %c0_15 = arith.constant 0 : index
    %c0_16 = arith.constant 0 : index
    %15 = vector.load %arg11[%14, %c0_15, %c0_16] : memref<8x16x128xf32, #tpu.memory_space<vmem>>, vector<1x16x128xf32>
    %16 = vector.shape_cast %15 : vector<1x16x128xf32> to vector<16x128xf32>
    %17 = arith.truncf %12 : vector<16x32xf32> to vector<16x32xbf16>
    %c0_17 = arith.constant 0 : index
    %c0_18 = arith.constant 0 : index
    %18 = vector.load %arg4[%c0_17, %c0_18] : memref<32x128xbf16, #tpu.memory_space<vmem>>, vector<32x128xbf16>
    %cst_19 = arith.constant dense<0.000000e+00> : vector<16x128xf32>
    %19 = tpu.matmul %17, %18, %cst_19 {dimension_numbers = #tpu.dot_dimension_numbers<[1], [0], [0], [1], [0, 0, 1, 1], [], []>} : vector<16x32xbf16>, vector<32x128xbf16>, vector<16x128xf32> -> vector<16x128xf32>
    %20 = arith.addf %16, %19 : vector<16x128xf32>
    %21 = vector.extract_strided_slice %20 {offsets = [0, 0], sizes = [16, 32], strides = [1, 1]} : vector<16x128xf32> to vector<16x32xf32>
    %22 = arith.negf %21 : vector<16x32xf32>
    %23 = math.exp %22 : vector<16x32xf32>
    %cst_20 = arith.constant 1.000000e+00 : f32
    %24 = vector.broadcast %cst_20 : f32 to vector<16x32xf32>
    %25 = arith.addf %24, %23 : vector<16x32xf32>
    %26 = arith.divf %24, %25 : vector<16x32xf32>
    %27 = vector.extract_strided_slice %20 {offsets = [0, 32], sizes = [16, 32], strides = [1, 1]} : vector<16x128xf32> to vector<16x32xf32>
    %28 = arith.negf %27 : vector<16x32xf32>
    %29 = math.exp %28 : vector<16x32xf32>
    %cst_21 = arith.constant 1.000000e+00 : f32
    %30 = vector.broadcast %cst_21 : f32 to vector<16x32xf32>
    %31 = arith.addf %30, %29 : vector<16x32xf32>
    %32 = arith.divf %30, %31 : vector<16x32xf32>
    %33 = vector.extract_strided_slice %20 {offsets = [0, 64], sizes = [16, 32], strides = [1, 1]} : vector<16x128xf32> to vector<16x32xf32>
    %34 = math.tanh %33 : vector<16x32xf32>
    %35 = vector.extract_strided_slice %20 {offsets = [0, 96], sizes = [16, 32], strides = [1, 1]} : vector<16x128xf32> to vector<16x32xf32>
    %36 = arith.negf %35 : vector<16x32xf32>
    %37 = math.exp %36 : vector<16x32xf32>
    %cst_22 = arith.constant 1.000000e+00 : f32
    %38 = vector.broadcast %cst_22 : f32 to vector<16x32xf32>
    %39 = arith.addf %38, %37 : vector<16x32xf32>
    %40 = arith.divf %38, %39 : vector<16x32xf32>
    %41 = arith.mulf %32, %13 : vector<16x32xf32>
    %42 = arith.mulf %26, %34 : vector<16x32xf32>
    %43 = arith.addf %41, %42 : vector<16x32xf32>
    %44 = math.tanh %43 : vector<16x32xf32>
    %45 = arith.mulf %40, %44 : vector<16x32xf32>
    %c0_23 = arith.constant 0 : index
    %c0_24 = arith.constant 0 : index
    %46 = vector.load %arg9[%c0_23, %c0_24] : memref<16x32xf32, #tpu.memory_space<vmem>>, vector<16x32xf32>
    tpu.vector_store %arg9[%c0_23, %c0_24], %45 {strides = array<i32>} : memref<16x32xf32, #tpu.memory_space<vmem>>, vector<16x32xf32>,
    %c0_25 = arith.constant 0 : index
    %c0_26 = arith.constant 0 : index
    %47 = vector.load %arg10[%c0_25, %c0_26] : memref<16x32xf32, #tpu.memory_space<vmem>>, vector<16x32xf32>
    tpu.vector_store %arg10[%c0_25, %c0_26], %43 {strides = array<i32>} : memref<16x32xf32, #tpu.memory_space<vmem>>, vector<16x32xf32>,
    %48 = arith.truncf %45 : vector<16x32xf32> to vector<16x32xbf16>
    %49 = arith.index_cast %c0_i32_10 : i32 to index
    %c0_27 = arith.constant 0 : index
    %c0_28 = arith.constant 0 : index
    %50 = vector.load %arg6[%49, %c0_27, %c0_28] : memref<8x16x32xbf16, #tpu.memory_space<vmem>>, vector<1x16x32xbf16>
    %51 = vector.shape_cast %50 : vector<1x16x32xbf16> to vector<16x32xbf16>
    %52 = vector.shape_cast %48 : vector<16x32xbf16> to vector<1x16x32xbf16>
    tpu.vector_store %arg6[%49, %c0_27, %c0_28], %52 {strides = array<i32>} : memref<8x16x32xbf16, #tpu.memory_space<vmem>>, vector<1x16x32xbf16>,
    %c1_i32 = arith.constant 1 : i32
    %c0_29 = arith.constant 0 : index
    %c0_30 = arith.constant 0 : index
    %53 = vector.load %arg9[%c0_29, %c0_30] : memref<16x32xf32, #tpu.memory_space<vmem>>, vector<16x32xf32>
    %c0_31 = arith.constant 0 : index
    %c0_32 = arith.constant 0 : index
    %54 = vector.load %arg10[%c0_31, %c0_32] : memref<16x32xf32, #tpu.memory_space<vmem>>, vector<16x32xf32>
    %55 = arith.index_cast %c1_i32 : i32 to index
    %c0_33 = arith.constant 0 : index
    %c0_34 = arith.constant 0 : index
    %56 = vector.load %arg11[%55, %c0_33, %c0_34] : memref<8x16x128xf32, #tpu.memory_space<vmem>>, vector<1x16x128xf32>
    %57 = vector.shape_cast %56 : vector<1x16x128xf32> to vector<16x128xf32>
    %58 = arith.truncf %53 : vector<16x32xf32> to vector<16x32xbf16>
    %c0_35 = arith.constant 0 : index
    %c0_36 = arith.constant 0 : index
    %59 = vector.load %arg4[%c0_35, %c0_36] : memref<32x128xbf16, #tpu.memory_space<vmem>>, vector<32x128xbf16>
    %cst_37 = arith.constant dense<0.000000e+00> : vector<16x128xf32>
    %60 = tpu.matmul %58, %59, %cst_37 {dimension_numbers = #tpu.dot_dimension_numbers<[1], [0], [0], [1], [0, 0, 1, 1], [], []>} : vector<16x32xbf16>, vector<32x128xbf16>, vector<16x128xf32> -> vector<16x128xf32>
    %61 = arith.addf %57, %60 : vector<16x128xf32>
    %62 = vector.extract_strided_slice %61 {offsets = [0, 0], sizes = [16, 32], strides = [1, 1]} : vector<16x128xf32> to vector<16x32xf32>
    %63 = arith.negf %62 : vector<16x32xf32>
    %64 = math.exp %63 : vector<16x32xf32>
    %cst_38 = arith.constant 1.000000e+00 : f32
    %65 = vector.broadcast %cst_38 : f32 to vector<16x32xf32>
    %66 = arith.addf %65, %64 : vector<16x32xf32>
    %67 = arith.divf %65, %66 : vector<16x32xf32>
    %68 = vector.extract_strided_slice %61 {offsets = [0, 32], sizes = [16, 32], strides = [1, 1]} : vector<16x128xf32> to vector<16x32xf32>
    %69 = arith.negf %68 : vector<16x32xf32>
    %70 = math.exp %69 : vector<16x32xf32>
    %cst_39 = arith.constant 1.000000e+00 : f32
    %71 = vector.broadcast %cst_39 : f32 to vector<16x32xf32>
    %72 = arith.addf %71, %70 : vector<16x32xf32>
    %73 = arith.divf %71, %72 : vector<16x32xf32>
    %74 = vector.extract_strided_slice %61 {offsets = [0, 64], sizes = [16, 32], strides = [1, 1]} : vector<16x128xf32> to vector<16x32xf32>
    %75 = math.tanh %74 : vector<16x32xf32>
    %76 = vector.extract_strided_slice %61 {offsets = [0, 96], sizes = [16, 32], strides = [1, 1]} : vector<16x128xf32> to vector<16x32xf32>
    %77 = arith.negf %76 : vector<16x32xf32>
    %78 = math.exp %77 : vector<16x32xf32>
    %cst_40 = arith.constant 1.000000e+00 : f32
    %79 = vector.broadcast %cst_40 : f32 to vector<16x32xf32>
    %80 = arith.addf %79, %78 : vector<16x32xf32>
    %81 = arith.divf %79, %80 : vector<16x32xf32>
    %82 = arith.mulf %73, %54 : vector<16x32xf32>
    %83 = arith.mulf %67, %75 : vector<16x32xf32>
    %84 = arith.addf %82, %83 : vector<16x32xf32>
    %85 = math.tanh %84 : vector<16x32xf32>
    %86 = arith.mulf %81, %85 : vector<16x32xf32>
    %c0_41 = arith.constant 0 : index
    %c0_42 = arith.constant 0 : index
    %87 = vector.load %arg9[%c0_41, %c0_42] : memref<16x32xf32, #tpu.memory_space<vmem>>, vector<16x32xf32>
    tpu.vector_store %arg9[%c0_41, %c0_42], %86 {strides = array<i32>} : memref<16x32xf32, #tpu.memory_space<vmem>>, vector<16x32xf32>,
    %c0_43 = arith.constant 0 : index
    %c0_44 = arith.constant 0 : index
    %88 = vector.load %arg10[%c0_43, %c0_44] : memref<16x32xf32, #tpu.memory_space<vmem>>, vector<16x32xf32>
    tpu.vector_store %arg10[%c0_43, %c0_44], %84 {strides = array<i32>} : memref<16x32xf32, #tpu.memory_space<vmem>>, vector<16x32xf32>,
    %89 = arith.truncf %86 : vector<16x32xf32> to vector<16x32xbf16>
    %90 = arith.index_cast %c1_i32 : i32 to index
    %c0_45 = arith.constant 0 : index
    %c0_46 = arith.constant 0 : index
    %91 = vector.load %arg6[%90, %c0_45, %c0_46] : memref<8x16x32xbf16, #tpu.memory_space<vmem>>, vector<1x16x32xbf16>
    %92 = vector.shape_cast %91 : vector<1x16x32xbf16> to vector<16x32xbf16>
    %93 = vector.shape_cast %89 : vector<16x32xbf16> to vector<1x16x32xbf16>
    tpu.vector_store %arg6[%90, %c0_45, %c0_46], %93 {strides = array<i32>} : memref<8x16x32xbf16, #tpu.memory_space<vmem>>, vector<1x16x32xbf16>,
    %c2_i32 = arith.constant 2 : i32
    %c0_47 = arith.constant 0 : index
    %c0_48 = arith.constant 0 : index
    %94 = vector.load %arg9[%c0_47, %c0_48] : memref<16x32xf32, #tpu.memory_space<vmem>>, vector<16x32xf32>
    %c0_49 = arith.constant 0 : index
    %c0_50 = arith.constant 0 : index
    %95 = vector.load %arg10[%c0_49, %c0_50] : memref<16x32xf32, #tpu.memory_space<vmem>>, vector<16x32xf32>
    %96 = arith.index_cast %c2_i32 : i32 to index
    %c0_51 = arith.constant 0 : index
    %c0_52 = arith.constant 0 : index
    %97 = vector.load %arg11[%96, %c0_51, %c0_52] : memref<8x16x128xf32, #tpu.memory_space<vmem>>, vector<1x16x128xf32>
    %98 = vector.shape_cast %97 : vector<1x16x128xf32> to vector<16x128xf32>
    %99 = arith.truncf %94 : vector<16x32xf32> to vector<16x32xbf16>
    %c0_53 = arith.constant 0 : index
    %c0_54 = arith.constant 0 : index
    %100 = vector.load %arg4[%c0_53, %c0_54] : memref<32x128xbf16, #tpu.memory_space<vmem>>, vector<32x128xbf16>
    %cst_55 = arith.constant dense<0.000000e+00> : vector<16x128xf32>
    %101 = tpu.matmul %99, %100, %cst_55 {dimension_numbers = #tpu.dot_dimension_numbers<[1], [0], [0], [1], [0, 0, 1, 1], [], []>} : vector<16x32xbf16>, vector<32x128xbf16>, vector<16x128xf32> -> vector<16x128xf32>
    %102 = arith.addf %98, %101 : vector<16x128xf32>
    %103 = vector.extract_strided_slice %102 {offsets = [0, 0], sizes = [16, 32], strides = [1, 1]} : vector<16x128xf32> to vector<16x32xf32>
    %104 = arith.negf %103 : vector<16x32xf32>
    %105 = math.exp %104 : vector<16x32xf32>
    %cst_56 = arith.constant 1.000000e+00 : f32
    %106 = vector.broadcast %cst_56 : f32 to vector<16x32xf32>
    %107 = arith.addf %106, %105 : vector<16x32xf32>
    %108 = arith.divf %106, %107 : vector<16x32xf32>
    %109 = vector.extract_strided_slice %102 {offsets = [0, 32], sizes = [16, 32], strides = [1, 1]} : vector<16x128xf32> to vector<16x32xf32>
    %110 = arith.negf %109 : vector<16x32xf32>
    %111 = math.exp %110 : vector<16x32xf32>
    %cst_57 = arith.constant 1.000000e+00 : f32
    %112 = vector.broadcast %cst_57 : f32 to vector<16x32xf32>
    %113 = arith.addf %112, %111 : vector<16x32xf32>
    %114 = arith.divf %112, %113 : vector<16x32xf32>
    %115 = vector.extract_strided_slice %102 {offsets = [0, 64], sizes = [16, 32], strides = [1, 1]} : vector<16x128xf32> to vector<16x32xf32>
    %116 = math.tanh %115 : vector<16x32xf32>
    %117 = vector.extract_strided_slice %102 {offsets = [0, 96], sizes = [16, 32], strides = [1, 1]} : vector<16x128xf32> to vector<16x32xf32>
    %118 = arith.negf %117 : vector<16x32xf32>
    %119 = math.exp %118 : vector<16x32xf32>
    %cst_58 = arith.constant 1.000000e+00 : f32
    %120 = vector.broadcast %cst_58 : f32 to vector<16x32xf32>
    %121 = arith.addf %120, %119 : vector<16x32xf32>
    %122 = arith.divf %120, %121 : vector<16x32xf32>
    %123 = arith.mulf %114, %95 : vector<16x32xf32>
    %124 = arith.mulf %108, %116 : vector<16x32xf32>
    %125 = arith.addf %123, %124 : vector<16x32xf32>
    %126 = math.tanh %125 : vector<16x32xf32>
    %127 = arith.mulf %122, %126 : vector<16x32xf32>
    %c0_59 = arith.constant 0 : index
    %c0_60 = arith.constant 0 : index
    %128 = vector.load %arg9[%c0_59, %c0_60] : memref<16x32xf32, #tpu.memory_space<vmem>>, vector<16x32xf32>
    tpu.vector_store %arg9[%c0_59, %c0_60], %127 {strides = array<i32>} : memref<16x32xf32, #tpu.memory_space<vmem>>, vector<16x32xf32>,
    %c0_61 = arith.constant 0 : index
    %c0_62 = arith.constant 0 : index
    %129 = vector.load %arg10[%c0_61, %c0_62] : memref<16x32xf32, #tpu.memory_space<vmem>>, vector<16x32xf32>
    tpu.vector_store %arg10[%c0_61, %c0_62], %125 {strides = array<i32>} : memref<16x32xf32, #tpu.memory_space<vmem>>, vector<16x32xf32>,
    %130 = arith.truncf %127 : vector<16x32xf32> to vector<16x32xbf16>
    %131 = arith.index_cast %c2_i32 : i32 to index
    %c0_63 = arith.constant 0 : index
    %c0_64 = arith.constant 0 : index
    %132 = vector.load %arg6[%131, %c0_63, %c0_64] : memref<8x16x32xbf16, #tpu.memory_space<vmem>>, vector<1x16x32xbf16>
    %133 = vector.shape_cast %132 : vector<1x16x32xbf16> to vector<16x32xbf16>
    %134 = vector.shape_cast %130 : vector<16x32xbf16> to vector<1x16x32xbf16>
    tpu.vector_store %arg6[%131, %c0_63, %c0_64], %134 {strides = array<i32>} : memref<8x16x32xbf16, #tpu.memory_space<vmem>>, vector<1x16x32xbf16>,
    %c3_i32 = arith.constant 3 : i32
    %c0_65 = arith.constant 0 : index
    %c0_66 = arith.constant 0 : index
    %135 = vector.load %arg9[%c0_65, %c0_66] : memref<16x32xf32, #tpu.memory_space<vmem>>, vector<16x32xf32>
    %c0_67 = arith.constant 0 : index
    %c0_68 = arith.constant 0 : index
    %136 = vector.load %arg10[%c0_67, %c0_68] : memref<16x32xf32, #tpu.memory_space<vmem>>, vector<16x32xf32>
    %137 = arith.index_cast %c3_i32 : i32 to index
    %c0_69 = arith.constant 0 : index
    %c0_70 = arith.constant 0 : index
    %138 = vector.load %arg11[%137, %c0_69, %c0_70] : memref<8x16x128xf32, #tpu.memory_space<vmem>>, vector<1x16x128xf32>
    %139 = vector.shape_cast %138 : vector<1x16x128xf32> to vector<16x128xf32>
    %140 = arith.truncf %135 : vector<16x32xf32> to vector<16x32xbf16>
    %c0_71 = arith.constant 0 : index
    %c0_72 = arith.constant 0 : index
    %141 = vector.load %arg4[%c0_71, %c0_72] : memref<32x128xbf16, #tpu.memory_space<vmem>>, vector<32x128xbf16>
    %cst_73 = arith.constant dense<0.000000e+00> : vector<16x128xf32>
    %142 = tpu.matmul %140, %141, %cst_73 {dimension_numbers = #tpu.dot_dimension_numbers<[1], [0], [0], [1], [0, 0, 1, 1], [], []>} : vector<16x32xbf16>, vector<32x128xbf16>, vector<16x128xf32> -> vector<16x128xf32>
    %143 = arith.addf %139, %142 : vector<16x128xf32>
    %144 = vector.extract_strided_slice %143 {offsets = [0, 0], sizes = [16, 32], strides = [1, 1]} : vector<16x128xf32> to vector<16x32xf32>
    %145 = arith.negf %144 : vector<16x32xf32>
    %146 = math.exp %145 : vector<16x32xf32>
    %cst_74 = arith.constant 1.000000e+00 : f32
    %147 = vector.broadcast %cst_74 : f32 to vector<16x32xf32>
    %148 = arith.addf %147, %146 : vector<16x32xf32>
    %149 = arith.divf %147, %148 : vector<16x32xf32>
    %150 = vector.extract_strided_slice %143 {offsets = [0, 32], sizes = [16, 32], strides = [1, 1]} : vector<16x128xf32> to vector<16x32xf32>
    %151 = arith.negf %150 : vector<16x32xf32>
    %152 = math.exp %151 : vector<16x32xf32>
    %cst_75 = arith.constant 1.000000e+00 : f32
    %153 = vector.broadcast %cst_75 : f32 to vector<16x32xf32>
    %154 = arith.addf %153, %152 : vector<16x32xf32>
    %155 = arith.divf %153, %154 : vector<16x32xf32>
    %156 = vector.extract_strided_slice %143 {offsets = [0, 64], sizes = [16, 32], strides = [1, 1]} : vector<16x128xf32> to vector<16x32xf32>
    %157 = math.tanh %156 : vector<16x32xf32>
    %158 = vector.extract_strided_slice %143 {offsets = [0, 96], sizes = [16, 32], strides = [1, 1]} : vector<16x128xf32> to vector<16x32xf32>
    %159 = arith.negf %158 : vector<16x32xf32>
    %160 = math.exp %159 : vector<16x32xf32>
    %cst_76 = arith.constant 1.000000e+00 : f32
    %161 = vector.broadcast %cst_76 : f32 to vector<16x32xf32>
    %162 = arith.addf %161, %160 : vector<16x32xf32>
    %163 = arith.divf %161, %162 : vector<16x32xf32>
    %164 = arith.mulf %155, %136 : vector<16x32xf32>
    %165 = arith.mulf %149, %157 : vector<16x32xf32>
    %166 = arith.addf %164, %165 : vector<16x32xf32>
    %167 = math.tanh %166 : vector<16x32xf32>
    %168 = arith.mulf %163, %167 : vector<16x32xf32>
    %c0_77 = arith.constant 0 : index
    %c0_78 = arith.constant 0 : index
    %169 = vector.load %arg9[%c0_77, %c0_78] : memref<16x32xf32, #tpu.memory_space<vmem>>, vector<16x32xf32>
    tpu.vector_store %arg9[%c0_77, %c0_78], %168 {strides = array<i32>} : memref<16x32xf32, #tpu.memory_space<vmem>>, vector<16x32xf32>,
    %c0_79 = arith.constant 0 : index
    %c0_80 = arith.constant 0 : index
    %170 = vector.load %arg10[%c0_79, %c0_80] : memref<16x32xf32, #tpu.memory_space<vmem>>, vector<16x32xf32>
    tpu.vector_store %arg10[%c0_79, %c0_80], %166 {strides = array<i32>} : memref<16x32xf32, #tpu.memory_space<vmem>>, vector<16x32xf32>,
    %171 = arith.truncf %168 : vector<16x32xf32> to vector<16x32xbf16>
    %172 = arith.index_cast %c3_i32 : i32 to index
    %c0_81 = arith.constant 0 : index
    %c0_82 = arith.constant 0 : index
    %173 = vector.load %arg6[%172, %c0_81, %c0_82] : memref<8x16x32xbf16, #tpu.memory_space<vmem>>, vector<1x16x32xbf16>
    %174 = vector.shape_cast %173 : vector<1x16x32xbf16> to vector<16x32xbf16>
    %175 = vector.shape_cast %171 : vector<16x32xbf16> to vector<1x16x32xbf16>
    tpu.vector_store %arg6[%172, %c0_81, %c0_82], %175 {strides = array<i32>} : memref<8x16x32xbf16, #tpu.memory_space<vmem>>, vector<1x16x32xbf16>,
    %c4_i32 = arith.constant 4 : i32
    %c0_83 = arith.constant 0 : index
    %c0_84 = arith.constant 0 : index
    %176 = vector.load %arg9[%c0_83, %c0_84] : memref<16x32xf32, #tpu.memory_space<vmem>>, vector<16x32xf32>
    %c0_85 = arith.constant 0 : index
    %c0_86 = arith.constant 0 : index
    %177 = vector.load %arg10[%c0_85, %c0_86] : memref<16x32xf32, #tpu.memory_space<vmem>>, vector<16x32xf32>
    %178 = arith.index_cast %c4_i32 : i32 to index
    %c0_87 = arith.constant 0 : index
    %c0_88 = arith.constant 0 : index
    %179 = vector.load %arg11[%178, %c0_87, %c0_88] : memref<8x16x128xf32, #tpu.memory_space<vmem>>, vector<1x16x128xf32>
    %180 = vector.shape_cast %179 : vector<1x16x128xf32> to vector<16x128xf32>
    %181 = arith.truncf %176 : vector<16x32xf32> to vector<16x32xbf16>
    %c0_89 = arith.constant 0 : index
    %c0_90 = arith.constant 0 : index
    %182 = vector.load %arg4[%c0_89, %c0_90] : memref<32x128xbf16, #tpu.memory_space<vmem>>, vector<32x128xbf16>
    %cst_91 = arith.constant dense<0.000000e+00> : vector<16x128xf32>
    %183 = tpu.matmul %181, %182, %cst_91 {dimension_numbers = #tpu.dot_dimension_numbers<[1], [0], [0], [1], [0, 0, 1, 1], [], []>} : vector<16x32xbf16>, vector<32x128xbf16>, vector<16x128xf32> -> vector<16x128xf32>
    %184 = arith.addf %180, %183 : vector<16x128xf32>
    %185 = vector.extract_strided_slice %184 {offsets = [0, 0], sizes = [16, 32], strides = [1, 1]} : vector<16x128xf32> to vector<16x32xf32>
    %186 = arith.negf %185 : vector<16x32xf32>
    %187 = math.exp %186 : vector<16x32xf32>
    %cst_92 = arith.constant 1.000000e+00 : f32
    %188 = vector.broadcast %cst_92 : f32 to vector<16x32xf32>
    %189 = arith.addf %188, %187 : vector<16x32xf32>
    %190 = arith.divf %188, %189 : vector<16x32xf32>
    %191 = vector.extract_strided_slice %184 {offsets = [0, 32], sizes = [16, 32], strides = [1, 1]} : vector<16x128xf32> to vector<16x32xf32>
    %192 = arith.negf %191 : vector<16x32xf32>
    %193 = math.exp %192 : vector<16x32xf32>
    %cst_93 = arith.constant 1.000000e+00 : f32
    %194 = vector.broadcast %cst_93 : f32 to vector<16x32xf32>
    %195 = arith.addf %194, %193 : vector<16x32xf32>
    %196 = arith.divf %194, %195 : vector<16x32xf32>
    %197 = vector.extract_strided_slice %184 {offsets = [0, 64], sizes = [16, 32], strides = [1, 1]} : vector<16x128xf32> to vector<16x32xf32>
    %198 = math.tanh %197 : vector<16x32xf32>
    %199 = vector.extract_strided_slice %184 {offsets = [0, 96], sizes = [16, 32], strides = [1, 1]} : vector<16x128xf32> to vector<16x32xf32>
    %200 = arith.negf %199 : vector<16x32xf32>
    %201 = math.exp %200 : vector<16x32xf32>
    %cst_94 = arith.constant 1.000000e+00 : f32
    %202 = vector.broadcast %cst_94 : f32 to vector<16x32xf32>
    %203 = arith.addf %202, %201 : vector<16x32xf32>
    %204 = arith.divf %202, %203 : vector<16x32xf32>
    %205 = arith.mulf %196, %177 : vector<16x32xf32>
    %206 = arith.mulf %190, %198 : vector<16x32xf32>
    %207 = arith.addf %205, %206 : vector<16x32xf32>
    %208 = math.tanh %207 : vector<16x32xf32>
    %209 = arith.mulf %204, %208 : vector<16x32xf32>
    %c0_95 = arith.constant 0 : index
    %c0_96 = arith.constant 0 : index
    %210 = vector.load %arg9[%c0_95, %c0_96] : memref<16x32xf32, #tpu.memory_space<vmem>>, vector<16x32xf32>
    tpu.vector_store %arg9[%c0_95, %c0_96], %209 {strides = array<i32>} : memref<16x32xf32, #tpu.memory_space<vmem>>, vector<16x32xf32>,
    %c0_97 = arith.constant 0 : index
    %c0_98 = arith.constant 0 : index
    %211 = vector.load %arg10[%c0_97, %c0_98] : memref<16x32xf32, #tpu.memory_space<vmem>>, vector<16x32xf32>
    tpu.vector_store %arg10[%c0_97, %c0_98], %207 {strides = array<i32>} : memref<16x32xf32, #tpu.memory_space<vmem>>, vector<16x32xf32>,
    %212 = arith.truncf %209 : vector<16x32xf32> to vector<16x32xbf16>
    %213 = arith.index_cast %c4_i32 : i32 to index
    %c0_99 = arith.constant 0 : index
    %c0_100 = arith.constant 0 : index
    %214 = vector.load %arg6[%213, %c0_99, %c0_100] : memref<8x16x32xbf16, #tpu.memory_space<vmem>>, vector<1x16x32xbf16>
    %215 = vector.shape_cast %214 : vector<1x16x32xbf16> to vector<16x32xbf16>
    %216 = vector.shape_cast %212 : vector<16x32xbf16> to vector<1x16x32xbf16>
    tpu.vector_store %arg6[%213, %c0_99, %c0_100], %216 {strides = array<i32>} : memref<8x16x32xbf16, #tpu.memory_space<vmem>>, vector<1x16x32xbf16>,
    %c5_i32 = arith.constant 5 : i32
    %c0_101 = arith.constant 0 : index
    %c0_102 = arith.constant 0 : index
    %217 = vector.load %arg9[%c0_101, %c0_102] : memref<16x32xf32, #tpu.memory_space<vmem>>, vector<16x32xf32>
    %c0_103 = arith.constant 0 : index
    %c0_104 = arith.constant 0 : index
    %218 = vector.load %arg10[%c0_103, %c0_104] : memref<16x32xf32, #tpu.memory_space<vmem>>, vector<16x32xf32>
    %219 = arith.index_cast %c5_i32 : i32 to index
    %c0_105 = arith.constant 0 : index
    %c0_106 = arith.constant 0 : index
    %220 = vector.load %arg11[%219, %c0_105, %c0_106] : memref<8x16x128xf32, #tpu.memory_space<vmem>>, vector<1x16x128xf32>
    %221 = vector.shape_cast %220 : vector<1x16x128xf32> to vector<16x128xf32>
    %222 = arith.truncf %217 : vector<16x32xf32> to vector<16x32xbf16>
    %c0_107 = arith.constant 0 : index
    %c0_108 = arith.constant 0 : index
    %223 = vector.load %arg4[%c0_107, %c0_108] : memref<32x128xbf16, #tpu.memory_space<vmem>>, vector<32x128xbf16>
    %cst_109 = arith.constant dense<0.000000e+00> : vector<16x128xf32>
    %224 = tpu.matmul %222, %223, %cst_109 {dimension_numbers = #tpu.dot_dimension_numbers<[1], [0], [0], [1], [0, 0, 1, 1], [], []>} : vector<16x32xbf16>, vector<32x128xbf16>, vector<16x128xf32> -> vector<16x128xf32>
    %225 = arith.addf %221, %224 : vector<16x128xf32>
    %226 = vector.extract_strided_slice %225 {offsets = [0, 0], sizes = [16, 32], strides = [1, 1]} : vector<16x128xf32> to vector<16x32xf32>
    %227 = arith.negf %226 : vector<16x32xf32>
    %228 = math.exp %227 : vector<16x32xf32>
    %cst_110 = arith.constant 1.000000e+00 : f32
    %229 = vector.broadcast %cst_110 : f32 to vector<16x32xf32>
    %230 = arith.addf %229, %228 : vector<16x32xf32>
    %231 = arith.divf %229, %230 : vector<16x32xf32>
    %232 = vector.extract_strided_slice %225 {offsets = [0, 32], sizes = [16, 32], strides = [1, 1]} : vector<16x128xf32> to vector<16x32xf32>
    %233 = arith.negf %232 : vector<16x32xf32>
    %234 = math.exp %233 : vector<16x32xf32>
    %cst_111 = arith.constant 1.000000e+00 : f32
    %235 = vector.broadcast %cst_111 : f32 to vector<16x32xf32>
    %236 = arith.addf %235, %234 : vector<16x32xf32>
    %237 = arith.divf %235, %236 : vector<16x32xf32>
    %238 = vector.extract_strided_slice %225 {offsets = [0, 64], sizes = [16, 32], strides = [1, 1]} : vector<16x128xf32> to vector<16x32xf32>
    %239 = math.tanh %238 : vector<16x32xf32>
    %240 = vector.extract_strided_slice %225 {offsets = [0, 96], sizes = [16, 32], strides = [1, 1]} : vector<16x128xf32> to vector<16x32xf32>
    %241 = arith.negf %240 : vector<16x32xf32>
    %242 = math.exp %241 : vector<16x32xf32>
    %cst_112 = arith.constant 1.000000e+00 : f32
    %243 = vector.broadcast %cst_112 : f32 to vector<16x32xf32>
    %244 = arith.addf %243, %242 : vector<16x32xf32>
    %245 = arith.divf %243, %244 : vector<16x32xf32>
    %246 = arith.mulf %237, %218 : vector<16x32xf32>
    %247 = arith.mulf %231, %239 : vector<16x32xf32>
    %248 = arith.addf %246, %247 : vector<16x32xf32>
    %249 = math.tanh %248 : vector<16x32xf32>
    %250 = arith.mulf %245, %249 : vector<16x32xf32>
    %c0_113 = arith.constant 0 : index
    %c0_114 = arith.constant 0 : index
    %251 = vector.load %arg9[%c0_113, %c0_114] : memref<16x32xf32, #tpu.memory_space<vmem>>, vector<16x32xf32>
    tpu.vector_store %arg9[%c0_113, %c0_114], %250 {strides = array<i32>} : memref<16x32xf32, #tpu.memory_space<vmem>>, vector<16x32xf32>,
    %c0_115 = arith.constant 0 : index
    %c0_116 = arith.constant 0 : index
    %252 = vector.load %arg10[%c0_115, %c0_116] : memref<16x32xf32, #tpu.memory_space<vmem>>, vector<16x32xf32>
    tpu.vector_store %arg10[%c0_115, %c0_116], %248 {strides = array<i32>} : memref<16x32xf32, #tpu.memory_space<vmem>>, vector<16x32xf32>,
    %253 = arith.truncf %250 : vector<16x32xf32> to vector<16x32xbf16>
    %254 = arith.index_cast %c5_i32 : i32 to index
    %c0_117 = arith.constant 0 : index
    %c0_118 = arith.constant 0 : index
    %255 = vector.load %arg6[%254, %c0_117, %c0_118] : memref<8x16x32xbf16, #tpu.memory_space<vmem>>, vector<1x16x32xbf16>
    %256 = vector.shape_cast %255 : vector<1x16x32xbf16> to vector<16x32xbf16>
    %257 = vector.shape_cast %253 : vector<16x32xbf16> to vector<1x16x32xbf16>
    tpu.vector_store %arg6[%254, %c0_117, %c0_118], %257 {strides = array<i32>} : memref<8x16x32xbf16, #tpu.memory_space<vmem>>, vector<1x16x32xbf16>,
    %c6_i32 = arith.constant 6 : i32
    %c0_119 = arith.constant 0 : index
    %c0_120 = arith.constant 0 : index
    %258 = vector.load %arg9[%c0_119, %c0_120] : memref<16x32xf32, #tpu.memory_space<vmem>>, vector<16x32xf32>
    %c0_121 = arith.constant 0 : index
    %c0_122 = arith.constant 0 : index
    %259 = vector.load %arg10[%c0_121, %c0_122] : memref<16x32xf32, #tpu.memory_space<vmem>>, vector<16x32xf32>
    %260 = arith.index_cast %c6_i32 : i32 to index
    %c0_123 = arith.constant 0 : index
    %c0_124 = arith.constant 0 : index
    %261 = vector.load %arg11[%260, %c0_123, %c0_124] : memref<8x16x128xf32, #tpu.memory_space<vmem>>, vector<1x16x128xf32>
    %262 = vector.shape_cast %261 : vector<1x16x128xf32> to vector<16x128xf32>
    %263 = arith.truncf %258 : vector<16x32xf32> to vector<16x32xbf16>
    %c0_125 = arith.constant 0 : index
    %c0_126 = arith.constant 0 : index
    %264 = vector.load %arg4[%c0_125, %c0_126] : memref<32x128xbf16, #tpu.memory_space<vmem>>, vector<32x128xbf16>
    %cst_127 = arith.constant dense<0.000000e+00> : vector<16x128xf32>
    %265 = tpu.matmul %263, %264, %cst_127 {dimension_numbers = #tpu.dot_dimension_numbers<[1], [0], [0], [1], [0, 0, 1, 1], [], []>} : vector<16x32xbf16>, vector<32x128xbf16>, vector<16x128xf32> -> vector<16x128xf32>
    %266 = arith.addf %262, %265 : vector<16x128xf32>
    %267 = vector.extract_strided_slice %266 {offsets = [0, 0], sizes = [16, 32], strides = [1, 1]} : vector<16x128xf32> to vector<16x32xf32>
    %268 = arith.negf %267 : vector<16x32xf32>
    %269 = math.exp %268 : vector<16x32xf32>
    %cst_128 = arith.constant 1.000000e+00 : f32
    %270 = vector.broadcast %cst_128 : f32 to vector<16x32xf32>
    %271 = arith.addf %270, %269 : vector<16x32xf32>
    %272 = arith.divf %270, %271 : vector<16x32xf32>
    %273 = vector.extract_strided_slice %266 {offsets = [0, 32], sizes = [16, 32], strides = [1, 1]} : vector<16x128xf32> to vector<16x32xf32>
    %274 = arith.negf %273 : vector<16x32xf32>
    %275 = math.exp %274 : vector<16x32xf32>
    %cst_129 = arith.constant 1.000000e+00 : f32
    %276 = vector.broadcast %cst_129 : f32 to vector<16x32xf32>
    %277 = arith.addf %276, %275 : vector<16x32xf32>
    %278 = arith.divf %276, %277 : vector<16x32xf32>
    %279 = vector.extract_strided_slice %266 {offsets = [0, 64], sizes = [16, 32], strides = [1, 1]} : vector<16x128xf32> to vector<16x32xf32>
    %280 = math.tanh %279 : vector<16x32xf32>
    %281 = vector.extract_strided_slice %266 {offsets = [0, 96], sizes = [16, 32], strides = [1, 1]} : vector<16x128xf32> to vector<16x32xf32>
    %282 = arith.negf %281 : vector<16x32xf32>
    %283 = math.exp %282 : vector<16x32xf32>
    %cst_130 = arith.constant 1.000000e+00 : f32
    %284 = vector.broadcast %cst_130 : f32 to vector<16x32xf32>
    %285 = arith.addf %284, %283 : vector<16x32xf32>
    %286 = arith.divf %284, %285 : vector<16x32xf32>
    %287 = arith.mulf %278, %259 : vector<16x32xf32>
    %288 = arith.mulf %272, %280 : vector<16x32xf32>
    %289 = arith.addf %287, %288 : vector<16x32xf32>
    %290 = math.tanh %289 : vector<16x32xf32>
    %291 = arith.mulf %286, %290 : vector<16x32xf32>
    %c0_131 = arith.constant 0 : index
    %c0_132 = arith.constant 0 : index
    %292 = vector.load %arg9[%c0_131, %c0_132] : memref<16x32xf32, #tpu.memory_space<vmem>>, vector<16x32xf32>
    tpu.vector_store %arg9[%c0_131, %c0_132], %291 {strides = array<i32>} : memref<16x32xf32, #tpu.memory_space<vmem>>, vector<16x32xf32>,
    %c0_133 = arith.constant 0 : index
    %c0_134 = arith.constant 0 : index
    %293 = vector.load %arg10[%c0_133, %c0_134] : memref<16x32xf32, #tpu.memory_space<vmem>>, vector<16x32xf32>
    tpu.vector_store %arg10[%c0_133, %c0_134], %289 {strides = array<i32>} : memref<16x32xf32, #tpu.memory_space<vmem>>, vector<16x32xf32>,
    %294 = arith.truncf %291 : vector<16x32xf32> to vector<16x32xbf16>
    %295 = arith.index_cast %c6_i32 : i32 to index
    %c0_135 = arith.constant 0 : index
    %c0_136 = arith.constant 0 : index
    %296 = vector.load %arg6[%295, %c0_135, %c0_136] : memref<8x16x32xbf16, #tpu.memory_space<vmem>>, vector<1x16x32xbf16>
    %297 = vector.shape_cast %296 : vector<1x16x32xbf16> to vector<16x32xbf16>
    %298 = vector.shape_cast %294 : vector<16x32xbf16> to vector<1x16x32xbf16>
    tpu.vector_store %arg6[%295, %c0_135, %c0_136], %298 {strides = array<i32>} : memref<8x16x32xbf16, #tpu.memory_space<vmem>>, vector<1x16x32xbf16>,
    %c7_i32 = arith.constant 7 : i32
    %c0_137 = arith.constant 0 : index
    %c0_138 = arith.constant 0 : index
    %299 = vector.load %arg9[%c0_137, %c0_138] : memref<16x32xf32, #tpu.memory_space<vmem>>, vector<16x32xf32>
    %c0_139 = arith.constant 0 : index
    %c0_140 = arith.constant 0 : index
    %300 = vector.load %arg10[%c0_139, %c0_140] : memref<16x32xf32, #tpu.memory_space<vmem>>, vector<16x32xf32>
    %301 = arith.index_cast %c7_i32 : i32 to index
    %c0_141 = arith.constant 0 : index
    %c0_142 = arith.constant 0 : index
    %302 = vector.load %arg11[%301, %c0_141, %c0_142] : memref<8x16x128xf32, #tpu.memory_space<vmem>>, vector<1x16x128xf32>
    %303 = vector.shape_cast %302 : vector<1x16x128xf32> to vector<16x128xf32>
    %304 = arith.truncf %299 : vector<16x32xf32> to vector<16x32xbf16>
    %c0_143 = arith.constant 0 : index
    %c0_144 = arith.constant 0 : index
    %305 = vector.load %arg4[%c0_143, %c0_144] : memref<32x128xbf16, #tpu.memory_space<vmem>>, vector<32x128xbf16>
    %cst_145 = arith.constant dense<0.000000e+00> : vector<16x128xf32>
    %306 = tpu.matmul %304, %305, %cst_145 {dimension_numbers = #tpu.dot_dimension_numbers<[1], [0], [0], [1], [0, 0, 1, 1], [], []>} : vector<16x32xbf16>, vector<32x128xbf16>, vector<16x128xf32> -> vector<16x128xf32>
    %307 = arith.addf %303, %306 : vector<16x128xf32>
    %308 = vector.extract_strided_slice %307 {offsets = [0, 0], sizes = [16, 32], strides = [1, 1]} : vector<16x128xf32> to vector<16x32xf32>
    %309 = arith.negf %308 : vector<16x32xf32>
    %310 = math.exp %309 : vector<16x32xf32>
    %cst_146 = arith.constant 1.000000e+00 : f32
    %311 = vector.broadcast %cst_146 : f32 to vector<16x32xf32>
    %312 = arith.addf %311, %310 : vector<16x32xf32>
    %313 = arith.divf %311, %312 : vector<16x32xf32>
    %314 = vector.extract_strided_slice %307 {offsets = [0, 32], sizes = [16, 32], strides = [1, 1]} : vector<16x128xf32> to vector<16x32xf32>
    %315 = arith.negf %314 : vector<16x32xf32>
    %316 = math.exp %315 : vector<16x32xf32>
    %cst_147 = arith.constant 1.000000e+00 : f32
    %317 = vector.broadcast %cst_147 : f32 to vector<16x32xf32>
    %318 = arith.addf %317, %316 : vector<16x32xf32>
    %319 = arith.divf %317, %318 : vector<16x32xf32>
    %320 = vector.extract_strided_slice %307 {offsets = [0, 64], sizes = [16, 32], strides = [1, 1]} : vector<16x128xf32> to vector<16x32xf32>
    %321 = math.tanh %320 : vector<16x32xf32>
    %322 = vector.extract_strided_slice %307 {offsets = [0, 96], sizes = [16, 32], strides = [1, 1]} : vector<16x128xf32> to vector<16x32xf32>
    %323 = arith.negf %322 : vector<16x32xf32>
    %324 = math.exp %323 : vector<16x32xf32>
    %cst_148 = arith.constant 1.000000e+00 : f32
    %325 = vector.broadcast %cst_148 : f32 to vector<16x32xf32>
    %326 = arith.addf %325, %324 : vector<16x32xf32>
    %327 = arith.divf %325, %326 : vector<16x32xf32>
    %328 = arith.mulf %319, %300 : vector<16x32xf32>
    %329 = arith.mulf %313, %321 : vector<16x32xf32>
    %330 = arith.addf %328, %329 : vector<16x32xf32>
    %331 = math.tanh %330 : vector<16x32xf32>
    %332 = arith.mulf %327, %331 : vector<16x32xf32>
    %c0_149 = arith.constant 0 : index
    %c0_150 = arith.constant 0 : index
    %333 = vector.load %arg9[%c0_149, %c0_150] : memref<16x32xf32, #tpu.memory_space<vmem>>, vector<16x32xf32>
    tpu.vector_store %arg9[%c0_149, %c0_150], %332 {strides = array<i32>} : memref<16x32xf32, #tpu.memory_space<vmem>>, vector<16x32xf32>,
    %c0_151 = arith.constant 0 : index
    %c0_152 = arith.constant 0 : index
    %334 = vector.load %arg10[%c0_151, %c0_152] : memref<16x32xf32, #tpu.memory_space<vmem>>, vector<16x32xf32>
    tpu.vector_store %arg10[%c0_151, %c0_152], %330 {strides = array<i32>} : memref<16x32xf32, #tpu.memory_space<vmem>>, vector<16x32xf32>,
    %335 = arith.truncf %332 : vector<16x32xf32> to vector<16x32xbf16>
    %336 = arith.index_cast %c7_i32 : i32 to index
    %c0_153 = arith.constant 0 : index
    %c0_154 = arith.constant 0 : index
    %337 = vector.load %arg6[%336, %c0_153, %c0_154] : memref<8x16x32xbf16, #tpu.memory_space<vmem>>, vector<1x16x32xbf16>
    %338 = vector.shape_cast %337 : vector<1x16x32xbf16> to vector<16x32xbf16>
    %339 = vector.shape_cast %335 : vector<16x32xbf16> to vector<1x16x32xbf16>
    tpu.vector_store %arg6[%336, %c0_153, %c0_154], %339 {strides = array<i32>} : memref<8x16x32xbf16, #tpu.memory_space<vmem>>, vector<1x16x32xbf16>,
    %c8_i32 = arith.constant 8 : i32
    %c0_i32_155 = arith.constant 0 : i32
    %340 = arith.cmpi eq, %arg1, %c0_i32_155 : i32
    %341 = arith.extui %340 : i1 to i32
    %c0_i32_156 = arith.constant 0 : i32
    %342 = arith.cmpi ne, %341, %c0_i32_156 : i32
    scf.if %342 {
      %c0_157 = arith.constant 0 : index
      %c0_158 = arith.constant 0 : index
      %343 = vector.load %arg9[%c0_157, %c0_158] : memref<16x32xf32, #tpu.memory_space<vmem>>, vector<16x32xf32>
      %c0_159 = arith.constant 0 : index
      %c0_160 = arith.constant 0 : index
      %344 = vector.load %arg7[%c0_159, %c0_160] : memref<16x32xf32, #tpu.memory_space<vmem>>, vector<16x32xf32>
      tpu.vector_store %arg7[%c0_159, %c0_160], %343 {strides = array<i32>} : memref<16x32xf32, #tpu.memory_space<vmem>>, vector<16x32xf32>,
      %c0_161 = arith.constant 0 : index
      %c0_162 = arith.constant 0 : index
      %345 = vector.load %arg10[%c0_161, %c0_162] : memref<16x32xf32, #tpu.memory_space<vmem>>, vector<16x32xf32>
      %c0_163 = arith.constant 0 : index
      %c0_164 = arith.constant 0 : index
      %346 = vector.load %arg8[%c0_163, %c0_164] : memref<16x32xf32, #tpu.memory_space<vmem>>, vector<16x32xf32>
      tpu.vector_store %arg8[%c0_163, %c0_164], %345 {strides = array<i32>} : memref<16x32xf32, #tpu.memory_space<vmem>>, vector<16x32xf32>,
    } else {
    }
    return
  }
  func.func @transform_0(%arg0: i32, %arg1: i32) -> (i32, i32, i32) {
    %c0_i32 = arith.constant 0 : i32
    %c0_i32_0 = arith.constant 0 : i32
    return %arg1, %arg0, %c0_i32 : i32, i32, i32
  }
  func.func @transform_1(%arg0: i32, %arg1: i32) -> (i32, i32) {
    %c0_i32 = arith.constant 0 : i32
    %c0_i32_0 = arith.constant 0 : i32
    %c0_i32_1 = arith.constant 0 : i32
    return %c0_i32, %c0_i32_0 : i32, i32
  }
  func.func @transform_2(%arg0: i32, %arg1: i32) -> (i32, i32) {
    %c0_i32 = arith.constant 0 : i32
    %c0_i32_0 = arith.constant 0 : i32
    %c0_i32_1 = arith.constant 0 : i32
    return %c0_i32, %c0_i32_0 : i32, i32
  }
  func.func @transform_3(%arg0: i32, %arg1: i32) -> (i32, i32) {
    %c0_i32 = arith.constant 0 : i32
    %c0_i32_0 = arith.constant 0 : i32
    %c0_i32_1 = arith.constant 0 : i32
    return %c0_i32, %c0_i32_0 : i32, i32
  }
  func.func @transform_4(%arg0: i32, %arg1: i32) -> (i32, i32, i32) {
    %c0_i32 = arith.constant 0 : i32
    %c0_i32_0 = arith.constant 0 : i32
    return %arg1, %arg0, %c0_i32 : i32, i32, i32
  }
  func.func @transform_5(%arg0: i32, %arg1: i32) -> (i32, i32) {
    %c0_i32 = arith.constant 0 : i32
    %c0_i32_0 = arith.constant 0 : i32
    return %arg0, %c0_i32 : i32, i32
  }
  func.func @transform_6(%arg0: i32, %arg1: i32) -> (i32, i32) {
    %c0_i32 = arith.constant 0 : i32
    %c0_i32_0 = arith.constant 0 : i32
    return %arg0, %c0_i32 : i32, i32
  }
}

module attributes {stable_mosaic.version = 11 : i64} {
  func.func @_lstm_layer_kernel(%arg0: i32, %arg1: i32, %arg2: memref<8x16x32xbf16, #tpu.memory_space<vmem>>, %arg3: memref<32x128xbf16, #tpu.memory_space<vmem>>, %arg4: memref<32x128xbf16, #tpu.memory_space<vmem>>, %arg5: memref<1x128xf32, #tpu.memory_space<vmem>>, %arg6: memref<8x16x32xf32, #tpu.memory_space<vmem>>, %arg7: memref<16x32xf32, #tpu.memory_space<vmem>>, %arg8: memref<16x32xf32, #tpu.memory_space<vmem>>, %arg9: memref<16x32xf32, #tpu.memory_space<vmem>>, %arg10: memref<16x32xf32, #tpu.memory_space<vmem>>, %arg11: memref<8x16x128xf32, #tpu.memory_space<vmem>>) attributes {dimension_semantics = [#tpu.dimension_semantics<parallel>, #tpu.dimension_semantics<arbitrary>], iteration_bounds = array<i64: 1, 1>, scalar_prefetch = 0 : i64, scratch_operands = 3 : i64, tpu.core_type = #tpu.core_type<tc>, window_params = [{transform_indices = @transform_0, window_bounds = array<i64: 8, 16, 32>}, {pipeline_mode = #tpu.pipeline_mode<synchronous>, transform_indices = @transform_1, window_bounds = array<i64: 32, 128>}, {pipeline_mode = #tpu.pipeline_mode<synchronous>, transform_indices = @transform_2, window_bounds = array<i64: 32, 128>}, {pipeline_mode = #tpu.pipeline_mode<synchronous>, transform_indices = @transform_3, window_bounds = array<i64: 1, 128>}, {transform_indices = @transform_4, window_bounds = array<i64: 8, 16, 32>}, {transform_indices = @transform_5, window_bounds = array<i64: 16, 32>}, {transform_indices = @transform_6, window_bounds = array<i64: 16, 32>}]} {
    %c0_i32 = arith.constant 0 : i32
    %0 = arith.cmpi eq, %arg1, %c0_i32 : i32
    %1 = arith.extui %0 : i1 to i32
    %c0_i32_0 = arith.constant 0 : i32
    %2 = arith.cmpi ne, %1, %c0_i32_0 : i32
    scf.if %2 {
      %cst_157 = arith.constant 0.000000e+00 : f32
      %335 = vector.broadcast %cst_157 : f32 to vector<16x32xf32>
      %c0_158 = arith.constant 0 : index
      %c0_159 = arith.constant 0 : index
      %336 = vector.load %arg9[%c0_158, %c0_159] : memref<16x32xf32, #tpu.memory_space<vmem>>, vector<16x32xf32>
      tpu.vector_store %arg9[%c0_158, %c0_159], %335 {strides = array<i32>} : memref<16x32xf32, #tpu.memory_space<vmem>>, vector<16x32xf32>,
      %cst_160 = arith.constant 0.000000e+00 : f32
      %337 = vector.broadcast %cst_160 : f32 to vector<16x32xf32>
      %c0_161 = arith.constant 0 : index
      %c0_162 = arith.constant 0 : index
      %338 = vector.load %arg10[%c0_161, %c0_162] : memref<16x32xf32, #tpu.memory_space<vmem>>, vector<16x32xf32>
      tpu.vector_store %arg10[%c0_161, %c0_162], %337 {strides = array<i32>} : memref<16x32xf32, #tpu.memory_space<vmem>>, vector<16x32xf32>,
    } else {
    }
    %c0 = arith.constant 0 : index
    %c0_1 = arith.constant 0 : index
    %c0_2 = arith.constant 0 : index
    %3 = vector.load %arg2[%c0, %c0_1, %c0_2] : memref<8x16x32xbf16, #tpu.memory_space<vmem>>, vector<8x16x32xbf16>
    %4 = vector.shape_cast %3 : vector<8x16x32xbf16> to vector<128x32xbf16>
    %c0_3 = arith.constant 0 : index
    %c0_4 = arith.constant 0 : index
    %5 = vector.load %arg3[%c0_3, %c0_4] : memref<32x128xbf16, #tpu.memory_space<vmem>>, vector<32x128xbf16>
    %cst = arith.constant dense<0.000000e+00> : vector<128x128xf32>
    %6 = tpu.matmul %4, %5, %cst {dimension_numbers = #tpu.dot_dimension_numbers<[1], [0], [0], [1], [0, 0, 1, 1], [], []>} : vector<128x32xbf16>, vector<32x128xbf16>, vector<128x128xf32> -> vector<128x128xf32>
    %c0_5 = arith.constant 0 : index
    %c0_6 = arith.constant 0 : index
    %7 = vector.load %arg5[%c0_5, %c0_6] : memref<1x128xf32, #tpu.memory_space<vmem>>, vector<1x128xf32>
    %8 = vector.broadcast %7 : vector<1x128xf32> to vector<128x128xf32>
    %9 = arith.addf %6, %8 : vector<128x128xf32>
    %10 = vector.shape_cast %9 : vector<128x128xf32> to vector<8x16x128xf32>
    %c0_7 = arith.constant 0 : index
    %c0_8 = arith.constant 0 : index
    %c0_9 = arith.constant 0 : index
    %11 = vector.load %arg11[%c0_7, %c0_8, %c0_9] : memref<8x16x128xf32, #tpu.memory_space<vmem>>, vector<8x16x128xf32>
    tpu.vector_store %arg11[%c0_7, %c0_8, %c0_9], %10 {strides = array<i32>} : memref<8x16x128xf32, #tpu.memory_space<vmem>>, vector<8x16x128xf32>,
    %c0_i32_10 = arith.constant 0 : i32
    %c0_11 = arith.constant 0 : index
    %c0_12 = arith.constant 0 : index
    %12 = vector.load %arg9[%c0_11, %c0_12] : memref<16x32xf32, #tpu.memory_space<vmem>>, vector<16x32xf32>
    %c0_13 = arith.constant 0 : index
    %c0_14 = arith.constant 0 : index
    %13 = vector.load %arg10[%c0_13, %c0_14] : memref<16x32xf32, #tpu.memory_space<vmem>>, vector<16x32xf32>
    %14 = arith.index_cast %c0_i32_10 : i32 to index
    %c0_15 = arith.constant 0 : index
    %c0_16 = arith.constant 0 : index
    %15 = vector.load %arg11[%14, %c0_15, %c0_16] : memref<8x16x128xf32, #tpu.memory_space<vmem>>, vector<1x16x128xf32>
    %16 = vector.shape_cast %15 : vector<1x16x128xf32> to vector<16x128xf32>
    %17 = arith.truncf %12 : vector<16x32xf32> to vector<16x32xbf16>
    %c0_17 = arith.constant 0 : index
    %c0_18 = arith.constant 0 : index
    %18 = vector.load %arg4[%c0_17, %c0_18] : memref<32x128xbf16, #tpu.memory_space<vmem>>, vector<32x128xbf16>
    %cst_19 = arith.constant dense<0.000000e+00> : vector<16x128xf32>
    %19 = tpu.matmul %17, %18, %cst_19 {dimension_numbers = #tpu.dot_dimension_numbers<[1], [0], [0], [1], [0, 0, 1, 1], [], []>} : vector<16x32xbf16>, vector<32x128xbf16>, vector<16x128xf32> -> vector<16x128xf32>
    %20 = arith.addf %16, %19 : vector<16x128xf32>
    %21 = vector.extract_strided_slice %20 {offsets = [0, 0], sizes = [16, 32], strides = [1, 1]} : vector<16x128xf32> to vector<16x32xf32>
    %22 = arith.negf %21 : vector<16x32xf32>
    %23 = math.exp %22 : vector<16x32xf32>
    %cst_20 = arith.constant 1.000000e+00 : f32
    %24 = vector.broadcast %cst_20 : f32 to vector<16x32xf32>
    %25 = arith.addf %24, %23 : vector<16x32xf32>
    %26 = arith.divf %24, %25 : vector<16x32xf32>
    %27 = vector.extract_strided_slice %20 {offsets = [0, 32], sizes = [16, 32], strides = [1, 1]} : vector<16x128xf32> to vector<16x32xf32>
    %28 = arith.negf %27 : vector<16x32xf32>
    %29 = math.exp %28 : vector<16x32xf32>
    %cst_21 = arith.constant 1.000000e+00 : f32
    %30 = vector.broadcast %cst_21 : f32 to vector<16x32xf32>
    %31 = arith.addf %30, %29 : vector<16x32xf32>
    %32 = arith.divf %30, %31 : vector<16x32xf32>
    %33 = vector.extract_strided_slice %20 {offsets = [0, 64], sizes = [16, 32], strides = [1, 1]} : vector<16x128xf32> to vector<16x32xf32>
    %34 = math.tanh %33 : vector<16x32xf32>
    %35 = vector.extract_strided_slice %20 {offsets = [0, 96], sizes = [16, 32], strides = [1, 1]} : vector<16x128xf32> to vector<16x32xf32>
    %36 = arith.negf %35 : vector<16x32xf32>
    %37 = math.exp %36 : vector<16x32xf32>
    %cst_22 = arith.constant 1.000000e+00 : f32
    %38 = vector.broadcast %cst_22 : f32 to vector<16x32xf32>
    %39 = arith.addf %38, %37 : vector<16x32xf32>
    %40 = arith.divf %38, %39 : vector<16x32xf32>
    %41 = arith.mulf %32, %13 : vector<16x32xf32>
    %42 = arith.mulf %26, %34 : vector<16x32xf32>
    %43 = arith.addf %41, %42 : vector<16x32xf32>
    %44 = math.tanh %43 : vector<16x32xf32>
    %45 = arith.mulf %40, %44 : vector<16x32xf32>
    %c0_23 = arith.constant 0 : index
    %c0_24 = arith.constant 0 : index
    %46 = vector.load %arg9[%c0_23, %c0_24] : memref<16x32xf32, #tpu.memory_space<vmem>>, vector<16x32xf32>
    tpu.vector_store %arg9[%c0_23, %c0_24], %45 {strides = array<i32>} : memref<16x32xf32, #tpu.memory_space<vmem>>, vector<16x32xf32>,
    %c0_25 = arith.constant 0 : index
    %c0_26 = arith.constant 0 : index
    %47 = vector.load %arg10[%c0_25, %c0_26] : memref<16x32xf32, #tpu.memory_space<vmem>>, vector<16x32xf32>
    tpu.vector_store %arg10[%c0_25, %c0_26], %43 {strides = array<i32>} : memref<16x32xf32, #tpu.memory_space<vmem>>, vector<16x32xf32>,
    %48 = arith.index_cast %c0_i32_10 : i32 to index
    %c0_27 = arith.constant 0 : index
    %c0_28 = arith.constant 0 : index
    %49 = vector.load %arg6[%48, %c0_27, %c0_28] : memref<8x16x32xf32, #tpu.memory_space<vmem>>, vector<1x16x32xf32>
    %50 = vector.shape_cast %49 : vector<1x16x32xf32> to vector<16x32xf32>
    %51 = vector.shape_cast %45 : vector<16x32xf32> to vector<1x16x32xf32>
    tpu.vector_store %arg6[%48, %c0_27, %c0_28], %51 {strides = array<i32>} : memref<8x16x32xf32, #tpu.memory_space<vmem>>, vector<1x16x32xf32>,
    %c1_i32 = arith.constant 1 : i32
    %c0_29 = arith.constant 0 : index
    %c0_30 = arith.constant 0 : index
    %52 = vector.load %arg9[%c0_29, %c0_30] : memref<16x32xf32, #tpu.memory_space<vmem>>, vector<16x32xf32>
    %c0_31 = arith.constant 0 : index
    %c0_32 = arith.constant 0 : index
    %53 = vector.load %arg10[%c0_31, %c0_32] : memref<16x32xf32, #tpu.memory_space<vmem>>, vector<16x32xf32>
    %54 = arith.index_cast %c1_i32 : i32 to index
    %c0_33 = arith.constant 0 : index
    %c0_34 = arith.constant 0 : index
    %55 = vector.load %arg11[%54, %c0_33, %c0_34] : memref<8x16x128xf32, #tpu.memory_space<vmem>>, vector<1x16x128xf32>
    %56 = vector.shape_cast %55 : vector<1x16x128xf32> to vector<16x128xf32>
    %57 = arith.truncf %52 : vector<16x32xf32> to vector<16x32xbf16>
    %c0_35 = arith.constant 0 : index
    %c0_36 = arith.constant 0 : index
    %58 = vector.load %arg4[%c0_35, %c0_36] : memref<32x128xbf16, #tpu.memory_space<vmem>>, vector<32x128xbf16>
    %cst_37 = arith.constant dense<0.000000e+00> : vector<16x128xf32>
    %59 = tpu.matmul %57, %58, %cst_37 {dimension_numbers = #tpu.dot_dimension_numbers<[1], [0], [0], [1], [0, 0, 1, 1], [], []>} : vector<16x32xbf16>, vector<32x128xbf16>, vector<16x128xf32> -> vector<16x128xf32>
    %60 = arith.addf %56, %59 : vector<16x128xf32>
    %61 = vector.extract_strided_slice %60 {offsets = [0, 0], sizes = [16, 32], strides = [1, 1]} : vector<16x128xf32> to vector<16x32xf32>
    %62 = arith.negf %61 : vector<16x32xf32>
    %63 = math.exp %62 : vector<16x32xf32>
    %cst_38 = arith.constant 1.000000e+00 : f32
    %64 = vector.broadcast %cst_38 : f32 to vector<16x32xf32>
    %65 = arith.addf %64, %63 : vector<16x32xf32>
    %66 = arith.divf %64, %65 : vector<16x32xf32>
    %67 = vector.extract_strided_slice %60 {offsets = [0, 32], sizes = [16, 32], strides = [1, 1]} : vector<16x128xf32> to vector<16x32xf32>
    %68 = arith.negf %67 : vector<16x32xf32>
    %69 = math.exp %68 : vector<16x32xf32>
    %cst_39 = arith.constant 1.000000e+00 : f32
    %70 = vector.broadcast %cst_39 : f32 to vector<16x32xf32>
    %71 = arith.addf %70, %69 : vector<16x32xf32>
    %72 = arith.divf %70, %71 : vector<16x32xf32>
    %73 = vector.extract_strided_slice %60 {offsets = [0, 64], sizes = [16, 32], strides = [1, 1]} : vector<16x128xf32> to vector<16x32xf32>
    %74 = math.tanh %73 : vector<16x32xf32>
    %75 = vector.extract_strided_slice %60 {offsets = [0, 96], sizes = [16, 32], strides = [1, 1]} : vector<16x128xf32> to vector<16x32xf32>
    %76 = arith.negf %75 : vector<16x32xf32>
    %77 = math.exp %76 : vector<16x32xf32>
    %cst_40 = arith.constant 1.000000e+00 : f32
    %78 = vector.broadcast %cst_40 : f32 to vector<16x32xf32>
    %79 = arith.addf %78, %77 : vector<16x32xf32>
    %80 = arith.divf %78, %79 : vector<16x32xf32>
    %81 = arith.mulf %72, %53 : vector<16x32xf32>
    %82 = arith.mulf %66, %74 : vector<16x32xf32>
    %83 = arith.addf %81, %82 : vector<16x32xf32>
    %84 = math.tanh %83 : vector<16x32xf32>
    %85 = arith.mulf %80, %84 : vector<16x32xf32>
    %c0_41 = arith.constant 0 : index
    %c0_42 = arith.constant 0 : index
    %86 = vector.load %arg9[%c0_41, %c0_42] : memref<16x32xf32, #tpu.memory_space<vmem>>, vector<16x32xf32>
    tpu.vector_store %arg9[%c0_41, %c0_42], %85 {strides = array<i32>} : memref<16x32xf32, #tpu.memory_space<vmem>>, vector<16x32xf32>,
    %c0_43 = arith.constant 0 : index
    %c0_44 = arith.constant 0 : index
    %87 = vector.load %arg10[%c0_43, %c0_44] : memref<16x32xf32, #tpu.memory_space<vmem>>, vector<16x32xf32>
    tpu.vector_store %arg10[%c0_43, %c0_44], %83 {strides = array<i32>} : memref<16x32xf32, #tpu.memory_space<vmem>>, vector<16x32xf32>,
    %88 = arith.index_cast %c1_i32 : i32 to index
    %c0_45 = arith.constant 0 : index
    %c0_46 = arith.constant 0 : index
    %89 = vector.load %arg6[%88, %c0_45, %c0_46] : memref<8x16x32xf32, #tpu.memory_space<vmem>>, vector<1x16x32xf32>
    %90 = vector.shape_cast %89 : vector<1x16x32xf32> to vector<16x32xf32>
    %91 = vector.shape_cast %85 : vector<16x32xf32> to vector<1x16x32xf32>
    tpu.vector_store %arg6[%88, %c0_45, %c0_46], %91 {strides = array<i32>} : memref<8x16x32xf32, #tpu.memory_space<vmem>>, vector<1x16x32xf32>,
    %c2_i32 = arith.constant 2 : i32
    %c0_47 = arith.constant 0 : index
    %c0_48 = arith.constant 0 : index
    %92 = vector.load %arg9[%c0_47, %c0_48] : memref<16x32xf32, #tpu.memory_space<vmem>>, vector<16x32xf32>
    %c0_49 = arith.constant 0 : index
    %c0_50 = arith.constant 0 : index
    %93 = vector.load %arg10[%c0_49, %c0_50] : memref<16x32xf32, #tpu.memory_space<vmem>>, vector<16x32xf32>
    %94 = arith.index_cast %c2_i32 : i32 to index
    %c0_51 = arith.constant 0 : index
    %c0_52 = arith.constant 0 : index
    %95 = vector.load %arg11[%94, %c0_51, %c0_52] : memref<8x16x128xf32, #tpu.memory_space<vmem>>, vector<1x16x128xf32>
    %96 = vector.shape_cast %95 : vector<1x16x128xf32> to vector<16x128xf32>
    %97 = arith.truncf %92 : vector<16x32xf32> to vector<16x32xbf16>
    %c0_53 = arith.constant 0 : index
    %c0_54 = arith.constant 0 : index
    %98 = vector.load %arg4[%c0_53, %c0_54] : memref<32x128xbf16, #tpu.memory_space<vmem>>, vector<32x128xbf16>
    %cst_55 = arith.constant dense<0.000000e+00> : vector<16x128xf32>
    %99 = tpu.matmul %97, %98, %cst_55 {dimension_numbers = #tpu.dot_dimension_numbers<[1], [0], [0], [1], [0, 0, 1, 1], [], []>} : vector<16x32xbf16>, vector<32x128xbf16>, vector<16x128xf32> -> vector<16x128xf32>
    %100 = arith.addf %96, %99 : vector<16x128xf32>
    %101 = vector.extract_strided_slice %100 {offsets = [0, 0], sizes = [16, 32], strides = [1, 1]} : vector<16x128xf32> to vector<16x32xf32>
    %102 = arith.negf %101 : vector<16x32xf32>
    %103 = math.exp %102 : vector<16x32xf32>
    %cst_56 = arith.constant 1.000000e+00 : f32
    %104 = vector.broadcast %cst_56 : f32 to vector<16x32xf32>
    %105 = arith.addf %104, %103 : vector<16x32xf32>
    %106 = arith.divf %104, %105 : vector<16x32xf32>
    %107 = vector.extract_strided_slice %100 {offsets = [0, 32], sizes = [16, 32], strides = [1, 1]} : vector<16x128xf32> to vector<16x32xf32>
    %108 = arith.negf %107 : vector<16x32xf32>
    %109 = math.exp %108 : vector<16x32xf32>
    %cst_57 = arith.constant 1.000000e+00 : f32
    %110 = vector.broadcast %cst_57 : f32 to vector<16x32xf32>
    %111 = arith.addf %110, %109 : vector<16x32xf32>
    %112 = arith.divf %110, %111 : vector<16x32xf32>
    %113 = vector.extract_strided_slice %100 {offsets = [0, 64], sizes = [16, 32], strides = [1, 1]} : vector<16x128xf32> to vector<16x32xf32>
    %114 = math.tanh %113 : vector<16x32xf32>
    %115 = vector.extract_strided_slice %100 {offsets = [0, 96], sizes = [16, 32], strides = [1, 1]} : vector<16x128xf32> to vector<16x32xf32>
    %116 = arith.negf %115 : vector<16x32xf32>
    %117 = math.exp %116 : vector<16x32xf32>
    %cst_58 = arith.constant 1.000000e+00 : f32
    %118 = vector.broadcast %cst_58 : f32 to vector<16x32xf32>
    %119 = arith.addf %118, %117 : vector<16x32xf32>
    %120 = arith.divf %118, %119 : vector<16x32xf32>
    %121 = arith.mulf %112, %93 : vector<16x32xf32>
    %122 = arith.mulf %106, %114 : vector<16x32xf32>
    %123 = arith.addf %121, %122 : vector<16x32xf32>
    %124 = math.tanh %123 : vector<16x32xf32>
    %125 = arith.mulf %120, %124 : vector<16x32xf32>
    %c0_59 = arith.constant 0 : index
    %c0_60 = arith.constant 0 : index
    %126 = vector.load %arg9[%c0_59, %c0_60] : memref<16x32xf32, #tpu.memory_space<vmem>>, vector<16x32xf32>
    tpu.vector_store %arg9[%c0_59, %c0_60], %125 {strides = array<i32>} : memref<16x32xf32, #tpu.memory_space<vmem>>, vector<16x32xf32>,
    %c0_61 = arith.constant 0 : index
    %c0_62 = arith.constant 0 : index
    %127 = vector.load %arg10[%c0_61, %c0_62] : memref<16x32xf32, #tpu.memory_space<vmem>>, vector<16x32xf32>
    tpu.vector_store %arg10[%c0_61, %c0_62], %123 {strides = array<i32>} : memref<16x32xf32, #tpu.memory_space<vmem>>, vector<16x32xf32>,
    %128 = arith.index_cast %c2_i32 : i32 to index
    %c0_63 = arith.constant 0 : index
    %c0_64 = arith.constant 0 : index
    %129 = vector.load %arg6[%128, %c0_63, %c0_64] : memref<8x16x32xf32, #tpu.memory_space<vmem>>, vector<1x16x32xf32>
    %130 = vector.shape_cast %129 : vector<1x16x32xf32> to vector<16x32xf32>
    %131 = vector.shape_cast %125 : vector<16x32xf32> to vector<1x16x32xf32>
    tpu.vector_store %arg6[%128, %c0_63, %c0_64], %131 {strides = array<i32>} : memref<8x16x32xf32, #tpu.memory_space<vmem>>, vector<1x16x32xf32>,
    %c3_i32 = arith.constant 3 : i32
    %c0_65 = arith.constant 0 : index
    %c0_66 = arith.constant 0 : index
    %132 = vector.load %arg9[%c0_65, %c0_66] : memref<16x32xf32, #tpu.memory_space<vmem>>, vector<16x32xf32>
    %c0_67 = arith.constant 0 : index
    %c0_68 = arith.constant 0 : index
    %133 = vector.load %arg10[%c0_67, %c0_68] : memref<16x32xf32, #tpu.memory_space<vmem>>, vector<16x32xf32>
    %134 = arith.index_cast %c3_i32 : i32 to index
    %c0_69 = arith.constant 0 : index
    %c0_70 = arith.constant 0 : index
    %135 = vector.load %arg11[%134, %c0_69, %c0_70] : memref<8x16x128xf32, #tpu.memory_space<vmem>>, vector<1x16x128xf32>
    %136 = vector.shape_cast %135 : vector<1x16x128xf32> to vector<16x128xf32>
    %137 = arith.truncf %132 : vector<16x32xf32> to vector<16x32xbf16>
    %c0_71 = arith.constant 0 : index
    %c0_72 = arith.constant 0 : index
    %138 = vector.load %arg4[%c0_71, %c0_72] : memref<32x128xbf16, #tpu.memory_space<vmem>>, vector<32x128xbf16>
    %cst_73 = arith.constant dense<0.000000e+00> : vector<16x128xf32>
    %139 = tpu.matmul %137, %138, %cst_73 {dimension_numbers = #tpu.dot_dimension_numbers<[1], [0], [0], [1], [0, 0, 1, 1], [], []>} : vector<16x32xbf16>, vector<32x128xbf16>, vector<16x128xf32> -> vector<16x128xf32>
    %140 = arith.addf %136, %139 : vector<16x128xf32>
    %141 = vector.extract_strided_slice %140 {offsets = [0, 0], sizes = [16, 32], strides = [1, 1]} : vector<16x128xf32> to vector<16x32xf32>
    %142 = arith.negf %141 : vector<16x32xf32>
    %143 = math.exp %142 : vector<16x32xf32>
    %cst_74 = arith.constant 1.000000e+00 : f32
    %144 = vector.broadcast %cst_74 : f32 to vector<16x32xf32>
    %145 = arith.addf %144, %143 : vector<16x32xf32>
    %146 = arith.divf %144, %145 : vector<16x32xf32>
    %147 = vector.extract_strided_slice %140 {offsets = [0, 32], sizes = [16, 32], strides = [1, 1]} : vector<16x128xf32> to vector<16x32xf32>
    %148 = arith.negf %147 : vector<16x32xf32>
    %149 = math.exp %148 : vector<16x32xf32>
    %cst_75 = arith.constant 1.000000e+00 : f32
    %150 = vector.broadcast %cst_75 : f32 to vector<16x32xf32>
    %151 = arith.addf %150, %149 : vector<16x32xf32>
    %152 = arith.divf %150, %151 : vector<16x32xf32>
    %153 = vector.extract_strided_slice %140 {offsets = [0, 64], sizes = [16, 32], strides = [1, 1]} : vector<16x128xf32> to vector<16x32xf32>
    %154 = math.tanh %153 : vector<16x32xf32>
    %155 = vector.extract_strided_slice %140 {offsets = [0, 96], sizes = [16, 32], strides = [1, 1]} : vector<16x128xf32> to vector<16x32xf32>
    %156 = arith.negf %155 : vector<16x32xf32>
    %157 = math.exp %156 : vector<16x32xf32>
    %cst_76 = arith.constant 1.000000e+00 : f32
    %158 = vector.broadcast %cst_76 : f32 to vector<16x32xf32>
    %159 = arith.addf %158, %157 : vector<16x32xf32>
    %160 = arith.divf %158, %159 : vector<16x32xf32>
    %161 = arith.mulf %152, %133 : vector<16x32xf32>
    %162 = arith.mulf %146, %154 : vector<16x32xf32>
    %163 = arith.addf %161, %162 : vector<16x32xf32>
    %164 = math.tanh %163 : vector<16x32xf32>
    %165 = arith.mulf %160, %164 : vector<16x32xf32>
    %c0_77 = arith.constant 0 : index
    %c0_78 = arith.constant 0 : index
    %166 = vector.load %arg9[%c0_77, %c0_78] : memref<16x32xf32, #tpu.memory_space<vmem>>, vector<16x32xf32>
    tpu.vector_store %arg9[%c0_77, %c0_78], %165 {strides = array<i32>} : memref<16x32xf32, #tpu.memory_space<vmem>>, vector<16x32xf32>,
    %c0_79 = arith.constant 0 : index
    %c0_80 = arith.constant 0 : index
    %167 = vector.load %arg10[%c0_79, %c0_80] : memref<16x32xf32, #tpu.memory_space<vmem>>, vector<16x32xf32>
    tpu.vector_store %arg10[%c0_79, %c0_80], %163 {strides = array<i32>} : memref<16x32xf32, #tpu.memory_space<vmem>>, vector<16x32xf32>,
    %168 = arith.index_cast %c3_i32 : i32 to index
    %c0_81 = arith.constant 0 : index
    %c0_82 = arith.constant 0 : index
    %169 = vector.load %arg6[%168, %c0_81, %c0_82] : memref<8x16x32xf32, #tpu.memory_space<vmem>>, vector<1x16x32xf32>
    %170 = vector.shape_cast %169 : vector<1x16x32xf32> to vector<16x32xf32>
    %171 = vector.shape_cast %165 : vector<16x32xf32> to vector<1x16x32xf32>
    tpu.vector_store %arg6[%168, %c0_81, %c0_82], %171 {strides = array<i32>} : memref<8x16x32xf32, #tpu.memory_space<vmem>>, vector<1x16x32xf32>,
    %c4_i32 = arith.constant 4 : i32
    %c0_83 = arith.constant 0 : index
    %c0_84 = arith.constant 0 : index
    %172 = vector.load %arg9[%c0_83, %c0_84] : memref<16x32xf32, #tpu.memory_space<vmem>>, vector<16x32xf32>
    %c0_85 = arith.constant 0 : index
    %c0_86 = arith.constant 0 : index
    %173 = vector.load %arg10[%c0_85, %c0_86] : memref<16x32xf32, #tpu.memory_space<vmem>>, vector<16x32xf32>
    %174 = arith.index_cast %c4_i32 : i32 to index
    %c0_87 = arith.constant 0 : index
    %c0_88 = arith.constant 0 : index
    %175 = vector.load %arg11[%174, %c0_87, %c0_88] : memref<8x16x128xf32, #tpu.memory_space<vmem>>, vector<1x16x128xf32>
    %176 = vector.shape_cast %175 : vector<1x16x128xf32> to vector<16x128xf32>
    %177 = arith.truncf %172 : vector<16x32xf32> to vector<16x32xbf16>
    %c0_89 = arith.constant 0 : index
    %c0_90 = arith.constant 0 : index
    %178 = vector.load %arg4[%c0_89, %c0_90] : memref<32x128xbf16, #tpu.memory_space<vmem>>, vector<32x128xbf16>
    %cst_91 = arith.constant dense<0.000000e+00> : vector<16x128xf32>
    %179 = tpu.matmul %177, %178, %cst_91 {dimension_numbers = #tpu.dot_dimension_numbers<[1], [0], [0], [1], [0, 0, 1, 1], [], []>} : vector<16x32xbf16>, vector<32x128xbf16>, vector<16x128xf32> -> vector<16x128xf32>
    %180 = arith.addf %176, %179 : vector<16x128xf32>
    %181 = vector.extract_strided_slice %180 {offsets = [0, 0], sizes = [16, 32], strides = [1, 1]} : vector<16x128xf32> to vector<16x32xf32>
    %182 = arith.negf %181 : vector<16x32xf32>
    %183 = math.exp %182 : vector<16x32xf32>
    %cst_92 = arith.constant 1.000000e+00 : f32
    %184 = vector.broadcast %cst_92 : f32 to vector<16x32xf32>
    %185 = arith.addf %184, %183 : vector<16x32xf32>
    %186 = arith.divf %184, %185 : vector<16x32xf32>
    %187 = vector.extract_strided_slice %180 {offsets = [0, 32], sizes = [16, 32], strides = [1, 1]} : vector<16x128xf32> to vector<16x32xf32>
    %188 = arith.negf %187 : vector<16x32xf32>
    %189 = math.exp %188 : vector<16x32xf32>
    %cst_93 = arith.constant 1.000000e+00 : f32
    %190 = vector.broadcast %cst_93 : f32 to vector<16x32xf32>
    %191 = arith.addf %190, %189 : vector<16x32xf32>
    %192 = arith.divf %190, %191 : vector<16x32xf32>
    %193 = vector.extract_strided_slice %180 {offsets = [0, 64], sizes = [16, 32], strides = [1, 1]} : vector<16x128xf32> to vector<16x32xf32>
    %194 = math.tanh %193 : vector<16x32xf32>
    %195 = vector.extract_strided_slice %180 {offsets = [0, 96], sizes = [16, 32], strides = [1, 1]} : vector<16x128xf32> to vector<16x32xf32>
    %196 = arith.negf %195 : vector<16x32xf32>
    %197 = math.exp %196 : vector<16x32xf32>
    %cst_94 = arith.constant 1.000000e+00 : f32
    %198 = vector.broadcast %cst_94 : f32 to vector<16x32xf32>
    %199 = arith.addf %198, %197 : vector<16x32xf32>
    %200 = arith.divf %198, %199 : vector<16x32xf32>
    %201 = arith.mulf %192, %173 : vector<16x32xf32>
    %202 = arith.mulf %186, %194 : vector<16x32xf32>
    %203 = arith.addf %201, %202 : vector<16x32xf32>
    %204 = math.tanh %203 : vector<16x32xf32>
    %205 = arith.mulf %200, %204 : vector<16x32xf32>
    %c0_95 = arith.constant 0 : index
    %c0_96 = arith.constant 0 : index
    %206 = vector.load %arg9[%c0_95, %c0_96] : memref<16x32xf32, #tpu.memory_space<vmem>>, vector<16x32xf32>
    tpu.vector_store %arg9[%c0_95, %c0_96], %205 {strides = array<i32>} : memref<16x32xf32, #tpu.memory_space<vmem>>, vector<16x32xf32>,
    %c0_97 = arith.constant 0 : index
    %c0_98 = arith.constant 0 : index
    %207 = vector.load %arg10[%c0_97, %c0_98] : memref<16x32xf32, #tpu.memory_space<vmem>>, vector<16x32xf32>
    tpu.vector_store %arg10[%c0_97, %c0_98], %203 {strides = array<i32>} : memref<16x32xf32, #tpu.memory_space<vmem>>, vector<16x32xf32>,
    %208 = arith.index_cast %c4_i32 : i32 to index
    %c0_99 = arith.constant 0 : index
    %c0_100 = arith.constant 0 : index
    %209 = vector.load %arg6[%208, %c0_99, %c0_100] : memref<8x16x32xf32, #tpu.memory_space<vmem>>, vector<1x16x32xf32>
    %210 = vector.shape_cast %209 : vector<1x16x32xf32> to vector<16x32xf32>
    %211 = vector.shape_cast %205 : vector<16x32xf32> to vector<1x16x32xf32>
    tpu.vector_store %arg6[%208, %c0_99, %c0_100], %211 {strides = array<i32>} : memref<8x16x32xf32, #tpu.memory_space<vmem>>, vector<1x16x32xf32>,
    %c5_i32 = arith.constant 5 : i32
    %c0_101 = arith.constant 0 : index
    %c0_102 = arith.constant 0 : index
    %212 = vector.load %arg9[%c0_101, %c0_102] : memref<16x32xf32, #tpu.memory_space<vmem>>, vector<16x32xf32>
    %c0_103 = arith.constant 0 : index
    %c0_104 = arith.constant 0 : index
    %213 = vector.load %arg10[%c0_103, %c0_104] : memref<16x32xf32, #tpu.memory_space<vmem>>, vector<16x32xf32>
    %214 = arith.index_cast %c5_i32 : i32 to index
    %c0_105 = arith.constant 0 : index
    %c0_106 = arith.constant 0 : index
    %215 = vector.load %arg11[%214, %c0_105, %c0_106] : memref<8x16x128xf32, #tpu.memory_space<vmem>>, vector<1x16x128xf32>
    %216 = vector.shape_cast %215 : vector<1x16x128xf32> to vector<16x128xf32>
    %217 = arith.truncf %212 : vector<16x32xf32> to vector<16x32xbf16>
    %c0_107 = arith.constant 0 : index
    %c0_108 = arith.constant 0 : index
    %218 = vector.load %arg4[%c0_107, %c0_108] : memref<32x128xbf16, #tpu.memory_space<vmem>>, vector<32x128xbf16>
    %cst_109 = arith.constant dense<0.000000e+00> : vector<16x128xf32>
    %219 = tpu.matmul %217, %218, %cst_109 {dimension_numbers = #tpu.dot_dimension_numbers<[1], [0], [0], [1], [0, 0, 1, 1], [], []>} : vector<16x32xbf16>, vector<32x128xbf16>, vector<16x128xf32> -> vector<16x128xf32>
    %220 = arith.addf %216, %219 : vector<16x128xf32>
    %221 = vector.extract_strided_slice %220 {offsets = [0, 0], sizes = [16, 32], strides = [1, 1]} : vector<16x128xf32> to vector<16x32xf32>
    %222 = arith.negf %221 : vector<16x32xf32>
    %223 = math.exp %222 : vector<16x32xf32>
    %cst_110 = arith.constant 1.000000e+00 : f32
    %224 = vector.broadcast %cst_110 : f32 to vector<16x32xf32>
    %225 = arith.addf %224, %223 : vector<16x32xf32>
    %226 = arith.divf %224, %225 : vector<16x32xf32>
    %227 = vector.extract_strided_slice %220 {offsets = [0, 32], sizes = [16, 32], strides = [1, 1]} : vector<16x128xf32> to vector<16x32xf32>
    %228 = arith.negf %227 : vector<16x32xf32>
    %229 = math.exp %228 : vector<16x32xf32>
    %cst_111 = arith.constant 1.000000e+00 : f32
    %230 = vector.broadcast %cst_111 : f32 to vector<16x32xf32>
    %231 = arith.addf %230, %229 : vector<16x32xf32>
    %232 = arith.divf %230, %231 : vector<16x32xf32>
    %233 = vector.extract_strided_slice %220 {offsets = [0, 64], sizes = [16, 32], strides = [1, 1]} : vector<16x128xf32> to vector<16x32xf32>
    %234 = math.tanh %233 : vector<16x32xf32>
    %235 = vector.extract_strided_slice %220 {offsets = [0, 96], sizes = [16, 32], strides = [1, 1]} : vector<16x128xf32> to vector<16x32xf32>
    %236 = arith.negf %235 : vector<16x32xf32>
    %237 = math.exp %236 : vector<16x32xf32>
    %cst_112 = arith.constant 1.000000e+00 : f32
    %238 = vector.broadcast %cst_112 : f32 to vector<16x32xf32>
    %239 = arith.addf %238, %237 : vector<16x32xf32>
    %240 = arith.divf %238, %239 : vector<16x32xf32>
    %241 = arith.mulf %232, %213 : vector<16x32xf32>
    %242 = arith.mulf %226, %234 : vector<16x32xf32>
    %243 = arith.addf %241, %242 : vector<16x32xf32>
    %244 = math.tanh %243 : vector<16x32xf32>
    %245 = arith.mulf %240, %244 : vector<16x32xf32>
    %c0_113 = arith.constant 0 : index
    %c0_114 = arith.constant 0 : index
    %246 = vector.load %arg9[%c0_113, %c0_114] : memref<16x32xf32, #tpu.memory_space<vmem>>, vector<16x32xf32>
    tpu.vector_store %arg9[%c0_113, %c0_114], %245 {strides = array<i32>} : memref<16x32xf32, #tpu.memory_space<vmem>>, vector<16x32xf32>,
    %c0_115 = arith.constant 0 : index
    %c0_116 = arith.constant 0 : index
    %247 = vector.load %arg10[%c0_115, %c0_116] : memref<16x32xf32, #tpu.memory_space<vmem>>, vector<16x32xf32>
    tpu.vector_store %arg10[%c0_115, %c0_116], %243 {strides = array<i32>} : memref<16x32xf32, #tpu.memory_space<vmem>>, vector<16x32xf32>,
    %248 = arith.index_cast %c5_i32 : i32 to index
    %c0_117 = arith.constant 0 : index
    %c0_118 = arith.constant 0 : index
    %249 = vector.load %arg6[%248, %c0_117, %c0_118] : memref<8x16x32xf32, #tpu.memory_space<vmem>>, vector<1x16x32xf32>
    %250 = vector.shape_cast %249 : vector<1x16x32xf32> to vector<16x32xf32>
    %251 = vector.shape_cast %245 : vector<16x32xf32> to vector<1x16x32xf32>
    tpu.vector_store %arg6[%248, %c0_117, %c0_118], %251 {strides = array<i32>} : memref<8x16x32xf32, #tpu.memory_space<vmem>>, vector<1x16x32xf32>,
    %c6_i32 = arith.constant 6 : i32
    %c0_119 = arith.constant 0 : index
    %c0_120 = arith.constant 0 : index
    %252 = vector.load %arg9[%c0_119, %c0_120] : memref<16x32xf32, #tpu.memory_space<vmem>>, vector<16x32xf32>
    %c0_121 = arith.constant 0 : index
    %c0_122 = arith.constant 0 : index
    %253 = vector.load %arg10[%c0_121, %c0_122] : memref<16x32xf32, #tpu.memory_space<vmem>>, vector<16x32xf32>
    %254 = arith.index_cast %c6_i32 : i32 to index
    %c0_123 = arith.constant 0 : index
    %c0_124 = arith.constant 0 : index
    %255 = vector.load %arg11[%254, %c0_123, %c0_124] : memref<8x16x128xf32, #tpu.memory_space<vmem>>, vector<1x16x128xf32>
    %256 = vector.shape_cast %255 : vector<1x16x128xf32> to vector<16x128xf32>
    %257 = arith.truncf %252 : vector<16x32xf32> to vector<16x32xbf16>
    %c0_125 = arith.constant 0 : index
    %c0_126 = arith.constant 0 : index
    %258 = vector.load %arg4[%c0_125, %c0_126] : memref<32x128xbf16, #tpu.memory_space<vmem>>, vector<32x128xbf16>
    %cst_127 = arith.constant dense<0.000000e+00> : vector<16x128xf32>
    %259 = tpu.matmul %257, %258, %cst_127 {dimension_numbers = #tpu.dot_dimension_numbers<[1], [0], [0], [1], [0, 0, 1, 1], [], []>} : vector<16x32xbf16>, vector<32x128xbf16>, vector<16x128xf32> -> vector<16x128xf32>
    %260 = arith.addf %256, %259 : vector<16x128xf32>
    %261 = vector.extract_strided_slice %260 {offsets = [0, 0], sizes = [16, 32], strides = [1, 1]} : vector<16x128xf32> to vector<16x32xf32>
    %262 = arith.negf %261 : vector<16x32xf32>
    %263 = math.exp %262 : vector<16x32xf32>
    %cst_128 = arith.constant 1.000000e+00 : f32
    %264 = vector.broadcast %cst_128 : f32 to vector<16x32xf32>
    %265 = arith.addf %264, %263 : vector<16x32xf32>
    %266 = arith.divf %264, %265 : vector<16x32xf32>
    %267 = vector.extract_strided_slice %260 {offsets = [0, 32], sizes = [16, 32], strides = [1, 1]} : vector<16x128xf32> to vector<16x32xf32>
    %268 = arith.negf %267 : vector<16x32xf32>
    %269 = math.exp %268 : vector<16x32xf32>
    %cst_129 = arith.constant 1.000000e+00 : f32
    %270 = vector.broadcast %cst_129 : f32 to vector<16x32xf32>
    %271 = arith.addf %270, %269 : vector<16x32xf32>
    %272 = arith.divf %270, %271 : vector<16x32xf32>
    %273 = vector.extract_strided_slice %260 {offsets = [0, 64], sizes = [16, 32], strides = [1, 1]} : vector<16x128xf32> to vector<16x32xf32>
    %274 = math.tanh %273 : vector<16x32xf32>
    %275 = vector.extract_strided_slice %260 {offsets = [0, 96], sizes = [16, 32], strides = [1, 1]} : vector<16x128xf32> to vector<16x32xf32>
    %276 = arith.negf %275 : vector<16x32xf32>
    %277 = math.exp %276 : vector<16x32xf32>
    %cst_130 = arith.constant 1.000000e+00 : f32
    %278 = vector.broadcast %cst_130 : f32 to vector<16x32xf32>
    %279 = arith.addf %278, %277 : vector<16x32xf32>
    %280 = arith.divf %278, %279 : vector<16x32xf32>
    %281 = arith.mulf %272, %253 : vector<16x32xf32>
    %282 = arith.mulf %266, %274 : vector<16x32xf32>
    %283 = arith.addf %281, %282 : vector<16x32xf32>
    %284 = math.tanh %283 : vector<16x32xf32>
    %285 = arith.mulf %280, %284 : vector<16x32xf32>
    %c0_131 = arith.constant 0 : index
    %c0_132 = arith.constant 0 : index
    %286 = vector.load %arg9[%c0_131, %c0_132] : memref<16x32xf32, #tpu.memory_space<vmem>>, vector<16x32xf32>
    tpu.vector_store %arg9[%c0_131, %c0_132], %285 {strides = array<i32>} : memref<16x32xf32, #tpu.memory_space<vmem>>, vector<16x32xf32>,
    %c0_133 = arith.constant 0 : index
    %c0_134 = arith.constant 0 : index
    %287 = vector.load %arg10[%c0_133, %c0_134] : memref<16x32xf32, #tpu.memory_space<vmem>>, vector<16x32xf32>
    tpu.vector_store %arg10[%c0_133, %c0_134], %283 {strides = array<i32>} : memref<16x32xf32, #tpu.memory_space<vmem>>, vector<16x32xf32>,
    %288 = arith.index_cast %c6_i32 : i32 to index
    %c0_135 = arith.constant 0 : index
    %c0_136 = arith.constant 0 : index
    %289 = vector.load %arg6[%288, %c0_135, %c0_136] : memref<8x16x32xf32, #tpu.memory_space<vmem>>, vector<1x16x32xf32>
    %290 = vector.shape_cast %289 : vector<1x16x32xf32> to vector<16x32xf32>
    %291 = vector.shape_cast %285 : vector<16x32xf32> to vector<1x16x32xf32>
    tpu.vector_store %arg6[%288, %c0_135, %c0_136], %291 {strides = array<i32>} : memref<8x16x32xf32, #tpu.memory_space<vmem>>, vector<1x16x32xf32>,
    %c7_i32 = arith.constant 7 : i32
    %c0_137 = arith.constant 0 : index
    %c0_138 = arith.constant 0 : index
    %292 = vector.load %arg9[%c0_137, %c0_138] : memref<16x32xf32, #tpu.memory_space<vmem>>, vector<16x32xf32>
    %c0_139 = arith.constant 0 : index
    %c0_140 = arith.constant 0 : index
    %293 = vector.load %arg10[%c0_139, %c0_140] : memref<16x32xf32, #tpu.memory_space<vmem>>, vector<16x32xf32>
    %294 = arith.index_cast %c7_i32 : i32 to index
    %c0_141 = arith.constant 0 : index
    %c0_142 = arith.constant 0 : index
    %295 = vector.load %arg11[%294, %c0_141, %c0_142] : memref<8x16x128xf32, #tpu.memory_space<vmem>>, vector<1x16x128xf32>
    %296 = vector.shape_cast %295 : vector<1x16x128xf32> to vector<16x128xf32>
    %297 = arith.truncf %292 : vector<16x32xf32> to vector<16x32xbf16>
    %c0_143 = arith.constant 0 : index
    %c0_144 = arith.constant 0 : index
    %298 = vector.load %arg4[%c0_143, %c0_144] : memref<32x128xbf16, #tpu.memory_space<vmem>>, vector<32x128xbf16>
    %cst_145 = arith.constant dense<0.000000e+00> : vector<16x128xf32>
    %299 = tpu.matmul %297, %298, %cst_145 {dimension_numbers = #tpu.dot_dimension_numbers<[1], [0], [0], [1], [0, 0, 1, 1], [], []>} : vector<16x32xbf16>, vector<32x128xbf16>, vector<16x128xf32> -> vector<16x128xf32>
    %300 = arith.addf %296, %299 : vector<16x128xf32>
    %301 = vector.extract_strided_slice %300 {offsets = [0, 0], sizes = [16, 32], strides = [1, 1]} : vector<16x128xf32> to vector<16x32xf32>
    %302 = arith.negf %301 : vector<16x32xf32>
    %303 = math.exp %302 : vector<16x32xf32>
    %cst_146 = arith.constant 1.000000e+00 : f32
    %304 = vector.broadcast %cst_146 : f32 to vector<16x32xf32>
    %305 = arith.addf %304, %303 : vector<16x32xf32>
    %306 = arith.divf %304, %305 : vector<16x32xf32>
    %307 = vector.extract_strided_slice %300 {offsets = [0, 32], sizes = [16, 32], strides = [1, 1]} : vector<16x128xf32> to vector<16x32xf32>
    %308 = arith.negf %307 : vector<16x32xf32>
    %309 = math.exp %308 : vector<16x32xf32>
    %cst_147 = arith.constant 1.000000e+00 : f32
    %310 = vector.broadcast %cst_147 : f32 to vector<16x32xf32>
    %311 = arith.addf %310, %309 : vector<16x32xf32>
    %312 = arith.divf %310, %311 : vector<16x32xf32>
    %313 = vector.extract_strided_slice %300 {offsets = [0, 64], sizes = [16, 32], strides = [1, 1]} : vector<16x128xf32> to vector<16x32xf32>
    %314 = math.tanh %313 : vector<16x32xf32>
    %315 = vector.extract_strided_slice %300 {offsets = [0, 96], sizes = [16, 32], strides = [1, 1]} : vector<16x128xf32> to vector<16x32xf32>
    %316 = arith.negf %315 : vector<16x32xf32>
    %317 = math.exp %316 : vector<16x32xf32>
    %cst_148 = arith.constant 1.000000e+00 : f32
    %318 = vector.broadcast %cst_148 : f32 to vector<16x32xf32>
    %319 = arith.addf %318, %317 : vector<16x32xf32>
    %320 = arith.divf %318, %319 : vector<16x32xf32>
    %321 = arith.mulf %312, %293 : vector<16x32xf32>
    %322 = arith.mulf %306, %314 : vector<16x32xf32>
    %323 = arith.addf %321, %322 : vector<16x32xf32>
    %324 = math.tanh %323 : vector<16x32xf32>
    %325 = arith.mulf %320, %324 : vector<16x32xf32>
    %c0_149 = arith.constant 0 : index
    %c0_150 = arith.constant 0 : index
    %326 = vector.load %arg9[%c0_149, %c0_150] : memref<16x32xf32, #tpu.memory_space<vmem>>, vector<16x32xf32>
    tpu.vector_store %arg9[%c0_149, %c0_150], %325 {strides = array<i32>} : memref<16x32xf32, #tpu.memory_space<vmem>>, vector<16x32xf32>,
    %c0_151 = arith.constant 0 : index
    %c0_152 = arith.constant 0 : index
    %327 = vector.load %arg10[%c0_151, %c0_152] : memref<16x32xf32, #tpu.memory_space<vmem>>, vector<16x32xf32>
    tpu.vector_store %arg10[%c0_151, %c0_152], %323 {strides = array<i32>} : memref<16x32xf32, #tpu.memory_space<vmem>>, vector<16x32xf32>,
    %328 = arith.index_cast %c7_i32 : i32 to index
    %c0_153 = arith.constant 0 : index
    %c0_154 = arith.constant 0 : index
    %329 = vector.load %arg6[%328, %c0_153, %c0_154] : memref<8x16x32xf32, #tpu.memory_space<vmem>>, vector<1x16x32xf32>
    %330 = vector.shape_cast %329 : vector<1x16x32xf32> to vector<16x32xf32>
    %331 = vector.shape_cast %325 : vector<16x32xf32> to vector<1x16x32xf32>
    tpu.vector_store %arg6[%328, %c0_153, %c0_154], %331 {strides = array<i32>} : memref<8x16x32xf32, #tpu.memory_space<vmem>>, vector<1x16x32xf32>,
    %c8_i32 = arith.constant 8 : i32
    %c0_i32_155 = arith.constant 0 : i32
    %332 = arith.cmpi eq, %arg1, %c0_i32_155 : i32
    %333 = arith.extui %332 : i1 to i32
    %c0_i32_156 = arith.constant 0 : i32
    %334 = arith.cmpi ne, %333, %c0_i32_156 : i32
    scf.if %334 {
      %c0_157 = arith.constant 0 : index
      %c0_158 = arith.constant 0 : index
      %335 = vector.load %arg9[%c0_157, %c0_158] : memref<16x32xf32, #tpu.memory_space<vmem>>, vector<16x32xf32>
      %c0_159 = arith.constant 0 : index
      %c0_160 = arith.constant 0 : index
      %336 = vector.load %arg7[%c0_159, %c0_160] : memref<16x32xf32, #tpu.memory_space<vmem>>, vector<16x32xf32>
      tpu.vector_store %arg7[%c0_159, %c0_160], %335 {strides = array<i32>} : memref<16x32xf32, #tpu.memory_space<vmem>>, vector<16x32xf32>,
      %c0_161 = arith.constant 0 : index
      %c0_162 = arith.constant 0 : index
      %337 = vector.load %arg10[%c0_161, %c0_162] : memref<16x32xf32, #tpu.memory_space<vmem>>, vector<16x32xf32>
      %c0_163 = arith.constant 0 : index
      %c0_164 = arith.constant 0 : index
      %338 = vector.load %arg8[%c0_163, %c0_164] : memref<16x32xf32, #tpu.memory_space<vmem>>, vector<16x32xf32>
      tpu.vector_store %arg8[%c0_163, %c0_164], %337 {strides = array<i32>} : memref<16x32xf32, #tpu.memory_space<vmem>>, vector<16x32xf32>,
    } else {
    }
    return
  }
  func.func @transform_0(%arg0: i32, %arg1: i32) -> (i32, i32, i32) {
    %c0_i32 = arith.constant 0 : i32
    %c0_i32_0 = arith.constant 0 : i32
    return %arg1, %arg0, %c0_i32 : i32, i32, i32
  }
  func.func @transform_1(%arg0: i32, %arg1: i32) -> (i32, i32) {
    %c0_i32 = arith.constant 0 : i32
    %c0_i32_0 = arith.constant 0 : i32
    %c0_i32_1 = arith.constant 0 : i32
    return %c0_i32, %c0_i32_0 : i32, i32
  }
  func.func @transform_2(%arg0: i32, %arg1: i32) -> (i32, i32) {
    %c0_i32 = arith.constant 0 : i32
    %c0_i32_0 = arith.constant 0 : i32
    %c0_i32_1 = arith.constant 0 : i32
    return %c0_i32, %c0_i32_0 : i32, i32
  }
  func.func @transform_3(%arg0: i32, %arg1: i32) -> (i32, i32) {
    %c0_i32 = arith.constant 0 : i32
    %c0_i32_0 = arith.constant 0 : i32
    %c0_i32_1 = arith.constant 0 : i32
    return %c0_i32, %c0_i32_0 : i32, i32
  }
  func.func @transform_4(%arg0: i32, %arg1: i32) -> (i32, i32, i32) {
    %c0_i32 = arith.constant 0 : i32
    %c0_i32_0 = arith.constant 0 : i32
    return %arg1, %arg0, %c0_i32 : i32, i32, i32
  }
  func.func @transform_5(%arg0: i32, %arg1: i32) -> (i32, i32) {
    %c0_i32 = arith.constant 0 : i32
    %c0_i32_0 = arith.constant 0 : i32
    return %arg0, %c0_i32 : i32, i32
  }
  func.func @transform_6(%arg0: i32, %arg1: i32) -> (i32, i32) {
    %c0_i32 = arith.constant 0 : i32
    %c0_i32_0 = arith.constant 0 : i32
    return %arg0, %c0_i32 : i32, i32
  }
}

module attributes {stable_mosaic.version = 11 : i64} {
  func.func @_lstm_layer_kernel(%arg0: i32, %arg1: i32, %arg2: memref<8x16x16xbf16, #tpu.memory_space<vmem>>, %arg3: memref<16x128xbf16, #tpu.memory_space<vmem>>, %arg4: memref<32x128xbf16, #tpu.memory_space<vmem>>, %arg5: memref<1x128xf32, #tpu.memory_space<vmem>>, %arg6: memref<8x16x32xbf16, #tpu.memory_space<vmem>>, %arg7: memref<16x32xf32, #tpu.memory_space<vmem>>, %arg8: memref<16x32xf32, #tpu.memory_space<vmem>>, %arg9: memref<16x32xf32, #tpu.memory_space<vmem>>, %arg10: memref<16x32xf32, #tpu.memory_space<vmem>>, %arg11: memref<8x16x128xf32, #tpu.memory_space<vmem>>) attributes {dimension_semantics = [#tpu.dimension_semantics<parallel>, #tpu.dimension_semantics<arbitrary>], iteration_bounds = array<i64: 1, 1>, scalar_prefetch = 0 : i64, scratch_operands = 3 : i64, tpu.core_type = #tpu.core_type<tc>, window_params = [{transform_indices = @transform_0, window_bounds = array<i64: 8, 16, 16>}, {pipeline_mode = #tpu.pipeline_mode<synchronous>, transform_indices = @transform_1, window_bounds = array<i64: 16, 128>}, {pipeline_mode = #tpu.pipeline_mode<synchronous>, transform_indices = @transform_2, window_bounds = array<i64: 32, 128>}, {pipeline_mode = #tpu.pipeline_mode<synchronous>, transform_indices = @transform_3, window_bounds = array<i64: 1, 128>}, {transform_indices = @transform_4, window_bounds = array<i64: 8, 16, 32>}, {transform_indices = @transform_5, window_bounds = array<i64: 16, 32>}, {transform_indices = @transform_6, window_bounds = array<i64: 16, 32>}]} {
    %c0_i32 = arith.constant 0 : i32
    %0 = arith.cmpi eq, %arg1, %c0_i32 : i32
    %1 = arith.extui %0 : i1 to i32
    %c0_i32_0 = arith.constant 0 : i32
    %2 = arith.cmpi ne, %1, %c0_i32_0 : i32
    scf.if %2 {
      %cst_157 = arith.constant 0.000000e+00 : f32
      %343 = vector.broadcast %cst_157 : f32 to vector<16x32xf32>
      %c0_158 = arith.constant 0 : index
      %c0_159 = arith.constant 0 : index
      %344 = vector.load %arg9[%c0_158, %c0_159] : memref<16x32xf32, #tpu.memory_space<vmem>>, vector<16x32xf32>
      tpu.vector_store %arg9[%c0_158, %c0_159], %343 {strides = array<i32>} : memref<16x32xf32, #tpu.memory_space<vmem>>, vector<16x32xf32>,
      %cst_160 = arith.constant 0.000000e+00 : f32
      %345 = vector.broadcast %cst_160 : f32 to vector<16x32xf32>
      %c0_161 = arith.constant 0 : index
      %c0_162 = arith.constant 0 : index
      %346 = vector.load %arg10[%c0_161, %c0_162] : memref<16x32xf32, #tpu.memory_space<vmem>>, vector<16x32xf32>
      tpu.vector_store %arg10[%c0_161, %c0_162], %345 {strides = array<i32>} : memref<16x32xf32, #tpu.memory_space<vmem>>, vector<16x32xf32>,
    } else {
    }
    %c0 = arith.constant 0 : index
    %c0_1 = arith.constant 0 : index
    %c0_2 = arith.constant 0 : index
    %3 = vector.load %arg2[%c0, %c0_1, %c0_2] : memref<8x16x16xbf16, #tpu.memory_space<vmem>>, vector<8x16x16xbf16>
    %4 = vector.shape_cast %3 : vector<8x16x16xbf16> to vector<128x16xbf16>
    %c0_3 = arith.constant 0 : index
    %c0_4 = arith.constant 0 : index
    %5 = vector.load %arg3[%c0_3, %c0_4] : memref<16x128xbf16, #tpu.memory_space<vmem>>, vector<16x128xbf16>
    %cst = arith.constant dense<0.000000e+00> : vector<128x128xf32>
    %6 = tpu.matmul %4, %5, %cst {dimension_numbers = #tpu.dot_dimension_numbers<[1], [0], [0], [1], [0, 0, 1, 1], [], []>} : vector<128x16xbf16>, vector<16x128xbf16>, vector<128x128xf32> -> vector<128x128xf32>
    %c0_5 = arith.constant 0 : index
    %c0_6 = arith.constant 0 : index
    %7 = vector.load %arg5[%c0_5, %c0_6] : memref<1x128xf32, #tpu.memory_space<vmem>>, vector<1x128xf32>
    %8 = vector.broadcast %7 : vector<1x128xf32> to vector<128x128xf32>
    %9 = arith.addf %6, %8 : vector<128x128xf32>
    %10 = vector.shape_cast %9 : vector<128x128xf32> to vector<8x16x128xf32>
    %c0_7 = arith.constant 0 : index
    %c0_8 = arith.constant 0 : index
    %c0_9 = arith.constant 0 : index
    %11 = vector.load %arg11[%c0_7, %c0_8, %c0_9] : memref<8x16x128xf32, #tpu.memory_space<vmem>>, vector<8x16x128xf32>
    tpu.vector_store %arg11[%c0_7, %c0_8, %c0_9], %10 {strides = array<i32>} : memref<8x16x128xf32, #tpu.memory_space<vmem>>, vector<8x16x128xf32>,
    %c0_i32_10 = arith.constant 0 : i32
    %c0_11 = arith.constant 0 : index
    %c0_12 = arith.constant 0 : index
    %12 = vector.load %arg9[%c0_11, %c0_12] : memref<16x32xf32, #tpu.memory_space<vmem>>, vector<16x32xf32>
    %c0_13 = arith.constant 0 : index
    %c0_14 = arith.constant 0 : index
    %13 = vector.load %arg10[%c0_13, %c0_14] : memref<16x32xf32, #tpu.memory_space<vmem>>, vector<16x32xf32>
    %14 = arith.index_cast %c0_i32_10 : i32 to index
    %c0_15 = arith.constant 0 : index
    %c0_16 = arith.constant 0 : index
    %15 = vector.load %arg11[%14, %c0_15, %c0_16] : memref<8x16x128xf32, #tpu.memory_space<vmem>>, vector<1x16x128xf32>
    %16 = vector.shape_cast %15 : vector<1x16x128xf32> to vector<16x128xf32>
    %17 = arith.truncf %12 : vector<16x32xf32> to vector<16x32xbf16>
    %c0_17 = arith.constant 0 : index
    %c0_18 = arith.constant 0 : index
    %18 = vector.load %arg4[%c0_17, %c0_18] : memref<32x128xbf16, #tpu.memory_space<vmem>>, vector<32x128xbf16>
    %cst_19 = arith.constant dense<0.000000e+00> : vector<16x128xf32>
    %19 = tpu.matmul %17, %18, %cst_19 {dimension_numbers = #tpu.dot_dimension_numbers<[1], [0], [0], [1], [0, 0, 1, 1], [], []>} : vector<16x32xbf16>, vector<32x128xbf16>, vector<16x128xf32> -> vector<16x128xf32>
    %20 = arith.addf %16, %19 : vector<16x128xf32>
    %21 = vector.extract_strided_slice %20 {offsets = [0, 0], sizes = [16, 32], strides = [1, 1]} : vector<16x128xf32> to vector<16x32xf32>
    %22 = arith.negf %21 : vector<16x32xf32>
    %23 = math.exp %22 : vector<16x32xf32>
    %cst_20 = arith.constant 1.000000e+00 : f32
    %24 = vector.broadcast %cst_20 : f32 to vector<16x32xf32>
    %25 = arith.addf %24, %23 : vector<16x32xf32>
    %26 = arith.divf %24, %25 : vector<16x32xf32>
    %27 = vector.extract_strided_slice %20 {offsets = [0, 32], sizes = [16, 32], strides = [1, 1]} : vector<16x128xf32> to vector<16x32xf32>
    %28 = arith.negf %27 : vector<16x32xf32>
    %29 = math.exp %28 : vector<16x32xf32>
    %cst_21 = arith.constant 1.000000e+00 : f32
    %30 = vector.broadcast %cst_21 : f32 to vector<16x32xf32>
    %31 = arith.addf %30, %29 : vector<16x32xf32>
    %32 = arith.divf %30, %31 : vector<16x32xf32>
    %33 = vector.extract_strided_slice %20 {offsets = [0, 64], sizes = [16, 32], strides = [1, 1]} : vector<16x128xf32> to vector<16x32xf32>
    %34 = math.tanh %33 : vector<16x32xf32>
    %35 = vector.extract_strided_slice %20 {offsets = [0, 96], sizes = [16, 32], strides = [1, 1]} : vector<16x128xf32> to vector<16x32xf32>
    %36 = arith.negf %35 : vector<16x32xf32>
    %37 = math.exp %36 : vector<16x32xf32>
    %cst_22 = arith.constant 1.000000e+00 : f32
    %38 = vector.broadcast %cst_22 : f32 to vector<16x32xf32>
    %39 = arith.addf %38, %37 : vector<16x32xf32>
    %40 = arith.divf %38, %39 : vector<16x32xf32>
    %41 = arith.mulf %32, %13 : vector<16x32xf32>
    %42 = arith.mulf %26, %34 : vector<16x32xf32>
    %43 = arith.addf %41, %42 : vector<16x32xf32>
    %44 = math.tanh %43 : vector<16x32xf32>
    %45 = arith.mulf %40, %44 : vector<16x32xf32>
    %c0_23 = arith.constant 0 : index
    %c0_24 = arith.constant 0 : index
    %46 = vector.load %arg9[%c0_23, %c0_24] : memref<16x32xf32, #tpu.memory_space<vmem>>, vector<16x32xf32>
    tpu.vector_store %arg9[%c0_23, %c0_24], %45 {strides = array<i32>} : memref<16x32xf32, #tpu.memory_space<vmem>>, vector<16x32xf32>,
    %c0_25 = arith.constant 0 : index
    %c0_26 = arith.constant 0 : index
    %47 = vector.load %arg10[%c0_25, %c0_26] : memref<16x32xf32, #tpu.memory_space<vmem>>, vector<16x32xf32>
    tpu.vector_store %arg10[%c0_25, %c0_26], %43 {strides = array<i32>} : memref<16x32xf32, #tpu.memory_space<vmem>>, vector<16x32xf32>,
    %48 = arith.truncf %45 : vector<16x32xf32> to vector<16x32xbf16>
    %49 = arith.index_cast %c0_i32_10 : i32 to index
    %c0_27 = arith.constant 0 : index
    %c0_28 = arith.constant 0 : index
    %50 = vector.load %arg6[%49, %c0_27, %c0_28] : memref<8x16x32xbf16, #tpu.memory_space<vmem>>, vector<1x16x32xbf16>
    %51 = vector.shape_cast %50 : vector<1x16x32xbf16> to vector<16x32xbf16>
    %52 = vector.shape_cast %48 : vector<16x32xbf16> to vector<1x16x32xbf16>
    tpu.vector_store %arg6[%49, %c0_27, %c0_28], %52 {strides = array<i32>} : memref<8x16x32xbf16, #tpu.memory_space<vmem>>, vector<1x16x32xbf16>,
    %c1_i32 = arith.constant 1 : i32
    %c0_29 = arith.constant 0 : index
    %c0_30 = arith.constant 0 : index
    %53 = vector.load %arg9[%c0_29, %c0_30] : memref<16x32xf32, #tpu.memory_space<vmem>>, vector<16x32xf32>
    %c0_31 = arith.constant 0 : index
    %c0_32 = arith.constant 0 : index
    %54 = vector.load %arg10[%c0_31, %c0_32] : memref<16x32xf32, #tpu.memory_space<vmem>>, vector<16x32xf32>
    %55 = arith.index_cast %c1_i32 : i32 to index
    %c0_33 = arith.constant 0 : index
    %c0_34 = arith.constant 0 : index
    %56 = vector.load %arg11[%55, %c0_33, %c0_34] : memref<8x16x128xf32, #tpu.memory_space<vmem>>, vector<1x16x128xf32>
    %57 = vector.shape_cast %56 : vector<1x16x128xf32> to vector<16x128xf32>
    %58 = arith.truncf %53 : vector<16x32xf32> to vector<16x32xbf16>
    %c0_35 = arith.constant 0 : index
    %c0_36 = arith.constant 0 : index
    %59 = vector.load %arg4[%c0_35, %c0_36] : memref<32x128xbf16, #tpu.memory_space<vmem>>, vector<32x128xbf16>
    %cst_37 = arith.constant dense<0.000000e+00> : vector<16x128xf32>
    %60 = tpu.matmul %58, %59, %cst_37 {dimension_numbers = #tpu.dot_dimension_numbers<[1], [0], [0], [1], [0, 0, 1, 1], [], []>} : vector<16x32xbf16>, vector<32x128xbf16>, vector<16x128xf32> -> vector<16x128xf32>
    %61 = arith.addf %57, %60 : vector<16x128xf32>
    %62 = vector.extract_strided_slice %61 {offsets = [0, 0], sizes = [16, 32], strides = [1, 1]} : vector<16x128xf32> to vector<16x32xf32>
    %63 = arith.negf %62 : vector<16x32xf32>
    %64 = math.exp %63 : vector<16x32xf32>
    %cst_38 = arith.constant 1.000000e+00 : f32
    %65 = vector.broadcast %cst_38 : f32 to vector<16x32xf32>
    %66 = arith.addf %65, %64 : vector<16x32xf32>
    %67 = arith.divf %65, %66 : vector<16x32xf32>
    %68 = vector.extract_strided_slice %61 {offsets = [0, 32], sizes = [16, 32], strides = [1, 1]} : vector<16x128xf32> to vector<16x32xf32>
    %69 = arith.negf %68 : vector<16x32xf32>
    %70 = math.exp %69 : vector<16x32xf32>
    %cst_39 = arith.constant 1.000000e+00 : f32
    %71 = vector.broadcast %cst_39 : f32 to vector<16x32xf32>
    %72 = arith.addf %71, %70 : vector<16x32xf32>
    %73 = arith.divf %71, %72 : vector<16x32xf32>
    %74 = vector.extract_strided_slice %61 {offsets = [0, 64], sizes = [16, 32], strides = [1, 1]} : vector<16x128xf32> to vector<16x32xf32>
    %75 = math.tanh %74 : vector<16x32xf32>
    %76 = vector.extract_strided_slice %61 {offsets = [0, 96], sizes = [16, 32], strides = [1, 1]} : vector<16x128xf32> to vector<16x32xf32>
    %77 = arith.negf %76 : vector<16x32xf32>
    %78 = math.exp %77 : vector<16x32xf32>
    %cst_40 = arith.constant 1.000000e+00 : f32
    %79 = vector.broadcast %cst_40 : f32 to vector<16x32xf32>
    %80 = arith.addf %79, %78 : vector<16x32xf32>
    %81 = arith.divf %79, %80 : vector<16x32xf32>
    %82 = arith.mulf %73, %54 : vector<16x32xf32>
    %83 = arith.mulf %67, %75 : vector<16x32xf32>
    %84 = arith.addf %82, %83 : vector<16x32xf32>
    %85 = math.tanh %84 : vector<16x32xf32>
    %86 = arith.mulf %81, %85 : vector<16x32xf32>
    %c0_41 = arith.constant 0 : index
    %c0_42 = arith.constant 0 : index
    %87 = vector.load %arg9[%c0_41, %c0_42] : memref<16x32xf32, #tpu.memory_space<vmem>>, vector<16x32xf32>
    tpu.vector_store %arg9[%c0_41, %c0_42], %86 {strides = array<i32>} : memref<16x32xf32, #tpu.memory_space<vmem>>, vector<16x32xf32>,
    %c0_43 = arith.constant 0 : index
    %c0_44 = arith.constant 0 : index
    %88 = vector.load %arg10[%c0_43, %c0_44] : memref<16x32xf32, #tpu.memory_space<vmem>>, vector<16x32xf32>
    tpu.vector_store %arg10[%c0_43, %c0_44], %84 {strides = array<i32>} : memref<16x32xf32, #tpu.memory_space<vmem>>, vector<16x32xf32>,
    %89 = arith.truncf %86 : vector<16x32xf32> to vector<16x32xbf16>
    %90 = arith.index_cast %c1_i32 : i32 to index
    %c0_45 = arith.constant 0 : index
    %c0_46 = arith.constant 0 : index
    %91 = vector.load %arg6[%90, %c0_45, %c0_46] : memref<8x16x32xbf16, #tpu.memory_space<vmem>>, vector<1x16x32xbf16>
    %92 = vector.shape_cast %91 : vector<1x16x32xbf16> to vector<16x32xbf16>
    %93 = vector.shape_cast %89 : vector<16x32xbf16> to vector<1x16x32xbf16>
    tpu.vector_store %arg6[%90, %c0_45, %c0_46], %93 {strides = array<i32>} : memref<8x16x32xbf16, #tpu.memory_space<vmem>>, vector<1x16x32xbf16>,
    %c2_i32 = arith.constant 2 : i32
    %c0_47 = arith.constant 0 : index
    %c0_48 = arith.constant 0 : index
    %94 = vector.load %arg9[%c0_47, %c0_48] : memref<16x32xf32, #tpu.memory_space<vmem>>, vector<16x32xf32>
    %c0_49 = arith.constant 0 : index
    %c0_50 = arith.constant 0 : index
    %95 = vector.load %arg10[%c0_49, %c0_50] : memref<16x32xf32, #tpu.memory_space<vmem>>, vector<16x32xf32>
    %96 = arith.index_cast %c2_i32 : i32 to index
    %c0_51 = arith.constant 0 : index
    %c0_52 = arith.constant 0 : index
    %97 = vector.load %arg11[%96, %c0_51, %c0_52] : memref<8x16x128xf32, #tpu.memory_space<vmem>>, vector<1x16x128xf32>
    %98 = vector.shape_cast %97 : vector<1x16x128xf32> to vector<16x128xf32>
    %99 = arith.truncf %94 : vector<16x32xf32> to vector<16x32xbf16>
    %c0_53 = arith.constant 0 : index
    %c0_54 = arith.constant 0 : index
    %100 = vector.load %arg4[%c0_53, %c0_54] : memref<32x128xbf16, #tpu.memory_space<vmem>>, vector<32x128xbf16>
    %cst_55 = arith.constant dense<0.000000e+00> : vector<16x128xf32>
    %101 = tpu.matmul %99, %100, %cst_55 {dimension_numbers = #tpu.dot_dimension_numbers<[1], [0], [0], [1], [0, 0, 1, 1], [], []>} : vector<16x32xbf16>, vector<32x128xbf16>, vector<16x128xf32> -> vector<16x128xf32>
    %102 = arith.addf %98, %101 : vector<16x128xf32>
    %103 = vector.extract_strided_slice %102 {offsets = [0, 0], sizes = [16, 32], strides = [1, 1]} : vector<16x128xf32> to vector<16x32xf32>
    %104 = arith.negf %103 : vector<16x32xf32>
    %105 = math.exp %104 : vector<16x32xf32>
    %cst_56 = arith.constant 1.000000e+00 : f32
    %106 = vector.broadcast %cst_56 : f32 to vector<16x32xf32>
    %107 = arith.addf %106, %105 : vector<16x32xf32>
    %108 = arith.divf %106, %107 : vector<16x32xf32>
    %109 = vector.extract_strided_slice %102 {offsets = [0, 32], sizes = [16, 32], strides = [1, 1]} : vector<16x128xf32> to vector<16x32xf32>
    %110 = arith.negf %109 : vector<16x32xf32>
    %111 = math.exp %110 : vector<16x32xf32>
    %cst_57 = arith.constant 1.000000e+00 : f32
    %112 = vector.broadcast %cst_57 : f32 to vector<16x32xf32>
    %113 = arith.addf %112, %111 : vector<16x32xf32>
    %114 = arith.divf %112, %113 : vector<16x32xf32>
    %115 = vector.extract_strided_slice %102 {offsets = [0, 64], sizes = [16, 32], strides = [1, 1]} : vector<16x128xf32> to vector<16x32xf32>
    %116 = math.tanh %115 : vector<16x32xf32>
    %117 = vector.extract_strided_slice %102 {offsets = [0, 96], sizes = [16, 32], strides = [1, 1]} : vector<16x128xf32> to vector<16x32xf32>
    %118 = arith.negf %117 : vector<16x32xf32>
    %119 = math.exp %118 : vector<16x32xf32>
    %cst_58 = arith.constant 1.000000e+00 : f32
    %120 = vector.broadcast %cst_58 : f32 to vector<16x32xf32>
    %121 = arith.addf %120, %119 : vector<16x32xf32>
    %122 = arith.divf %120, %121 : vector<16x32xf32>
    %123 = arith.mulf %114, %95 : vector<16x32xf32>
    %124 = arith.mulf %108, %116 : vector<16x32xf32>
    %125 = arith.addf %123, %124 : vector<16x32xf32>
    %126 = math.tanh %125 : vector<16x32xf32>
    %127 = arith.mulf %122, %126 : vector<16x32xf32>
    %c0_59 = arith.constant 0 : index
    %c0_60 = arith.constant 0 : index
    %128 = vector.load %arg9[%c0_59, %c0_60] : memref<16x32xf32, #tpu.memory_space<vmem>>, vector<16x32xf32>
    tpu.vector_store %arg9[%c0_59, %c0_60], %127 {strides = array<i32>} : memref<16x32xf32, #tpu.memory_space<vmem>>, vector<16x32xf32>,
    %c0_61 = arith.constant 0 : index
    %c0_62 = arith.constant 0 : index
    %129 = vector.load %arg10[%c0_61, %c0_62] : memref<16x32xf32, #tpu.memory_space<vmem>>, vector<16x32xf32>
    tpu.vector_store %arg10[%c0_61, %c0_62], %125 {strides = array<i32>} : memref<16x32xf32, #tpu.memory_space<vmem>>, vector<16x32xf32>,
    %130 = arith.truncf %127 : vector<16x32xf32> to vector<16x32xbf16>
    %131 = arith.index_cast %c2_i32 : i32 to index
    %c0_63 = arith.constant 0 : index
    %c0_64 = arith.constant 0 : index
    %132 = vector.load %arg6[%131, %c0_63, %c0_64] : memref<8x16x32xbf16, #tpu.memory_space<vmem>>, vector<1x16x32xbf16>
    %133 = vector.shape_cast %132 : vector<1x16x32xbf16> to vector<16x32xbf16>
    %134 = vector.shape_cast %130 : vector<16x32xbf16> to vector<1x16x32xbf16>
    tpu.vector_store %arg6[%131, %c0_63, %c0_64], %134 {strides = array<i32>} : memref<8x16x32xbf16, #tpu.memory_space<vmem>>, vector<1x16x32xbf16>,
    %c3_i32 = arith.constant 3 : i32
    %c0_65 = arith.constant 0 : index
    %c0_66 = arith.constant 0 : index
    %135 = vector.load %arg9[%c0_65, %c0_66] : memref<16x32xf32, #tpu.memory_space<vmem>>, vector<16x32xf32>
    %c0_67 = arith.constant 0 : index
    %c0_68 = arith.constant 0 : index
    %136 = vector.load %arg10[%c0_67, %c0_68] : memref<16x32xf32, #tpu.memory_space<vmem>>, vector<16x32xf32>
    %137 = arith.index_cast %c3_i32 : i32 to index
    %c0_69 = arith.constant 0 : index
    %c0_70 = arith.constant 0 : index
    %138 = vector.load %arg11[%137, %c0_69, %c0_70] : memref<8x16x128xf32, #tpu.memory_space<vmem>>, vector<1x16x128xf32>
    %139 = vector.shape_cast %138 : vector<1x16x128xf32> to vector<16x128xf32>
    %140 = arith.truncf %135 : vector<16x32xf32> to vector<16x32xbf16>
    %c0_71 = arith.constant 0 : index
    %c0_72 = arith.constant 0 : index
    %141 = vector.load %arg4[%c0_71, %c0_72] : memref<32x128xbf16, #tpu.memory_space<vmem>>, vector<32x128xbf16>
    %cst_73 = arith.constant dense<0.000000e+00> : vector<16x128xf32>
    %142 = tpu.matmul %140, %141, %cst_73 {dimension_numbers = #tpu.dot_dimension_numbers<[1], [0], [0], [1], [0, 0, 1, 1], [], []>} : vector<16x32xbf16>, vector<32x128xbf16>, vector<16x128xf32> -> vector<16x128xf32>
    %143 = arith.addf %139, %142 : vector<16x128xf32>
    %144 = vector.extract_strided_slice %143 {offsets = [0, 0], sizes = [16, 32], strides = [1, 1]} : vector<16x128xf32> to vector<16x32xf32>
    %145 = arith.negf %144 : vector<16x32xf32>
    %146 = math.exp %145 : vector<16x32xf32>
    %cst_74 = arith.constant 1.000000e+00 : f32
    %147 = vector.broadcast %cst_74 : f32 to vector<16x32xf32>
    %148 = arith.addf %147, %146 : vector<16x32xf32>
    %149 = arith.divf %147, %148 : vector<16x32xf32>
    %150 = vector.extract_strided_slice %143 {offsets = [0, 32], sizes = [16, 32], strides = [1, 1]} : vector<16x128xf32> to vector<16x32xf32>
    %151 = arith.negf %150 : vector<16x32xf32>
    %152 = math.exp %151 : vector<16x32xf32>
    %cst_75 = arith.constant 1.000000e+00 : f32
    %153 = vector.broadcast %cst_75 : f32 to vector<16x32xf32>
    %154 = arith.addf %153, %152 : vector<16x32xf32>
    %155 = arith.divf %153, %154 : vector<16x32xf32>
    %156 = vector.extract_strided_slice %143 {offsets = [0, 64], sizes = [16, 32], strides = [1, 1]} : vector<16x128xf32> to vector<16x32xf32>
    %157 = math.tanh %156 : vector<16x32xf32>
    %158 = vector.extract_strided_slice %143 {offsets = [0, 96], sizes = [16, 32], strides = [1, 1]} : vector<16x128xf32> to vector<16x32xf32>
    %159 = arith.negf %158 : vector<16x32xf32>
    %160 = math.exp %159 : vector<16x32xf32>
    %cst_76 = arith.constant 1.000000e+00 : f32
    %161 = vector.broadcast %cst_76 : f32 to vector<16x32xf32>
    %162 = arith.addf %161, %160 : vector<16x32xf32>
    %163 = arith.divf %161, %162 : vector<16x32xf32>
    %164 = arith.mulf %155, %136 : vector<16x32xf32>
    %165 = arith.mulf %149, %157 : vector<16x32xf32>
    %166 = arith.addf %164, %165 : vector<16x32xf32>
    %167 = math.tanh %166 : vector<16x32xf32>
    %168 = arith.mulf %163, %167 : vector<16x32xf32>
    %c0_77 = arith.constant 0 : index
    %c0_78 = arith.constant 0 : index
    %169 = vector.load %arg9[%c0_77, %c0_78] : memref<16x32xf32, #tpu.memory_space<vmem>>, vector<16x32xf32>
    tpu.vector_store %arg9[%c0_77, %c0_78], %168 {strides = array<i32>} : memref<16x32xf32, #tpu.memory_space<vmem>>, vector<16x32xf32>,
    %c0_79 = arith.constant 0 : index
    %c0_80 = arith.constant 0 : index
    %170 = vector.load %arg10[%c0_79, %c0_80] : memref<16x32xf32, #tpu.memory_space<vmem>>, vector<16x32xf32>
    tpu.vector_store %arg10[%c0_79, %c0_80], %166 {strides = array<i32>} : memref<16x32xf32, #tpu.memory_space<vmem>>, vector<16x32xf32>,
    %171 = arith.truncf %168 : vector<16x32xf32> to vector<16x32xbf16>
    %172 = arith.index_cast %c3_i32 : i32 to index
    %c0_81 = arith.constant 0 : index
    %c0_82 = arith.constant 0 : index
    %173 = vector.load %arg6[%172, %c0_81, %c0_82] : memref<8x16x32xbf16, #tpu.memory_space<vmem>>, vector<1x16x32xbf16>
    %174 = vector.shape_cast %173 : vector<1x16x32xbf16> to vector<16x32xbf16>
    %175 = vector.shape_cast %171 : vector<16x32xbf16> to vector<1x16x32xbf16>
    tpu.vector_store %arg6[%172, %c0_81, %c0_82], %175 {strides = array<i32>} : memref<8x16x32xbf16, #tpu.memory_space<vmem>>, vector<1x16x32xbf16>,
    %c4_i32 = arith.constant 4 : i32
    %c0_83 = arith.constant 0 : index
    %c0_84 = arith.constant 0 : index
    %176 = vector.load %arg9[%c0_83, %c0_84] : memref<16x32xf32, #tpu.memory_space<vmem>>, vector<16x32xf32>
    %c0_85 = arith.constant 0 : index
    %c0_86 = arith.constant 0 : index
    %177 = vector.load %arg10[%c0_85, %c0_86] : memref<16x32xf32, #tpu.memory_space<vmem>>, vector<16x32xf32>
    %178 = arith.index_cast %c4_i32 : i32 to index
    %c0_87 = arith.constant 0 : index
    %c0_88 = arith.constant 0 : index
    %179 = vector.load %arg11[%178, %c0_87, %c0_88] : memref<8x16x128xf32, #tpu.memory_space<vmem>>, vector<1x16x128xf32>
    %180 = vector.shape_cast %179 : vector<1x16x128xf32> to vector<16x128xf32>
    %181 = arith.truncf %176 : vector<16x32xf32> to vector<16x32xbf16>
    %c0_89 = arith.constant 0 : index
    %c0_90 = arith.constant 0 : index
    %182 = vector.load %arg4[%c0_89, %c0_90] : memref<32x128xbf16, #tpu.memory_space<vmem>>, vector<32x128xbf16>
    %cst_91 = arith.constant dense<0.000000e+00> : vector<16x128xf32>
    %183 = tpu.matmul %181, %182, %cst_91 {dimension_numbers = #tpu.dot_dimension_numbers<[1], [0], [0], [1], [0, 0, 1, 1], [], []>} : vector<16x32xbf16>, vector<32x128xbf16>, vector<16x128xf32> -> vector<16x128xf32>
    %184 = arith.addf %180, %183 : vector<16x128xf32>
    %185 = vector.extract_strided_slice %184 {offsets = [0, 0], sizes = [16, 32], strides = [1, 1]} : vector<16x128xf32> to vector<16x32xf32>
    %186 = arith.negf %185 : vector<16x32xf32>
    %187 = math.exp %186 : vector<16x32xf32>
    %cst_92 = arith.constant 1.000000e+00 : f32
    %188 = vector.broadcast %cst_92 : f32 to vector<16x32xf32>
    %189 = arith.addf %188, %187 : vector<16x32xf32>
    %190 = arith.divf %188, %189 : vector<16x32xf32>
    %191 = vector.extract_strided_slice %184 {offsets = [0, 32], sizes = [16, 32], strides = [1, 1]} : vector<16x128xf32> to vector<16x32xf32>
    %192 = arith.negf %191 : vector<16x32xf32>
    %193 = math.exp %192 : vector<16x32xf32>
    %cst_93 = arith.constant 1.000000e+00 : f32
    %194 = vector.broadcast %cst_93 : f32 to vector<16x32xf32>
    %195 = arith.addf %194, %193 : vector<16x32xf32>
    %196 = arith.divf %194, %195 : vector<16x32xf32>
    %197 = vector.extract_strided_slice %184 {offsets = [0, 64], sizes = [16, 32], strides = [1, 1]} : vector<16x128xf32> to vector<16x32xf32>
    %198 = math.tanh %197 : vector<16x32xf32>
    %199 = vector.extract_strided_slice %184 {offsets = [0, 96], sizes = [16, 32], strides = [1, 1]} : vector<16x128xf32> to vector<16x32xf32>
    %200 = arith.negf %199 : vector<16x32xf32>
    %201 = math.exp %200 : vector<16x32xf32>
    %cst_94 = arith.constant 1.000000e+00 : f32
    %202 = vector.broadcast %cst_94 : f32 to vector<16x32xf32>
    %203 = arith.addf %202, %201 : vector<16x32xf32>
    %204 = arith.divf %202, %203 : vector<16x32xf32>
    %205 = arith.mulf %196, %177 : vector<16x32xf32>
    %206 = arith.mulf %190, %198 : vector<16x32xf32>
    %207 = arith.addf %205, %206 : vector<16x32xf32>
    %208 = math.tanh %207 : vector<16x32xf32>
    %209 = arith.mulf %204, %208 : vector<16x32xf32>
    %c0_95 = arith.constant 0 : index
    %c0_96 = arith.constant 0 : index
    %210 = vector.load %arg9[%c0_95, %c0_96] : memref<16x32xf32, #tpu.memory_space<vmem>>, vector<16x32xf32>
    tpu.vector_store %arg9[%c0_95, %c0_96], %209 {strides = array<i32>} : memref<16x32xf32, #tpu.memory_space<vmem>>, vector<16x32xf32>,
    %c0_97 = arith.constant 0 : index
    %c0_98 = arith.constant 0 : index
    %211 = vector.load %arg10[%c0_97, %c0_98] : memref<16x32xf32, #tpu.memory_space<vmem>>, vector<16x32xf32>
    tpu.vector_store %arg10[%c0_97, %c0_98], %207 {strides = array<i32>} : memref<16x32xf32, #tpu.memory_space<vmem>>, vector<16x32xf32>,
    %212 = arith.truncf %209 : vector<16x32xf32> to vector<16x32xbf16>
    %213 = arith.index_cast %c4_i32 : i32 to index
    %c0_99 = arith.constant 0 : index
    %c0_100 = arith.constant 0 : index
    %214 = vector.load %arg6[%213, %c0_99, %c0_100] : memref<8x16x32xbf16, #tpu.memory_space<vmem>>, vector<1x16x32xbf16>
    %215 = vector.shape_cast %214 : vector<1x16x32xbf16> to vector<16x32xbf16>
    %216 = vector.shape_cast %212 : vector<16x32xbf16> to vector<1x16x32xbf16>
    tpu.vector_store %arg6[%213, %c0_99, %c0_100], %216 {strides = array<i32>} : memref<8x16x32xbf16, #tpu.memory_space<vmem>>, vector<1x16x32xbf16>,
    %c5_i32 = arith.constant 5 : i32
    %c0_101 = arith.constant 0 : index
    %c0_102 = arith.constant 0 : index
    %217 = vector.load %arg9[%c0_101, %c0_102] : memref<16x32xf32, #tpu.memory_space<vmem>>, vector<16x32xf32>
    %c0_103 = arith.constant 0 : index
    %c0_104 = arith.constant 0 : index
    %218 = vector.load %arg10[%c0_103, %c0_104] : memref<16x32xf32, #tpu.memory_space<vmem>>, vector<16x32xf32>
    %219 = arith.index_cast %c5_i32 : i32 to index
    %c0_105 = arith.constant 0 : index
    %c0_106 = arith.constant 0 : index
    %220 = vector.load %arg11[%219, %c0_105, %c0_106] : memref<8x16x128xf32, #tpu.memory_space<vmem>>, vector<1x16x128xf32>
    %221 = vector.shape_cast %220 : vector<1x16x128xf32> to vector<16x128xf32>
    %222 = arith.truncf %217 : vector<16x32xf32> to vector<16x32xbf16>
    %c0_107 = arith.constant 0 : index
    %c0_108 = arith.constant 0 : index
    %223 = vector.load %arg4[%c0_107, %c0_108] : memref<32x128xbf16, #tpu.memory_space<vmem>>, vector<32x128xbf16>
    %cst_109 = arith.constant dense<0.000000e+00> : vector<16x128xf32>
    %224 = tpu.matmul %222, %223, %cst_109 {dimension_numbers = #tpu.dot_dimension_numbers<[1], [0], [0], [1], [0, 0, 1, 1], [], []>} : vector<16x32xbf16>, vector<32x128xbf16>, vector<16x128xf32> -> vector<16x128xf32>
    %225 = arith.addf %221, %224 : vector<16x128xf32>
    %226 = vector.extract_strided_slice %225 {offsets = [0, 0], sizes = [16, 32], strides = [1, 1]} : vector<16x128xf32> to vector<16x32xf32>
    %227 = arith.negf %226 : vector<16x32xf32>
    %228 = math.exp %227 : vector<16x32xf32>
    %cst_110 = arith.constant 1.000000e+00 : f32
    %229 = vector.broadcast %cst_110 : f32 to vector<16x32xf32>
    %230 = arith.addf %229, %228 : vector<16x32xf32>
    %231 = arith.divf %229, %230 : vector<16x32xf32>
    %232 = vector.extract_strided_slice %225 {offsets = [0, 32], sizes = [16, 32], strides = [1, 1]} : vector<16x128xf32> to vector<16x32xf32>
    %233 = arith.negf %232 : vector<16x32xf32>
    %234 = math.exp %233 : vector<16x32xf32>
    %cst_111 = arith.constant 1.000000e+00 : f32
    %235 = vector.broadcast %cst_111 : f32 to vector<16x32xf32>
    %236 = arith.addf %235, %234 : vector<16x32xf32>
    %237 = arith.divf %235, %236 : vector<16x32xf32>
    %238 = vector.extract_strided_slice %225 {offsets = [0, 64], sizes = [16, 32], strides = [1, 1]} : vector<16x128xf32> to vector<16x32xf32>
    %239 = math.tanh %238 : vector<16x32xf32>
    %240 = vector.extract_strided_slice %225 {offsets = [0, 96], sizes = [16, 32], strides = [1, 1]} : vector<16x128xf32> to vector<16x32xf32>
    %241 = arith.negf %240 : vector<16x32xf32>
    %242 = math.exp %241 : vector<16x32xf32>
    %cst_112 = arith.constant 1.000000e+00 : f32
    %243 = vector.broadcast %cst_112 : f32 to vector<16x32xf32>
    %244 = arith.addf %243, %242 : vector<16x32xf32>
    %245 = arith.divf %243, %244 : vector<16x32xf32>
    %246 = arith.mulf %237, %218 : vector<16x32xf32>
    %247 = arith.mulf %231, %239 : vector<16x32xf32>
    %248 = arith.addf %246, %247 : vector<16x32xf32>
    %249 = math.tanh %248 : vector<16x32xf32>
    %250 = arith.mulf %245, %249 : vector<16x32xf32>
    %c0_113 = arith.constant 0 : index
    %c0_114 = arith.constant 0 : index
    %251 = vector.load %arg9[%c0_113, %c0_114] : memref<16x32xf32, #tpu.memory_space<vmem>>, vector<16x32xf32>
    tpu.vector_store %arg9[%c0_113, %c0_114], %250 {strides = array<i32>} : memref<16x32xf32, #tpu.memory_space<vmem>>, vector<16x32xf32>,
    %c0_115 = arith.constant 0 : index
    %c0_116 = arith.constant 0 : index
    %252 = vector.load %arg10[%c0_115, %c0_116] : memref<16x32xf32, #tpu.memory_space<vmem>>, vector<16x32xf32>
    tpu.vector_store %arg10[%c0_115, %c0_116], %248 {strides = array<i32>} : memref<16x32xf32, #tpu.memory_space<vmem>>, vector<16x32xf32>,
    %253 = arith.truncf %250 : vector<16x32xf32> to vector<16x32xbf16>
    %254 = arith.index_cast %c5_i32 : i32 to index
    %c0_117 = arith.constant 0 : index
    %c0_118 = arith.constant 0 : index
    %255 = vector.load %arg6[%254, %c0_117, %c0_118] : memref<8x16x32xbf16, #tpu.memory_space<vmem>>, vector<1x16x32xbf16>
    %256 = vector.shape_cast %255 : vector<1x16x32xbf16> to vector<16x32xbf16>
    %257 = vector.shape_cast %253 : vector<16x32xbf16> to vector<1x16x32xbf16>
    tpu.vector_store %arg6[%254, %c0_117, %c0_118], %257 {strides = array<i32>} : memref<8x16x32xbf16, #tpu.memory_space<vmem>>, vector<1x16x32xbf16>,
    %c6_i32 = arith.constant 6 : i32
    %c0_119 = arith.constant 0 : index
    %c0_120 = arith.constant 0 : index
    %258 = vector.load %arg9[%c0_119, %c0_120] : memref<16x32xf32, #tpu.memory_space<vmem>>, vector<16x32xf32>
    %c0_121 = arith.constant 0 : index
    %c0_122 = arith.constant 0 : index
    %259 = vector.load %arg10[%c0_121, %c0_122] : memref<16x32xf32, #tpu.memory_space<vmem>>, vector<16x32xf32>
    %260 = arith.index_cast %c6_i32 : i32 to index
    %c0_123 = arith.constant 0 : index
    %c0_124 = arith.constant 0 : index
    %261 = vector.load %arg11[%260, %c0_123, %c0_124] : memref<8x16x128xf32, #tpu.memory_space<vmem>>, vector<1x16x128xf32>
    %262 = vector.shape_cast %261 : vector<1x16x128xf32> to vector<16x128xf32>
    %263 = arith.truncf %258 : vector<16x32xf32> to vector<16x32xbf16>
    %c0_125 = arith.constant 0 : index
    %c0_126 = arith.constant 0 : index
    %264 = vector.load %arg4[%c0_125, %c0_126] : memref<32x128xbf16, #tpu.memory_space<vmem>>, vector<32x128xbf16>
    %cst_127 = arith.constant dense<0.000000e+00> : vector<16x128xf32>
    %265 = tpu.matmul %263, %264, %cst_127 {dimension_numbers = #tpu.dot_dimension_numbers<[1], [0], [0], [1], [0, 0, 1, 1], [], []>} : vector<16x32xbf16>, vector<32x128xbf16>, vector<16x128xf32> -> vector<16x128xf32>
    %266 = arith.addf %262, %265 : vector<16x128xf32>
    %267 = vector.extract_strided_slice %266 {offsets = [0, 0], sizes = [16, 32], strides = [1, 1]} : vector<16x128xf32> to vector<16x32xf32>
    %268 = arith.negf %267 : vector<16x32xf32>
    %269 = math.exp %268 : vector<16x32xf32>
    %cst_128 = arith.constant 1.000000e+00 : f32
    %270 = vector.broadcast %cst_128 : f32 to vector<16x32xf32>
    %271 = arith.addf %270, %269 : vector<16x32xf32>
    %272 = arith.divf %270, %271 : vector<16x32xf32>
    %273 = vector.extract_strided_slice %266 {offsets = [0, 32], sizes = [16, 32], strides = [1, 1]} : vector<16x128xf32> to vector<16x32xf32>
    %274 = arith.negf %273 : vector<16x32xf32>
    %275 = math.exp %274 : vector<16x32xf32>
    %cst_129 = arith.constant 1.000000e+00 : f32
    %276 = vector.broadcast %cst_129 : f32 to vector<16x32xf32>
    %277 = arith.addf %276, %275 : vector<16x32xf32>
    %278 = arith.divf %276, %277 : vector<16x32xf32>
    %279 = vector.extract_strided_slice %266 {offsets = [0, 64], sizes = [16, 32], strides = [1, 1]} : vector<16x128xf32> to vector<16x32xf32>
    %280 = math.tanh %279 : vector<16x32xf32>
    %281 = vector.extract_strided_slice %266 {offsets = [0, 96], sizes = [16, 32], strides = [1, 1]} : vector<16x128xf32> to vector<16x32xf32>
    %282 = arith.negf %281 : vector<16x32xf32>
    %283 = math.exp %282 : vector<16x32xf32>
    %cst_130 = arith.constant 1.000000e+00 : f32
    %284 = vector.broadcast %cst_130 : f32 to vector<16x32xf32>
    %285 = arith.addf %284, %283 : vector<16x32xf32>
    %286 = arith.divf %284, %285 : vector<16x32xf32>
    %287 = arith.mulf %278, %259 : vector<16x32xf32>
    %288 = arith.mulf %272, %280 : vector<16x32xf32>
    %289 = arith.addf %287, %288 : vector<16x32xf32>
    %290 = math.tanh %289 : vector<16x32xf32>
    %291 = arith.mulf %286, %290 : vector<16x32xf32>
    %c0_131 = arith.constant 0 : index
    %c0_132 = arith.constant 0 : index
    %292 = vector.load %arg9[%c0_131, %c0_132] : memref<16x32xf32, #tpu.memory_space<vmem>>, vector<16x32xf32>
    tpu.vector_store %arg9[%c0_131, %c0_132], %291 {strides = array<i32>} : memref<16x32xf32, #tpu.memory_space<vmem>>, vector<16x32xf32>,
    %c0_133 = arith.constant 0 : index
    %c0_134 = arith.constant 0 : index
    %293 = vector.load %arg10[%c0_133, %c0_134] : memref<16x32xf32, #tpu.memory_space<vmem>>, vector<16x32xf32>
    tpu.vector_store %arg10[%c0_133, %c0_134], %289 {strides = array<i32>} : memref<16x32xf32, #tpu.memory_space<vmem>>, vector<16x32xf32>,
    %294 = arith.truncf %291 : vector<16x32xf32> to vector<16x32xbf16>
    %295 = arith.index_cast %c6_i32 : i32 to index
    %c0_135 = arith.constant 0 : index
    %c0_136 = arith.constant 0 : index
    %296 = vector.load %arg6[%295, %c0_135, %c0_136] : memref<8x16x32xbf16, #tpu.memory_space<vmem>>, vector<1x16x32xbf16>
    %297 = vector.shape_cast %296 : vector<1x16x32xbf16> to vector<16x32xbf16>
    %298 = vector.shape_cast %294 : vector<16x32xbf16> to vector<1x16x32xbf16>
    tpu.vector_store %arg6[%295, %c0_135, %c0_136], %298 {strides = array<i32>} : memref<8x16x32xbf16, #tpu.memory_space<vmem>>, vector<1x16x32xbf16>,
    %c7_i32 = arith.constant 7 : i32
    %c0_137 = arith.constant 0 : index
    %c0_138 = arith.constant 0 : index
    %299 = vector.load %arg9[%c0_137, %c0_138] : memref<16x32xf32, #tpu.memory_space<vmem>>, vector<16x32xf32>
    %c0_139 = arith.constant 0 : index
    %c0_140 = arith.constant 0 : index
    %300 = vector.load %arg10[%c0_139, %c0_140] : memref<16x32xf32, #tpu.memory_space<vmem>>, vector<16x32xf32>
    %301 = arith.index_cast %c7_i32 : i32 to index
    %c0_141 = arith.constant 0 : index
    %c0_142 = arith.constant 0 : index
    %302 = vector.load %arg11[%301, %c0_141, %c0_142] : memref<8x16x128xf32, #tpu.memory_space<vmem>>, vector<1x16x128xf32>
    %303 = vector.shape_cast %302 : vector<1x16x128xf32> to vector<16x128xf32>
    %304 = arith.truncf %299 : vector<16x32xf32> to vector<16x32xbf16>
    %c0_143 = arith.constant 0 : index
    %c0_144 = arith.constant 0 : index
    %305 = vector.load %arg4[%c0_143, %c0_144] : memref<32x128xbf16, #tpu.memory_space<vmem>>, vector<32x128xbf16>
    %cst_145 = arith.constant dense<0.000000e+00> : vector<16x128xf32>
    %306 = tpu.matmul %304, %305, %cst_145 {dimension_numbers = #tpu.dot_dimension_numbers<[1], [0], [0], [1], [0, 0, 1, 1], [], []>} : vector<16x32xbf16>, vector<32x128xbf16>, vector<16x128xf32> -> vector<16x128xf32>
    %307 = arith.addf %303, %306 : vector<16x128xf32>
    %308 = vector.extract_strided_slice %307 {offsets = [0, 0], sizes = [16, 32], strides = [1, 1]} : vector<16x128xf32> to vector<16x32xf32>
    %309 = arith.negf %308 : vector<16x32xf32>
    %310 = math.exp %309 : vector<16x32xf32>
    %cst_146 = arith.constant 1.000000e+00 : f32
    %311 = vector.broadcast %cst_146 : f32 to vector<16x32xf32>
    %312 = arith.addf %311, %310 : vector<16x32xf32>
    %313 = arith.divf %311, %312 : vector<16x32xf32>
    %314 = vector.extract_strided_slice %307 {offsets = [0, 32], sizes = [16, 32], strides = [1, 1]} : vector<16x128xf32> to vector<16x32xf32>
    %315 = arith.negf %314 : vector<16x32xf32>
    %316 = math.exp %315 : vector<16x32xf32>
    %cst_147 = arith.constant 1.000000e+00 : f32
    %317 = vector.broadcast %cst_147 : f32 to vector<16x32xf32>
    %318 = arith.addf %317, %316 : vector<16x32xf32>
    %319 = arith.divf %317, %318 : vector<16x32xf32>
    %320 = vector.extract_strided_slice %307 {offsets = [0, 64], sizes = [16, 32], strides = [1, 1]} : vector<16x128xf32> to vector<16x32xf32>
    %321 = math.tanh %320 : vector<16x32xf32>
    %322 = vector.extract_strided_slice %307 {offsets = [0, 96], sizes = [16, 32], strides = [1, 1]} : vector<16x128xf32> to vector<16x32xf32>
    %323 = arith.negf %322 : vector<16x32xf32>
    %324 = math.exp %323 : vector<16x32xf32>
    %cst_148 = arith.constant 1.000000e+00 : f32
    %325 = vector.broadcast %cst_148 : f32 to vector<16x32xf32>
    %326 = arith.addf %325, %324 : vector<16x32xf32>
    %327 = arith.divf %325, %326 : vector<16x32xf32>
    %328 = arith.mulf %319, %300 : vector<16x32xf32>
    %329 = arith.mulf %313, %321 : vector<16x32xf32>
    %330 = arith.addf %328, %329 : vector<16x32xf32>
    %331 = math.tanh %330 : vector<16x32xf32>
    %332 = arith.mulf %327, %331 : vector<16x32xf32>
    %c0_149 = arith.constant 0 : index
    %c0_150 = arith.constant 0 : index
    %333 = vector.load %arg9[%c0_149, %c0_150] : memref<16x32xf32, #tpu.memory_space<vmem>>, vector<16x32xf32>
    tpu.vector_store %arg9[%c0_149, %c0_150], %332 {strides = array<i32>} : memref<16x32xf32, #tpu.memory_space<vmem>>, vector<16x32xf32>,
    %c0_151 = arith.constant 0 : index
    %c0_152 = arith.constant 0 : index
    %334 = vector.load %arg10[%c0_151, %c0_152] : memref<16x32xf32, #tpu.memory_space<vmem>>, vector<16x32xf32>
    tpu.vector_store %arg10[%c0_151, %c0_152], %330 {strides = array<i32>} : memref<16x32xf32, #tpu.memory_space<vmem>>, vector<16x32xf32>,
    %335 = arith.truncf %332 : vector<16x32xf32> to vector<16x32xbf16>
    %336 = arith.index_cast %c7_i32 : i32 to index
    %c0_153 = arith.constant 0 : index
    %c0_154 = arith.constant 0 : index
    %337 = vector.load %arg6[%336, %c0_153, %c0_154] : memref<8x16x32xbf16, #tpu.memory_space<vmem>>, vector<1x16x32xbf16>
    %338 = vector.shape_cast %337 : vector<1x16x32xbf16> to vector<16x32xbf16>
    %339 = vector.shape_cast %335 : vector<16x32xbf16> to vector<1x16x32xbf16>
    tpu.vector_store %arg6[%336, %c0_153, %c0_154], %339 {strides = array<i32>} : memref<8x16x32xbf16, #tpu.memory_space<vmem>>, vector<1x16x32xbf16>,
    %c8_i32 = arith.constant 8 : i32
    %c0_i32_155 = arith.constant 0 : i32
    %340 = arith.cmpi eq, %arg1, %c0_i32_155 : i32
    %341 = arith.extui %340 : i1 to i32
    %c0_i32_156 = arith.constant 0 : i32
    %342 = arith.cmpi ne, %341, %c0_i32_156 : i32
    scf.if %342 {
      %c0_157 = arith.constant 0 : index
      %c0_158 = arith.constant 0 : index
      %343 = vector.load %arg9[%c0_157, %c0_158] : memref<16x32xf32, #tpu.memory_space<vmem>>, vector<16x32xf32>
      %c0_159 = arith.constant 0 : index
      %c0_160 = arith.constant 0 : index
      %344 = vector.load %arg7[%c0_159, %c0_160] : memref<16x32xf32, #tpu.memory_space<vmem>>, vector<16x32xf32>
      tpu.vector_store %arg7[%c0_159, %c0_160], %343 {strides = array<i32>} : memref<16x32xf32, #tpu.memory_space<vmem>>, vector<16x32xf32>,
      %c0_161 = arith.constant 0 : index
      %c0_162 = arith.constant 0 : index
      %345 = vector.load %arg10[%c0_161, %c0_162] : memref<16x32xf32, #tpu.memory_space<vmem>>, vector<16x32xf32>
      %c0_163 = arith.constant 0 : index
      %c0_164 = arith.constant 0 : index
      %346 = vector.load %arg8[%c0_163, %c0_164] : memref<16x32xf32, #tpu.memory_space<vmem>>, vector<16x32xf32>
      tpu.vector_store %arg8[%c0_163, %c0_164], %345 {strides = array<i32>} : memref<16x32xf32, #tpu.memory_space<vmem>>, vector<16x32xf32>,
    } else {
    }
    return
  }
  func.func @transform_0(%arg0: i32, %arg1: i32) -> (i32, i32, i32) {
    %c0_i32 = arith.constant 0 : i32
    %c0_i32_0 = arith.constant 0 : i32
    return %arg1, %arg0, %c0_i32 : i32, i32, i32
  }
  func.func @transform_1(%arg0: i32, %arg1: i32) -> (i32, i32) {
    %c0_i32 = arith.constant 0 : i32
    %c0_i32_0 = arith.constant 0 : i32
    %c0_i32_1 = arith.constant 0 : i32
    return %c0_i32, %c0_i32_0 : i32, i32
  }
  func.func @transform_2(%arg0: i32, %arg1: i32) -> (i32, i32) {
    %c0_i32 = arith.constant 0 : i32
    %c0_i32_0 = arith.constant 0 : i32
    %c0_i32_1 = arith.constant 0 : i32
    return %c0_i32, %c0_i32_0 : i32, i32
  }
  func.func @transform_3(%arg0: i32, %arg1: i32) -> (i32, i32) {
    %c0_i32 = arith.constant 0 : i32
    %c0_i32_0 = arith.constant 0 : i32
    %c0_i32_1 = arith.constant 0 : i32
    return %c0_i32, %c0_i32_0 : i32, i32
  }
  func.func @transform_4(%arg0: i32, %arg1: i32) -> (i32, i32, i32) {
    %c0_i32 = arith.constant 0 : i32
    %c0_i32_0 = arith.constant 0 : i32
    return %arg1, %arg0, %c0_i32 : i32, i32, i32
  }
  func.func @transform_5(%arg0: i32, %arg1: i32) -> (i32, i32) {
    %c0_i32 = arith.constant 0 : i32
    %c0_i32_0 = arith.constant 0 : i32
    return %arg0, %c0_i32 : i32, i32
  }
  func.func @transform_6(%arg0: i32, %arg1: i32) -> (i32, i32) {
    %c0_i32 = arith.constant 0 : i32
    %c0_i32_0 = arith.constant 0 : i32
    return %arg0, %c0_i32 : i32, i32
  }
}

module attributes {stable_mosaic.version = 11 : i64} {
  func.func @_lstm_layer_kernel(%arg0: i32, %arg1: i32, %arg2: memref<8x16x32xbf16, #tpu.memory_space<vmem>>, %arg3: memref<32x128xbf16, #tpu.memory_space<vmem>>, %arg4: memref<32x128xbf16, #tpu.memory_space<vmem>>, %arg5: memref<1x128xf32, #tpu.memory_space<vmem>>, %arg6: memref<8x16x32xf32, #tpu.memory_space<vmem>>, %arg7: memref<16x32xf32, #tpu.memory_space<vmem>>, %arg8: memref<16x32xf32, #tpu.memory_space<vmem>>, %arg9: memref<16x32xf32, #tpu.memory_space<vmem>>, %arg10: memref<16x32xf32, #tpu.memory_space<vmem>>, %arg11: memref<8x16x128xf32, #tpu.memory_space<vmem>>) attributes {dimension_semantics = [#tpu.dimension_semantics<parallel>, #tpu.dimension_semantics<arbitrary>], iteration_bounds = array<i64: 1, 1>, scalar_prefetch = 0 : i64, scratch_operands = 3 : i64, tpu.core_type = #tpu.core_type<tc>, window_params = [{transform_indices = @transform_0, window_bounds = array<i64: 8, 16, 32>}, {pipeline_mode = #tpu.pipeline_mode<synchronous>, transform_indices = @transform_1, window_bounds = array<i64: 32, 128>}, {pipeline_mode = #tpu.pipeline_mode<synchronous>, transform_indices = @transform_2, window_bounds = array<i64: 32, 128>}, {pipeline_mode = #tpu.pipeline_mode<synchronous>, transform_indices = @transform_3, window_bounds = array<i64: 1, 128>}, {transform_indices = @transform_4, window_bounds = array<i64: 8, 16, 32>}, {transform_indices = @transform_5, window_bounds = array<i64: 16, 32>}, {transform_indices = @transform_6, window_bounds = array<i64: 16, 32>}]} {
    %c0_i32 = arith.constant 0 : i32
    %0 = arith.cmpi eq, %arg1, %c0_i32 : i32
    %1 = arith.extui %0 : i1 to i32
    %c0_i32_0 = arith.constant 0 : i32
    %2 = arith.cmpi ne, %1, %c0_i32_0 : i32
    scf.if %2 {
      %cst_157 = arith.constant 0.000000e+00 : f32
      %335 = vector.broadcast %cst_157 : f32 to vector<16x32xf32>
      %c0_158 = arith.constant 0 : index
      %c0_159 = arith.constant 0 : index
      %336 = vector.load %arg9[%c0_158, %c0_159] : memref<16x32xf32, #tpu.memory_space<vmem>>, vector<16x32xf32>
      tpu.vector_store %arg9[%c0_158, %c0_159], %335 {strides = array<i32>} : memref<16x32xf32, #tpu.memory_space<vmem>>, vector<16x32xf32>,
      %cst_160 = arith.constant 0.000000e+00 : f32
      %337 = vector.broadcast %cst_160 : f32 to vector<16x32xf32>
      %c0_161 = arith.constant 0 : index
      %c0_162 = arith.constant 0 : index
      %338 = vector.load %arg10[%c0_161, %c0_162] : memref<16x32xf32, #tpu.memory_space<vmem>>, vector<16x32xf32>
      tpu.vector_store %arg10[%c0_161, %c0_162], %337 {strides = array<i32>} : memref<16x32xf32, #tpu.memory_space<vmem>>, vector<16x32xf32>,
    } else {
    }
    %c0 = arith.constant 0 : index
    %c0_1 = arith.constant 0 : index
    %c0_2 = arith.constant 0 : index
    %3 = vector.load %arg2[%c0, %c0_1, %c0_2] : memref<8x16x32xbf16, #tpu.memory_space<vmem>>, vector<8x16x32xbf16>
    %4 = vector.shape_cast %3 : vector<8x16x32xbf16> to vector<128x32xbf16>
    %c0_3 = arith.constant 0 : index
    %c0_4 = arith.constant 0 : index
    %5 = vector.load %arg3[%c0_3, %c0_4] : memref<32x128xbf16, #tpu.memory_space<vmem>>, vector<32x128xbf16>
    %cst = arith.constant dense<0.000000e+00> : vector<128x128xf32>
    %6 = tpu.matmul %4, %5, %cst {dimension_numbers = #tpu.dot_dimension_numbers<[1], [0], [0], [1], [0, 0, 1, 1], [], []>} : vector<128x32xbf16>, vector<32x128xbf16>, vector<128x128xf32> -> vector<128x128xf32>
    %c0_5 = arith.constant 0 : index
    %c0_6 = arith.constant 0 : index
    %7 = vector.load %arg5[%c0_5, %c0_6] : memref<1x128xf32, #tpu.memory_space<vmem>>, vector<1x128xf32>
    %8 = vector.broadcast %7 : vector<1x128xf32> to vector<128x128xf32>
    %9 = arith.addf %6, %8 : vector<128x128xf32>
    %10 = vector.shape_cast %9 : vector<128x128xf32> to vector<8x16x128xf32>
    %c0_7 = arith.constant 0 : index
    %c0_8 = arith.constant 0 : index
    %c0_9 = arith.constant 0 : index
    %11 = vector.load %arg11[%c0_7, %c0_8, %c0_9] : memref<8x16x128xf32, #tpu.memory_space<vmem>>, vector<8x16x128xf32>
    tpu.vector_store %arg11[%c0_7, %c0_8, %c0_9], %10 {strides = array<i32>} : memref<8x16x128xf32, #tpu.memory_space<vmem>>, vector<8x16x128xf32>,
    %c0_i32_10 = arith.constant 0 : i32
    %c0_11 = arith.constant 0 : index
    %c0_12 = arith.constant 0 : index
    %12 = vector.load %arg9[%c0_11, %c0_12] : memref<16x32xf32, #tpu.memory_space<vmem>>, vector<16x32xf32>
    %c0_13 = arith.constant 0 : index
    %c0_14 = arith.constant 0 : index
    %13 = vector.load %arg10[%c0_13, %c0_14] : memref<16x32xf32, #tpu.memory_space<vmem>>, vector<16x32xf32>
    %14 = arith.index_cast %c0_i32_10 : i32 to index
    %c0_15 = arith.constant 0 : index
    %c0_16 = arith.constant 0 : index
    %15 = vector.load %arg11[%14, %c0_15, %c0_16] : memref<8x16x128xf32, #tpu.memory_space<vmem>>, vector<1x16x128xf32>
    %16 = vector.shape_cast %15 : vector<1x16x128xf32> to vector<16x128xf32>
    %17 = arith.truncf %12 : vector<16x32xf32> to vector<16x32xbf16>
    %c0_17 = arith.constant 0 : index
    %c0_18 = arith.constant 0 : index
    %18 = vector.load %arg4[%c0_17, %c0_18] : memref<32x128xbf16, #tpu.memory_space<vmem>>, vector<32x128xbf16>
    %cst_19 = arith.constant dense<0.000000e+00> : vector<16x128xf32>
    %19 = tpu.matmul %17, %18, %cst_19 {dimension_numbers = #tpu.dot_dimension_numbers<[1], [0], [0], [1], [0, 0, 1, 1], [], []>} : vector<16x32xbf16>, vector<32x128xbf16>, vector<16x128xf32> -> vector<16x128xf32>
    %20 = arith.addf %16, %19 : vector<16x128xf32>
    %21 = vector.extract_strided_slice %20 {offsets = [0, 0], sizes = [16, 32], strides = [1, 1]} : vector<16x128xf32> to vector<16x32xf32>
    %22 = arith.negf %21 : vector<16x32xf32>
    %23 = math.exp %22 : vector<16x32xf32>
    %cst_20 = arith.constant 1.000000e+00 : f32
    %24 = vector.broadcast %cst_20 : f32 to vector<16x32xf32>
    %25 = arith.addf %24, %23 : vector<16x32xf32>
    %26 = arith.divf %24, %25 : vector<16x32xf32>
    %27 = vector.extract_strided_slice %20 {offsets = [0, 32], sizes = [16, 32], strides = [1, 1]} : vector<16x128xf32> to vector<16x32xf32>
    %28 = arith.negf %27 : vector<16x32xf32>
    %29 = math.exp %28 : vector<16x32xf32>
    %cst_21 = arith.constant 1.000000e+00 : f32
    %30 = vector.broadcast %cst_21 : f32 to vector<16x32xf32>
    %31 = arith.addf %30, %29 : vector<16x32xf32>
    %32 = arith.divf %30, %31 : vector<16x32xf32>
    %33 = vector.extract_strided_slice %20 {offsets = [0, 64], sizes = [16, 32], strides = [1, 1]} : vector<16x128xf32> to vector<16x32xf32>
    %34 = math.tanh %33 : vector<16x32xf32>
    %35 = vector.extract_strided_slice %20 {offsets = [0, 96], sizes = [16, 32], strides = [1, 1]} : vector<16x128xf32> to vector<16x32xf32>
    %36 = arith.negf %35 : vector<16x32xf32>
    %37 = math.exp %36 : vector<16x32xf32>
    %cst_22 = arith.constant 1.000000e+00 : f32
    %38 = vector.broadcast %cst_22 : f32 to vector<16x32xf32>
    %39 = arith.addf %38, %37 : vector<16x32xf32>
    %40 = arith.divf %38, %39 : vector<16x32xf32>
    %41 = arith.mulf %32, %13 : vector<16x32xf32>
    %42 = arith.mulf %26, %34 : vector<16x32xf32>
    %43 = arith.addf %41, %42 : vector<16x32xf32>
    %44 = math.tanh %43 : vector<16x32xf32>
    %45 = arith.mulf %40, %44 : vector<16x32xf32>
    %c0_23 = arith.constant 0 : index
    %c0_24 = arith.constant 0 : index
    %46 = vector.load %arg9[%c0_23, %c0_24] : memref<16x32xf32, #tpu.memory_space<vmem>>, vector<16x32xf32>
    tpu.vector_store %arg9[%c0_23, %c0_24], %45 {strides = array<i32>} : memref<16x32xf32, #tpu.memory_space<vmem>>, vector<16x32xf32>,
    %c0_25 = arith.constant 0 : index
    %c0_26 = arith.constant 0 : index
    %47 = vector.load %arg10[%c0_25, %c0_26] : memref<16x32xf32, #tpu.memory_space<vmem>>, vector<16x32xf32>
    tpu.vector_store %arg10[%c0_25, %c0_26], %43 {strides = array<i32>} : memref<16x32xf32, #tpu.memory_space<vmem>>, vector<16x32xf32>,
    %48 = arith.index_cast %c0_i32_10 : i32 to index
    %c0_27 = arith.constant 0 : index
    %c0_28 = arith.constant 0 : index
    %49 = vector.load %arg6[%48, %c0_27, %c0_28] : memref<8x16x32xf32, #tpu.memory_space<vmem>>, vector<1x16x32xf32>
    %50 = vector.shape_cast %49 : vector<1x16x32xf32> to vector<16x32xf32>
    %51 = vector.shape_cast %45 : vector<16x32xf32> to vector<1x16x32xf32>
    tpu.vector_store %arg6[%48, %c0_27, %c0_28], %51 {strides = array<i32>} : memref<8x16x32xf32, #tpu.memory_space<vmem>>, vector<1x16x32xf32>,
    %c1_i32 = arith.constant 1 : i32
    %c0_29 = arith.constant 0 : index
    %c0_30 = arith.constant 0 : index
    %52 = vector.load %arg9[%c0_29, %c0_30] : memref<16x32xf32, #tpu.memory_space<vmem>>, vector<16x32xf32>
    %c0_31 = arith.constant 0 : index
    %c0_32 = arith.constant 0 : index
    %53 = vector.load %arg10[%c0_31, %c0_32] : memref<16x32xf32, #tpu.memory_space<vmem>>, vector<16x32xf32>
    %54 = arith.index_cast %c1_i32 : i32 to index
    %c0_33 = arith.constant 0 : index
    %c0_34 = arith.constant 0 : index
    %55 = vector.load %arg11[%54, %c0_33, %c0_34] : memref<8x16x128xf32, #tpu.memory_space<vmem>>, vector<1x16x128xf32>
    %56 = vector.shape_cast %55 : vector<1x16x128xf32> to vector<16x128xf32>
    %57 = arith.truncf %52 : vector<16x32xf32> to vector<16x32xbf16>
    %c0_35 = arith.constant 0 : index
    %c0_36 = arith.constant 0 : index
    %58 = vector.load %arg4[%c0_35, %c0_36] : memref<32x128xbf16, #tpu.memory_space<vmem>>, vector<32x128xbf16>
    %cst_37 = arith.constant dense<0.000000e+00> : vector<16x128xf32>
    %59 = tpu.matmul %57, %58, %cst_37 {dimension_numbers = #tpu.dot_dimension_numbers<[1], [0], [0], [1], [0, 0, 1, 1], [], []>} : vector<16x32xbf16>, vector<32x128xbf16>, vector<16x128xf32> -> vector<16x128xf32>
    %60 = arith.addf %56, %59 : vector<16x128xf32>
    %61 = vector.extract_strided_slice %60 {offsets = [0, 0], sizes = [16, 32], strides = [1, 1]} : vector<16x128xf32> to vector<16x32xf32>
    %62 = arith.negf %61 : vector<16x32xf32>
    %63 = math.exp %62 : vector<16x32xf32>
    %cst_38 = arith.constant 1.000000e+00 : f32
    %64 = vector.broadcast %cst_38 : f32 to vector<16x32xf32>
    %65 = arith.addf %64, %63 : vector<16x32xf32>
    %66 = arith.divf %64, %65 : vector<16x32xf32>
    %67 = vector.extract_strided_slice %60 {offsets = [0, 32], sizes = [16, 32], strides = [1, 1]} : vector<16x128xf32> to vector<16x32xf32>
    %68 = arith.negf %67 : vector<16x32xf32>
    %69 = math.exp %68 : vector<16x32xf32>
    %cst_39 = arith.constant 1.000000e+00 : f32
    %70 = vector.broadcast %cst_39 : f32 to vector<16x32xf32>
    %71 = arith.addf %70, %69 : vector<16x32xf32>
    %72 = arith.divf %70, %71 : vector<16x32xf32>
    %73 = vector.extract_strided_slice %60 {offsets = [0, 64], sizes = [16, 32], strides = [1, 1]} : vector<16x128xf32> to vector<16x32xf32>
    %74 = math.tanh %73 : vector<16x32xf32>
    %75 = vector.extract_strided_slice %60 {offsets = [0, 96], sizes = [16, 32], strides = [1, 1]} : vector<16x128xf32> to vector<16x32xf32>
    %76 = arith.negf %75 : vector<16x32xf32>
    %77 = math.exp %76 : vector<16x32xf32>
    %cst_40 = arith.constant 1.000000e+00 : f32
    %78 = vector.broadcast %cst_40 : f32 to vector<16x32xf32>
    %79 = arith.addf %78, %77 : vector<16x32xf32>
    %80 = arith.divf %78, %79 : vector<16x32xf32>
    %81 = arith.mulf %72, %53 : vector<16x32xf32>
    %82 = arith.mulf %66, %74 : vector<16x32xf32>
    %83 = arith.addf %81, %82 : vector<16x32xf32>
    %84 = math.tanh %83 : vector<16x32xf32>
    %85 = arith.mulf %80, %84 : vector<16x32xf32>
    %c0_41 = arith.constant 0 : index
    %c0_42 = arith.constant 0 : index
    %86 = vector.load %arg9[%c0_41, %c0_42] : memref<16x32xf32, #tpu.memory_space<vmem>>, vector<16x32xf32>
    tpu.vector_store %arg9[%c0_41, %c0_42], %85 {strides = array<i32>} : memref<16x32xf32, #tpu.memory_space<vmem>>, vector<16x32xf32>,
    %c0_43 = arith.constant 0 : index
    %c0_44 = arith.constant 0 : index
    %87 = vector.load %arg10[%c0_43, %c0_44] : memref<16x32xf32, #tpu.memory_space<vmem>>, vector<16x32xf32>
    tpu.vector_store %arg10[%c0_43, %c0_44], %83 {strides = array<i32>} : memref<16x32xf32, #tpu.memory_space<vmem>>, vector<16x32xf32>,
    %88 = arith.index_cast %c1_i32 : i32 to index
    %c0_45 = arith.constant 0 : index
    %c0_46 = arith.constant 0 : index
    %89 = vector.load %arg6[%88, %c0_45, %c0_46] : memref<8x16x32xf32, #tpu.memory_space<vmem>>, vector<1x16x32xf32>
    %90 = vector.shape_cast %89 : vector<1x16x32xf32> to vector<16x32xf32>
    %91 = vector.shape_cast %85 : vector<16x32xf32> to vector<1x16x32xf32>
    tpu.vector_store %arg6[%88, %c0_45, %c0_46], %91 {strides = array<i32>} : memref<8x16x32xf32, #tpu.memory_space<vmem>>, vector<1x16x32xf32>,
    %c2_i32 = arith.constant 2 : i32
    %c0_47 = arith.constant 0 : index
    %c0_48 = arith.constant 0 : index
    %92 = vector.load %arg9[%c0_47, %c0_48] : memref<16x32xf32, #tpu.memory_space<vmem>>, vector<16x32xf32>
    %c0_49 = arith.constant 0 : index
    %c0_50 = arith.constant 0 : index
    %93 = vector.load %arg10[%c0_49, %c0_50] : memref<16x32xf32, #tpu.memory_space<vmem>>, vector<16x32xf32>
    %94 = arith.index_cast %c2_i32 : i32 to index
    %c0_51 = arith.constant 0 : index
    %c0_52 = arith.constant 0 : index
    %95 = vector.load %arg11[%94, %c0_51, %c0_52] : memref<8x16x128xf32, #tpu.memory_space<vmem>>, vector<1x16x128xf32>
    %96 = vector.shape_cast %95 : vector<1x16x128xf32> to vector<16x128xf32>
    %97 = arith.truncf %92 : vector<16x32xf32> to vector<16x32xbf16>
    %c0_53 = arith.constant 0 : index
    %c0_54 = arith.constant 0 : index
    %98 = vector.load %arg4[%c0_53, %c0_54] : memref<32x128xbf16, #tpu.memory_space<vmem>>, vector<32x128xbf16>
    %cst_55 = arith.constant dense<0.000000e+00> : vector<16x128xf32>
    %99 = tpu.matmul %97, %98, %cst_55 {dimension_numbers = #tpu.dot_dimension_numbers<[1], [0], [0], [1], [0, 0, 1, 1], [], []>} : vector<16x32xbf16>, vector<32x128xbf16>, vector<16x128xf32> -> vector<16x128xf32>
    %100 = arith.addf %96, %99 : vector<16x128xf32>
    %101 = vector.extract_strided_slice %100 {offsets = [0, 0], sizes = [16, 32], strides = [1, 1]} : vector<16x128xf32> to vector<16x32xf32>
    %102 = arith.negf %101 : vector<16x32xf32>
    %103 = math.exp %102 : vector<16x32xf32>
    %cst_56 = arith.constant 1.000000e+00 : f32
    %104 = vector.broadcast %cst_56 : f32 to vector<16x32xf32>
    %105 = arith.addf %104, %103 : vector<16x32xf32>
    %106 = arith.divf %104, %105 : vector<16x32xf32>
    %107 = vector.extract_strided_slice %100 {offsets = [0, 32], sizes = [16, 32], strides = [1, 1]} : vector<16x128xf32> to vector<16x32xf32>
    %108 = arith.negf %107 : vector<16x32xf32>
    %109 = math.exp %108 : vector<16x32xf32>
    %cst_57 = arith.constant 1.000000e+00 : f32
    %110 = vector.broadcast %cst_57 : f32 to vector<16x32xf32>
    %111 = arith.addf %110, %109 : vector<16x32xf32>
    %112 = arith.divf %110, %111 : vector<16x32xf32>
    %113 = vector.extract_strided_slice %100 {offsets = [0, 64], sizes = [16, 32], strides = [1, 1]} : vector<16x128xf32> to vector<16x32xf32>
    %114 = math.tanh %113 : vector<16x32xf32>
    %115 = vector.extract_strided_slice %100 {offsets = [0, 96], sizes = [16, 32], strides = [1, 1]} : vector<16x128xf32> to vector<16x32xf32>
    %116 = arith.negf %115 : vector<16x32xf32>
    %117 = math.exp %116 : vector<16x32xf32>
    %cst_58 = arith.constant 1.000000e+00 : f32
    %118 = vector.broadcast %cst_58 : f32 to vector<16x32xf32>
    %119 = arith.addf %118, %117 : vector<16x32xf32>
    %120 = arith.divf %118, %119 : vector<16x32xf32>
    %121 = arith.mulf %112, %93 : vector<16x32xf32>
    %122 = arith.mulf %106, %114 : vector<16x32xf32>
    %123 = arith.addf %121, %122 : vector<16x32xf32>
    %124 = math.tanh %123 : vector<16x32xf32>
    %125 = arith.mulf %120, %124 : vector<16x32xf32>
    %c0_59 = arith.constant 0 : index
    %c0_60 = arith.constant 0 : index
    %126 = vector.load %arg9[%c0_59, %c0_60] : memref<16x32xf32, #tpu.memory_space<vmem>>, vector<16x32xf32>
    tpu.vector_store %arg9[%c0_59, %c0_60], %125 {strides = array<i32>} : memref<16x32xf32, #tpu.memory_space<vmem>>, vector<16x32xf32>,
    %c0_61 = arith.constant 0 : index
    %c0_62 = arith.constant 0 : index
    %127 = vector.load %arg10[%c0_61, %c0_62] : memref<16x32xf32, #tpu.memory_space<vmem>>, vector<16x32xf32>
    tpu.vector_store %arg10[%c0_61, %c0_62], %123 {strides = array<i32>} : memref<16x32xf32, #tpu.memory_space<vmem>>, vector<16x32xf32>,
    %128 = arith.index_cast %c2_i32 : i32 to index
    %c0_63 = arith.constant 0 : index
    %c0_64 = arith.constant 0 : index
    %129 = vector.load %arg6[%128, %c0_63, %c0_64] : memref<8x16x32xf32, #tpu.memory_space<vmem>>, vector<1x16x32xf32>
    %130 = vector.shape_cast %129 : vector<1x16x32xf32> to vector<16x32xf32>
    %131 = vector.shape_cast %125 : vector<16x32xf32> to vector<1x16x32xf32>
    tpu.vector_store %arg6[%128, %c0_63, %c0_64], %131 {strides = array<i32>} : memref<8x16x32xf32, #tpu.memory_space<vmem>>, vector<1x16x32xf32>,
    %c3_i32 = arith.constant 3 : i32
    %c0_65 = arith.constant 0 : index
    %c0_66 = arith.constant 0 : index
    %132 = vector.load %arg9[%c0_65, %c0_66] : memref<16x32xf32, #tpu.memory_space<vmem>>, vector<16x32xf32>
    %c0_67 = arith.constant 0 : index
    %c0_68 = arith.constant 0 : index
    %133 = vector.load %arg10[%c0_67, %c0_68] : memref<16x32xf32, #tpu.memory_space<vmem>>, vector<16x32xf32>
    %134 = arith.index_cast %c3_i32 : i32 to index
    %c0_69 = arith.constant 0 : index
    %c0_70 = arith.constant 0 : index
    %135 = vector.load %arg11[%134, %c0_69, %c0_70] : memref<8x16x128xf32, #tpu.memory_space<vmem>>, vector<1x16x128xf32>
    %136 = vector.shape_cast %135 : vector<1x16x128xf32> to vector<16x128xf32>
    %137 = arith.truncf %132 : vector<16x32xf32> to vector<16x32xbf16>
    %c0_71 = arith.constant 0 : index
    %c0_72 = arith.constant 0 : index
    %138 = vector.load %arg4[%c0_71, %c0_72] : memref<32x128xbf16, #tpu.memory_space<vmem>>, vector<32x128xbf16>
    %cst_73 = arith.constant dense<0.000000e+00> : vector<16x128xf32>
    %139 = tpu.matmul %137, %138, %cst_73 {dimension_numbers = #tpu.dot_dimension_numbers<[1], [0], [0], [1], [0, 0, 1, 1], [], []>} : vector<16x32xbf16>, vector<32x128xbf16>, vector<16x128xf32> -> vector<16x128xf32>
    %140 = arith.addf %136, %139 : vector<16x128xf32>
    %141 = vector.extract_strided_slice %140 {offsets = [0, 0], sizes = [16, 32], strides = [1, 1]} : vector<16x128xf32> to vector<16x32xf32>
    %142 = arith.negf %141 : vector<16x32xf32>
    %143 = math.exp %142 : vector<16x32xf32>
    %cst_74 = arith.constant 1.000000e+00 : f32
    %144 = vector.broadcast %cst_74 : f32 to vector<16x32xf32>
    %145 = arith.addf %144, %143 : vector<16x32xf32>
    %146 = arith.divf %144, %145 : vector<16x32xf32>
    %147 = vector.extract_strided_slice %140 {offsets = [0, 32], sizes = [16, 32], strides = [1, 1]} : vector<16x128xf32> to vector<16x32xf32>
    %148 = arith.negf %147 : vector<16x32xf32>
    %149 = math.exp %148 : vector<16x32xf32>
    %cst_75 = arith.constant 1.000000e+00 : f32
    %150 = vector.broadcast %cst_75 : f32 to vector<16x32xf32>
    %151 = arith.addf %150, %149 : vector<16x32xf32>
    %152 = arith.divf %150, %151 : vector<16x32xf32>
    %153 = vector.extract_strided_slice %140 {offsets = [0, 64], sizes = [16, 32], strides = [1, 1]} : vector<16x128xf32> to vector<16x32xf32>
    %154 = math.tanh %153 : vector<16x32xf32>
    %155 = vector.extract_strided_slice %140 {offsets = [0, 96], sizes = [16, 32], strides = [1, 1]} : vector<16x128xf32> to vector<16x32xf32>
    %156 = arith.negf %155 : vector<16x32xf32>
    %157 = math.exp %156 : vector<16x32xf32>
    %cst_76 = arith.constant 1.000000e+00 : f32
    %158 = vector.broadcast %cst_76 : f32 to vector<16x32xf32>
    %159 = arith.addf %158, %157 : vector<16x32xf32>
    %160 = arith.divf %158, %159 : vector<16x32xf32>
    %161 = arith.mulf %152, %133 : vector<16x32xf32>
    %162 = arith.mulf %146, %154 : vector<16x32xf32>
    %163 = arith.addf %161, %162 : vector<16x32xf32>
    %164 = math.tanh %163 : vector<16x32xf32>
    %165 = arith.mulf %160, %164 : vector<16x32xf32>
    %c0_77 = arith.constant 0 : index
    %c0_78 = arith.constant 0 : index
    %166 = vector.load %arg9[%c0_77, %c0_78] : memref<16x32xf32, #tpu.memory_space<vmem>>, vector<16x32xf32>
    tpu.vector_store %arg9[%c0_77, %c0_78], %165 {strides = array<i32>} : memref<16x32xf32, #tpu.memory_space<vmem>>, vector<16x32xf32>,
    %c0_79 = arith.constant 0 : index
    %c0_80 = arith.constant 0 : index
    %167 = vector.load %arg10[%c0_79, %c0_80] : memref<16x32xf32, #tpu.memory_space<vmem>>, vector<16x32xf32>
    tpu.vector_store %arg10[%c0_79, %c0_80], %163 {strides = array<i32>} : memref<16x32xf32, #tpu.memory_space<vmem>>, vector<16x32xf32>,
    %168 = arith.index_cast %c3_i32 : i32 to index
    %c0_81 = arith.constant 0 : index
    %c0_82 = arith.constant 0 : index
    %169 = vector.load %arg6[%168, %c0_81, %c0_82] : memref<8x16x32xf32, #tpu.memory_space<vmem>>, vector<1x16x32xf32>
    %170 = vector.shape_cast %169 : vector<1x16x32xf32> to vector<16x32xf32>
    %171 = vector.shape_cast %165 : vector<16x32xf32> to vector<1x16x32xf32>
    tpu.vector_store %arg6[%168, %c0_81, %c0_82], %171 {strides = array<i32>} : memref<8x16x32xf32, #tpu.memory_space<vmem>>, vector<1x16x32xf32>,
    %c4_i32 = arith.constant 4 : i32
    %c0_83 = arith.constant 0 : index
    %c0_84 = arith.constant 0 : index
    %172 = vector.load %arg9[%c0_83, %c0_84] : memref<16x32xf32, #tpu.memory_space<vmem>>, vector<16x32xf32>
    %c0_85 = arith.constant 0 : index
    %c0_86 = arith.constant 0 : index
    %173 = vector.load %arg10[%c0_85, %c0_86] : memref<16x32xf32, #tpu.memory_space<vmem>>, vector<16x32xf32>
    %174 = arith.index_cast %c4_i32 : i32 to index
    %c0_87 = arith.constant 0 : index
    %c0_88 = arith.constant 0 : index
    %175 = vector.load %arg11[%174, %c0_87, %c0_88] : memref<8x16x128xf32, #tpu.memory_space<vmem>>, vector<1x16x128xf32>
    %176 = vector.shape_cast %175 : vector<1x16x128xf32> to vector<16x128xf32>
    %177 = arith.truncf %172 : vector<16x32xf32> to vector<16x32xbf16>
    %c0_89 = arith.constant 0 : index
    %c0_90 = arith.constant 0 : index
    %178 = vector.load %arg4[%c0_89, %c0_90] : memref<32x128xbf16, #tpu.memory_space<vmem>>, vector<32x128xbf16>
    %cst_91 = arith.constant dense<0.000000e+00> : vector<16x128xf32>
    %179 = tpu.matmul %177, %178, %cst_91 {dimension_numbers = #tpu.dot_dimension_numbers<[1], [0], [0], [1], [0, 0, 1, 1], [], []>} : vector<16x32xbf16>, vector<32x128xbf16>, vector<16x128xf32> -> vector<16x128xf32>
    %180 = arith.addf %176, %179 : vector<16x128xf32>
    %181 = vector.extract_strided_slice %180 {offsets = [0, 0], sizes = [16, 32], strides = [1, 1]} : vector<16x128xf32> to vector<16x32xf32>
    %182 = arith.negf %181 : vector<16x32xf32>
    %183 = math.exp %182 : vector<16x32xf32>
    %cst_92 = arith.constant 1.000000e+00 : f32
    %184 = vector.broadcast %cst_92 : f32 to vector<16x32xf32>
    %185 = arith.addf %184, %183 : vector<16x32xf32>
    %186 = arith.divf %184, %185 : vector<16x32xf32>
    %187 = vector.extract_strided_slice %180 {offsets = [0, 32], sizes = [16, 32], strides = [1, 1]} : vector<16x128xf32> to vector<16x32xf32>
    %188 = arith.negf %187 : vector<16x32xf32>
    %189 = math.exp %188 : vector<16x32xf32>
    %cst_93 = arith.constant 1.000000e+00 : f32
    %190 = vector.broadcast %cst_93 : f32 to vector<16x32xf32>
    %191 = arith.addf %190, %189 : vector<16x32xf32>
    %192 = arith.divf %190, %191 : vector<16x32xf32>
    %193 = vector.extract_strided_slice %180 {offsets = [0, 64], sizes = [16, 32], strides = [1, 1]} : vector<16x128xf32> to vector<16x32xf32>
    %194 = math.tanh %193 : vector<16x32xf32>
    %195 = vector.extract_strided_slice %180 {offsets = [0, 96], sizes = [16, 32], strides = [1, 1]} : vector<16x128xf32> to vector<16x32xf32>
    %196 = arith.negf %195 : vector<16x32xf32>
    %197 = math.exp %196 : vector<16x32xf32>
    %cst_94 = arith.constant 1.000000e+00 : f32
    %198 = vector.broadcast %cst_94 : f32 to vector<16x32xf32>
    %199 = arith.addf %198, %197 : vector<16x32xf32>
    %200 = arith.divf %198, %199 : vector<16x32xf32>
    %201 = arith.mulf %192, %173 : vector<16x32xf32>
    %202 = arith.mulf %186, %194 : vector<16x32xf32>
    %203 = arith.addf %201, %202 : vector<16x32xf32>
    %204 = math.tanh %203 : vector<16x32xf32>
    %205 = arith.mulf %200, %204 : vector<16x32xf32>
    %c0_95 = arith.constant 0 : index
    %c0_96 = arith.constant 0 : index
    %206 = vector.load %arg9[%c0_95, %c0_96] : memref<16x32xf32, #tpu.memory_space<vmem>>, vector<16x32xf32>
    tpu.vector_store %arg9[%c0_95, %c0_96], %205 {strides = array<i32>} : memref<16x32xf32, #tpu.memory_space<vmem>>, vector<16x32xf32>,
    %c0_97 = arith.constant 0 : index
    %c0_98 = arith.constant 0 : index
    %207 = vector.load %arg10[%c0_97, %c0_98] : memref<16x32xf32, #tpu.memory_space<vmem>>, vector<16x32xf32>
    tpu.vector_store %arg10[%c0_97, %c0_98], %203 {strides = array<i32>} : memref<16x32xf32, #tpu.memory_space<vmem>>, vector<16x32xf32>,
    %208 = arith.index_cast %c4_i32 : i32 to index
    %c0_99 = arith.constant 0 : index
    %c0_100 = arith.constant 0 : index
    %209 = vector.load %arg6[%208, %c0_99, %c0_100] : memref<8x16x32xf32, #tpu.memory_space<vmem>>, vector<1x16x32xf32>
    %210 = vector.shape_cast %209 : vector<1x16x32xf32> to vector<16x32xf32>
    %211 = vector.shape_cast %205 : vector<16x32xf32> to vector<1x16x32xf32>
    tpu.vector_store %arg6[%208, %c0_99, %c0_100], %211 {strides = array<i32>} : memref<8x16x32xf32, #tpu.memory_space<vmem>>, vector<1x16x32xf32>,
    %c5_i32 = arith.constant 5 : i32
    %c0_101 = arith.constant 0 : index
    %c0_102 = arith.constant 0 : index
    %212 = vector.load %arg9[%c0_101, %c0_102] : memref<16x32xf32, #tpu.memory_space<vmem>>, vector<16x32xf32>
    %c0_103 = arith.constant 0 : index
    %c0_104 = arith.constant 0 : index
    %213 = vector.load %arg10[%c0_103, %c0_104] : memref<16x32xf32, #tpu.memory_space<vmem>>, vector<16x32xf32>
    %214 = arith.index_cast %c5_i32 : i32 to index
    %c0_105 = arith.constant 0 : index
    %c0_106 = arith.constant 0 : index
    %215 = vector.load %arg11[%214, %c0_105, %c0_106] : memref<8x16x128xf32, #tpu.memory_space<vmem>>, vector<1x16x128xf32>
    %216 = vector.shape_cast %215 : vector<1x16x128xf32> to vector<16x128xf32>
    %217 = arith.truncf %212 : vector<16x32xf32> to vector<16x32xbf16>
    %c0_107 = arith.constant 0 : index
    %c0_108 = arith.constant 0 : index
    %218 = vector.load %arg4[%c0_107, %c0_108] : memref<32x128xbf16, #tpu.memory_space<vmem>>, vector<32x128xbf16>
    %cst_109 = arith.constant dense<0.000000e+00> : vector<16x128xf32>
    %219 = tpu.matmul %217, %218, %cst_109 {dimension_numbers = #tpu.dot_dimension_numbers<[1], [0], [0], [1], [0, 0, 1, 1], [], []>} : vector<16x32xbf16>, vector<32x128xbf16>, vector<16x128xf32> -> vector<16x128xf32>
    %220 = arith.addf %216, %219 : vector<16x128xf32>
    %221 = vector.extract_strided_slice %220 {offsets = [0, 0], sizes = [16, 32], strides = [1, 1]} : vector<16x128xf32> to vector<16x32xf32>
    %222 = arith.negf %221 : vector<16x32xf32>
    %223 = math.exp %222 : vector<16x32xf32>
    %cst_110 = arith.constant 1.000000e+00 : f32
    %224 = vector.broadcast %cst_110 : f32 to vector<16x32xf32>
    %225 = arith.addf %224, %223 : vector<16x32xf32>
    %226 = arith.divf %224, %225 : vector<16x32xf32>
    %227 = vector.extract_strided_slice %220 {offsets = [0, 32], sizes = [16, 32], strides = [1, 1]} : vector<16x128xf32> to vector<16x32xf32>
    %228 = arith.negf %227 : vector<16x32xf32>
    %229 = math.exp %228 : vector<16x32xf32>
    %cst_111 = arith.constant 1.000000e+00 : f32
    %230 = vector.broadcast %cst_111 : f32 to vector<16x32xf32>
    %231 = arith.addf %230, %229 : vector<16x32xf32>
    %232 = arith.divf %230, %231 : vector<16x32xf32>
    %233 = vector.extract_strided_slice %220 {offsets = [0, 64], sizes = [16, 32], strides = [1, 1]} : vector<16x128xf32> to vector<16x32xf32>
    %234 = math.tanh %233 : vector<16x32xf32>
    %235 = vector.extract_strided_slice %220 {offsets = [0, 96], sizes = [16, 32], strides = [1, 1]} : vector<16x128xf32> to vector<16x32xf32>
    %236 = arith.negf %235 : vector<16x32xf32>
    %237 = math.exp %236 : vector<16x32xf32>
    %cst_112 = arith.constant 1.000000e+00 : f32
    %238 = vector.broadcast %cst_112 : f32 to vector<16x32xf32>
    %239 = arith.addf %238, %237 : vector<16x32xf32>
    %240 = arith.divf %238, %239 : vector<16x32xf32>
    %241 = arith.mulf %232, %213 : vector<16x32xf32>
    %242 = arith.mulf %226, %234 : vector<16x32xf32>
    %243 = arith.addf %241, %242 : vector<16x32xf32>
    %244 = math.tanh %243 : vector<16x32xf32>
    %245 = arith.mulf %240, %244 : vector<16x32xf32>
    %c0_113 = arith.constant 0 : index
    %c0_114 = arith.constant 0 : index
    %246 = vector.load %arg9[%c0_113, %c0_114] : memref<16x32xf32, #tpu.memory_space<vmem>>, vector<16x32xf32>
    tpu.vector_store %arg9[%c0_113, %c0_114], %245 {strides = array<i32>} : memref<16x32xf32, #tpu.memory_space<vmem>>, vector<16x32xf32>,
    %c0_115 = arith.constant 0 : index
    %c0_116 = arith.constant 0 : index
    %247 = vector.load %arg10[%c0_115, %c0_116] : memref<16x32xf32, #tpu.memory_space<vmem>>, vector<16x32xf32>
    tpu.vector_store %arg10[%c0_115, %c0_116], %243 {strides = array<i32>} : memref<16x32xf32, #tpu.memory_space<vmem>>, vector<16x32xf32>,
    %248 = arith.index_cast %c5_i32 : i32 to index
    %c0_117 = arith.constant 0 : index
    %c0_118 = arith.constant 0 : index
    %249 = vector.load %arg6[%248, %c0_117, %c0_118] : memref<8x16x32xf32, #tpu.memory_space<vmem>>, vector<1x16x32xf32>
    %250 = vector.shape_cast %249 : vector<1x16x32xf32> to vector<16x32xf32>
    %251 = vector.shape_cast %245 : vector<16x32xf32> to vector<1x16x32xf32>
    tpu.vector_store %arg6[%248, %c0_117, %c0_118], %251 {strides = array<i32>} : memref<8x16x32xf32, #tpu.memory_space<vmem>>, vector<1x16x32xf32>,
    %c6_i32 = arith.constant 6 : i32
    %c0_119 = arith.constant 0 : index
    %c0_120 = arith.constant 0 : index
    %252 = vector.load %arg9[%c0_119, %c0_120] : memref<16x32xf32, #tpu.memory_space<vmem>>, vector<16x32xf32>
    %c0_121 = arith.constant 0 : index
    %c0_122 = arith.constant 0 : index
    %253 = vector.load %arg10[%c0_121, %c0_122] : memref<16x32xf32, #tpu.memory_space<vmem>>, vector<16x32xf32>
    %254 = arith.index_cast %c6_i32 : i32 to index
    %c0_123 = arith.constant 0 : index
    %c0_124 = arith.constant 0 : index
    %255 = vector.load %arg11[%254, %c0_123, %c0_124] : memref<8x16x128xf32, #tpu.memory_space<vmem>>, vector<1x16x128xf32>
    %256 = vector.shape_cast %255 : vector<1x16x128xf32> to vector<16x128xf32>
    %257 = arith.truncf %252 : vector<16x32xf32> to vector<16x32xbf16>
    %c0_125 = arith.constant 0 : index
    %c0_126 = arith.constant 0 : index
    %258 = vector.load %arg4[%c0_125, %c0_126] : memref<32x128xbf16, #tpu.memory_space<vmem>>, vector<32x128xbf16>
    %cst_127 = arith.constant dense<0.000000e+00> : vector<16x128xf32>
    %259 = tpu.matmul %257, %258, %cst_127 {dimension_numbers = #tpu.dot_dimension_numbers<[1], [0], [0], [1], [0, 0, 1, 1], [], []>} : vector<16x32xbf16>, vector<32x128xbf16>, vector<16x128xf32> -> vector<16x128xf32>
    %260 = arith.addf %256, %259 : vector<16x128xf32>
    %261 = vector.extract_strided_slice %260 {offsets = [0, 0], sizes = [16, 32], strides = [1, 1]} : vector<16x128xf32> to vector<16x32xf32>
    %262 = arith.negf %261 : vector<16x32xf32>
    %263 = math.exp %262 : vector<16x32xf32>
    %cst_128 = arith.constant 1.000000e+00 : f32
    %264 = vector.broadcast %cst_128 : f32 to vector<16x32xf32>
    %265 = arith.addf %264, %263 : vector<16x32xf32>
    %266 = arith.divf %264, %265 : vector<16x32xf32>
    %267 = vector.extract_strided_slice %260 {offsets = [0, 32], sizes = [16, 32], strides = [1, 1]} : vector<16x128xf32> to vector<16x32xf32>
    %268 = arith.negf %267 : vector<16x32xf32>
    %269 = math.exp %268 : vector<16x32xf32>
    %cst_129 = arith.constant 1.000000e+00 : f32
    %270 = vector.broadcast %cst_129 : f32 to vector<16x32xf32>
    %271 = arith.addf %270, %269 : vector<16x32xf32>
    %272 = arith.divf %270, %271 : vector<16x32xf32>
    %273 = vector.extract_strided_slice %260 {offsets = [0, 64], sizes = [16, 32], strides = [1, 1]} : vector<16x128xf32> to vector<16x32xf32>
    %274 = math.tanh %273 : vector<16x32xf32>
    %275 = vector.extract_strided_slice %260 {offsets = [0, 96], sizes = [16, 32], strides = [1, 1]} : vector<16x128xf32> to vector<16x32xf32>
    %276 = arith.negf %275 : vector<16x32xf32>
    %277 = math.exp %276 : vector<16x32xf32>
    %cst_130 = arith.constant 1.000000e+00 : f32
    %278 = vector.broadcast %cst_130 : f32 to vector<16x32xf32>
    %279 = arith.addf %278, %277 : vector<16x32xf32>
    %280 = arith.divf %278, %279 : vector<16x32xf32>
    %281 = arith.mulf %272, %253 : vector<16x32xf32>
    %282 = arith.mulf %266, %274 : vector<16x32xf32>
    %283 = arith.addf %281, %282 : vector<16x32xf32>
    %284 = math.tanh %283 : vector<16x32xf32>
    %285 = arith.mulf %280, %284 : vector<16x32xf32>
    %c0_131 = arith.constant 0 : index
    %c0_132 = arith.constant 0 : index
    %286 = vector.load %arg9[%c0_131, %c0_132] : memref<16x32xf32, #tpu.memory_space<vmem>>, vector<16x32xf32>
    tpu.vector_store %arg9[%c0_131, %c0_132], %285 {strides = array<i32>} : memref<16x32xf32, #tpu.memory_space<vmem>>, vector<16x32xf32>,
    %c0_133 = arith.constant 0 : index
    %c0_134 = arith.constant 0 : index
    %287 = vector.load %arg10[%c0_133, %c0_134] : memref<16x32xf32, #tpu.memory_space<vmem>>, vector<16x32xf32>
    tpu.vector_store %arg10[%c0_133, %c0_134], %283 {strides = array<i32>} : memref<16x32xf32, #tpu.memory_space<vmem>>, vector<16x32xf32>,
    %288 = arith.index_cast %c6_i32 : i32 to index
    %c0_135 = arith.constant 0 : index
    %c0_136 = arith.constant 0 : index
    %289 = vector.load %arg6[%288, %c0_135, %c0_136] : memref<8x16x32xf32, #tpu.memory_space<vmem>>, vector<1x16x32xf32>
    %290 = vector.shape_cast %289 : vector<1x16x32xf32> to vector<16x32xf32>
    %291 = vector.shape_cast %285 : vector<16x32xf32> to vector<1x16x32xf32>
    tpu.vector_store %arg6[%288, %c0_135, %c0_136], %291 {strides = array<i32>} : memref<8x16x32xf32, #tpu.memory_space<vmem>>, vector<1x16x32xf32>,
    %c7_i32 = arith.constant 7 : i32
    %c0_137 = arith.constant 0 : index
    %c0_138 = arith.constant 0 : index
    %292 = vector.load %arg9[%c0_137, %c0_138] : memref<16x32xf32, #tpu.memory_space<vmem>>, vector<16x32xf32>
    %c0_139 = arith.constant 0 : index
    %c0_140 = arith.constant 0 : index
    %293 = vector.load %arg10[%c0_139, %c0_140] : memref<16x32xf32, #tpu.memory_space<vmem>>, vector<16x32xf32>
    %294 = arith.index_cast %c7_i32 : i32 to index
    %c0_141 = arith.constant 0 : index
    %c0_142 = arith.constant 0 : index
    %295 = vector.load %arg11[%294, %c0_141, %c0_142] : memref<8x16x128xf32, #tpu.memory_space<vmem>>, vector<1x16x128xf32>
    %296 = vector.shape_cast %295 : vector<1x16x128xf32> to vector<16x128xf32>
    %297 = arith.truncf %292 : vector<16x32xf32> to vector<16x32xbf16>
    %c0_143 = arith.constant 0 : index
    %c0_144 = arith.constant 0 : index
    %298 = vector.load %arg4[%c0_143, %c0_144] : memref<32x128xbf16, #tpu.memory_space<vmem>>, vector<32x128xbf16>
    %cst_145 = arith.constant dense<0.000000e+00> : vector<16x128xf32>
    %299 = tpu.matmul %297, %298, %cst_145 {dimension_numbers = #tpu.dot_dimension_numbers<[1], [0], [0], [1], [0, 0, 1, 1], [], []>} : vector<16x32xbf16>, vector<32x128xbf16>, vector<16x128xf32> -> vector<16x128xf32>
    %300 = arith.addf %296, %299 : vector<16x128xf32>
    %301 = vector.extract_strided_slice %300 {offsets = [0, 0], sizes = [16, 32], strides = [1, 1]} : vector<16x128xf32> to vector<16x32xf32>
    %302 = arith.negf %301 : vector<16x32xf32>
    %303 = math.exp %302 : vector<16x32xf32>
    %cst_146 = arith.constant 1.000000e+00 : f32
    %304 = vector.broadcast %cst_146 : f32 to vector<16x32xf32>
    %305 = arith.addf %304, %303 : vector<16x32xf32>
    %306 = arith.divf %304, %305 : vector<16x32xf32>
    %307 = vector.extract_strided_slice %300 {offsets = [0, 32], sizes = [16, 32], strides = [1, 1]} : vector<16x128xf32> to vector<16x32xf32>
    %308 = arith.negf %307 : vector<16x32xf32>
    %309 = math.exp %308 : vector<16x32xf32>
    %cst_147 = arith.constant 1.000000e+00 : f32
    %310 = vector.broadcast %cst_147 : f32 to vector<16x32xf32>
    %311 = arith.addf %310, %309 : vector<16x32xf32>
    %312 = arith.divf %310, %311 : vector<16x32xf32>
    %313 = vector.extract_strided_slice %300 {offsets = [0, 64], sizes = [16, 32], strides = [1, 1]} : vector<16x128xf32> to vector<16x32xf32>
    %314 = math.tanh %313 : vector<16x32xf32>
    %315 = vector.extract_strided_slice %300 {offsets = [0, 96], sizes = [16, 32], strides = [1, 1]} : vector<16x128xf32> to vector<16x32xf32>
    %316 = arith.negf %315 : vector<16x32xf32>
    %317 = math.exp %316 : vector<16x32xf32>
    %cst_148 = arith.constant 1.000000e+00 : f32
    %318 = vector.broadcast %cst_148 : f32 to vector<16x32xf32>
    %319 = arith.addf %318, %317 : vector<16x32xf32>
    %320 = arith.divf %318, %319 : vector<16x32xf32>
    %321 = arith.mulf %312, %293 : vector<16x32xf32>
    %322 = arith.mulf %306, %314 : vector<16x32xf32>
    %323 = arith.addf %321, %322 : vector<16x32xf32>
    %324 = math.tanh %323 : vector<16x32xf32>
    %325 = arith.mulf %320, %324 : vector<16x32xf32>
    %c0_149 = arith.constant 0 : index
    %c0_150 = arith.constant 0 : index
    %326 = vector.load %arg9[%c0_149, %c0_150] : memref<16x32xf32, #tpu.memory_space<vmem>>, vector<16x32xf32>
    tpu.vector_store %arg9[%c0_149, %c0_150], %325 {strides = array<i32>} : memref<16x32xf32, #tpu.memory_space<vmem>>, vector<16x32xf32>,
    %c0_151 = arith.constant 0 : index
    %c0_152 = arith.constant 0 : index
    %327 = vector.load %arg10[%c0_151, %c0_152] : memref<16x32xf32, #tpu.memory_space<vmem>>, vector<16x32xf32>
    tpu.vector_store %arg10[%c0_151, %c0_152], %323 {strides = array<i32>} : memref<16x32xf32, #tpu.memory_space<vmem>>, vector<16x32xf32>,
    %328 = arith.index_cast %c7_i32 : i32 to index
    %c0_153 = arith.constant 0 : index
    %c0_154 = arith.constant 0 : index
    %329 = vector.load %arg6[%328, %c0_153, %c0_154] : memref<8x16x32xf32, #tpu.memory_space<vmem>>, vector<1x16x32xf32>
    %330 = vector.shape_cast %329 : vector<1x16x32xf32> to vector<16x32xf32>
    %331 = vector.shape_cast %325 : vector<16x32xf32> to vector<1x16x32xf32>
    tpu.vector_store %arg6[%328, %c0_153, %c0_154], %331 {strides = array<i32>} : memref<8x16x32xf32, #tpu.memory_space<vmem>>, vector<1x16x32xf32>,
    %c8_i32 = arith.constant 8 : i32
    %c0_i32_155 = arith.constant 0 : i32
    %332 = arith.cmpi eq, %arg1, %c0_i32_155 : i32
    %333 = arith.extui %332 : i1 to i32
    %c0_i32_156 = arith.constant 0 : i32
    %334 = arith.cmpi ne, %333, %c0_i32_156 : i32
    scf.if %334 {
      %c0_157 = arith.constant 0 : index
      %c0_158 = arith.constant 0 : index
      %335 = vector.load %arg9[%c0_157, %c0_158] : memref<16x32xf32, #tpu.memory_space<vmem>>, vector<16x32xf32>
      %c0_159 = arith.constant 0 : index
      %c0_160 = arith.constant 0 : index
      %336 = vector.load %arg7[%c0_159, %c0_160] : memref<16x32xf32, #tpu.memory_space<vmem>>, vector<16x32xf32>
      tpu.vector_store %arg7[%c0_159, %c0_160], %335 {strides = array<i32>} : memref<16x32xf32, #tpu.memory_space<vmem>>, vector<16x32xf32>,
      %c0_161 = arith.constant 0 : index
      %c0_162 = arith.constant 0 : index
      %337 = vector.load %arg10[%c0_161, %c0_162] : memref<16x32xf32, #tpu.memory_space<vmem>>, vector<16x32xf32>
      %c0_163 = arith.constant 0 : index
      %c0_164 = arith.constant 0 : index
      %338 = vector.load %arg8[%c0_163, %c0_164] : memref<16x32xf32, #tpu.memory_space<vmem>>, vector<16x32xf32>
      tpu.vector_store %arg8[%c0_163, %c0_164], %337 {strides = array<i32>} : memref<16x32xf32, #tpu.memory_space<vmem>>, vector<16x32xf32>,
    } else {
    }
    return
  }
  func.func @transform_0(%arg0: i32, %arg1: i32) -> (i32, i32, i32) {
    %c0_i32 = arith.constant 0 : i32
    %c0_i32_0 = arith.constant 0 : i32
    return %arg1, %arg0, %c0_i32 : i32, i32, i32
  }
  func.func @transform_1(%arg0: i32, %arg1: i32) -> (i32, i32) {
    %c0_i32 = arith.constant 0 : i32
    %c0_i32_0 = arith.constant 0 : i32
    %c0_i32_1 = arith.constant 0 : i32
    return %c0_i32, %c0_i32_0 : i32, i32
  }
  func.func @transform_2(%arg0: i32, %arg1: i32) -> (i32, i32) {
    %c0_i32 = arith.constant 0 : i32
    %c0_i32_0 = arith.constant 0 : i32
    %c0_i32_1 = arith.constant 0 : i32
    return %c0_i32, %c0_i32_0 : i32, i32
  }
  func.func @transform_3(%arg0: i32, %arg1: i32) -> (i32, i32) {
    %c0_i32 = arith.constant 0 : i32
    %c0_i32_0 = arith.constant 0 : i32
    %c0_i32_1 = arith.constant 0 : i32
    return %c0_i32, %c0_i32_0 : i32, i32
  }
  func.func @transform_4(%arg0: i32, %arg1: i32) -> (i32, i32, i32) {
    %c0_i32 = arith.constant 0 : i32
    %c0_i32_0 = arith.constant 0 : i32
    return %arg1, %arg0, %c0_i32 : i32, i32, i32
  }
  func.func @transform_5(%arg0: i32, %arg1: i32) -> (i32, i32) {
    %c0_i32 = arith.constant 0 : i32
    %c0_i32_0 = arith.constant 0 : i32
    return %arg0, %c0_i32 : i32, i32
  }
  func.func @transform_6(%arg0: i32, %arg1: i32) -> (i32, i32) {
    %c0_i32 = arith.constant 0 : i32
    %c0_i32_0 = arith.constant 0 : i32
    return %arg0, %c0_i32 : i32, i32
  }
}

</mosaic_0001>

<llo_original>
// kernel: encoder_forward.2
$region0: #{encoder_forward.2}
  #allocation0 [shape = 'u32[]', space=smem, size = 0x4, offset = 0x4, fixed_abs, tag = 'smem constant byte address 0x4 - core index']
  #allocation1 [shape = 'u32[144,128]{1,0:T(1,128)}', space=vmem, size = 0x12000, scoped, tag = 'internal scratch']
  #allocation2 [shape = 'f32[16,32]{1,0:T(8,128)}', space=vmem, size = 0x2000, scoped, tag = 'scratch operand']
  #allocation3 [shape = 'f32[16,32]{1,0:T(8,128)}', space=vmem, size = 0x2000, scoped, tag = 'scratch operand']
  #allocation4 [shape = 'f32[8,16,128]{2,1,0:T(8,128)}', space=vmem, size = 0x10000, scoped, tag = 'scratch operand']
  %s0 = inlined_call_operand.vmem [shape: bf16[8,16,16], index: 0, kind: input, shape index: {}]
  %s1 = inlined_call_operand.vmem [shape: bf16[16,128], index: 1, kind: input, shape index: {}]
  %s2 = inlined_call_operand.vmem [shape: bf16[32,128], index: 2, kind: input, shape index: {}]
  %s3 = inlined_call_operand.vmem [shape: f32[1,128], index: 3, kind: input, shape index: {}]
  %s4 = inlined_call_operand.vmem [shape: bf16[8,16,32], index: 4, kind: output, shape index: {0}]
  %s5 = inlined_call_operand.vmem [shape: f32[16,32], index: 5, kind: output, shape index: {1}]
  %s6 = inlined_call_operand.vmem [shape: f32[16,32], index: 6, kind: output, shape index: {2}]
  %7 = xla_tuple %s4, %s5, %s6
  %s8 = sld [smem:[#allocation0]]
  $region50: #{encoder_forward.2} parent=0
    _
  %s10 = ssub.s32 1, %s8
  %s11 = scalar_select 0, %s10, %s8
  // Predicated region
  $region2: #{encoder_forward.2} parent=0 // pred_check
    _
  $region3: #{encoder_forward.2} parent=0 // pred_check_branch
    %13 = sbr.rel (0) target = $region5
  $region4: #{encoder_forward.2} parent=0 // pred_region
    _
  $region5: #{encoder_forward.2} parent=0 // pred_fallthru
    _
  // Predicated region
  $region6: #{encoder_forward.2} parent=0 // pred_check
    _
  $region7: #{encoder_forward.2} parent=0 // pred_check_branch
    %15 = sbr.rel (0) target = $region9
  $region8: #{encoder_forward.2} parent=0 // pred_region
    _
  $region9: #{encoder_forward.2} parent=0 // pred_fallthru
    _
  // Predicated region
  $region10: #{encoder_forward.2} parent=0 // pred_check
    _
  $region11: #{encoder_forward.2} parent=0 // pred_check_branch
    %17 = sbr.rel (0) target = $region13
  $region12: #{encoder_forward.2} parent=0 // pred_region
    _
  $region13: #{encoder_forward.2} parent=0 // pred_fallthru
    _
  // Predicated region
  $region14: #{encoder_forward.2} parent=0 // pred_check
    _
  $region15: #{encoder_forward.2} parent=0 // pred_check_branch
    %19 = sbr.rel (0) target = $region17
  $region16: #{encoder_forward.2} parent=0 // pred_region
    _
  $region17: #{encoder_forward.2} parent=0 // pred_fallthru
    _
  %p21 = scmp.eq.s32.totalorder 0, 0
  // Predicated region
  $region18: #{encoder_forward.2} parent=0 // pred_check
    %p22 = pneg %p21
  $region19: #{encoder_forward.2} parent=0 // pred_check_branch
    %24 = sbr.rel (%p22) target = $region21
  $region20: #{encoder_forward.2} parent=0 // pred_region
    %vm25 = vcmask 261120
    %26 = vst.msk [vmem:[#allocation2] sm:$0xff] %vm25, 0.0
    %27 = vst.msk [vmem:[#allocation2 + $0x8] sm:$0xff] %vm25, 0.0
    %28 = vst.msk [vmem:[#allocation3] sm:$0xff] %vm25, 0.0
    %29 = vst.msk [vmem:[#allocation3 + $0x8] sm:$0xff] %vm25, 0.0
  $region21: #{encoder_forward.2} parent=0 // pred_fallthru
    _
  %v30 = vld [vmem:[%s0] sm:$0xf]
  %v31 = vld [vmem:[%s0 + $0x4] sm:$0xf]
  %v32 = vld [vmem:[%s0 + $0x8] sm:$0xf]
  %v33 = vld [vmem:[%s0 + $0xc] sm:$0xf]
  %v34 = vld [vmem:[%s0 + $0x10] sm:$0xf]
  %v35 = vld [vmem:[%s0 + $0x14] sm:$0xf]
  %v36 = vld [vmem:[%s0 + $0x18] sm:$0xf]
  %v37 = vld [vmem:[%s0 + $0x1c] sm:$0xf]
  %v38 = vld [vmem:[%s0 + $0x20] sm:$0xf]
  %v39 = vld [vmem:[%s0 + $0x24] sm:$0xf]
  %v40 = vld [vmem:[%s0 + $0x28] sm:$0xf]
  %v41 = vld [vmem:[%s0 + $0x2c] sm:$0xf]
  %v42 = vld [vmem:[%s0 + $0x30] sm:$0xf]
  %v43 = vld [vmem:[%s0 + $0x34] sm:$0xf]
  %v44 = vld [vmem:[%s0 + $0x38] sm:$0xf]
  %v45 = vld [vmem:[%s0 + $0x3c] sm:$0xf]
  %v46 = vld [vmem:[%s1] sm:$0xf]
  %v47 = vld [vmem:[%s1 + $0x4] sm:$0xf]
  %v48 = vld [vmem:[%s3] sm:$0x1]
  %v50 = vlaneseq
  %v51 = vshrl.u32 %v50, 7
  %v52 = vsub.s32 0, %v51
  %v53 = vrot.slane %v48, %v52
  %v71 = vunpack.c.l.b16 %v30
  %v72 = vunpack.c.l.b16 %v31
  %v73 = vunpack.c.l.b16 %v32
  %v74 = vunpack.c.l.b16 %v33
  %v75 = vunpack.c.l.b16 %v34
  %v76 = vunpack.c.l.b16 %v35
  %v77 = vunpack.c.l.b16 %v36
  %v78 = vunpack.c.l.b16 %v37
  %v79 = vunpack.c.l.b16 %v38
  %v80 = vunpack.c.l.b16 %v39
  %v81 = vunpack.c.l.b16 %v40
  %v82 = vunpack.c.l.b16 %v41
  %v83 = vunpack.c.l.b16 %v42
  %v84 = vunpack.c.l.b16 %v43
  %v85 = vunpack.c.l.b16 %v44
  %v86 = vunpack.c.l.b16 %v45
  %v87 = vpack.c.b16 %v72, %v71
  %v88 = vpack.c.b16 %v74, %v73
  %v89 = vpack.c.b16 %v76, %v75
  %v90 = vpack.c.b16 %v78, %v77
  %v91 = vpack.c.b16 %v80, %v79
  %v92 = vpack.c.b16 %v82, %v81
  %v93 = vpack.c.b16 %v84, %v83
  %v94 = vpack.c.b16 %v86, %v85
  %v97 = vunpack.c.l.b16 %v46
  %v98 = vunpack.c.l.b16 %v47
  %v99 = vpack.c.b16 %v98, %v97
  %vm101 = vcmask 130048
  %v103 = vsel %vm101, %v87, 0
  %v106 = vsel %vm101, %v88, 0
  %v109 = vsel %vm101, %v89, 0
  %v112 = vsel %vm101, %v90, 0
  %v115 = vsel %vm101, %v91, 0
  %v118 = vsel %vm101, %v92, 0
  %v121 = vsel %vm101, %v93, 0
  %v124 = vsel %vm101, %v94, 0
  %126 = vmatprep.subr.bf16.mxu0 0
  %127 = vmatpush1.bf16.msra.mxu0 %v99
  %128 = vmatprep.subr.bf16.mxu0 0
  %129 = vmatpush1.bf16.msra.mxu0 0
  %130 = vmatprep.subr.bf16.mxu0 0
  %131 = vmatpush1.bf16.msra.mxu0 0
  %132 = vmatprep.subr.bf16.mxu0 0
  %133 = vmatpush1.bf16.msra.mxu0 0
  %134 = vmatprep.subr.bf16.mxu0 0
  %135 = vmatpush1.bf16.msra.mxu0 0
  %136 = vmatprep.subr.bf16.mxu0 0
  %137 = vmatpush1.bf16.msra.mxu0 0
  %138 = vmatprep.subr.bf16.mxu0 0
  %139 = vmatpush1.bf16.msra.mxu0 0
  %140 = vmatprep.subr.bf16.mxu0 0
  %141 = vmatpush1.bf16.msra.mxu0 0
  %142 = vmatprep.subr.bf16.mxu0 0
  %143 = vmatpush1.bf16.msra.mxu0 0
  %144 = vmatprep.subr.bf16.mxu0 0
  %145 = vmatpush1.bf16.msra.mxu0 0
  %146 = vmatprep.subr.bf16.mxu0 0
  %147 = vmatpush1.bf16.msra.mxu0 0
  %148 = vmatprep.subr.bf16.mxu0 0
  %149 = vmatpush1.bf16.msra.mxu0 0
  %150 = vmatprep.subr.bf16.mxu0 0
  %151 = vmatpush1.bf16.msra.mxu0 0
  %152 = vmatprep.subr.bf16.mxu0 0
  %153 = vmatpush1.bf16.msra.mxu0 0
  %154 = vmatprep.subr.bf16.mxu0 0
  %155 = vmatpush1.bf16.msra.mxu0 0
  %156 = vmatprep.subr.bf16.mxu0 0
  %157 = vmatpush1.bf16.msra.mxu0 0
  %158 = vmatprep.mubr.bf16.mxu0 0
  %159 = vmatmul.mubr.bf16.gmra.mrb[0].mxu0 %v103
  %v160 = vpop.f32.mrb[0].mxu0
  %v161 = vadd.f32 %v53, %v160
  %v162 = vpop.f32.mrb[0].mxu0
  %v163 = vpop.f32.mrb[0].mxu0
  %v164 = vadd.f32 %v53, %v163
  %v165 = vpop.f32.mrb[0].mxu0
  %166 = vmatprep.mubr.bf16.mxu0 0
  %167 = vmatmul.mubr.bf16.gmra.mrb[0].mxu0 %v106
  %v168 = vpop.f32.mrb[0].mxu0
  %v169 = vadd.f32 %v53, %v168
  %v170 = vpop.f32.mrb[0].mxu0
  %v171 = vpop.f32.mrb[0].mxu0
  %v172 = vadd.f32 %v53, %v171
  %v173 = vpop.f32.mrb[0].mxu0
  %174 = vmatprep.mubr.bf16.mxu0 0
  %175 = vmatmul.mubr.bf16.gmra.mrb[0].mxu0 %v109
  %v176 = vpop.f32.mrb[0].mxu0
  %v177 = vadd.f32 %v53, %v176
  %v178 = vpop.f32.mrb[0].mxu0
  %v179 = vpop.f32.mrb[0].mxu0
  %v180 = vadd.f32 %v53, %v179
  %v181 = vpop.f32.mrb[0].mxu0
  %182 = vmatprep.mubr.bf16.mxu0 0
  %183 = vmatmul.mubr.bf16.gmra.mrb[0].mxu0 %v112
  %v184 = vpop.f32.mrb[0].mxu0
  %v185 = vadd.f32 %v53, %v184
  %v186 = vpop.f32.mrb[0].mxu0
  %v187 = vpop.f32.mrb[0].mxu0
  %v188 = vadd.f32 %v53, %v187
  %v189 = vpop.f32.mrb[0].mxu0
  %190 = vmatprep.mubr.bf16.mxu0 0
  %191 = vmatmul.mubr.bf16.gmra.mrb[0].mxu0 %v115
  %v192 = vpop.f32.mrb[0].mxu0
  %v193 = vadd.f32 %v53, %v192
  %v194 = vpop.f32.mrb[0].mxu0
  %v195 = vpop.f32.mrb[0].mxu0
  %v196 = vadd.f32 %v53, %v195
  %v197 = vpop.f32.mrb[0].mxu0
  %198 = vmatprep.mubr.bf16.mxu0 0
  %199 = vmatmul.mubr.bf16.gmra.mrb[0].mxu0 %v118
  %v200 = vpop.f32.mrb[0].mxu0
  %v201 = vadd.f32 %v53, %v200
  %v202 = vpop.f32.mrb[0].mxu0
  %v203 = vpop.f32.mrb[0].mxu0
  %v204 = vadd.f32 %v53, %v203
  %v205 = vpop.f32.mrb[0].mxu0
  %206 = vmatprep.mubr.bf16.mxu0 0
  %207 = vmatmul.mubr.bf16.gmra.mrb[0].mxu0 %v121
  %v208 = vpop.f32.mrb[0].mxu0
  %v209 = vadd.f32 %v53, %v208
  %v210 = vpop.f32.mrb[0].mxu0
  %v211 = vpop.f32.mrb[0].mxu0
  %v212 = vadd.f32 %v53, %v211
  %v213 = vpop.f32.mrb[0].mxu0
  %214 = vmatprep.mubr.bf16.mxu0 0
  %215 = vmatmul.mubr.bf16.gmra.mrb[0].mxu0 %v124
  %v216 = vpop.f32.mrb[0].mxu0
  %v217 = vadd.f32 %v53, %v216
  %v218 = vpop.f32.mrb[0].mxu0
  %v219 = vpop.f32.mrb[0].mxu0
  %v220 = vadd.f32 %v53, %v219
  %v221 = vpop.f32.mrb[0].mxu0
  %222 = vdwg.mxu0
  %223 = vst [vmem:[#allocation4] sm:$0xff] %v161
  %224 = vst [vmem:[#allocation4 + $0x8] sm:$0xff] %v164
  %225 = vst [vmem:[#allocation4 + $0x10] sm:$0xff] %v169
  %226 = vst [vmem:[#allocation4 + $0x18] sm:$0xff] %v172
  %227 = vst [vmem:[#allocation4 + $0x20] sm:$0xff] %v177
  %228 = vst [vmem:[#allocation4 + $0x28] sm:$0xff] %v180
  %229 = vst [vmem:[#allocation4 + $0x30] sm:$0xff] %v185
  %230 = vst [vmem:[#allocation4 + $0x38] sm:$0xff] %v188
  %231 = vst [vmem:[#allocation4 + $0x40] sm:$0xff] %v193
  %232 = vst [vmem:[#allocation4 + $0x48] sm:$0xff] %v196
  %233 = vst [vmem:[#allocation4 + $0x50] sm:$0xff] %v201
  %234 = vst [vmem:[#allocation4 + $0x58] sm:$0xff] %v204
  %235 = vst [vmem:[#allocation4 + $0x60] sm:$0xff] %v209
  %236 = vst [vmem:[#allocation4 + $0x68] sm:$0xff] %v212
  %237 = vst [vmem:[#allocation4 + $0x70] sm:$0xff] %v217
  %238 = vst [vmem:[#allocation4 + $0x78] sm:$0xff] %v220
  %v239 = vld [vmem:[#allocation2] sm:$0xff]
  %v240 = vld [vmem:[#allocation2 + $0x8] sm:$0xff]
  %v241 = vld [vmem:[#allocation3] sm:$0xff]
  %v242 = vld [vmem:[#allocation3 + $0x8] sm:$0xff]
  %v243 = vld [vmem:[#allocation4] sm:$0xff]
  %v244 = vld [vmem:[#allocation4 + $0x8] sm:$0xff]
  %v245 = vpack.c.bf16 %v240, %v239
  %v246 = vld [vmem:[%s2] sm:$0xf]
  %v247 = vld [vmem:[%s2 + $0x4] sm:$0xf]
  %v248 = vld [vmem:[%s2 + $0x8] sm:$0xf]
  %v249 = vld [vmem:[%s2 + $0xc] sm:$0xf]
  %v254 = vunpack.c.l.b16 %v246
  %v255 = vunpack.c.l.b16 %v247
  %v256 = vunpack.c.l.b16 %v248
  %v257 = vunpack.c.l.b16 %v249
  %v258 = vpack.c.b16 %v255, %v254
  %v259 = vpack.c.b16 %v257, %v256
  %vm262 = vcmask 261120
  %v264 = vsel %vm262, %v245, 0
  %266 = vmatprep.subr.bf16.mxu0 0
  %267 = vmatpush1.bf16.msra.mxu0 %v258
  %268 = vmatprep.subr.bf16.mxu0 0
  %269 = vmatpush1.bf16.msra.mxu0 %v259
  %270 = vmatprep.subr.bf16.mxu0 0
  %271 = vmatpush1.bf16.msra.mxu0 0
  %272 = vmatprep.subr.bf16.mxu0 0
  %273 = vmatpush1.bf16.msra.mxu0 0
  %274 = vmatprep.subr.bf16.mxu0 0
  %275 = vmatpush1.bf16.msra.mxu0 0
  %276 = vmatprep.subr.bf16.mxu0 0
  %277 = vmatpush1.bf16.msra.mxu0 0
  %278 = vmatprep.subr.bf16.mxu0 0
  %279 = vmatpush1.bf16.msra.mxu0 0
  %280 = vmatprep.subr.bf16.mxu0 0
  %281 = vmatpush1.bf16.msra.mxu0 0
  %282 = vmatprep.subr.bf16.mxu0 0
  %283 = vmatpush1.bf16.msra.mxu0 0
  %284 = vmatprep.subr.bf16.mxu0 0
  %285 = vmatpush1.bf16.msra.mxu0 0
  %286 = vmatprep.subr.bf16.mxu0 0
  %287 = vmatpush1.bf16.msra.mxu0 0
  %288 = vmatprep.subr.bf16.mxu0 0
  %289 = vmatpush1.bf16.msra.mxu0 0
  %290 = vmatprep.subr.bf16.mxu0 0
  %291 = vmatpush1.bf16.msra.mxu0 0
  %292 = vmatprep.subr.bf16.mxu0 0
  %293 = vmatpush1.bf16.msra.mxu0 0
  %294 = vmatprep.subr.bf16.mxu0 0
  %295 = vmatpush1.bf16.msra.mxu0 0
  %296 = vmatprep.subr.bf16.mxu0 0
  %297 = vmatpush1.bf16.msra.mxu0 0
  %298 = vmatprep.mubr.bf16.mxu0 0
  %299 = vmatmul.mubr.bf16.gmra.mrb[0].mxu0 %v264
  %v300 = vpop.f32.mrb[0].mxu0
  %v301 = vadd.f32 0.0, %v300
  %v302 = vpop.f32.mrb[0].mxu0
  %v303 = vpop.f32.mrb[0].mxu0
  %v304 = vadd.f32 0.0, %v303
  %v305 = vpop.f32.mrb[0].mxu0
  %306 = vdwg.mxu0
  %v307 = vadd.f32 %v243, %v301
  %v308 = vadd.f32 %v244, %v304
  %v309 = vxor.u32 %v307, 2147483648
  %v310 = vxor.u32 %v308, 2147483648
  %v311 = vmul.f32 %v309, 1.442695
  %v312 = vpow.pop %v311
  %v313 = vmul.f32 %v310, 1.442695
  %v314 = vpow.pop %v313
  %v315 = vadd.f32 %v312, 1.0
  %v316 = vadd.f32 %v314, 1.0
  %v317 = vrcp.pop %v315
  %v318 = vmul.f32 1.0, %v317
  %v319 = vrcp.pop %v316
  %v320 = vmul.f32 1.0, %v319
  %v321 = vtanh.pop %v307
  %v322 = vtanh.pop %v308
  %325 = vrot.lane.b32.xlu0 %v241, 32
  %v326 = vpop.permute.xlu0 %325
  %327 = vrot.lane.b32.xlu0 %v242, 32
  %v328 = vpop.permute.xlu0 %327
  %v331 = vmul.f32 %v318, %v326
  %v332 = vmul.f32 %v320, %v328
  %335 = vrot.lane.b32.xlu0 %v321, 64
  %v336 = vpop.permute.xlu0 %335
  %337 = vrot.lane.b32.xlu0 %v322, 64
  %v338 = vpop.permute.xlu0 %337
  %v341 = vmul.f32 %v318, %v336
  %v342 = vmul.f32 %v320, %v338
  %345 = vrot.lane.b32.xlu0 %v341, 32
  %v346 = vpop.permute.xlu0 %345
  %347 = vrot.lane.b32.xlu0 %v342, 32
  %v348 = vpop.permute.xlu0 %347
  %v351 = vadd.f32 %v331, %v346
  %v352 = vadd.f32 %v332, %v348
  %v353 = vtanh.pop %v351
  %v354 = vtanh.pop %v352
  %357 = vrot.lane.b32.xlu0 %v353, 64
  %v358 = vpop.permute.xlu0 %357
  %359 = vrot.lane.b32.xlu0 %v354, 64
  %v360 = vpop.permute.xlu0 %359
  %v363 = vmul.f32 %v318, %v358
  %v364 = vmul.f32 %v320, %v360
  %367 = vrot.lane.b32.xlu0 %v363, 32
  %v368 = vpop.permute.xlu0 %367
  %369 = vrot.lane.b32.xlu0 %v364, 32
  %v370 = vpop.permute.xlu0 %369
  %373 = vst.msk [vmem:[#allocation2] sm:$0xff] %vm262, %v368
  %374 = vst.msk [vmem:[#allocation2 + $0x8] sm:$0xff] %vm262, %v370
  %377 = vrot.lane.b32.xlu0 %v351, 96
  %v378 = vpop.permute.xlu0 %377
  %379 = vrot.lane.b32.xlu0 %v352, 96
  %v380 = vpop.permute.xlu0 %379
  %383 = vst.msk [vmem:[#allocation3] sm:$0xff] %vm262, %v378
  %384 = vst.msk [vmem:[#allocation3 + $0x8] sm:$0xff] %vm262, %v380
  %v385 = vpack.c.bf16 %v364, %v363
  %v387 = vunpack.c.l.b16 %v385
  %v388 = vunpack.c.h.b16 %v385
  %v389 = vpack.c.b16 %v387, %v387
  %v390 = vpack.c.b16 %v388, %v388
  %391 = vrot.lane.b32.xlu0 %v389, 32
  %v392 = vpop.permute.xlu0 %391
  %393 = vrot.lane.b32.xlu0 %v390, 32
  %v394 = vpop.permute.xlu0 %393
  %vm397 = vcmask 257024
  %398 = vst.msk [vmem:[%s4] sm:$0xf] %vm397, %v392
  %399 = vst.msk [vmem:[%s4 + $0x4] sm:$0xf] %vm397, %v394
  %v400 = vld [vmem:[#allocation2] sm:$0xff]
  %v401 = vld [vmem:[#allocation2 + $0x8] sm:$0xff]
  %v402 = vld [vmem:[#allocation3] sm:$0xff]
  %v403 = vld [vmem:[#allocation3 + $0x8] sm:$0xff]
  %s404 = scalar_lea.vmem [#allocation4], 16
  %v405 = vld [vmem:[%s404] sm:$0xff]
  %v406 = vld [vmem:[%s404 + $0x8] sm:$0xff]
  %v407 = vpack.c.bf16 %v401, %v400
  %v408 = vld [vmem:[%s2] sm:$0xf]
  %v409 = vld [vmem:[%s2 + $0x4] sm:$0xf]
  %v410 = vld [vmem:[%s2 + $0x8] sm:$0xf]
  %v411 = vld [vmem:[%s2 + $0xc] sm:$0xf]
  %v416 = vunpack.c.l.b16 %v408
  %v417 = vunpack.c.l.b16 %v409
  %v418 = vunpack.c.l.b16 %v410
  %v419 = vunpack.c.l.b16 %v411
  %v420 = vpack.c.b16 %v417, %v416
  %v421 = vpack.c.b16 %v419, %v418
  %v425 = vsel %vm262, %v407, 0
  %427 = vmatprep.subr.bf16.mxu0 0
  %428 = vmatpush1.bf16.msra.mxu0 %v420
  %429 = vmatprep.subr.bf16.mxu0 0
  %430 = vmatpush1.bf16.msra.mxu0 %v421
  %431 = vmatprep.subr.bf16.mxu0 0
  %432 = vmatpush1.bf16.msra.mxu0 0
  %433 = vmatprep.subr.bf16.mxu0 0
  %434 = vmatpush1.bf16.msra.mxu0 0
  %435 = vmatprep.subr.bf16.mxu0 0
  %436 = vmatpush1.bf16.msra.mxu0 0
  %437 = vmatprep.subr.bf16.mxu0 0
  %438 = vmatpush1.bf16.msra.mxu0 0
  %439 = vmatprep.subr.bf16.mxu0 0
  %440 = vmatpush1.bf16.msra.mxu0 0
  %441 = vmatprep.subr.bf16.mxu0 0
  %442 = vmatpush1.bf16.msra.mxu0 0
  %443 = vmatprep.subr.bf16.mxu0 0
  %444 = vmatpush1.bf16.msra.mxu0 0
  %445 = vmatprep.subr.bf16.mxu0 0
  %446 = vmatpush1.bf16.msra.mxu0 0
  %447 = vmatprep.subr.bf16.mxu0 0
  %448 = vmatpush1.bf16.msra.mxu0 0
  %449 = vmatprep.subr.bf16.mxu0 0
  %450 = vmatpush1.bf16.msra.mxu0 0
  %451 = vmatprep.subr.bf16.mxu0 0
  %452 = vmatpush1.bf16.msra.mxu0 0
  %453 = vmatprep.subr.bf16.mxu0 0
  %454 = vmatpush1.bf16.msra.mxu0 0
  %455 = vmatprep.subr.bf16.mxu0 0
  %456 = vmatpush1.bf16.msra.mxu0 0
  %457 = vmatprep.subr.bf16.mxu0 0
  %458 = vmatpush1.bf16.msra.mxu0 0
  %459 = vmatprep.mubr.bf16.mxu0 0
  %460 = vmatmul.mubr.bf16.gmra.mrb[0].mxu0 %v425
  %v461 = vpop.f32.mrb[0].mxu0
  %v462 = vadd.f32 0.0, %v461
  %v463 = vpop.f32.mrb[0].mxu0
  %v464 = vpop.f32.mrb[0].mxu0
  %v465 = vadd.f32 0.0, %v464
  %v466 = vpop.f32.mrb[0].mxu0
  %467 = vdwg.mxu0
  %v468 = vadd.f32 %v405, %v462
  %v469 = vadd.f32 %v406, %v465
  %v470 = vxor.u32 %v468, 2147483648
  %v471 = vxor.u32 %v469, 2147483648
  %v472 = vmul.f32 %v470, 1.442695
  %v473 = vpow.pop %v472
  %v474 = vmul.f32 %v471, 1.442695
  %v475 = vpow.pop %v474
  %v476 = vadd.f32 %v473, 1.0
  %v477 = vadd.f32 %v475, 1.0
  %v478 = vrcp.pop %v476
  %v479 = vmul.f32 1.0, %v478
  %v480 = vrcp.pop %v477
  %v481 = vmul.f32 1.0, %v480
  %v482 = vtanh.pop %v468
  %v483 = vtanh.pop %v469
  %486 = vrot.lane.b32.xlu0 %v402, 32
  %v487 = vpop.permute.xlu0 %486
  %488 = vrot.lane.b32.xlu0 %v403, 32
  %v489 = vpop.permute.xlu0 %488
  %v492 = vmul.f32 %v479, %v487
  %v493 = vmul.f32 %v481, %v489
  %496 = vrot.lane.b32.xlu0 %v482, 64
  %v497 = vpop.permute.xlu0 %496
  %498 = vrot.lane.b32.xlu0 %v483, 64
  %v499 = vpop.permute.xlu0 %498
  %v502 = vmul.f32 %v479, %v497
  %v503 = vmul.f32 %v481, %v499
  %506 = vrot.lane.b32.xlu0 %v502, 32
  %v507 = vpop.permute.xlu0 %506
  %508 = vrot.lane.b32.xlu0 %v503, 32
  %v509 = vpop.permute.xlu0 %508
  %v512 = vadd.f32 %v492, %v507
  %v513 = vadd.f32 %v493, %v509
  %v514 = vtanh.pop %v512
  %v515 = vtanh.pop %v513
  %518 = vrot.lane.b32.xlu0 %v514, 64
  %v519 = vpop.permute.xlu0 %518
  %520 = vrot.lane.b32.xlu0 %v515, 64
  %v521 = vpop.permute.xlu0 %520
  %v524 = vmul.f32 %v479, %v519
  %v525 = vmul.f32 %v481, %v521
  %528 = vrot.lane.b32.xlu0 %v524, 32
  %v529 = vpop.permute.xlu0 %528
  %530 = vrot.lane.b32.xlu0 %v525, 32
  %v531 = vpop.permute.xlu0 %530
  %534 = vst.msk [vmem:[#allocation2] sm:$0xff] %vm262, %v529
  %535 = vst.msk [vmem:[#allocation2 + $0x8] sm:$0xff] %vm262, %v531
  %538 = vrot.lane.b32.xlu0 %v512, 96
  %v539 = vpop.permute.xlu0 %538
  %540 = vrot.lane.b32.xlu0 %v513, 96
  %v541 = vpop.permute.xlu0 %540
  %544 = vst.msk [vmem:[#allocation3] sm:$0xff] %vm262, %v539
  %545 = vst.msk [vmem:[#allocation3 + $0x8] sm:$0xff] %vm262, %v541
  %v546 = vpack.c.bf16 %v525, %v524
  %v548 = vunpack.c.l.b16 %v546
  %v549 = vunpack.c.h.b16 %v546
  %v550 = vpack.c.b16 %v548, %v548
  %v551 = vpack.c.b16 %v549, %v549
  %552 = vrot.lane.b32.xlu0 %v550, 32
  %v553 = vpop.permute.xlu0 %552
  %554 = vrot.lane.b32.xlu0 %v551, 32
  %v555 = vpop.permute.xlu0 %554
  %s558 = scalar_lea.vmem %s4, 8
  %559 = vst.msk [vmem:[%s558] sm:$0xf] %vm397, %v553
  %560 = vst.msk [vmem:[%s558 + $0x4] sm:$0xf] %vm397, %v555
  %v561 = vld [vmem:[#allocation2] sm:$0xff]
  %v562 = vld [vmem:[#allocation2 + $0x8] sm:$0xff]
  %v563 = vld [vmem:[#allocation3] sm:$0xff]
  %v564 = vld [vmem:[#allocation3 + $0x8] sm:$0xff]
  %s565 = scalar_lea.vmem [#allocation4], 32
  %v566 = vld [vmem:[%s565] sm:$0xff]
  %v567 = vld [vmem:[%s565 + $0x8] sm:$0xff]
  %v568 = vpack.c.bf16 %v562, %v561
  %v569 = vld [vmem:[%s2] sm:$0xf]
  %v570 = vld [vmem:[%s2 + $0x4] sm:$0xf]
  %v571 = vld [vmem:[%s2 + $0x8] sm:$0xf]
  %v572 = vld [vmem:[%s2 + $0xc] sm:$0xf]
  %v577 = vunpack.c.l.b16 %v569
  %v578 = vunpack.c.l.b16 %v570
  %v579 = vunpack.c.l.b16 %v571
  %v580 = vunpack.c.l.b16 %v572
  %v581 = vpack.c.b16 %v578, %v577
  %v582 = vpack.c.b16 %v580, %v579
  %v586 = vsel %vm262, %v568, 0
  %588 = vmatprep.subr.bf16.mxu0 0
  %589 = vmatpush1.bf16.msra.mxu0 %v581
  %590 = vmatprep.subr.bf16.mxu0 0
  %591 = vmatpush1.bf16.msra.mxu0 %v582
  %592 = vmatprep.subr.bf16.mxu0 0
  %593 = vmatpush1.bf16.msra.mxu0 0
  %594 = vmatprep.subr.bf16.mxu0 0
  %595 = vmatpush1.bf16.msra.mxu0 0
  %596 = vmatprep.subr.bf16.mxu0 0
  %597 = vmatpush1.bf16.msra.mxu0 0
  %598 = vmatprep.subr.bf16.mxu0 0
  %599 = vmatpush1.bf16.msra.mxu0 0
  %600 = vmatprep.subr.bf16.mxu0 0
  %601 = vmatpush1.bf16.msra.mxu0 0
  %602 = vmatprep.subr.bf16.mxu0 0
  %603 = vmatpush1.bf16.msra.mxu0 0
  %604 = vmatprep.subr.bf16.mxu0 0
  %605 = vmatpush1.bf16.msra.mxu0 0
  %606 = vmatprep.subr.bf16.mxu0 0
  %607 = vmatpush1.bf16.msra.mxu0 0
  %608 = vmatprep.subr.bf16.mxu0 0
  %609 = vmatpush1.bf16.msra.mxu0 0
  %610 = vmatprep.subr.bf16.mxu0 0
  %611 = vmatpush1.bf16.msra.mxu0 0
  %612 = vmatprep.subr.bf16.mxu0 0
  %613 = vmatpush1.bf16.msra.mxu0 0
  %614 = vmatprep.subr.bf16.mxu0 0
  %615 = vmatpush1.bf16.msra.mxu0 0
  %616 = vmatprep.subr.bf16.mxu0 0
  %617 = vmatpush1.bf16.msra.mxu0 0
  %618 = vmatprep.subr.bf16.mxu0 0
  %619 = vmatpush1.bf16.msra.mxu0 0
  %620 = vmatprep.mubr.bf16.mxu0 0
  %621 = vmatmul.mubr.bf16.gmra.mrb[0].mxu0 %v586
  %v622 = vpop.f32.mrb[0].mxu0
  %v623 = vadd.f32 0.0, %v622
  %v624 = vpop.f32.mrb[0].mxu0
  %v625 = vpop.f32.mrb[0].mxu0
  %v626 = vadd.f32 0.0, %v625
  %v627 = vpop.f32.mrb[0].mxu0
  %628 = vdwg.mxu0
  %v629 = vadd.f32 %v566, %v623
  %v630 = vadd.f32 %v567, %v626
  %v631 = vxor.u32 %v629, 2147483648
  %v632 = vxor.u32 %v630, 2147483648
  %v633 = vmul.f32 %v631, 1.442695
  %v634 = vpow.pop %v633
  %v635 = vmul.f32 %v632, 1.442695
  %v636 = vpow.pop %v635
  %v637 = vadd.f32 %v634, 1.0
  %v638 = vadd.f32 %v636, 1.0
  %v639 = vrcp.pop %v637
  %v640 = vmul.f32 1.0, %v639
  %v641 = vrcp.pop %v638
  %v642 = vmul.f32 1.0, %v641
  %v643 = vtanh.pop %v629
  %v644 = vtanh.pop %v630
  %647 = vrot.lane.b32.xlu0 %v563, 32
  %v648 = vpop.permute.xlu0 %647
  %649 = vrot.lane.b32.xlu0 %v564, 32
  %v650 = vpop.permute.xlu0 %649
  %v653 = vmul.f32 %v640, %v648
  %v654 = vmul.f32 %v642, %v650
  %657 = vrot.lane.b32.xlu0 %v643, 64
  %v658 = vpop.permute.xlu0 %657
  %659 = vrot.lane.b32.xlu0 %v644, 64
  %v660 = vpop.permute.xlu0 %659
  %v663 = vmul.f32 %v640, %v658
  %v664 = vmul.f32 %v642, %v660
  %667 = vrot.lane.b32.xlu0 %v663, 32
  %v668 = vpop.permute.xlu0 %667
  %669 = vrot.lane.b32.xlu0 %v664, 32
  %v670 = vpop.permute.xlu0 %669
  %v673 = vadd.f32 %v653, %v668
  %v674 = vadd.f32 %v654, %v670
  %v675 = vtanh.pop %v673
  %v676 = vtanh.pop %v674
  %679 = vrot.lane.b32.xlu0 %v675, 64
  %v680 = vpop.permute.xlu0 %679
  %681 = vrot.lane.b32.xlu0 %v676, 64
  %v682 = vpop.permute.xlu0 %681
  %v685 = vmul.f32 %v640, %v680
  %v686 = vmul.f32 %v642, %v682
  %689 = vrot.lane.b32.xlu0 %v685, 32
  %v690 = vpop.permute.xlu0 %689
  %691 = vrot.lane.b32.xlu0 %v686, 32
  %v692 = vpop.permute.xlu0 %691
  %695 = vst.msk [vmem:[#allocation2] sm:$0xff] %vm262, %v690
  %696 = vst.msk [vmem:[#allocation2 + $0x8] sm:$0xff] %vm262, %v692
  %699 = vrot.lane.b32.xlu0 %v673, 96
  %v700 = vpop.permute.xlu0 %699
  %701 = vrot.lane.b32.xlu0 %v674, 96
  %v702 = vpop.permute.xlu0 %701
  %705 = vst.msk [vmem:[#allocation3] sm:$0xff] %vm262, %v700
  %706 = vst.msk [vmem:[#allocation3 + $0x8] sm:$0xff] %vm262, %v702
  %v707 = vpack.c.bf16 %v686, %v685
  %v709 = vunpack.c.l.b16 %v707
  %v710 = vunpack.c.h.b16 %v707
  %v711 = vpack.c.b16 %v709, %v709
  %v712 = vpack.c.b16 %v710, %v710
  %713 = vrot.lane.b32.xlu0 %v711, 32
  %v714 = vpop.permute.xlu0 %713
  %715 = vrot.lane.b32.xlu0 %v712, 32
  %v716 = vpop.permute.xlu0 %715
  %s719 = scalar_lea.vmem %s4, 16
  %720 = vst.msk [vmem:[%s719] sm:$0xf] %vm397, %v714
  %721 = vst.msk [vmem:[%s719 + $0x4] sm:$0xf] %vm397, %v716
  %v722 = vld [vmem:[#allocation2] sm:$0xff]
  %v723 = vld [vmem:[#allocation2 + $0x8] sm:$0xff]
  %v724 = vld [vmem:[#allocation3] sm:$0xff]
  %v725 = vld [vmem:[#allocation3 + $0x8] sm:$0xff]
  %s726 = scalar_lea.vmem [#allocation4], 48
  %v727 = vld [vmem:[%s726] sm:$0xff]
  %v728 = vld [vmem:[%s726 + $0x8] sm:$0xff]
  %v729 = vpack.c.bf16 %v723, %v722
  %v730 = vld [vmem:[%s2] sm:$0xf]
  %v731 = vld [vmem:[%s2 + $0x4] sm:$0xf]
  %v732 = vld [vmem:[%s2 + $0x8] sm:$0xf]
  %v733 = vld [vmem:[%s2 + $0xc] sm:$0xf]
  %v738 = vunpack.c.l.b16 %v730
  %v739 = vunpack.c.l.b16 %v731
  %v740 = vunpack.c.l.b16 %v732
  %v741 = vunpack.c.l.b16 %v733
  %v742 = vpack.c.b16 %v739, %v738
  %v743 = vpack.c.b16 %v741, %v740
  %v747 = vsel %vm262, %v729, 0
  %749 = vmatprep.subr.bf16.mxu0 0
  %750 = vmatpush1.bf16.msra.mxu0 %v742
  %751 = vmatprep.subr.bf16.mxu0 0
  %752 = vmatpush1.bf16.msra.mxu0 %v743
  %753 = vmatprep.subr.bf16.mxu0 0
  %754 = vmatpush1.bf16.msra.mxu0 0
  %755 = vmatprep.subr.bf16.mxu0 0
  %756 = vmatpush1.bf16.msra.mxu0 0
  %757 = vmatprep.subr.bf16.mxu0 0
  %758 = vmatpush1.bf16.msra.mxu0 0
  %759 = vmatprep.subr.bf16.mxu0 0
  %760 = vmatpush1.bf16.msra.mxu0 0
  %761 = vmatprep.subr.bf16.mxu0 0
  %762 = vmatpush1.bf16.msra.mxu0 0
  %763 = vmatprep.subr.bf16.mxu0 0
  %764 = vmatpush1.bf16.msra.mxu0 0
  %765 = vmatprep.subr.bf16.mxu0 0
  %766 = vmatpush1.bf16.msra.mxu0 0
  %767 = vmatprep.subr.bf16.mxu0 0
  %768 = vmatpush1.bf16.msra.mxu0 0
  %769 = vmatprep.subr.bf16.mxu0 0
  %770 = vmatpush1.bf16.msra.mxu0 0
  %771 = vmatprep.subr.bf16.mxu0 0
  %772 = vmatpush1.bf16.msra.mxu0 0
  %773 = vmatprep.subr.bf16.mxu0 0
  %774 = vmatpush1.bf16.msra.mxu0 0
  %775 = vmatprep.subr.bf16.mxu0 0
  %776 = vmatpush1.bf16.msra.mxu0 0
  %777 = vmatprep.subr.bf16.mxu0 0
  %778 = vmatpush1.bf16.msra.mxu0 0
  %779 = vmatprep.subr.bf16.mxu0 0
  %780 = vmatpush1.bf16.msra.mxu0 0
  %781 = vmatprep.mubr.bf16.mxu0 0
  %782 = vmatmul.mubr.bf16.gmra.mrb[0].mxu0 %v747
  %v783 = vpop.f32.mrb[0].mxu0
  %v784 = vadd.f32 0.0, %v783
  %v785 = vpop.f32.mrb[0].mxu0
  %v786 = vpop.f32.mrb[0].mxu0
  %v787 = vadd.f32 0.0, %v786
  %v788 = vpop.f32.mrb[0].mxu0
  %789 = vdwg.mxu0
  %v790 = vadd.f32 %v727, %v784
  %v791 = vadd.f32 %v728, %v787
  %v792 = vxor.u32 %v790, 2147483648
  %v793 = vxor.u32 %v791, 2147483648
  %v794 = vmul.f32 %v792, 1.442695
  %v795 = vpow.pop %v794
  %v796 = vmul.f32 %v793, 1.442695
  %v797 = vpow.pop %v796
  %v798 = vadd.f32 %v795, 1.0
  %v799 = vadd.f32 %v797, 1.0
  %v800 = vrcp.pop %v798
  %v801 = vmul.f32 1.0, %v800
  %v802 = vrcp.pop %v799
  %v803 = vmul.f32 1.0, %v802
  %v804 = vtanh.pop %v790
  %v805 = vtanh.pop %v791
  %808 = vrot.lane.b32.xlu0 %v724, 32
  %v809 = vpop.permute.xlu0 %808
  %810 = vrot.lane.b32.xlu0 %v725, 32
  %v811 = vpop.permute.xlu0 %810
  %v814 = vmul.f32 %v801, %v809
  %v815 = vmul.f32 %v803, %v811
  %818 = vrot.lane.b32.xlu0 %v804, 64
  %v819 = vpop.permute.xlu0 %818
  %820 = vrot.lane.b32.xlu0 %v805, 64
  %v821 = vpop.permute.xlu0 %820
  %v824 = vmul.f32 %v801, %v819
  %v825 = vmul.f32 %v803, %v821
  %828 = vrot.lane.b32.xlu0 %v824, 32
  %v829 = vpop.permute.xlu0 %828
  %830 = vrot.lane.b32.xlu0 %v825, 32
  %v831 = vpop.permute.xlu0 %830
  %v834 = vadd.f32 %v814, %v829
  %v835 = vadd.f32 %v815, %v831
  %v836 = vtanh.pop %v834
  %v837 = vtanh.pop %v835
  %840 = vrot.lane.b32.xlu0 %v836, 64
  %v841 = vpop.permute.xlu0 %840
  %842 = vrot.lane.b32.xlu0 %v837, 64
  %v843 = vpop.permute.xlu0 %842
  %v846 = vmul.f32 %v801, %v841
  %v847 = vmul.f32 %v803, %v843
  %850 = vrot.lane.b32.xlu0 %v846, 32
  %v851 = vpop.permute.xlu0 %850
  %852 = vrot.lane.b32.xlu0 %v847, 32
  %v853 = vpop.permute.xlu0 %852
  %856 = vst.msk [vmem:[#allocation2] sm:$0xff] %vm262, %v851
  %857 = vst.msk [vmem:[#allocation2 + $0x8] sm:$0xff] %vm262, %v853
  %860 = vrot.lane.b32.xlu0 %v834, 96
  %v861 = vpop.permute.xlu0 %860
  %862 = vrot.lane.b32.xlu0 %v835, 96
  %v863 = vpop.permute.xlu0 %862
  %866 = vst.msk [vmem:[#allocation3] sm:$0xff] %vm262, %v861
  %867 = vst.msk [vmem:[#allocation3 + $0x8] sm:$0xff] %vm262, %v863
  %v868 = vpack.c.bf16 %v847, %v846
  %v870 = vunpack.c.l.b16 %v868
  %v871 = vunpack.c.h.b16 %v868
  %v872 = vpack.c.b16 %v870, %v870
  %v873 = vpack.c.b16 %v871, %v871
  %874 = vrot.lane.b32.xlu0 %v872, 32
  %v875 = vpop.permute.xlu0 %874
  %876 = vrot.lane.b32.xlu0 %v873, 32
  %v877 = vpop.permute.xlu0 %876
  %s880 = scalar_lea.vmem %s4, 24
  %881 = vst.msk [vmem:[%s880] sm:$0xf] %vm397, %v875
  %882 = vst.msk [vmem:[%s880 + $0x4] sm:$0xf] %vm397, %v877
  %v883 = vld [vmem:[#allocation2] sm:$0xff]
  %v884 = vld [vmem:[#allocation2 + $0x8] sm:$0xff]
  %v885 = vld [vmem:[#allocation3] sm:$0xff]
  %v886 = vld [vmem:[#allocation3 + $0x8] sm:$0xff]
  %s887 = scalar_lea.vmem [#allocation4], 64
  %v888 = vld [vmem:[%s887] sm:$0xff]
  %v889 = vld [vmem:[%s887 + $0x8] sm:$0xff]
  %v890 = vpack.c.bf16 %v884, %v883
  %v891 = vld [vmem:[%s2] sm:$0xf]
  %v892 = vld [vmem:[%s2 + $0x4] sm:$0xf]
  %v893 = vld [vmem:[%s2 + $0x8] sm:$0xf]
  %v894 = vld [vmem:[%s2 + $0xc] sm:$0xf]
  %v899 = vunpack.c.l.b16 %v891
  %v900 = vunpack.c.l.b16 %v892
  %v901 = vunpack.c.l.b16 %v893
  %v902 = vunpack.c.l.b16 %v894
  %v903 = vpack.c.b16 %v900, %v899
  %v904 = vpack.c.b16 %v902, %v901
  %v908 = vsel %vm262, %v890, 0
  %910 = vmatprep.subr.bf16.mxu0 0
  %911 = vmatpush1.bf16.msra.mxu0 %v903
  %912 = vmatprep.subr.bf16.mxu0 0
  %913 = vmatpush1.bf16.msra.mxu0 %v904
  %914 = vmatprep.subr.bf16.mxu0 0
  %915 = vmatpush1.bf16.msra.mxu0 0
  %916 = vmatprep.subr.bf16.mxu0 0
  %917 = vmatpush1.bf16.msra.mxu0 0
  %918 = vmatprep.subr.bf16.mxu0 0
  %919 = vmatpush1.bf16.msra.mxu0 0
  %920 = vmatprep.subr.bf16.mxu0 0
  %921 = vmatpush1.bf16.msra.mxu0 0
  %922 = vmatprep.subr.bf16.mxu0 0
  %923 = vmatpush1.bf16.msra.mxu0 0
  %924 = vmatprep.subr.bf16.mxu0 0
  %925 = vmatpush1.bf16.msra.mxu0 0
  %926 = vmatprep.subr.bf16.mxu0 0
  %927 = vmatpush1.bf16.msra.mxu0 0
  %928 = vmatprep.subr.bf16.mxu0 0
  %929 = vmatpush1.bf16.msra.mxu0 0
  %930 = vmatprep.subr.bf16.mxu0 0
  %931 = vmatpush1.bf16.msra.mxu0 0
  %932 = vmatprep.subr.bf16.mxu0 0
  %933 = vmatpush1.bf16.msra.mxu0 0
  %934 = vmatprep.subr.bf16.mxu0 0
  %935 = vmatpush1.bf16.msra.mxu0 0
  %936 = vmatprep.subr.bf16.mxu0 0
  %937 = vmatpush1.bf16.msra.mxu0 0
  %938 = vmatprep.subr.bf16.mxu0 0
  %939 = vmatpush1.bf16.msra.mxu0 0
  %940 = vmatprep.subr.bf16.mxu0 0
  %941 = vmatpush1.bf16.msra.mxu0 0
  %942 = vmatprep.mubr.bf16.mxu0 0
  %943 = vmatmul.mubr.bf16.gmra.mrb[0].mxu0 %v908
  %v944 = vpop.f32.mrb[0].mxu0
  %v945 = vadd.f32 0.0, %v944
  %v946 = vpop.f32.mrb[0].mxu0
  %v947 = vpop.f32.mrb[0].mxu0
  %v948 = vadd.f32 0.0, %v947
  %v949 = vpop.f32.mrb[0].mxu0
  %950 = vdwg.mxu0
  %v951 = vadd.f32 %v888, %v945
  %v952 = vadd.f32 %v889, %v948
  %v953 = vxor.u32 %v951, 2147483648
  %v954 = vxor.u32 %v952, 2147483648
  %v955 = vmul.f32 %v953, 1.442695
  %v956 = vpow.pop %v955
  %v957 = vmul.f32 %v954, 1.442695
  %v958 = vpow.pop %v957
  %v959 = vadd.f32 %v956, 1.0
  %v960 = vadd.f32 %v958, 1.0
  %v961 = vrcp.pop %v959
  %v962 = vmul.f32 1.0, %v961
  %v963 = vrcp.pop %v960
  %v964 = vmul.f32 1.0, %v963
  %v965 = vtanh.pop %v951
  %v966 = vtanh.pop %v952
  %969 = vrot.lane.b32.xlu0 %v885, 32
  %v970 = vpop.permute.xlu0 %969
  %971 = vrot.lane.b32.xlu0 %v886, 32
  %v972 = vpop.permute.xlu0 %971
  %v975 = vmul.f32 %v962, %v970
  %v976 = vmul.f32 %v964, %v972
  %979 = vrot.lane.b32.xlu0 %v965, 64
  %v980 = vpop.permute.xlu0 %979
  %981 = vrot.lane.b32.xlu0 %v966, 64
  %v982 = vpop.permute.xlu0 %981
  %v985 = vmul.f32 %v962, %v980
  %v986 = vmul.f32 %v964, %v982
  %989 = vrot.lane.b32.xlu0 %v985, 32
  %v990 = vpop.permute.xlu0 %989
  %991 = vrot.lane.b32.xlu0 %v986, 32
  %v992 = vpop.permute.xlu0 %991
  %v995 = vadd.f32 %v975, %v990
  %v996 = vadd.f32 %v976, %v992
  %v997 = vtanh.pop %v995
  %v998 = vtanh.pop %v996
  %1001 = vrot.lane.b32.xlu0 %v997, 64
  %v1002 = vpop.permute.xlu0 %1001
  %1003 = vrot.lane.b32.xlu0 %v998, 64
  %v1004 = vpop.permute.xlu0 %1003
  %v1007 = vmul.f32 %v962, %v1002
  %v1008 = vmul.f32 %v964, %v1004
  %1011 = vrot.lane.b32.xlu0 %v1007, 32
  %v1012 = vpop.permute.xlu0 %1011
  %1013 = vrot.lane.b32.xlu0 %v1008, 32
  %v1014 = vpop.permute.xlu0 %1013
  %1017 = vst.msk [vmem:[#allocation2] sm:$0xff] %vm262, %v1012
  %1018 = vst.msk [vmem:[#allocation2 + $0x8] sm:$0xff] %vm262, %v1014
  %1021 = vrot.lane.b32.xlu0 %v995, 96
  %v1022 = vpop.permute.xlu0 %1021
  %1023 = vrot.lane.b32.xlu0 %v996, 96
  %v1024 = vpop.permute.xlu0 %1023
  %1027 = vst.msk [vmem:[#allocation3] sm:$0xff] %vm262, %v1022
  %1028 = vst.msk [vmem:[#allocation3 + $0x8] sm:$0xff] %vm262, %v1024
  %v1029 = vpack.c.bf16 %v1008, %v1007
  %v1031 = vunpack.c.l.b16 %v1029
  %v1032 = vunpack.c.h.b16 %v1029
  %v1033 = vpack.c.b16 %v1031, %v1031
  %v1034 = vpack.c.b16 %v1032, %v1032
  %1035 = vrot.lane.b32.xlu0 %v1033, 32
  %v1036 = vpop.permute.xlu0 %1035
  %1037 = vrot.lane.b32.xlu0 %v1034, 32
  %v1038 = vpop.permute.xlu0 %1037
  %s1041 = scalar_lea.vmem %s4, 32
  %1042 = vst.msk [vmem:[%s1041] sm:$0xf] %vm397, %v1036
  %1043 = vst.msk [vmem:[%s1041 + $0x4] sm:$0xf] %vm397, %v1038
  %v1044 = vld [vmem:[#allocation2] sm:$0xff]
  %v1045 = vld [vmem:[#allocation2 + $0x8] sm:$0xff]
  %v1046 = vld [vmem:[#allocation3] sm:$0xff]
  %v1047 = vld [vmem:[#allocation3 + $0x8] sm:$0xff]
  %s1048 = scalar_lea.vmem [#allocation4], 80
  %v1049 = vld [vmem:[%s1048] sm:$0xff]
  %v1050 = vld [vmem:[%s1048 + $0x8] sm:$0xff]
  %v1051 = vpack.c.bf16 %v1045, %v1044
  %v1052 = vld [vmem:[%s2] sm:$0xf]
  %v1053 = vld [vmem:[%s2 + $0x4] sm:$0xf]
  %v1054 = vld [vmem:[%s2 + $0x8] sm:$0xf]
  %v1055 = vld [vmem:[%s2 + $0xc] sm:$0xf]
  %v1060 = vunpack.c.l.b16 %v1052
  %v1061 = vunpack.c.l.b16 %v1053
  %v1062 = vunpack.c.l.b16 %v1054
  %v1063 = vunpack.c.l.b16 %v1055
  %v1064 = vpack.c.b16 %v1061, %v1060
  %v1065 = vpack.c.b16 %v1063, %v1062
  %v1069 = vsel %vm262, %v1051, 0
  %1071 = vmatprep.subr.bf16.mxu0 0
  %1072 = vmatpush1.bf16.msra.mxu0 %v1064
  %1073 = vmatprep.subr.bf16.mxu0 0
  %1074 = vmatpush1.bf16.msra.mxu0 %v1065
  %1075 = vmatprep.subr.bf16.mxu0 0
  %1076 = vmatpush1.bf16.msra.mxu0 0
  %1077 = vmatprep.subr.bf16.mxu0 0
  %1078 = vmatpush1.bf16.msra.mxu0 0
  %1079 = vmatprep.subr.bf16.mxu0 0
  %1080 = vmatpush1.bf16.msra.mxu0 0
  %1081 = vmatprep.subr.bf16.mxu0 0
  %1082 = vmatpush1.bf16.msra.mxu0 0
  %1083 = vmatprep.subr.bf16.mxu0 0
  %1084 = vmatpush1.bf16.msra.mxu0 0
  %1085 = vmatprep.subr.bf16.mxu0 0
  %1086 = vmatpush1.bf16.msra.mxu0 0
  %1087 = vmatprep.subr.bf16.mxu0 0
  %1088 = vmatpush1.bf16.msra.mxu0 0
  %1089 = vmatprep.subr.bf16.mxu0 0
  %1090 = vmatpush1.bf16.msra.mxu0 0
  %1091 = vmatprep.subr.bf16.mxu0 0
  %1092 = vmatpush1.bf16.msra.mxu0 0
  %1093 = vmatprep.subr.bf16.mxu0 0
  %1094 = vmatpush1.bf16.msra.mxu0 0
  %1095 = vmatprep.subr.bf16.mxu0 0
  %1096 = vmatpush1.bf16.msra.mxu0 0
  %1097 = vmatprep.subr.bf16.mxu0 0
  %1098 = vmatpush1.bf16.msra.mxu0 0
  %1099 = vmatprep.subr.bf16.mxu0 0
  %1100 = vmatpush1.bf16.msra.mxu0 0
  %1101 = vmatprep.subr.bf16.mxu0 0
  %1102 = vmatpush1.bf16.msra.mxu0 0
  %1103 = vmatprep.mubr.bf16.mxu0 0
  %1104 = vmatmul.mubr.bf16.gmra.mrb[0].mxu0 %v1069
  %v1105 = vpop.f32.mrb[0].mxu0
  %v1106 = vadd.f32 0.0, %v1105
  %v1107 = vpop.f32.mrb[0].mxu0
  %v1108 = vpop.f32.mrb[0].mxu0
  %v1109 = vadd.f32 0.0, %v1108
  %v1110 = vpop.f32.mrb[0].mxu0
  %1111 = vdwg.mxu0
  %v1112 = vadd.f32 %v1049, %v1106
  %v1113 = vadd.f32 %v1050, %v1109
  %v1114 = vxor.u32 %v1112, 2147483648
  %v1115 = vxor.u32 %v1113, 2147483648
  %v1116 = vmul.f32 %v1114, 1.442695
  %v1117 = vpow.pop %v1116
  %v1118 = vmul.f32 %v1115, 1.442695
  %v1119 = vpow.pop %v1118
  %v1120 = vadd.f32 %v1117, 1.0
  %v1121 = vadd.f32 %v1119, 1.0
  %v1122 = vrcp.pop %v1120
  %v1123 = vmul.f32 1.0, %v1122
  %v1124 = vrcp.pop %v1121
  %v1125 = vmul.f32 1.0, %v1124
  %v1126 = vtanh.pop %v1112
  %v1127 = vtanh.pop %v1113
  %1130 = vrot.lane.b32.xlu0 %v1046, 32
  %v1131 = vpop.permute.xlu0 %1130
  %1132 = vrot.lane.b32.xlu0 %v1047, 32
  %v1133 = vpop.permute.xlu0 %1132
  %v1136 = vmul.f32 %v1123, %v1131
  %v1137 = vmul.f32 %v1125, %v1133
  %1140 = vrot.lane.b32.xlu0 %v1126, 64
  %v1141 = vpop.permute.xlu0 %1140
  %1142 = vrot.lane.b32.xlu0 %v1127, 64
  %v1143 = vpop.permute.xlu0 %1142
  %v1146 = vmul.f32 %v1123, %v1141
  %v1147 = vmul.f32 %v1125, %v1143
  %1150 = vrot.lane.b32.xlu0 %v1146, 32
  %v1151 = vpop.permute.xlu0 %1150
  %1152 = vrot.lane.b32.xlu0 %v1147, 32
  %v1153 = vpop.permute.xlu0 %1152
  %v1156 = vadd.f32 %v1136, %v1151
  %v1157 = vadd.f32 %v1137, %v1153
  %v1158 = vtanh.pop %v1156
  %v1159 = vtanh.pop %v1157
  %1162 = vrot.lane.b32.xlu0 %v1158, 64
  %v1163 = vpop.permute.xlu0 %1162
  %1164 = vrot.lane.b32.xlu0 %v1159, 64
  %v1165 = vpop.permute.xlu0 %1164
  %v1168 = vmul.f32 %v1123, %v1163
  %v1169 = vmul.f32 %v1125, %v1165
  %1172 = vrot.lane.b32.xlu0 %v1168, 32
  %v1173 = vpop.permute.xlu0 %1172
  %1174 = vrot.lane.b32.xlu0 %v1169, 32
  %v1175 = vpop.permute.xlu0 %1174
  %1178 = vst.msk [vmem:[#allocation2] sm:$0xff] %vm262, %v1173
  %1179 = vst.msk [vmem:[#allocation2 + $0x8] sm:$0xff] %vm262, %v1175
  %1182 = vrot.lane.b32.xlu0 %v1156, 96
  %v1183 = vpop.permute.xlu0 %1182
  %1184 = vrot.lane.b32.xlu0 %v1157, 96
  %v1185 = vpop.permute.xlu0 %1184
  %1188 = vst.msk [vmem:[#allocation3] sm:$0xff] %vm262, %v1183
  %1189 = vst.msk [vmem:[#allocation3 + $0x8] sm:$0xff] %vm262, %v1185
  %v1190 = vpack.c.bf16 %v1169, %v1168
  %v1192 = vunpack.c.l.b16 %v1190
  %v1193 = vunpack.c.h.b16 %v1190
  %v1194 = vpack.c.b16 %v1192, %v1192
  %v1195 = vpack.c.b16 %v1193, %v1193
  %1196 = vrot.lane.b32.xlu0 %v1194, 32
  %v1197 = vpop.permute.xlu0 %1196
  %1198 = vrot.lane.b32.xlu0 %v1195, 32
  %v1199 = vpop.permute.xlu0 %1198
  %s1202 = scalar_lea.vmem %s4, 40
  %1203 = vst.msk [vmem:[%s1202] sm:$0xf] %vm397, %v1197
  %1204 = vst.msk [vmem:[%s1202 + $0x4] sm:$0xf] %vm397, %v1199
  %v1205 = vld [vmem:[#allocation2] sm:$0xff]
  %v1206 = vld [vmem:[#allocation2 + $0x8] sm:$0xff]
  %v1207 = vld [vmem:[#allocation3] sm:$0xff]
  %v1208 = vld [vmem:[#allocation3 + $0x8] sm:$0xff]
  %s1209 = scalar_lea.vmem [#allocation4], 96
  %v1210 = vld [vmem:[%s1209] sm:$0xff]
  %v1211 = vld [vmem:[%s1209 + $0x8] sm:$0xff]
  %v1212 = vpack.c.bf16 %v1206, %v1205
  %v1213 = vld [vmem:[%s2] sm:$0xf]
  %v1214 = vld [vmem:[%s2 + $0x4] sm:$0xf]
  %v1215 = vld [vmem:[%s2 + $0x8] sm:$0xf]
  %v1216 = vld [vmem:[%s2 + $0xc] sm:$0xf]
  %v1221 = vunpack.c.l.b16 %v1213
  %v1222 = vunpack.c.l.b16 %v1214
  %v1223 = vunpack.c.l.b16 %v1215
  %v1224 = vunpack.c.l.b16 %v1216
  %v1225 = vpack.c.b16 %v1222, %v1221
  %v1226 = vpack.c.b16 %v1224, %v1223
  %v1230 = vsel %vm262, %v1212, 0
  %1232 = vmatprep.subr.bf16.mxu0 0
  %1233 = vmatpush1.bf16.msra.mxu0 %v1225
  %1234 = vmatprep.subr.bf16.mxu0 0
  %1235 = vmatpush1.bf16.msra.mxu0 %v1226
  %1236 = vmatprep.subr.bf16.mxu0 0
  %1237 = vmatpush1.bf16.msra.mxu0 0
  %1238 = vmatprep.subr.bf16.mxu0 0
  %1239 = vmatpush1.bf16.msra.mxu0 0
  %1240 = vmatprep.subr.bf16.mxu0 0
  %1241 = vmatpush1.bf16.msra.mxu0 0
  %1242 = vmatprep.subr.bf16.mxu0 0
  %1243 = vmatpush1.bf16.msra.mxu0 0
  %1244 = vmatprep.subr.bf16.mxu0 0
  %1245 = vmatpush1.bf16.msra.mxu0 0
  %1246 = vmatprep.subr.bf16.mxu0 0
  %1247 = vmatpush1.bf16.msra.mxu0 0
  %1248 = vmatprep.subr.bf16.mxu0 0
  %1249 = vmatpush1.bf16.msra.mxu0 0
  %1250 = vmatprep.subr.bf16.mxu0 0
  %1251 = vmatpush1.bf16.msra.mxu0 0
  %1252 = vmatprep.subr.bf16.mxu0 0
  %1253 = vmatpush1.bf16.msra.mxu0 0
  %1254 = vmatprep.subr.bf16.mxu0 0
  %1255 = vmatpush1.bf16.msra.mxu0 0
  %1256 = vmatprep.subr.bf16.mxu0 0
  %1257 = vmatpush1.bf16.msra.mxu0 0
  %1258 = vmatprep.subr.bf16.mxu0 0
  %1259 = vmatpush1.bf16.msra.mxu0 0
  %1260 = vmatprep.subr.bf16.mxu0 0
  %1261 = vmatpush1.bf16.msra.mxu0 0
  %1262 = vmatprep.subr.bf16.mxu0 0
  %1263 = vmatpush1.bf16.msra.mxu0 0
  %1264 = vmatprep.mubr.bf16.mxu0 0
  %1265 = vmatmul.mubr.bf16.gmra.mrb[0].mxu0 %v1230
  %v1266 = vpop.f32.mrb[0].mxu0
  %v1267 = vadd.f32 0.0, %v1266
  %v1268 = vpop.f32.mrb[0].mxu0
  %v1269 = vpop.f32.mrb[0].mxu0
  %v1270 = vadd.f32 0.0, %v1269
  %v1271 = vpop.f32.mrb[0].mxu0
  %1272 = vdwg.mxu0
  %v1273 = vadd.f32 %v1210, %v1267
  %v1274 = vadd.f32 %v1211, %v1270
  %v1275 = vxor.u32 %v1273, 2147483648
  %v1276 = vxor.u32 %v1274, 2147483648
  %v1277 = vmul.f32 %v1275, 1.442695
  %v1278 = vpow.pop %v1277
  %v1279 = vmul.f32 %v1276, 1.442695
  %v1280 = vpow.pop %v1279
  %v1281 = vadd.f32 %v1278, 1.0
  %v1282 = vadd.f32 %v1280, 1.0
  %v1283 = vrcp.pop %v1281
  %v1284 = vmul.f32 1.0, %v1283
  %v1285 = vrcp.pop %v1282
  %v1286 = vmul.f32 1.0, %v1285
  %v1287 = vtanh.pop %v1273
  %v1288 = vtanh.pop %v1274
  %1291 = vrot.lane.b32.xlu0 %v1207, 32
  %v1292 = vpop.permute.xlu0 %1291
  %1293 = vrot.lane.b32.xlu0 %v1208, 32
  %v1294 = vpop.permute.xlu0 %1293
  %v1297 = vmul.f32 %v1284, %v1292
  %v1298 = vmul.f32 %v1286, %v1294
  %1301 = vrot.lane.b32.xlu0 %v1287, 64
  %v1302 = vpop.permute.xlu0 %1301
  %1303 = vrot.lane.b32.xlu0 %v1288, 64
  %v1304 = vpop.permute.xlu0 %1303
  %v1307 = vmul.f32 %v1284, %v1302
  %v1308 = vmul.f32 %v1286, %v1304
  %1311 = vrot.lane.b32.xlu0 %v1307, 32
  %v1312 = vpop.permute.xlu0 %1311
  %1313 = vrot.lane.b32.xlu0 %v1308, 32
  %v1314 = vpop.permute.xlu0 %1313
  %v1317 = vadd.f32 %v1297, %v1312
  %v1318 = vadd.f32 %v1298, %v1314
  %v1319 = vtanh.pop %v1317
  %v1320 = vtanh.pop %v1318
  %1323 = vrot.lane.b32.xlu0 %v1319, 64
  %v1324 = vpop.permute.xlu0 %1323
  %1325 = vrot.lane.b32.xlu0 %v1320, 64
  %v1326 = vpop.permute.xlu0 %1325
  %v1329 = vmul.f32 %v1284, %v1324
  %v1330 = vmul.f32 %v1286, %v1326
  %1333 = vrot.lane.b32.xlu0 %v1329, 32
  %v1334 = vpop.permute.xlu0 %1333
  %1335 = vrot.lane.b32.xlu0 %v1330, 32
  %v1336 = vpop.permute.xlu0 %1335
  %1339 = vst.msk [vmem:[#allocation2] sm:$0xff] %vm262, %v1334
  %1340 = vst.msk [vmem:[#allocation2 + $0x8] sm:$0xff] %vm262, %v1336
  %1343 = vrot.lane.b32.xlu0 %v1317, 96
  %v1344 = vpop.permute.xlu0 %1343
  %1345 = vrot.lane.b32.xlu0 %v1318, 96
  %v1346 = vpop.permute.xlu0 %1345
  %1349 = vst.msk [vmem:[#allocation3] sm:$0xff] %vm262, %v1344
  %1350 = vst.msk [vmem:[#allocation3 + $0x8] sm:$0xff] %vm262, %v1346
  %v1351 = vpack.c.bf16 %v1330, %v1329
  %v1353 = vunpack.c.l.b16 %v1351
  %v1354 = vunpack.c.h.b16 %v1351
  %v1355 = vpack.c.b16 %v1353, %v1353
  %v1356 = vpack.c.b16 %v1354, %v1354
  %1357 = vrot.lane.b32.xlu0 %v1355, 32
  %v1358 = vpop.permute.xlu0 %1357
  %1359 = vrot.lane.b32.xlu0 %v1356, 32
  %v1360 = vpop.permute.xlu0 %1359
  %s1363 = scalar_lea.vmem %s4, 48
  %1364 = vst.msk [vmem:[%s1363] sm:$0xf] %vm397, %v1358
  %1365 = vst.msk [vmem:[%s1363 + $0x4] sm:$0xf] %vm397, %v1360
  %v1366 = vld [vmem:[#allocation2] sm:$0xff]
  %v1367 = vld [vmem:[#allocation2 + $0x8] sm:$0xff]
  %v1368 = vld [vmem:[#allocation3] sm:$0xff]
  %v1369 = vld [vmem:[#allocation3 + $0x8] sm:$0xff]
  %s1370 = scalar_lea.vmem [#allocation4], 112
  %v1371 = vld [vmem:[%s1370] sm:$0xff]
  %v1372 = vld [vmem:[%s1370 + $0x8] sm:$0xff]
  %v1373 = vpack.c.bf16 %v1367, %v1366
  %v1374 = vld [vmem:[%s2] sm:$0xf]
  %v1375 = vld [vmem:[%s2 + $0x4] sm:$0xf]
  %v1376 = vld [vmem:[%s2 + $0x8] sm:$0xf]
  %v1377 = vld [vmem:[%s2 + $0xc] sm:$0xf]
  %v1382 = vunpack.c.l.b16 %v1374
  %v1383 = vunpack.c.l.b16 %v1375
  %v1384 = vunpack.c.l.b16 %v1376
  %v1385 = vunpack.c.l.b16 %v1377
  %v1386 = vpack.c.b16 %v1383, %v1382
  %v1387 = vpack.c.b16 %v1385, %v1384
  %v1391 = vsel %vm262, %v1373, 0
  %1393 = vmatprep.subr.bf16.mxu0 0
  %1394 = vmatpush1.bf16.msra.mxu0 %v1386
  %1395 = vmatprep.subr.bf16.mxu0 0
  %1396 = vmatpush1.bf16.msra.mxu0 %v1387
  %1397 = vmatprep.subr.bf16.mxu0 0
  %1398 = vmatpush1.bf16.msra.mxu0 0
  %1399 = vmatprep.subr.bf16.mxu0 0
  %1400 = vmatpush1.bf16.msra.mxu0 0
  %1401 = vmatprep.subr.bf16.mxu0 0
  %1402 = vmatpush1.bf16.msra.mxu0 0
  %1403 = vmatprep.subr.bf16.mxu0 0
  %1404 = vmatpush1.bf16.msra.mxu0 0
  %1405 = vmatprep.subr.bf16.mxu0 0
  %1406 = vmatpush1.bf16.msra.mxu0 0
  %1407 = vmatprep.subr.bf16.mxu0 0
  %1408 = vmatpush1.bf16.msra.mxu0 0
  %1409 = vmatprep.subr.bf16.mxu0 0
  %1410 = vmatpush1.bf16.msra.mxu0 0
  %1411 = vmatprep.subr.bf16.mxu0 0
  %1412 = vmatpush1.bf16.msra.mxu0 0
  %1413 = vmatprep.subr.bf16.mxu0 0
  %1414 = vmatpush1.bf16.msra.mxu0 0
  %1415 = vmatprep.subr.bf16.mxu0 0
  %1416 = vmatpush1.bf16.msra.mxu0 0
  %1417 = vmatprep.subr.bf16.mxu0 0
  %1418 = vmatpush1.bf16.msra.mxu0 0
  %1419 = vmatprep.subr.bf16.mxu0 0
  %1420 = vmatpush1.bf16.msra.mxu0 0
  %1421 = vmatprep.subr.bf16.mxu0 0
  %1422 = vmatpush1.bf16.msra.mxu0 0
  %1423 = vmatprep.subr.bf16.mxu0 0
  %1424 = vmatpush1.bf16.msra.mxu0 0
  %1425 = vmatprep.mubr.bf16.mxu0 0
  %1426 = vmatmul.mubr.bf16.gmra.mrb[0].mxu0 %v1391
  %v1427 = vpop.f32.mrb[0].mxu0
  %v1428 = vadd.f32 0.0, %v1427
  %v1429 = vpop.f32.mrb[0].mxu0
  %v1430 = vpop.f32.mrb[0].mxu0
  %v1431 = vadd.f32 0.0, %v1430
  %v1432 = vpop.f32.mrb[0].mxu0
  %1433 = vdwg.mxu0
  %v1434 = vadd.f32 %v1371, %v1428
  %v1435 = vadd.f32 %v1372, %v1431
  %v1436 = vxor.u32 %v1434, 2147483648
  %v1437 = vxor.u32 %v1435, 2147483648
  %v1438 = vmul.f32 %v1436, 1.442695
  %v1439 = vpow.pop %v1438
  %v1440 = vmul.f32 %v1437, 1.442695
  %v1441 = vpow.pop %v1440
  %v1442 = vadd.f32 %v1439, 1.0
  %v1443 = vadd.f32 %v1441, 1.0
  %v1444 = vrcp.pop %v1442
  %v1445 = vmul.f32 1.0, %v1444
  %v1446 = vrcp.pop %v1443
  %v1447 = vmul.f32 1.0, %v1446
  %v1448 = vtanh.pop %v1434
  %v1449 = vtanh.pop %v1435
  %1452 = vrot.lane.b32.xlu0 %v1368, 32
  %v1453 = vpop.permute.xlu0 %1452
  %1454 = vrot.lane.b32.xlu0 %v1369, 32
  %v1455 = vpop.permute.xlu0 %1454
  %v1458 = vmul.f32 %v1445, %v1453
  %v1459 = vmul.f32 %v1447, %v1455
  %1462 = vrot.lane.b32.xlu0 %v1448, 64
  %v1463 = vpop.permute.xlu0 %1462
  %1464 = vrot.lane.b32.xlu0 %v1449, 64
  %v1465 = vpop.permute.xlu0 %1464
  %v1468 = vmul.f32 %v1445, %v1463
  %v1469 = vmul.f32 %v1447, %v1465
  %1472 = vrot.lane.b32.xlu0 %v1468, 32
  %v1473 = vpop.permute.xlu0 %1472
  %1474 = vrot.lane.b32.xlu0 %v1469, 32
  %v1475 = vpop.permute.xlu0 %1474
  %v1478 = vadd.f32 %v1458, %v1473
  %v1479 = vadd.f32 %v1459, %v1475
  %v1480 = vtanh.pop %v1478
  %v1481 = vtanh.pop %v1479
  %1484 = vrot.lane.b32.xlu0 %v1480, 64
  %v1485 = vpop.permute.xlu0 %1484
  %1486 = vrot.lane.b32.xlu0 %v1481, 64
  %v1487 = vpop.permute.xlu0 %1486
  %v1490 = vmul.f32 %v1445, %v1485
  %v1491 = vmul.f32 %v1447, %v1487
  %1494 = vrot.lane.b32.xlu0 %v1490, 32
  %v1495 = vpop.permute.xlu0 %1494
  %1496 = vrot.lane.b32.xlu0 %v1491, 32
  %v1497 = vpop.permute.xlu0 %1496
  %1500 = vst.msk [vmem:[#allocation2] sm:$0xff] %vm262, %v1495
  %1501 = vst.msk [vmem:[#allocation2 + $0x8] sm:$0xff] %vm262, %v1497
  %1504 = vrot.lane.b32.xlu0 %v1478, 96
  %v1505 = vpop.permute.xlu0 %1504
  %1506 = vrot.lane.b32.xlu0 %v1479, 96
  %v1507 = vpop.permute.xlu0 %1506
  %1510 = vst.msk [vmem:[#allocation3] sm:$0xff] %vm262, %v1505
  %1511 = vst.msk [vmem:[#allocation3 + $0x8] sm:$0xff] %vm262, %v1507
  %v1512 = vpack.c.bf16 %v1491, %v1490
  %v1514 = vunpack.c.l.b16 %v1512
  %v1515 = vunpack.c.h.b16 %v1512
  %v1516 = vpack.c.b16 %v1514, %v1514
  %v1517 = vpack.c.b16 %v1515, %v1515
  %1518 = vrot.lane.b32.xlu0 %v1516, 32
  %v1519 = vpop.permute.xlu0 %1518
  %1520 = vrot.lane.b32.xlu0 %v1517, 32
  %v1521 = vpop.permute.xlu0 %1520
  %s1524 = scalar_lea.vmem %s4, 56
  %1525 = vst.msk [vmem:[%s1524] sm:$0xf] %vm397, %v1519
  %1526 = vst.msk [vmem:[%s1524 + $0x4] sm:$0xf] %vm397, %v1521
  // Predicated region
  $region22: #{encoder_forward.2} parent=0 // pred_check
    %p1527 = pneg %p21
  $region23: #{encoder_forward.2} parent=0 // pred_check_branch
    %1529 = sbr.rel (%p1527) target = $region25
  $region24: #{encoder_forward.2} parent=0 // pred_region
    %v1530 = vld [vmem:[#allocation2] sm:$0xff]
    %v1531 = vld [vmem:[#allocation2 + $0x8] sm:$0xff]
    %1532 = vst.msk [vmem:[%s5] sm:$0xff] %vm262, %v1530
    %1533 = vst.msk [vmem:[%s5 + $0x8] sm:$0xff] %vm262, %v1531
    %v1534 = vld [vmem:[#allocation3] sm:$0xff]
    %v1535 = vld [vmem:[#allocation3 + $0x8] sm:$0xff]
    %1536 = vst.msk [vmem:[%s6] sm:$0xff] %vm262, %v1534
    %1537 = vst.msk [vmem:[%s6 + $0x8] sm:$0xff] %vm262, %v1535
  $region25: #{encoder_forward.2} parent=0 // pred_fallthru
    _
  // Predicated region
  $region26: #{encoder_forward.2} parent=0 // pred_check
    _
  $region27: #{encoder_forward.2} parent=0 // pred_check_branch
    %1539 = sbr.rel (0) target = $region29
  $region28: #{encoder_forward.2} parent=0 // pred_region
    _
  $region29: #{encoder_forward.2} parent=0 // pred_fallthru
    _
  // Predicated region
  $region30: #{encoder_forward.2} parent=0 // pred_check
    _
  $region31: #{encoder_forward.2} parent=0 // pred_check_branch
    %1541 = sbr.rel (0) target = $region33
  $region32: #{encoder_forward.2} parent=0 // pred_region
    _
  $region33: #{encoder_forward.2} parent=0 // pred_fallthru
    _
  // Predicated region
  $region34: #{encoder_forward.2} parent=0 // pred_check
    _
  $region35: #{encoder_forward.2} parent=0 // pred_check_branch
    %1543 = sbr.rel (0) target = $region37
  $region36: #{encoder_forward.2} parent=0 // pred_region
    _
  $region37: #{encoder_forward.2} parent=0 // pred_fallthru
    _
  // Predicated region
  $region38: #{encoder_forward.2} parent=0 // pred_check
    _
  $region39: #{encoder_forward.2} parent=0 // pred_check_branch
    %1545 = sbr.rel (0) target = $region41
  $region40: #{encoder_forward.2} parent=0 // pred_region
    _
  $region41: #{encoder_forward.2} parent=0 // pred_fallthru
    _
  // Predicated region
  $region42: #{encoder_forward.2} parent=0 // pred_check
    _
  $region43: #{encoder_forward.2} parent=0 // pred_check_branch
    %1547 = sbr.rel (0) target = $region45
  $region44: #{encoder_forward.2} parent=0 // pred_region
    _
  $region45: #{encoder_forward.2} parent=0 // pred_fallthru
    _
  // Predicated region
  $region46: #{encoder_forward.2} parent=0 // pred_check
    _
  $region47: #{encoder_forward.2} parent=0 // pred_check_branch
    %1549 = sbr.rel (0) target = $region49
  $region48: #{encoder_forward.2} parent=0 // pred_region
    _
  $region49: #{encoder_forward.2} parent=0 // pred_fallthru
    _

// kernel: encoder_forward.3
$region0: #{encoder_forward.3}
  #allocation0 [shape = 'u32[]', space=smem, size = 0x4, offset = 0x4, fixed_abs, tag = 'smem constant byte address 0x4 - core index']
  #allocation1 [shape = 'u32[144,128]{1,0:T(1,128)}', space=vmem, size = 0x12000, scoped, tag = 'internal scratch']
  #allocation2 [shape = 'f32[16,32]{1,0:T(8,128)}', space=vmem, size = 0x2000, scoped, tag = 'scratch operand']
  #allocation3 [shape = 'f32[16,32]{1,0:T(8,128)}', space=vmem, size = 0x2000, scoped, tag = 'scratch operand']
  #allocation4 [shape = 'f32[8,16,128]{2,1,0:T(8,128)}', space=vmem, size = 0x10000, scoped, tag = 'scratch operand']
  %s0 = inlined_call_operand.vmem [shape: bf16[8,16,32], index: 0, kind: input, shape index: {}]
  %s1 = inlined_call_operand.vmem [shape: bf16[32,128], index: 1, kind: input, shape index: {}]
  %s2 = inlined_call_operand.vmem [shape: bf16[32,128], index: 2, kind: input, shape index: {}]
  %s3 = inlined_call_operand.vmem [shape: f32[1,128], index: 3, kind: input, shape index: {}]
  %s4 = inlined_call_operand.vmem [shape: f32[8,16,32], index: 4, kind: output, shape index: {0}]
  %s5 = inlined_call_operand.vmem [shape: f32[16,32], index: 5, kind: output, shape index: {1}]
  %s6 = inlined_call_operand.vmem [shape: f32[16,32], index: 6, kind: output, shape index: {2}]
  %7 = xla_tuple %s4, %s5, %s6
  %s8 = sld [smem:[#allocation0]]
  $region50: #{encoder_forward.3} parent=0
    _
  %s10 = ssub.s32 1, %s8
  %s11 = scalar_select 0, %s10, %s8
  // Predicated region
  $region2: #{encoder_forward.3} parent=0 // pred_check
    _
  $region3: #{encoder_forward.3} parent=0 // pred_check_branch
    %13 = sbr.rel (0) target = $region5
  $region4: #{encoder_forward.3} parent=0 // pred_region
    _
  $region5: #{encoder_forward.3} parent=0 // pred_fallthru
    _
  // Predicated region
  $region6: #{encoder_forward.3} parent=0 // pred_check
    _
  $region7: #{encoder_forward.3} parent=0 // pred_check_branch
    %15 = sbr.rel (0) target = $region9
  $region8: #{encoder_forward.3} parent=0 // pred_region
    _
  $region9: #{encoder_forward.3} parent=0 // pred_fallthru
    _
  // Predicated region
  $region10: #{encoder_forward.3} parent=0 // pred_check
    _
  $region11: #{encoder_forward.3} parent=0 // pred_check_branch
    %17 = sbr.rel (0) target = $region13
  $region12: #{encoder_forward.3} parent=0 // pred_region
    _
  $region13: #{encoder_forward.3} parent=0 // pred_fallthru
    _
  // Predicated region
  $region14: #{encoder_forward.3} parent=0 // pred_check
    _
  $region15: #{encoder_forward.3} parent=0 // pred_check_branch
    %19 = sbr.rel (0) target = $region17
  $region16: #{encoder_forward.3} parent=0 // pred_region
    _
  $region17: #{encoder_forward.3} parent=0 // pred_fallthru
    _
  %p21 = scmp.eq.s32.totalorder 0, 0
  // Predicated region
  $region18: #{encoder_forward.3} parent=0 // pred_check
    %p22 = pneg %p21
  $region19: #{encoder_forward.3} parent=0 // pred_check_branch
    %24 = sbr.rel (%p22) target = $region21
  $region20: #{encoder_forward.3} parent=0 // pred_region
    %vm25 = vcmask 261120
    %26 = vst.msk [vmem:[#allocation2] sm:$0xff] %vm25, 0.0
    %27 = vst.msk [vmem:[#allocation2 + $0x8] sm:$0xff] %vm25, 0.0
    %28 = vst.msk [vmem:[#allocation3] sm:$0xff] %vm25, 0.0
    %29 = vst.msk [vmem:[#allocation3 + $0x8] sm:$0xff] %vm25, 0.0
  $region21: #{encoder_forward.3} parent=0 // pred_fallthru
    _
  %v30 = vld [vmem:[%s0] sm:$0xf]
  %v31 = vld [vmem:[%s0 + $0x4] sm:$0xf]
  %v32 = vld [vmem:[%s0 + $0x8] sm:$0xf]
  %v33 = vld [vmem:[%s0 + $0xc] sm:$0xf]
  %v34 = vld [vmem:[%s0 + $0x10] sm:$0xf]
  %v35 = vld [vmem:[%s0 + $0x14] sm:$0xf]
  %v36 = vld [vmem:[%s0 + $0x18] sm:$0xf]
  %v37 = vld [vmem:[%s0 + $0x1c] sm:$0xf]
  %v38 = vld [vmem:[%s0 + $0x20] sm:$0xf]
  %v39 = vld [vmem:[%s0 + $0x24] sm:$0xf]
  %v40 = vld [vmem:[%s0 + $0x28] sm:$0xf]
  %v41 = vld [vmem:[%s0 + $0x2c] sm:$0xf]
  %v42 = vld [vmem:[%s0 + $0x30] sm:$0xf]
  %v43 = vld [vmem:[%s0 + $0x34] sm:$0xf]
  %v44 = vld [vmem:[%s0 + $0x38] sm:$0xf]
  %v45 = vld [vmem:[%s0 + $0x3c] sm:$0xf]
  %v46 = vld [vmem:[%s1] sm:$0xf]
  %v47 = vld [vmem:[%s1 + $0x4] sm:$0xf]
  %v48 = vld [vmem:[%s1 + $0x8] sm:$0xf]
  %v49 = vld [vmem:[%s1 + $0xc] sm:$0xf]
  %v50 = vld [vmem:[%s3] sm:$0x1]
  %v52 = vlaneseq
  %v53 = vshrl.u32 %v52, 7
  %v54 = vsub.s32 0, %v53
  %v55 = vrot.slane %v50, %v54
  %v73 = vunpack.c.l.b16 %v30
  %v74 = vunpack.c.l.b16 %v31
  %v75 = vunpack.c.l.b16 %v32
  %v76 = vunpack.c.l.b16 %v33
  %v77 = vunpack.c.l.b16 %v34
  %v78 = vunpack.c.l.b16 %v35
  %v79 = vunpack.c.l.b16 %v36
  %v80 = vunpack.c.l.b16 %v37
  %v81 = vunpack.c.l.b16 %v38
  %v82 = vunpack.c.l.b16 %v39
  %v83 = vunpack.c.l.b16 %v40
  %v84 = vunpack.c.l.b16 %v41
  %v85 = vunpack.c.l.b16 %v42
  %v86 = vunpack.c.l.b16 %v43
  %v87 = vunpack.c.l.b16 %v44
  %v88 = vunpack.c.l.b16 %v45
  %v89 = vpack.c.b16 %v74, %v73
  %v90 = vpack.c.b16 %v76, %v75
  %v91 = vpack.c.b16 %v78, %v77
  %v92 = vpack.c.b16 %v80, %v79
  %v93 = vpack.c.b16 %v82, %v81
  %v94 = vpack.c.b16 %v84, %v83
  %v95 = vpack.c.b16 %v86, %v85
  %v96 = vpack.c.b16 %v88, %v87
  %v101 = vunpack.c.l.b16 %v46
  %v102 = vunpack.c.l.b16 %v47
  %v103 = vunpack.c.l.b16 %v48
  %v104 = vunpack.c.l.b16 %v49
  %v105 = vpack.c.b16 %v102, %v101
  %v106 = vpack.c.b16 %v104, %v103
  %vm109 = vcmask 261120
  %v111 = vsel %vm109, %v89, 0
  %v114 = vsel %vm109, %v90, 0
  %v117 = vsel %vm109, %v91, 0
  %v120 = vsel %vm109, %v92, 0
  %v123 = vsel %vm109, %v93, 0
  %v126 = vsel %vm109, %v94, 0
  %v129 = vsel %vm109, %v95, 0
  %v132 = vsel %vm109, %v96, 0
  %134 = vmatprep.subr.bf16.mxu0 0
  %135 = vmatpush1.bf16.msra.mxu0 %v105
  %136 = vmatprep.subr.bf16.mxu0 0
  %137 = vmatpush1.bf16.msra.mxu0 %v106
  %138 = vmatprep.subr.bf16.mxu0 0
  %139 = vmatpush1.bf16.msra.mxu0 0
  %140 = vmatprep.subr.bf16.mxu0 0
  %141 = vmatpush1.bf16.msra.mxu0 0
  %142 = vmatprep.subr.bf16.mxu0 0
  %143 = vmatpush1.bf16.msra.mxu0 0
  %144 = vmatprep.subr.bf16.mxu0 0
  %145 = vmatpush1.bf16.msra.mxu0 0
  %146 = vmatprep.subr.bf16.mxu0 0
  %147 = vmatpush1.bf16.msra.mxu0 0
  %148 = vmatprep.subr.bf16.mxu0 0
  %149 = vmatpush1.bf16.msra.mxu0 0
  %150 = vmatprep.subr.bf16.mxu0 0
  %151 = vmatpush1.bf16.msra.mxu0 0
  %152 = vmatprep.subr.bf16.mxu0 0
  %153 = vmatpush1.bf16.msra.mxu0 0
  %154 = vmatprep.subr.bf16.mxu0 0
  %155 = vmatpush1.bf16.msra.mxu0 0
  %156 = vmatprep.subr.bf16.mxu0 0
  %157 = vmatpush1.bf16.msra.mxu0 0
  %158 = vmatprep.subr.bf16.mxu0 0
  %159 = vmatpush1.bf16.msra.mxu0 0
  %160 = vmatprep.subr.bf16.mxu0 0
  %161 = vmatpush1.bf16.msra.mxu0 0
  %162 = vmatprep.subr.bf16.mxu0 0
  %163 = vmatpush1.bf16.msra.mxu0 0
  %164 = vmatprep.subr.bf16.mxu0 0
  %165 = vmatpush1.bf16.msra.mxu0 0
  %166 = vmatprep.mubr.bf16.mxu0 0
  %167 = vmatmul.mubr.bf16.gmra.mrb[0].mxu0 %v111
  %v168 = vpop.f32.mrb[0].mxu0
  %v169 = vadd.f32 %v55, %v168
  %v170 = vpop.f32.mrb[0].mxu0
  %v171 = vpop.f32.mrb[0].mxu0
  %v172 = vadd.f32 %v55, %v171
  %v173 = vpop.f32.mrb[0].mxu0
  %174 = vmatprep.mubr.bf16.mxu0 0
  %175 = vmatmul.mubr.bf16.gmra.mrb[0].mxu0 %v114
  %v176 = vpop.f32.mrb[0].mxu0
  %v177 = vadd.f32 %v55, %v176
  %v178 = vpop.f32.mrb[0].mxu0
  %v179 = vpop.f32.mrb[0].mxu0
  %v180 = vadd.f32 %v55, %v179
  %v181 = vpop.f32.mrb[0].mxu0
  %182 = vmatprep.mubr.bf16.mxu0 0
  %183 = vmatmul.mubr.bf16.gmra.mrb[0].mxu0 %v117
  %v184 = vpop.f32.mrb[0].mxu0
  %v185 = vadd.f32 %v55, %v184
  %v186 = vpop.f32.mrb[0].mxu0
  %v187 = vpop.f32.mrb[0].mxu0
  %v188 = vadd.f32 %v55, %v187
  %v189 = vpop.f32.mrb[0].mxu0
  %190 = vmatprep.mubr.bf16.mxu0 0
  %191 = vmatmul.mubr.bf16.gmra.mrb[0].mxu0 %v120
  %v192 = vpop.f32.mrb[0].mxu0
  %v193 = vadd.f32 %v55, %v192
  %v194 = vpop.f32.mrb[0].mxu0
  %v195 = vpop.f32.mrb[0].mxu0
  %v196 = vadd.f32 %v55, %v195
  %v197 = vpop.f32.mrb[0].mxu0
  %198 = vmatprep.mubr.bf16.mxu0 0
  %199 = vmatmul.mubr.bf16.gmra.mrb[0].mxu0 %v123
  %v200 = vpop.f32.mrb[0].mxu0
  %v201 = vadd.f32 %v55, %v200
  %v202 = vpop.f32.mrb[0].mxu0
  %v203 = vpop.f32.mrb[0].mxu0
  %v204 = vadd.f32 %v55, %v203
  %v205 = vpop.f32.mrb[0].mxu0
  %206 = vmatprep.mubr.bf16.mxu0 0
  %207 = vmatmul.mubr.bf16.gmra.mrb[0].mxu0 %v126
  %v208 = vpop.f32.mrb[0].mxu0
  %v209 = vadd.f32 %v55, %v208
  %v210 = vpop.f32.mrb[0].mxu0
  %v211 = vpop.f32.mrb[0].mxu0
  %v212 = vadd.f32 %v55, %v211
  %v213 = vpop.f32.mrb[0].mxu0
  %214 = vmatprep.mubr.bf16.mxu0 0
  %215 = vmatmul.mubr.bf16.gmra.mrb[0].mxu0 %v129
  %v216 = vpop.f32.mrb[0].mxu0
  %v217 = vadd.f32 %v55, %v216
  %v218 = vpop.f32.mrb[0].mxu0
  %v219 = vpop.f32.mrb[0].mxu0
  %v220 = vadd.f32 %v55, %v219
  %v221 = vpop.f32.mrb[0].mxu0
  %222 = vmatprep.mubr.bf16.mxu0 0
  %223 = vmatmul.mubr.bf16.gmra.mrb[0].mxu0 %v132
  %v224 = vpop.f32.mrb[0].mxu0
  %v225 = vadd.f32 %v55, %v224
  %v226 = vpop.f32.mrb[0].mxu0
  %v227 = vpop.f32.mrb[0].mxu0
  %v228 = vadd.f32 %v55, %v227
  %v229 = vpop.f32.mrb[0].mxu0
  %230 = vdwg.mxu0
  %231 = vst [vmem:[#allocation4] sm:$0xff] %v169
  %232 = vst [vmem:[#allocation4 + $0x8] sm:$0xff] %v172
  %233 = vst [vmem:[#allocation4 + $0x10] sm:$0xff] %v177
  %234 = vst [vmem:[#allocation4 + $0x18] sm:$0xff] %v180
  %235 = vst [vmem:[#allocation4 + $0x20] sm:$0xff] %v185
  %236 = vst [vmem:[#allocation4 + $0x28] sm:$0xff] %v188
  %237 = vst [vmem:[#allocation4 + $0x30] sm:$0xff] %v193
  %238 = vst [vmem:[#allocation4 + $0x38] sm:$0xff] %v196
  %239 = vst [vmem:[#allocation4 + $0x40] sm:$0xff] %v201
  %240 = vst [vmem:[#allocation4 + $0x48] sm:$0xff] %v204
  %241 = vst [vmem:[#allocation4 + $0x50] sm:$0xff] %v209
  %242 = vst [vmem:[#allocation4 + $0x58] sm:$0xff] %v212
  %243 = vst [vmem:[#allocation4 + $0x60] sm:$0xff] %v217
  %244 = vst [vmem:[#allocation4 + $0x68] sm:$0xff] %v220
  %245 = vst [vmem:[#allocation4 + $0x70] sm:$0xff] %v225
  %246 = vst [vmem:[#allocation4 + $0x78] sm:$0xff] %v228
  %v247 = vld [vmem:[#allocation2] sm:$0xff]
  %v248 = vld [vmem:[#allocation2 + $0x8] sm:$0xff]
  %v249 = vld [vmem:[#allocation3] sm:$0xff]
  %v250 = vld [vmem:[#allocation3 + $0x8] sm:$0xff]
  %v251 = vld [vmem:[#allocation4] sm:$0xff]
  %v252 = vld [vmem:[#allocation4 + $0x8] sm:$0xff]
  %v253 = vpack.c.bf16 %v248, %v247
  %v254 = vld [vmem:[%s2] sm:$0xf]
  %v255 = vld [vmem:[%s2 + $0x4] sm:$0xf]
  %v256 = vld [vmem:[%s2 + $0x8] sm:$0xf]
  %v257 = vld [vmem:[%s2 + $0xc] sm:$0xf]
  %v262 = vunpack.c.l.b16 %v254
  %v263 = vunpack.c.l.b16 %v255
  %v264 = vunpack.c.l.b16 %v256
  %v265 = vunpack.c.l.b16 %v257
  %v266 = vpack.c.b16 %v263, %v262
  %v267 = vpack.c.b16 %v265, %v264
  %v271 = vsel %vm109, %v253, 0
  %273 = vmatprep.subr.bf16.mxu0 0
  %274 = vmatpush1.bf16.msra.mxu0 %v266
  %275 = vmatprep.subr.bf16.mxu0 0
  %276 = vmatpush1.bf16.msra.mxu0 %v267
  %277 = vmatprep.subr.bf16.mxu0 0
  %278 = vmatpush1.bf16.msra.mxu0 0
  %279 = vmatprep.subr.bf16.mxu0 0
  %280 = vmatpush1.bf16.msra.mxu0 0
  %281 = vmatprep.subr.bf16.mxu0 0
  %282 = vmatpush1.bf16.msra.mxu0 0
  %283 = vmatprep.subr.bf16.mxu0 0
  %284 = vmatpush1.bf16.msra.mxu0 0
  %285 = vmatprep.subr.bf16.mxu0 0
  %286 = vmatpush1.bf16.msra.mxu0 0
  %287 = vmatprep.subr.bf16.mxu0 0
  %288 = vmatpush1.bf16.msra.mxu0 0
  %289 = vmatprep.subr.bf16.mxu0 0
  %290 = vmatpush1.bf16.msra.mxu0 0
  %291 = vmatprep.subr.bf16.mxu0 0
  %292 = vmatpush1.bf16.msra.mxu0 0
  %293 = vmatprep.subr.bf16.mxu0 0
  %294 = vmatpush1.bf16.msra.mxu0 0
  %295 = vmatprep.subr.bf16.mxu0 0
  %296 = vmatpush1.bf16.msra.mxu0 0
  %297 = vmatprep.subr.bf16.mxu0 0
  %298 = vmatpush1.bf16.msra.mxu0 0
  %299 = vmatprep.subr.bf16.mxu0 0
  %300 = vmatpush1.bf16.msra.mxu0 0
  %301 = vmatprep.subr.bf16.mxu0 0
  %302 = vmatpush1.bf16.msra.mxu0 0
  %303 = vmatprep.subr.bf16.mxu0 0
  %304 = vmatpush1.bf16.msra.mxu0 0
  %305 = vmatprep.mubr.bf16.mxu0 0
  %306 = vmatmul.mubr.bf16.gmra.mrb[0].mxu0 %v271
  %v307 = vpop.f32.mrb[0].mxu0
  %v308 = vadd.f32 0.0, %v307
  %v309 = vpop.f32.mrb[0].mxu0
  %v310 = vpop.f32.mrb[0].mxu0
  %v311 = vadd.f32 0.0, %v310
  %v312 = vpop.f32.mrb[0].mxu0
  %313 = vdwg.mxu0
  %v314 = vadd.f32 %v251, %v308
  %v315 = vadd.f32 %v252, %v311
  %v316 = vxor.u32 %v314, 2147483648
  %v317 = vxor.u32 %v315, 2147483648
  %v318 = vmul.f32 %v316, 1.442695
  %v319 = vpow.pop %v318
  %v320 = vmul.f32 %v317, 1.442695
  %v321 = vpow.pop %v320
  %v322 = vadd.f32 %v319, 1.0
  %v323 = vadd.f32 %v321, 1.0
  %v324 = vrcp.pop %v322
  %v325 = vmul.f32 1.0, %v324
  %v326 = vrcp.pop %v323
  %v327 = vmul.f32 1.0, %v326
  %v328 = vtanh.pop %v314
  %v329 = vtanh.pop %v315
  %332 = vrot.lane.b32.xlu0 %v249, 32
  %v333 = vpop.permute.xlu0 %332
  %334 = vrot.lane.b32.xlu0 %v250, 32
  %v335 = vpop.permute.xlu0 %334
  %v338 = vmul.f32 %v325, %v333
  %v339 = vmul.f32 %v327, %v335
  %342 = vrot.lane.b32.xlu0 %v328, 64
  %v343 = vpop.permute.xlu0 %342
  %344 = vrot.lane.b32.xlu0 %v329, 64
  %v345 = vpop.permute.xlu0 %344
  %v348 = vmul.f32 %v325, %v343
  %v349 = vmul.f32 %v327, %v345
  %352 = vrot.lane.b32.xlu0 %v348, 32
  %v353 = vpop.permute.xlu0 %352
  %354 = vrot.lane.b32.xlu0 %v349, 32
  %v355 = vpop.permute.xlu0 %354
  %v358 = vadd.f32 %v338, %v353
  %v359 = vadd.f32 %v339, %v355
  %v360 = vtanh.pop %v358
  %v361 = vtanh.pop %v359
  %364 = vrot.lane.b32.xlu0 %v360, 64
  %v365 = vpop.permute.xlu0 %364
  %366 = vrot.lane.b32.xlu0 %v361, 64
  %v367 = vpop.permute.xlu0 %366
  %v370 = vmul.f32 %v325, %v365
  %v371 = vmul.f32 %v327, %v367
  %374 = vrot.lane.b32.xlu0 %v370, 32
  %v375 = vpop.permute.xlu0 %374
  %376 = vrot.lane.b32.xlu0 %v371, 32
  %v377 = vpop.permute.xlu0 %376
  %380 = vst.msk [vmem:[#allocation2] sm:$0xff] %vm109, %v375
  %381 = vst.msk [vmem:[#allocation2 + $0x8] sm:$0xff] %vm109, %v377
  %384 = vrot.lane.b32.xlu0 %v358, 96
  %v385 = vpop.permute.xlu0 %384
  %386 = vrot.lane.b32.xlu0 %v359, 96
  %v387 = vpop.permute.xlu0 %386
  %390 = vst.msk [vmem:[#allocation3] sm:$0xff] %vm109, %v385
  %391 = vst.msk [vmem:[#allocation3 + $0x8] sm:$0xff] %vm109, %v387
  %392 = vst.msk [vmem:[%s4] sm:$0xff] %vm109, %v375
  %393 = vst.msk [vmem:[%s4 + $0x8] sm:$0xff] %vm109, %v377
  %v394 = vld [vmem:[#allocation2] sm:$0xff]
  %v395 = vld [vmem:[#allocation2 + $0x8] sm:$0xff]
  %v396 = vld [vmem:[#allocation3] sm:$0xff]
  %v397 = vld [vmem:[#allocation3 + $0x8] sm:$0xff]
  %s398 = scalar_lea.vmem [#allocation4], 16
  %v399 = vld [vmem:[%s398] sm:$0xff]
  %v400 = vld [vmem:[%s398 + $0x8] sm:$0xff]
  %v401 = vpack.c.bf16 %v395, %v394
  %v402 = vld [vmem:[%s2] sm:$0xf]
  %v403 = vld [vmem:[%s2 + $0x4] sm:$0xf]
  %v404 = vld [vmem:[%s2 + $0x8] sm:$0xf]
  %v405 = vld [vmem:[%s2 + $0xc] sm:$0xf]
  %v410 = vunpack.c.l.b16 %v402
  %v411 = vunpack.c.l.b16 %v403
  %v412 = vunpack.c.l.b16 %v404
  %v413 = vunpack.c.l.b16 %v405
  %v414 = vpack.c.b16 %v411, %v410
  %v415 = vpack.c.b16 %v413, %v412
  %v419 = vsel %vm109, %v401, 0
  %421 = vmatprep.subr.bf16.mxu0 0
  %422 = vmatpush1.bf16.msra.mxu0 %v414
  %423 = vmatprep.subr.bf16.mxu0 0
  %424 = vmatpush1.bf16.msra.mxu0 %v415
  %425 = vmatprep.subr.bf16.mxu0 0
  %426 = vmatpush1.bf16.msra.mxu0 0
  %427 = vmatprep.subr.bf16.mxu0 0
  %428 = vmatpush1.bf16.msra.mxu0 0
  %429 = vmatprep.subr.bf16.mxu0 0
  %430 = vmatpush1.bf16.msra.mxu0 0
  %431 = vmatprep.subr.bf16.mxu0 0
  %432 = vmatpush1.bf16.msra.mxu0 0
  %433 = vmatprep.subr.bf16.mxu0 0
  %434 = vmatpush1.bf16.msra.mxu0 0
  %435 = vmatprep.subr.bf16.mxu0 0
  %436 = vmatpush1.bf16.msra.mxu0 0
  %437 = vmatprep.subr.bf16.mxu0 0
  %438 = vmatpush1.bf16.msra.mxu0 0
  %439 = vmatprep.subr.bf16.mxu0 0
  %440 = vmatpush1.bf16.msra.mxu0 0
  %441 = vmatprep.subr.bf16.mxu0 0
  %442 = vmatpush1.bf16.msra.mxu0 0
  %443 = vmatprep.subr.bf16.mxu0 0
  %444 = vmatpush1.bf16.msra.mxu0 0
  %445 = vmatprep.subr.bf16.mxu0 0
  %446 = vmatpush1.bf16.msra.mxu0 0
  %447 = vmatprep.subr.bf16.mxu0 0
  %448 = vmatpush1.bf16.msra.mxu0 0
  %449 = vmatprep.subr.bf16.mxu0 0
  %450 = vmatpush1.bf16.msra.mxu0 0
  %451 = vmatprep.subr.bf16.mxu0 0
  %452 = vmatpush1.bf16.msra.mxu0 0
  %453 = vmatprep.mubr.bf16.mxu0 0
  %454 = vmatmul.mubr.bf16.gmra.mrb[0].mxu0 %v419
  %v455 = vpop.f32.mrb[0].mxu0
  %v456 = vadd.f32 0.0, %v455
  %v457 = vpop.f32.mrb[0].mxu0
  %v458 = vpop.f32.mrb[0].mxu0
  %v459 = vadd.f32 0.0, %v458
  %v460 = vpop.f32.mrb[0].mxu0
  %461 = vdwg.mxu0
  %v462 = vadd.f32 %v399, %v456
  %v463 = vadd.f32 %v400, %v459
  %v464 = vxor.u32 %v462, 2147483648
  %v465 = vxor.u32 %v463, 2147483648
  %v466 = vmul.f32 %v464, 1.442695
  %v467 = vpow.pop %v466
  %v468 = vmul.f32 %v465, 1.442695
  %v469 = vpow.pop %v468
  %v470 = vadd.f32 %v467, 1.0
  %v471 = vadd.f32 %v469, 1.0
  %v472 = vrcp.pop %v470
  %v473 = vmul.f32 1.0, %v472
  %v474 = vrcp.pop %v471
  %v475 = vmul.f32 1.0, %v474
  %v476 = vtanh.pop %v462
  %v477 = vtanh.pop %v463
  %480 = vrot.lane.b32.xlu0 %v396, 32
  %v481 = vpop.permute.xlu0 %480
  %482 = vrot.lane.b32.xlu0 %v397, 32
  %v483 = vpop.permute.xlu0 %482
  %v486 = vmul.f32 %v473, %v481
  %v487 = vmul.f32 %v475, %v483
  %490 = vrot.lane.b32.xlu0 %v476, 64
  %v491 = vpop.permute.xlu0 %490
  %492 = vrot.lane.b32.xlu0 %v477, 64
  %v493 = vpop.permute.xlu0 %492
  %v496 = vmul.f32 %v473, %v491
  %v497 = vmul.f32 %v475, %v493
  %500 = vrot.lane.b32.xlu0 %v496, 32
  %v501 = vpop.permute.xlu0 %500
  %502 = vrot.lane.b32.xlu0 %v497, 32
  %v503 = vpop.permute.xlu0 %502
  %v506 = vadd.f32 %v486, %v501
  %v507 = vadd.f32 %v487, %v503
  %v508 = vtanh.pop %v506
  %v509 = vtanh.pop %v507
  %512 = vrot.lane.b32.xlu0 %v508, 64
  %v513 = vpop.permute.xlu0 %512
  %514 = vrot.lane.b32.xlu0 %v509, 64
  %v515 = vpop.permute.xlu0 %514
  %v518 = vmul.f32 %v473, %v513
  %v519 = vmul.f32 %v475, %v515
  %522 = vrot.lane.b32.xlu0 %v518, 32
  %v523 = vpop.permute.xlu0 %522
  %524 = vrot.lane.b32.xlu0 %v519, 32
  %v525 = vpop.permute.xlu0 %524
  %528 = vst.msk [vmem:[#allocation2] sm:$0xff] %vm109, %v523
  %529 = vst.msk [vmem:[#allocation2 + $0x8] sm:$0xff] %vm109, %v525
  %532 = vrot.lane.b32.xlu0 %v506, 96
  %v533 = vpop.permute.xlu0 %532
  %534 = vrot.lane.b32.xlu0 %v507, 96
  %v535 = vpop.permute.xlu0 %534
  %538 = vst.msk [vmem:[#allocation3] sm:$0xff] %vm109, %v533
  %539 = vst.msk [vmem:[#allocation3 + $0x8] sm:$0xff] %vm109, %v535
  %s540 = scalar_lea.vmem %s4, 16
  %541 = vst.msk [vmem:[%s540] sm:$0xff] %vm109, %v523
  %542 = vst.msk [vmem:[%s540 + $0x8] sm:$0xff] %vm109, %v525
  %v543 = vld [vmem:[#allocation2] sm:$0xff]
  %v544 = vld [vmem:[#allocation2 + $0x8] sm:$0xff]
  %v545 = vld [vmem:[#allocation3] sm:$0xff]
  %v546 = vld [vmem:[#allocation3 + $0x8] sm:$0xff]
  %s547 = scalar_lea.vmem [#allocation4], 32
  %v548 = vld [vmem:[%s547] sm:$0xff]
  %v549 = vld [vmem:[%s547 + $0x8] sm:$0xff]
  %v550 = vpack.c.bf16 %v544, %v543
  %v551 = vld [vmem:[%s2] sm:$0xf]
  %v552 = vld [vmem:[%s2 + $0x4] sm:$0xf]
  %v553 = vld [vmem:[%s2 + $0x8] sm:$0xf]
  %v554 = vld [vmem:[%s2 + $0xc] sm:$0xf]
  %v559 = vunpack.c.l.b16 %v551
  %v560 = vunpack.c.l.b16 %v552
  %v561 = vunpack.c.l.b16 %v553
  %v562 = vunpack.c.l.b16 %v554
  %v563 = vpack.c.b16 %v560, %v559
  %v564 = vpack.c.b16 %v562, %v561
  %v568 = vsel %vm109, %v550, 0
  %570 = vmatprep.subr.bf16.mxu0 0
  %571 = vmatpush1.bf16.msra.mxu0 %v563
  %572 = vmatprep.subr.bf16.mxu0 0
  %573 = vmatpush1.bf16.msra.mxu0 %v564
  %574 = vmatprep.subr.bf16.mxu0 0
  %575 = vmatpush1.bf16.msra.mxu0 0
  %576 = vmatprep.subr.bf16.mxu0 0
  %577 = vmatpush1.bf16.msra.mxu0 0
  %578 = vmatprep.subr.bf16.mxu0 0
  %579 = vmatpush1.bf16.msra.mxu0 0
  %580 = vmatprep.subr.bf16.mxu0 0
  %581 = vmatpush1.bf16.msra.mxu0 0
  %582 = vmatprep.subr.bf16.mxu0 0
  %583 = vmatpush1.bf16.msra.mxu0 0
  %584 = vmatprep.subr.bf16.mxu0 0
  %585 = vmatpush1.bf16.msra.mxu0 0
  %586 = vmatprep.subr.bf16.mxu0 0
  %587 = vmatpush1.bf16.msra.mxu0 0
  %588 = vmatprep.subr.bf16.mxu0 0
  %589 = vmatpush1.bf16.msra.mxu0 0
  %590 = vmatprep.subr.bf16.mxu0 0
  %591 = vmatpush1.bf16.msra.mxu0 0
  %592 = vmatprep.subr.bf16.mxu0 0
  %593 = vmatpush1.bf16.msra.mxu0 0
  %594 = vmatprep.subr.bf16.mxu0 0
  %595 = vmatpush1.bf16.msra.mxu0 0
  %596 = vmatprep.subr.bf16.mxu0 0
  %597 = vmatpush1.bf16.msra.mxu0 0
  %598 = vmatprep.subr.bf16.mxu0 0
  %599 = vmatpush1.bf16.msra.mxu0 0
  %600 = vmatprep.subr.bf16.mxu0 0
  %601 = vmatpush1.bf16.msra.mxu0 0
  %602 = vmatprep.mubr.bf16.mxu0 0
  %603 = vmatmul.mubr.bf16.gmra.mrb[0].mxu0 %v568
  %v604 = vpop.f32.mrb[0].mxu0
  %v605 = vadd.f32 0.0, %v604
  %v606 = vpop.f32.mrb[0].mxu0
  %v607 = vpop.f32.mrb[0].mxu0
  %v608 = vadd.f32 0.0, %v607
  %v609 = vpop.f32.mrb[0].mxu0
  %610 = vdwg.mxu0
  %v611 = vadd.f32 %v548, %v605
  %v612 = vadd.f32 %v549, %v608
  %v613 = vxor.u32 %v611, 2147483648
  %v614 = vxor.u32 %v612, 2147483648
  %v615 = vmul.f32 %v613, 1.442695
  %v616 = vpow.pop %v615
  %v617 = vmul.f32 %v614, 1.442695
  %v618 = vpow.pop %v617
  %v619 = vadd.f32 %v616, 1.0
  %v620 = vadd.f32 %v618, 1.0
  %v621 = vrcp.pop %v619
  %v622 = vmul.f32 1.0, %v621
  %v623 = vrcp.pop %v620
  %v624 = vmul.f32 1.0, %v623
  %v625 = vtanh.pop %v611
  %v626 = vtanh.pop %v612
  %629 = vrot.lane.b32.xlu0 %v545, 32
  %v630 = vpop.permute.xlu0 %629
  %631 = vrot.lane.b32.xlu0 %v546, 32
  %v632 = vpop.permute.xlu0 %631
  %v635 = vmul.f32 %v622, %v630
  %v636 = vmul.f32 %v624, %v632
  %639 = vrot.lane.b32.xlu0 %v625, 64
  %v640 = vpop.permute.xlu0 %639
  %641 = vrot.lane.b32.xlu0 %v626, 64
  %v642 = vpop.permute.xlu0 %641
  %v645 = vmul.f32 %v622, %v640
  %v646 = vmul.f32 %v624, %v642
  %649 = vrot.lane.b32.xlu0 %v645, 32
  %v650 = vpop.permute.xlu0 %649
  %651 = vrot.lane.b32.xlu0 %v646, 32
  %v652 = vpop.permute.xlu0 %651
  %v655 = vadd.f32 %v635, %v650
  %v656 = vadd.f32 %v636, %v652
  %v657 = vtanh.pop %v655
  %v658 = vtanh.pop %v656
  %661 = vrot.lane.b32.xlu0 %v657, 64
  %v662 = vpop.permute.xlu0 %661
  %663 = vrot.lane.b32.xlu0 %v658, 64
  %v664 = vpop.permute.xlu0 %663
  %v667 = vmul.f32 %v622, %v662
  %v668 = vmul.f32 %v624, %v664
  %671 = vrot.lane.b32.xlu0 %v667, 32
  %v672 = vpop.permute.xlu0 %671
  %673 = vrot.lane.b32.xlu0 %v668, 32
  %v674 = vpop.permute.xlu0 %673
  %677 = vst.msk [vmem:[#allocation2] sm:$0xff] %vm109, %v672
  %678 = vst.msk [vmem:[#allocation2 + $0x8] sm:$0xff] %vm109, %v674
  %681 = vrot.lane.b32.xlu0 %v655, 96
  %v682 = vpop.permute.xlu0 %681
  %683 = vrot.lane.b32.xlu0 %v656, 96
  %v684 = vpop.permute.xlu0 %683
  %687 = vst.msk [vmem:[#allocation3] sm:$0xff] %vm109, %v682
  %688 = vst.msk [vmem:[#allocation3 + $0x8] sm:$0xff] %vm109, %v684
  %s689 = scalar_lea.vmem %s4, 32
  %690 = vst.msk [vmem:[%s689] sm:$0xff] %vm109, %v672
  %691 = vst.msk [vmem:[%s689 + $0x8] sm:$0xff] %vm109, %v674
  %v692 = vld [vmem:[#allocation2] sm:$0xff]
  %v693 = vld [vmem:[#allocation2 + $0x8] sm:$0xff]
  %v694 = vld [vmem:[#allocation3] sm:$0xff]
  %v695 = vld [vmem:[#allocation3 + $0x8] sm:$0xff]
  %s696 = scalar_lea.vmem [#allocation4], 48
  %v697 = vld [vmem:[%s696] sm:$0xff]
  %v698 = vld [vmem:[%s696 + $0x8] sm:$0xff]
  %v699 = vpack.c.bf16 %v693, %v692
  %v700 = vld [vmem:[%s2] sm:$0xf]
  %v701 = vld [vmem:[%s2 + $0x4] sm:$0xf]
  %v702 = vld [vmem:[%s2 + $0x8] sm:$0xf]
  %v703 = vld [vmem:[%s2 + $0xc] sm:$0xf]
  %v708 = vunpack.c.l.b16 %v700
  %v709 = vunpack.c.l.b16 %v701
  %v710 = vunpack.c.l.b16 %v702
  %v711 = vunpack.c.l.b16 %v703
  %v712 = vpack.c.b16 %v709, %v708
  %v713 = vpack.c.b16 %v711, %v710
  %v717 = vsel %vm109, %v699, 0
  %719 = vmatprep.subr.bf16.mxu0 0
  %720 = vmatpush1.bf16.msra.mxu0 %v712
  %721 = vmatprep.subr.bf16.mxu0 0
  %722 = vmatpush1.bf16.msra.mxu0 %v713
  %723 = vmatprep.subr.bf16.mxu0 0
  %724 = vmatpush1.bf16.msra.mxu0 0
  %725 = vmatprep.subr.bf16.mxu0 0
  %726 = vmatpush1.bf16.msra.mxu0 0
  %727 = vmatprep.subr.bf16.mxu0 0
  %728 = vmatpush1.bf16.msra.mxu0 0
  %729 = vmatprep.subr.bf16.mxu0 0
  %730 = vmatpush1.bf16.msra.mxu0 0
  %731 = vmatprep.subr.bf16.mxu0 0
  %732 = vmatpush1.bf16.msra.mxu0 0
  %733 = vmatprep.subr.bf16.mxu0 0
  %734 = vmatpush1.bf16.msra.mxu0 0
  %735 = vmatprep.subr.bf16.mxu0 0
  %736 = vmatpush1.bf16.msra.mxu0 0
  %737 = vmatprep.subr.bf16.mxu0 0
  %738 = vmatpush1.bf16.msra.mxu0 0
  %739 = vmatprep.subr.bf16.mxu0 0
  %740 = vmatpush1.bf16.msra.mxu0 0
  %741 = vmatprep.subr.bf16.mxu0 0
  %742 = vmatpush1.bf16.msra.mxu0 0
  %743 = vmatprep.subr.bf16.mxu0 0
  %744 = vmatpush1.bf16.msra.mxu0 0
  %745 = vmatprep.subr.bf16.mxu0 0
  %746 = vmatpush1.bf16.msra.mxu0 0
  %747 = vmatprep.subr.bf16.mxu0 0
  %748 = vmatpush1.bf16.msra.mxu0 0
  %749 = vmatprep.subr.bf16.mxu0 0
  %750 = vmatpush1.bf16.msra.mxu0 0
  %751 = vmatprep.mubr.bf16.mxu0 0
  %752 = vmatmul.mubr.bf16.gmra.mrb[0].mxu0 %v717
  %v753 = vpop.f32.mrb[0].mxu0
  %v754 = vadd.f32 0.0, %v753
  %v755 = vpop.f32.mrb[0].mxu0
  %v756 = vpop.f32.mrb[0].mxu0
  %v757 = vadd.f32 0.0, %v756
  %v758 = vpop.f32.mrb[0].mxu0
  %759 = vdwg.mxu0
  %v760 = vadd.f32 %v697, %v754
  %v761 = vadd.f32 %v698, %v757
  %v762 = vxor.u32 %v760, 2147483648
  %v763 = vxor.u32 %v761, 2147483648
  %v764 = vmul.f32 %v762, 1.442695
  %v765 = vpow.pop %v764
  %v766 = vmul.f32 %v763, 1.442695
  %v767 = vpow.pop %v766
  %v768 = vadd.f32 %v765, 1.0
  %v769 = vadd.f32 %v767, 1.0
  %v770 = vrcp.pop %v768
  %v771 = vmul.f32 1.0, %v770
  %v772 = vrcp.pop %v769
  %v773 = vmul.f32 1.0, %v772
  %v774 = vtanh.pop %v760
  %v775 = vtanh.pop %v761
  %778 = vrot.lane.b32.xlu0 %v694, 32
  %v779 = vpop.permute.xlu0 %778
  %780 = vrot.lane.b32.xlu0 %v695, 32
  %v781 = vpop.permute.xlu0 %780
  %v784 = vmul.f32 %v771, %v779
  %v785 = vmul.f32 %v773, %v781
  %788 = vrot.lane.b32.xlu0 %v774, 64
  %v789 = vpop.permute.xlu0 %788
  %790 = vrot.lane.b32.xlu0 %v775, 64
  %v791 = vpop.permute.xlu0 %790
  %v794 = vmul.f32 %v771, %v789
  %v795 = vmul.f32 %v773, %v791
  %798 = vrot.lane.b32.xlu0 %v794, 32
  %v799 = vpop.permute.xlu0 %798
  %800 = vrot.lane.b32.xlu0 %v795, 32
  %v801 = vpop.permute.xlu0 %800
  %v804 = vadd.f32 %v784, %v799
  %v805 = vadd.f32 %v785, %v801
  %v806 = vtanh.pop %v804
  %v807 = vtanh.pop %v805
  %810 = vrot.lane.b32.xlu0 %v806, 64
  %v811 = vpop.permute.xlu0 %810
  %812 = vrot.lane.b32.xlu0 %v807, 64
  %v813 = vpop.permute.xlu0 %812
  %v816 = vmul.f32 %v771, %v811
  %v817 = vmul.f32 %v773, %v813
  %820 = vrot.lane.b32.xlu0 %v816, 32
  %v821 = vpop.permute.xlu0 %820
  %822 = vrot.lane.b32.xlu0 %v817, 32
  %v823 = vpop.permute.xlu0 %822
  %826 = vst.msk [vmem:[#allocation2] sm:$0xff] %vm109, %v821
  %827 = vst.msk [vmem:[#allocation2 + $0x8] sm:$0xff] %vm109, %v823
  %830 = vrot.lane.b32.xlu0 %v804, 96
  %v831 = vpop.permute.xlu0 %830
  %832 = vrot.lane.b32.xlu0 %v805, 96
  %v833 = vpop.permute.xlu0 %832
  %836 = vst.msk [vmem:[#allocation3] sm:$0xff] %vm109, %v831
  %837 = vst.msk [vmem:[#allocation3 + $0x8] sm:$0xff] %vm109, %v833
  %s838 = scalar_lea.vmem %s4, 48
  %839 = vst.msk [vmem:[%s838] sm:$0xff] %vm109, %v821
  %840 = vst.msk [vmem:[%s838 + $0x8] sm:$0xff] %vm109, %v823
  %v841 = vld [vmem:[#allocation2] sm:$0xff]
  %v842 = vld [vmem:[#allocation2 + $0x8] sm:$0xff]
  %v843 = vld [vmem:[#allocation3] sm:$0xff]
  %v844 = vld [vmem:[#allocation3 + $0x8] sm:$0xff]
  %s845 = scalar_lea.vmem [#allocation4], 64
  %v846 = vld [vmem:[%s845] sm:$0xff]
  %v847 = vld [vmem:[%s845 + $0x8] sm:$0xff]
  %v848 = vpack.c.bf16 %v842, %v841
  %v849 = vld [vmem:[%s2] sm:$0xf]
  %v850 = vld [vmem:[%s2 + $0x4] sm:$0xf]
  %v851 = vld [vmem:[%s2 + $0x8] sm:$0xf]
  %v852 = vld [vmem:[%s2 + $0xc] sm:$0xf]
  %v857 = vunpack.c.l.b16 %v849
  %v858 = vunpack.c.l.b16 %v850
  %v859 = vunpack.c.l.b16 %v851
  %v860 = vunpack.c.l.b16 %v852
  %v861 = vpack.c.b16 %v858, %v857
  %v862 = vpack.c.b16 %v860, %v859
  %v866 = vsel %vm109, %v848, 0
  %868 = vmatprep.subr.bf16.mxu0 0
  %869 = vmatpush1.bf16.msra.mxu0 %v861
  %870 = vmatprep.subr.bf16.mxu0 0
  %871 = vmatpush1.bf16.msra.mxu0 %v862
  %872 = vmatprep.subr.bf16.mxu0 0
  %873 = vmatpush1.bf16.msra.mxu0 0
  %874 = vmatprep.subr.bf16.mxu0 0
  %875 = vmatpush1.bf16.msra.mxu0 0
  %876 = vmatprep.subr.bf16.mxu0 0
  %877 = vmatpush1.bf16.msra.mxu0 0
  %878 = vmatprep.subr.bf16.mxu0 0
  %879 = vmatpush1.bf16.msra.mxu0 0
  %880 = vmatprep.subr.bf16.mxu0 0
  %881 = vmatpush1.bf16.msra.mxu0 0
  %882 = vmatprep.subr.bf16.mxu0 0
  %883 = vmatpush1.bf16.msra.mxu0 0
  %884 = vmatprep.subr.bf16.mxu0 0
  %885 = vmatpush1.bf16.msra.mxu0 0
  %886 = vmatprep.subr.bf16.mxu0 0
  %887 = vmatpush1.bf16.msra.mxu0 0
  %888 = vmatprep.subr.bf16.mxu0 0
  %889 = vmatpush1.bf16.msra.mxu0 0
  %890 = vmatprep.subr.bf16.mxu0 0
  %891 = vmatpush1.bf16.msra.mxu0 0
  %892 = vmatprep.subr.bf16.mxu0 0
  %893 = vmatpush1.bf16.msra.mxu0 0
  %894 = vmatprep.subr.bf16.mxu0 0
  %895 = vmatpush1.bf16.msra.mxu0 0
  %896 = vmatprep.subr.bf16.mxu0 0
  %897 = vmatpush1.bf16.msra.mxu0 0
  %898 = vmatprep.subr.bf16.mxu0 0
  %899 = vmatpush1.bf16.msra.mxu0 0
  %900 = vmatprep.mubr.bf16.mxu0 0
  %901 = vmatmul.mubr.bf16.gmra.mrb[0].mxu0 %v866
  %v902 = vpop.f32.mrb[0].mxu0
  %v903 = vadd.f32 0.0, %v902
  %v904 = vpop.f32.mrb[0].mxu0
  %v905 = vpop.f32.mrb[0].mxu0
  %v906 = vadd.f32 0.0, %v905
  %v907 = vpop.f32.mrb[0].mxu0
  %908 = vdwg.mxu0
  %v909 = vadd.f32 %v846, %v903
  %v910 = vadd.f32 %v847, %v906
  %v911 = vxor.u32 %v909, 2147483648
  %v912 = vxor.u32 %v910, 2147483648
  %v913 = vmul.f32 %v911, 1.442695
  %v914 = vpow.pop %v913
  %v915 = vmul.f32 %v912, 1.442695
  %v916 = vpow.pop %v915
  %v917 = vadd.f32 %v914, 1.0
  %v918 = vadd.f32 %v916, 1.0
  %v919 = vrcp.pop %v917
  %v920 = vmul.f32 1.0, %v919
  %v921 = vrcp.pop %v918
  %v922 = vmul.f32 1.0, %v921
  %v923 = vtanh.pop %v909
  %v924 = vtanh.pop %v910
  %927 = vrot.lane.b32.xlu0 %v843, 32
  %v928 = vpop.permute.xlu0 %927
  %929 = vrot.lane.b32.xlu0 %v844, 32
  %v930 = vpop.permute.xlu0 %929
  %v933 = vmul.f32 %v920, %v928
  %v934 = vmul.f32 %v922, %v930
  %937 = vrot.lane.b32.xlu0 %v923, 64
  %v938 = vpop.permute.xlu0 %937
  %939 = vrot.lane.b32.xlu0 %v924, 64
  %v940 = vpop.permute.xlu0 %939
  %v943 = vmul.f32 %v920, %v938
  %v944 = vmul.f32 %v922, %v940
  %947 = vrot.lane.b32.xlu0 %v943, 32
  %v948 = vpop.permute.xlu0 %947
  %949 = vrot.lane.b32.xlu0 %v944, 32
  %v950 = vpop.permute.xlu0 %949
  %v953 = vadd.f32 %v933, %v948
  %v954 = vadd.f32 %v934, %v950
  %v955 = vtanh.pop %v953
  %v956 = vtanh.pop %v954
  %959 = vrot.lane.b32.xlu0 %v955, 64
  %v960 = vpop.permute.xlu0 %959
  %961 = vrot.lane.b32.xlu0 %v956, 64
  %v962 = vpop.permute.xlu0 %961
  %v965 = vmul.f32 %v920, %v960
  %v966 = vmul.f32 %v922, %v962
  %969 = vrot.lane.b32.xlu0 %v965, 32
  %v970 = vpop.permute.xlu0 %969
  %971 = vrot.lane.b32.xlu0 %v966, 32
  %v972 = vpop.permute.xlu0 %971
  %975 = vst.msk [vmem:[#allocation2] sm:$0xff] %vm109, %v970
  %976 = vst.msk [vmem:[#allocation2 + $0x8] sm:$0xff] %vm109, %v972
  %979 = vrot.lane.b32.xlu0 %v953, 96
  %v980 = vpop.permute.xlu0 %979
  %981 = vrot.lane.b32.xlu0 %v954, 96
  %v982 = vpop.permute.xlu0 %981
  %985 = vst.msk [vmem:[#allocation3] sm:$0xff] %vm109, %v980
  %986 = vst.msk [vmem:[#allocation3 + $0x8] sm:$0xff] %vm109, %v982
  %s987 = scalar_lea.vmem %s4, 64
  %988 = vst.msk [vmem:[%s987] sm:$0xff] %vm109, %v970
  %989 = vst.msk [vmem:[%s987 + $0x8] sm:$0xff] %vm109, %v972
  %v990 = vld [vmem:[#allocation2] sm:$0xff]
  %v991 = vld [vmem:[#allocation2 + $0x8] sm:$0xff]
  %v992 = vld [vmem:[#allocation3] sm:$0xff]
  %v993 = vld [vmem:[#allocation3 + $0x8] sm:$0xff]
  %s994 = scalar_lea.vmem [#allocation4], 80
  %v995 = vld [vmem:[%s994] sm:$0xff]
  %v996 = vld [vmem:[%s994 + $0x8] sm:$0xff]
  %v997 = vpack.c.bf16 %v991, %v990
  %v998 = vld [vmem:[%s2] sm:$0xf]
  %v999 = vld [vmem:[%s2 + $0x4] sm:$0xf]
  %v1000 = vld [vmem:[%s2 + $0x8] sm:$0xf]
  %v1001 = vld [vmem:[%s2 + $0xc] sm:$0xf]
  %v1006 = vunpack.c.l.b16 %v998
  %v1007 = vunpack.c.l.b16 %v999
  %v1008 = vunpack.c.l.b16 %v1000
  %v1009 = vunpack.c.l.b16 %v1001
  %v1010 = vpack.c.b16 %v1007, %v1006
  %v1011 = vpack.c.b16 %v1009, %v1008
  %v1015 = vsel %vm109, %v997, 0
  %1017 = vmatprep.subr.bf16.mxu0 0
  %1018 = vmatpush1.bf16.msra.mxu0 %v1010
  %1019 = vmatprep.subr.bf16.mxu0 0
  %1020 = vmatpush1.bf16.msra.mxu0 %v1011
  %1021 = vmatprep.subr.bf16.mxu0 0
  %1022 = vmatpush1.bf16.msra.mxu0 0
  %1023 = vmatprep.subr.bf16.mxu0 0
  %1024 = vmatpush1.bf16.msra.mxu0 0
  %1025 = vmatprep.subr.bf16.mxu0 0
  %1026 = vmatpush1.bf16.msra.mxu0 0
  %1027 = vmatprep.subr.bf16.mxu0 0
  %1028 = vmatpush1.bf16.msra.mxu0 0
  %1029 = vmatprep.subr.bf16.mxu0 0
  %1030 = vmatpush1.bf16.msra.mxu0 0
  %1031 = vmatprep.subr.bf16.mxu0 0
  %1032 = vmatpush1.bf16.msra.mxu0 0
  %1033 = vmatprep.subr.bf16.mxu0 0
  %1034 = vmatpush1.bf16.msra.mxu0 0
  %1035 = vmatprep.subr.bf16.mxu0 0
  %1036 = vmatpush1.bf16.msra.mxu0 0
  %1037 = vmatprep.subr.bf16.mxu0 0
  %1038 = vmatpush1.bf16.msra.mxu0 0
  %1039 = vmatprep.subr.bf16.mxu0 0
  %1040 = vmatpush1.bf16.msra.mxu0 0
  %1041 = vmatprep.subr.bf16.mxu0 0
  %1042 = vmatpush1.bf16.msra.mxu0 0
  %1043 = vmatprep.subr.bf16.mxu0 0
  %1044 = vmatpush1.bf16.msra.mxu0 0
  %1045 = vmatprep.subr.bf16.mxu0 0
  %1046 = vmatpush1.bf16.msra.mxu0 0
  %1047 = vmatprep.subr.bf16.mxu0 0
  %1048 = vmatpush1.bf16.msra.mxu0 0
  %1049 = vmatprep.mubr.bf16.mxu0 0
  %1050 = vmatmul.mubr.bf16.gmra.mrb[0].mxu0 %v1015
  %v1051 = vpop.f32.mrb[0].mxu0
  %v1052 = vadd.f32 0.0, %v1051
  %v1053 = vpop.f32.mrb[0].mxu0
  %v1054 = vpop.f32.mrb[0].mxu0
  %v1055 = vadd.f32 0.0, %v1054
  %v1056 = vpop.f32.mrb[0].mxu0
  %1057 = vdwg.mxu0
  %v1058 = vadd.f32 %v995, %v1052
  %v1059 = vadd.f32 %v996, %v1055
  %v1060 = vxor.u32 %v1058, 2147483648
  %v1061 = vxor.u32 %v1059, 2147483648
  %v1062 = vmul.f32 %v1060, 1.442695
  %v1063 = vpow.pop %v1062
  %v1064 = vmul.f32 %v1061, 1.442695
  %v1065 = vpow.pop %v1064
  %v1066 = vadd.f32 %v1063, 1.0
  %v1067 = vadd.f32 %v1065, 1.0
  %v1068 = vrcp.pop %v1066
  %v1069 = vmul.f32 1.0, %v1068
  %v1070 = vrcp.pop %v1067
  %v1071 = vmul.f32 1.0, %v1070
  %v1072 = vtanh.pop %v1058
  %v1073 = vtanh.pop %v1059
  %1076 = vrot.lane.b32.xlu0 %v992, 32
  %v1077 = vpop.permute.xlu0 %1076
  %1078 = vrot.lane.b32.xlu0 %v993, 32
  %v1079 = vpop.permute.xlu0 %1078
  %v1082 = vmul.f32 %v1069, %v1077
  %v1083 = vmul.f32 %v1071, %v1079
  %1086 = vrot.lane.b32.xlu0 %v1072, 64
  %v1087 = vpop.permute.xlu0 %1086
  %1088 = vrot.lane.b32.xlu0 %v1073, 64
  %v1089 = vpop.permute.xlu0 %1088
  %v1092 = vmul.f32 %v1069, %v1087
  %v1093 = vmul.f32 %v1071, %v1089
  %1096 = vrot.lane.b32.xlu0 %v1092, 32
  %v1097 = vpop.permute.xlu0 %1096
  %1098 = vrot.lane.b32.xlu0 %v1093, 32
  %v1099 = vpop.permute.xlu0 %1098
  %v1102 = vadd.f32 %v1082, %v1097
  %v1103 = vadd.f32 %v1083, %v1099
  %v1104 = vtanh.pop %v1102
  %v1105 = vtanh.pop %v1103
  %1108 = vrot.lane.b32.xlu0 %v1104, 64
  %v1109 = vpop.permute.xlu0 %1108
  %1110 = vrot.lane.b32.xlu0 %v1105, 64
  %v1111 = vpop.permute.xlu0 %1110
  %v1114 = vmul.f32 %v1069, %v1109
  %v1115 = vmul.f32 %v1071, %v1111
  %1118 = vrot.lane.b32.xlu0 %v1114, 32
  %v1119 = vpop.permute.xlu0 %1118
  %1120 = vrot.lane.b32.xlu0 %v1115, 32
  %v1121 = vpop.permute.xlu0 %1120
  %1124 = vst.msk [vmem:[#allocation2] sm:$0xff] %vm109, %v1119
  %1125 = vst.msk [vmem:[#allocation2 + $0x8] sm:$0xff] %vm109, %v1121
  %1128 = vrot.lane.b32.xlu0 %v1102, 96
  %v1129 = vpop.permute.xlu0 %1128
  %1130 = vrot.lane.b32.xlu0 %v1103, 96
  %v1131 = vpop.permute.xlu0 %1130
  %1134 = vst.msk [vmem:[#allocation3] sm:$0xff] %vm109, %v1129
  %1135 = vst.msk [vmem:[#allocation3 + $0x8] sm:$0xff] %vm109, %v1131
  %s1136 = scalar_lea.vmem %s4, 80
  %1137 = vst.msk [vmem:[%s1136] sm:$0xff] %vm109, %v1119
  %1138 = vst.msk [vmem:[%s1136 + $0x8] sm:$0xff] %vm109, %v1121
  %v1139 = vld [vmem:[#allocation2] sm:$0xff]
  %v1140 = vld [vmem:[#allocation2 + $0x8] sm:$0xff]
  %v1141 = vld [vmem:[#allocation3] sm:$0xff]
  %v1142 = vld [vmem:[#allocation3 + $0x8] sm:$0xff]
  %s1143 = scalar_lea.vmem [#allocation4], 96
  %v1144 = vld [vmem:[%s1143] sm:$0xff]
  %v1145 = vld [vmem:[%s1143 + $0x8] sm:$0xff]
  %v1146 = vpack.c.bf16 %v1140, %v1139
  %v1147 = vld [vmem:[%s2] sm:$0xf]
  %v1148 = vld [vmem:[%s2 + $0x4] sm:$0xf]
  %v1149 = vld [vmem:[%s2 + $0x8] sm:$0xf]
  %v1150 = vld [vmem:[%s2 + $0xc] sm:$0xf]
  %v1155 = vunpack.c.l.b16 %v1147
  %v1156 = vunpack.c.l.b16 %v1148
  %v1157 = vunpack.c.l.b16 %v1149
  %v1158 = vunpack.c.l.b16 %v1150
  %v1159 = vpack.c.b16 %v1156, %v1155
  %v1160 = vpack.c.b16 %v1158, %v1157
  %v1164 = vsel %vm109, %v1146, 0
  %1166 = vmatprep.subr.bf16.mxu0 0
  %1167 = vmatpush1.bf16.msra.mxu0 %v1159
  %1168 = vmatprep.subr.bf16.mxu0 0
  %1169 = vmatpush1.bf16.msra.mxu0 %v1160
  %1170 = vmatprep.subr.bf16.mxu0 0
  %1171 = vmatpush1.bf16.msra.mxu0 0
  %1172 = vmatprep.subr.bf16.mxu0 0
  %1173 = vmatpush1.bf16.msra.mxu0 0
  %1174 = vmatprep.subr.bf16.mxu0 0
  %1175 = vmatpush1.bf16.msra.mxu0 0
  %1176 = vmatprep.subr.bf16.mxu0 0
  %1177 = vmatpush1.bf16.msra.mxu0 0
  %1178 = vmatprep.subr.bf16.mxu0 0
  %1179 = vmatpush1.bf16.msra.mxu0 0
  %1180 = vmatprep.subr.bf16.mxu0 0
  %1181 = vmatpush1.bf16.msra.mxu0 0
  %1182 = vmatprep.subr.bf16.mxu0 0
  %1183 = vmatpush1.bf16.msra.mxu0 0
  %1184 = vmatprep.subr.bf16.mxu0 0
  %1185 = vmatpush1.bf16.msra.mxu0 0
  %1186 = vmatprep.subr.bf16.mxu0 0
  %1187 = vmatpush1.bf16.msra.mxu0 0
  %1188 = vmatprep.subr.bf16.mxu0 0
  %1189 = vmatpush1.bf16.msra.mxu0 0
  %1190 = vmatprep.subr.bf16.mxu0 0
  %1191 = vmatpush1.bf16.msra.mxu0 0
  %1192 = vmatprep.subr.bf16.mxu0 0
  %1193 = vmatpush1.bf16.msra.mxu0 0
  %1194 = vmatprep.subr.bf16.mxu0 0
  %1195 = vmatpush1.bf16.msra.mxu0 0
  %1196 = vmatprep.subr.bf16.mxu0 0
  %1197 = vmatpush1.bf16.msra.mxu0 0
  %1198 = vmatprep.mubr.bf16.mxu0 0
  %1199 = vmatmul.mubr.bf16.gmra.mrb[0].mxu0 %v1164
  %v1200 = vpop.f32.mrb[0].mxu0
  %v1201 = vadd.f32 0.0, %v1200
  %v1202 = vpop.f32.mrb[0].mxu0
  %v1203 = vpop.f32.mrb[0].mxu0
  %v1204 = vadd.f32 0.0, %v1203
  %v1205 = vpop.f32.mrb[0].mxu0
  %1206 = vdwg.mxu0
  %v1207 = vadd.f32 %v1144, %v1201
  %v1208 = vadd.f32 %v1145, %v1204
  %v1209 = vxor.u32 %v1207, 2147483648
  %v1210 = vxor.u32 %v1208, 2147483648
  %v1211 = vmul.f32 %v1209, 1.442695
  %v1212 = vpow.pop %v1211
  %v1213 = vmul.f32 %v1210, 1.442695
  %v1214 = vpow.pop %v1213
  %v1215 = vadd.f32 %v1212, 1.0
  %v1216 = vadd.f32 %v1214, 1.0
  %v1217 = vrcp.pop %v1215
  %v1218 = vmul.f32 1.0, %v1217
  %v1219 = vrcp.pop %v1216
  %v1220 = vmul.f32 1.0, %v1219
  %v1221 = vtanh.pop %v1207
  %v1222 = vtanh.pop %v1208
  %1225 = vrot.lane.b32.xlu0 %v1141, 32
  %v1226 = vpop.permute.xlu0 %1225
  %1227 = vrot.lane.b32.xlu0 %v1142, 32
  %v1228 = vpop.permute.xlu0 %1227
  %v1231 = vmul.f32 %v1218, %v1226
  %v1232 = vmul.f32 %v1220, %v1228
  %1235 = vrot.lane.b32.xlu0 %v1221, 64
  %v1236 = vpop.permute.xlu0 %1235
  %1237 = vrot.lane.b32.xlu0 %v1222, 64
  %v1238 = vpop.permute.xlu0 %1237
  %v1241 = vmul.f32 %v1218, %v1236
  %v1242 = vmul.f32 %v1220, %v1238
  %1245 = vrot.lane.b32.xlu0 %v1241, 32
  %v1246 = vpop.permute.xlu0 %1245
  %1247 = vrot.lane.b32.xlu0 %v1242, 32
  %v1248 = vpop.permute.xlu0 %1247
  %v1251 = vadd.f32 %v1231, %v1246
  %v1252 = vadd.f32 %v1232, %v1248
  %v1253 = vtanh.pop %v1251
  %v1254 = vtanh.pop %v1252
  %1257 = vrot.lane.b32.xlu0 %v1253, 64
  %v1258 = vpop.permute.xlu0 %1257
  %1259 = vrot.lane.b32.xlu0 %v1254, 64
  %v1260 = vpop.permute.xlu0 %1259
  %v1263 = vmul.f32 %v1218, %v1258
  %v1264 = vmul.f32 %v1220, %v1260
  %1267 = vrot.lane.b32.xlu0 %v1263, 32
  %v1268 = vpop.permute.xlu0 %1267
  %1269 = vrot.lane.b32.xlu0 %v1264, 32
  %v1270 = vpop.permute.xlu0 %1269
  %1273 = vst.msk [vmem:[#allocation2] sm:$0xff] %vm109, %v1268
  %1274 = vst.msk [vmem:[#allocation2 + $0x8] sm:$0xff] %vm109, %v1270
  %1277 = vrot.lane.b32.xlu0 %v1251, 96
  %v1278 = vpop.permute.xlu0 %1277
  %1279 = vrot.lane.b32.xlu0 %v1252, 96
  %v1280 = vpop.permute.xlu0 %1279
  %1283 = vst.msk [vmem:[#allocation3] sm:$0xff] %vm109, %v1278
  %1284 = vst.msk [vmem:[#allocation3 + $0x8] sm:$0xff] %vm109, %v1280
  %s1285 = scalar_lea.vmem %s4, 96
  %1286 = vst.msk [vmem:[%s1285] sm:$0xff] %vm109, %v1268
  %1287 = vst.msk [vmem:[%s1285 + $0x8] sm:$0xff] %vm109, %v1270
  %v1288 = vld [vmem:[#allocation2] sm:$0xff]
  %v1289 = vld [vmem:[#allocation2 + $0x8] sm:$0xff]
  %v1290 = vld [vmem:[#allocation3] sm:$0xff]
  %v1291 = vld [vmem:[#allocation3 + $0x8] sm:$0xff]
  %s1292 = scalar_lea.vmem [#allocation4], 112
  %v1293 = vld [vmem:[%s1292] sm:$0xff]
  %v1294 = vld [vmem:[%s1292 + $0x8] sm:$0xff]
  %v1295 = vpack.c.bf16 %v1289, %v1288
  %v1296 = vld [vmem:[%s2] sm:$0xf]
  %v1297 = vld [vmem:[%s2 + $0x4] sm:$0xf]
  %v1298 = vld [vmem:[%s2 + $0x8] sm:$0xf]
  %v1299 = vld [vmem:[%s2 + $0xc] sm:$0xf]
  %v1304 = vunpack.c.l.b16 %v1296
  %v1305 = vunpack.c.l.b16 %v1297
  %v1306 = vunpack.c.l.b16 %v1298
  %v1307 = vunpack.c.l.b16 %v1299
  %v1308 = vpack.c.b16 %v1305, %v1304
  %v1309 = vpack.c.b16 %v1307, %v1306
  %v1313 = vsel %vm109, %v1295, 0
  %1315 = vmatprep.subr.bf16.mxu0 0
  %1316 = vmatpush1.bf16.msra.mxu0 %v1308
  %1317 = vmatprep.subr.bf16.mxu0 0
  %1318 = vmatpush1.bf16.msra.mxu0 %v1309
  %1319 = vmatprep.subr.bf16.mxu0 0
  %1320 = vmatpush1.bf16.msra.mxu0 0
  %1321 = vmatprep.subr.bf16.mxu0 0
  %1322 = vmatpush1.bf16.msra.mxu0 0
  %1323 = vmatprep.subr.bf16.mxu0 0
  %1324 = vmatpush1.bf16.msra.mxu0 0
  %1325 = vmatprep.subr.bf16.mxu0 0
  %1326 = vmatpush1.bf16.msra.mxu0 0
  %1327 = vmatprep.subr.bf16.mxu0 0
  %1328 = vmatpush1.bf16.msra.mxu0 0
  %1329 = vmatprep.subr.bf16.mxu0 0
  %1330 = vmatpush1.bf16.msra.mxu0 0
  %1331 = vmatprep.subr.bf16.mxu0 0
  %1332 = vmatpush1.bf16.msra.mxu0 0
  %1333 = vmatprep.subr.bf16.mxu0 0
  %1334 = vmatpush1.bf16.msra.mxu0 0
  %1335 = vmatprep.subr.bf16.mxu0 0
  %1336 = vmatpush1.bf16.msra.mxu0 0
  %1337 = vmatprep.subr.bf16.mxu0 0
  %1338 = vmatpush1.bf16.msra.mxu0 0
  %1339 = vmatprep.subr.bf16.mxu0 0
  %1340 = vmatpush1.bf16.msra.mxu0 0
  %1341 = vmatprep.subr.bf16.mxu0 0
  %1342 = vmatpush1.bf16.msra.mxu0 0
  %1343 = vmatprep.subr.bf16.mxu0 0
  %1344 = vmatpush1.bf16.msra.mxu0 0
  %1345 = vmatprep.subr.bf16.mxu0 0
  %1346 = vmatpush1.bf16.msra.mxu0 0
  %1347 = vmatprep.mubr.bf16.mxu0 0
  %1348 = vmatmul.mubr.bf16.gmra.mrb[0].mxu0 %v1313
  %v1349 = vpop.f32.mrb[0].mxu0
  %v1350 = vadd.f32 0.0, %v1349
  %v1351 = vpop.f32.mrb[0].mxu0
  %v1352 = vpop.f32.mrb[0].mxu0
  %v1353 = vadd.f32 0.0, %v1352
  %v1354 = vpop.f32.mrb[0].mxu0
  %1355 = vdwg.mxu0
  %v1356 = vadd.f32 %v1293, %v1350
  %v1357 = vadd.f32 %v1294, %v1353
  %v1358 = vxor.u32 %v1356, 2147483648
  %v1359 = vxor.u32 %v1357, 2147483648
  %v1360 = vmul.f32 %v1358, 1.442695
  %v1361 = vpow.pop %v1360
  %v1362 = vmul.f32 %v1359, 1.442695
  %v1363 = vpow.pop %v1362
  %v1364 = vadd.f32 %v1361, 1.0
  %v1365 = vadd.f32 %v1363, 1.0
  %v1366 = vrcp.pop %v1364
  %v1367 = vmul.f32 1.0, %v1366
  %v1368 = vrcp.pop %v1365
  %v1369 = vmul.f32 1.0, %v1368
  %v1370 = vtanh.pop %v1356
  %v1371 = vtanh.pop %v1357
  %1374 = vrot.lane.b32.xlu0 %v1290, 32
  %v1375 = vpop.permute.xlu0 %1374
  %1376 = vrot.lane.b32.xlu0 %v1291, 32
  %v1377 = vpop.permute.xlu0 %1376
  %v1380 = vmul.f32 %v1367, %v1375
  %v1381 = vmul.f32 %v1369, %v1377
  %1384 = vrot.lane.b32.xlu0 %v1370, 64
  %v1385 = vpop.permute.xlu0 %1384
  %1386 = vrot.lane.b32.xlu0 %v1371, 64
  %v1387 = vpop.permute.xlu0 %1386
  %v1390 = vmul.f32 %v1367, %v1385
  %v1391 = vmul.f32 %v1369, %v1387
  %1394 = vrot.lane.b32.xlu0 %v1390, 32
  %v1395 = vpop.permute.xlu0 %1394
  %1396 = vrot.lane.b32.xlu0 %v1391, 32
  %v1397 = vpop.permute.xlu0 %1396
  %v1400 = vadd.f32 %v1380, %v1395
  %v1401 = vadd.f32 %v1381, %v1397
  %v1402 = vtanh.pop %v1400
  %v1403 = vtanh.pop %v1401
  %1406 = vrot.lane.b32.xlu0 %v1402, 64
  %v1407 = vpop.permute.xlu0 %1406
  %1408 = vrot.lane.b32.xlu0 %v1403, 64
  %v1409 = vpop.permute.xlu0 %1408
  %v1412 = vmul.f32 %v1367, %v1407
  %v1413 = vmul.f32 %v1369, %v1409
  %1416 = vrot.lane.b32.xlu0 %v1412, 32
  %v1417 = vpop.permute.xlu0 %1416
  %1418 = vrot.lane.b32.xlu0 %v1413, 32
  %v1419 = vpop.permute.xlu0 %1418
  %1422 = vst.msk [vmem:[#allocation2] sm:$0xff] %vm109, %v1417
  %1423 = vst.msk [vmem:[#allocation2 + $0x8] sm:$0xff] %vm109, %v1419
  %1426 = vrot.lane.b32.xlu0 %v1400, 96
  %v1427 = vpop.permute.xlu0 %1426
  %1428 = vrot.lane.b32.xlu0 %v1401, 96
  %v1429 = vpop.permute.xlu0 %1428
  %1432 = vst.msk [vmem:[#allocation3] sm:$0xff] %vm109, %v1427
  %1433 = vst.msk [vmem:[#allocation3 + $0x8] sm:$0xff] %vm109, %v1429
  %s1434 = scalar_lea.vmem %s4, 112
  %1435 = vst.msk [vmem:[%s1434] sm:$0xff] %vm109, %v1417
  %1436 = vst.msk [vmem:[%s1434 + $0x8] sm:$0xff] %vm109, %v1419
  // Predicated region
  $region22: #{encoder_forward.3} parent=0 // pred_check
    %p1437 = pneg %p21
  $region23: #{encoder_forward.3} parent=0 // pred_check_branch
    %1439 = sbr.rel (%p1437) target = $region25
  $region24: #{encoder_forward.3} parent=0 // pred_region
    %v1440 = vld [vmem:[#allocation2] sm:$0xff]
    %v1441 = vld [vmem:[#allocation2 + $0x8] sm:$0xff]
    %1442 = vst.msk [vmem:[%s5] sm:$0xff] %vm109, %v1440
    %1443 = vst.msk [vmem:[%s5 + $0x8] sm:$0xff] %vm109, %v1441
    %v1444 = vld [vmem:[#allocation3] sm:$0xff]
    %v1445 = vld [vmem:[#allocation3 + $0x8] sm:$0xff]
    %1446 = vst.msk [vmem:[%s6] sm:$0xff] %vm109, %v1444
    %1447 = vst.msk [vmem:[%s6 + $0x8] sm:$0xff] %vm109, %v1445
  $region25: #{encoder_forward.3} parent=0 // pred_fallthru
    _
  // Predicated region
  $region26: #{encoder_forward.3} parent=0 // pred_check
    _
  $region27: #{encoder_forward.3} parent=0 // pred_check_branch
    %1449 = sbr.rel (0) target = $region29
  $region28: #{encoder_forward.3} parent=0 // pred_region
    _
  $region29: #{encoder_forward.3} parent=0 // pred_fallthru
    _
  // Predicated region
  $region30: #{encoder_forward.3} parent=0 // pred_check
    _
  $region31: #{encoder_forward.3} parent=0 // pred_check_branch
    %1451 = sbr.rel (0) target = $region33
  $region32: #{encoder_forward.3} parent=0 // pred_region
    _
  $region33: #{encoder_forward.3} parent=0 // pred_fallthru
    _
  // Predicated region
  $region34: #{encoder_forward.3} parent=0 // pred_check
    _
  $region35: #{encoder_forward.3} parent=0 // pred_check_branch
    %1453 = sbr.rel (0) target = $region37
  $region36: #{encoder_forward.3} parent=0 // pred_region
    _
  $region37: #{encoder_forward.3} parent=0 // pred_fallthru
    _
  // Predicated region
  $region38: #{encoder_forward.3} parent=0 // pred_check
    _
  $region39: #{encoder_forward.3} parent=0 // pred_check_branch
    %1455 = sbr.rel (0) target = $region41
  $region40: #{encoder_forward.3} parent=0 // pred_region
    _
  $region41: #{encoder_forward.3} parent=0 // pred_fallthru
    _
  // Predicated region
  $region42: #{encoder_forward.3} parent=0 // pred_check
    _
  $region43: #{encoder_forward.3} parent=0 // pred_check_branch
    %1457 = sbr.rel (0) target = $region45
  $region44: #{encoder_forward.3} parent=0 // pred_region
    _
  $region45: #{encoder_forward.3} parent=0 // pred_fallthru
    _
  // Predicated region
  $region46: #{encoder_forward.3} parent=0 // pred_check
    _
  $region47: #{encoder_forward.3} parent=0 // pred_check_branch
    %1459 = sbr.rel (0) target = $region49
  $region48: #{encoder_forward.3} parent=0 // pred_region
    _
  $region49: #{encoder_forward.3} parent=0 // pred_fallthru
    _

// kernel: encoder_forward.3
$region0: #{encoder_forward.3}
  #allocation0 [shape = 'u32[]', space=smem, size = 0x4, offset = 0x4, fixed_abs, tag = 'smem constant byte address 0x4 - core index']
  #allocation1 [shape = 'u32[144,128]{1,0:T(1,128)}', space=vmem, size = 0x12000, scoped, tag = 'internal scratch']
  #allocation2 [shape = 'f32[16,32]{1,0:T(8,128)}', space=vmem, size = 0x2000, scoped, tag = 'scratch operand']
  #allocation3 [shape = 'f32[16,32]{1,0:T(8,128)}', space=vmem, size = 0x2000, scoped, tag = 'scratch operand']
  #allocation4 [shape = 'f32[8,16,128]{2,1,0:T(8,128)}', space=vmem, size = 0x10000, scoped, tag = 'scratch operand']
  %s0 = inlined_call_operand.vmem [shape: bf16[8,16,32], index: 0, kind: input, shape index: {}]
  %s1 = inlined_call_operand.vmem [shape: bf16[32,128], index: 1, kind: input, shape index: {}]
  %s2 = inlined_call_operand.vmem [shape: bf16[32,128], index: 2, kind: input, shape index: {}]
  %s3 = inlined_call_operand.vmem [shape: f32[1,128], index: 3, kind: input, shape index: {}]
  %s4 = inlined_call_operand.vmem [shape: f32[8,16,32], index: 4, kind: output, shape index: {0}]
  %s5 = inlined_call_operand.vmem [shape: f32[16,32], index: 5, kind: output, shape index: {1}]
  %s6 = inlined_call_operand.vmem [shape: f32[16,32], index: 6, kind: output, shape index: {2}]
  %7 = xla_tuple %s4, %s5, %s6
  %s8 = sld [smem:[#allocation0]]
  $region50: #{encoder_forward.3} parent=0
    _
  %s10 = ssub.s32 1, %s8
  %s11 = scalar_select 0, %s10, %s8
  // Predicated region
  $region2: #{encoder_forward.3} parent=0 // pred_check
    _
  $region3: #{encoder_forward.3} parent=0 // pred_check_branch
    %13 = sbr.rel (0) target = $region5
  $region4: #{encoder_forward.3} parent=0 // pred_region
    _
  $region5: #{encoder_forward.3} parent=0 // pred_fallthru
    _
  // Predicated region
  $region6: #{encoder_forward.3} parent=0 // pred_check
    _
  $region7: #{encoder_forward.3} parent=0 // pred_check_branch
    %15 = sbr.rel (0) target = $region9
  $region8: #{encoder_forward.3} parent=0 // pred_region
    _
  $region9: #{encoder_forward.3} parent=0 // pred_fallthru
    _
  // Predicated region
  $region10: #{encoder_forward.3} parent=0 // pred_check
    _
  $region11: #{encoder_forward.3} parent=0 // pred_check_branch
    %17 = sbr.rel (0) target = $region13
  $region12: #{encoder_forward.3} parent=0 // pred_region
    _
  $region13: #{encoder_forward.3} parent=0 // pred_fallthru
    _
  // Predicated region
  $region14: #{encoder_forward.3} parent=0 // pred_check
    _
  $region15: #{encoder_forward.3} parent=0 // pred_check_branch
    %19 = sbr.rel (0) target = $region17
  $region16: #{encoder_forward.3} parent=0 // pred_region
    _
  $region17: #{encoder_forward.3} parent=0 // pred_fallthru
    _
  %p21 = scmp.eq.s32.totalorder 0, 0
  // Predicated region
  $region18: #{encoder_forward.3} parent=0 // pred_check
    %p22 = pneg %p21
  $region19: #{encoder_forward.3} parent=0 // pred_check_branch
    %24 = sbr.rel (%p22) target = $region21
  $region20: #{encoder_forward.3} parent=0 // pred_region
    %vm25 = vcmask 261120
    %26 = vst.msk [vmem:[#allocation2] sm:$0xff] %vm25, 0.0
    %27 = vst.msk [vmem:[#allocation2 + $0x8] sm:$0xff] %vm25, 0.0
    %28 = vst.msk [vmem:[#allocation3] sm:$0xff] %vm25, 0.0
    %29 = vst.msk [vmem:[#allocation3 + $0x8] sm:$0xff] %vm25, 0.0
  $region21: #{encoder_forward.3} parent=0 // pred_fallthru
    _
  %v30 = vld [vmem:[%s0] sm:$0xf]
  %v31 = vld [vmem:[%s0 + $0x4] sm:$0xf]
  %v32 = vld [vmem:[%s0 + $0x8] sm:$0xf]
  %v33 = vld [vmem:[%s0 + $0xc] sm:$0xf]
  %v34 = vld [vmem:[%s0 + $0x10] sm:$0xf]
  %v35 = vld [vmem:[%s0 + $0x14] sm:$0xf]
  %v36 = vld [vmem:[%s0 + $0x18] sm:$0xf]
  %v37 = vld [vmem:[%s0 + $0x1c] sm:$0xf]
  %v38 = vld [vmem:[%s0 + $0x20] sm:$0xf]
  %v39 = vld [vmem:[%s0 + $0x24] sm:$0xf]
  %v40 = vld [vmem:[%s0 + $0x28] sm:$0xf]
  %v41 = vld [vmem:[%s0 + $0x2c] sm:$0xf]
  %v42 = vld [vmem:[%s0 + $0x30] sm:$0xf]
  %v43 = vld [vmem:[%s0 + $0x34] sm:$0xf]
  %v44 = vld [vmem:[%s0 + $0x38] sm:$0xf]
  %v45 = vld [vmem:[%s0 + $0x3c] sm:$0xf]
  %v46 = vld [vmem:[%s1] sm:$0xf]
  %v47 = vld [vmem:[%s1 + $0x4] sm:$0xf]
  %v48 = vld [vmem:[%s1 + $0x8] sm:$0xf]
  %v49 = vld [vmem:[%s1 + $0xc] sm:$0xf]
  %v50 = vld [vmem:[%s3] sm:$0x1]
  %v52 = vlaneseq
  %v53 = vshrl.u32 %v52, 7
  %v54 = vsub.s32 0, %v53
  %v55 = vrot.slane %v50, %v54
  %v73 = vunpack.c.l.b16 %v30
  %v74 = vunpack.c.l.b16 %v31
  %v75 = vunpack.c.l.b16 %v32
  %v76 = vunpack.c.l.b16 %v33
  %v77 = vunpack.c.l.b16 %v34
  %v78 = vunpack.c.l.b16 %v35
  %v79 = vunpack.c.l.b16 %v36
  %v80 = vunpack.c.l.b16 %v37
  %v81 = vunpack.c.l.b16 %v38
  %v82 = vunpack.c.l.b16 %v39
  %v83 = vunpack.c.l.b16 %v40
  %v84 = vunpack.c.l.b16 %v41
  %v85 = vunpack.c.l.b16 %v42
  %v86 = vunpack.c.l.b16 %v43
  %v87 = vunpack.c.l.b16 %v44
  %v88 = vunpack.c.l.b16 %v45
  %v89 = vpack.c.b16 %v74, %v73
  %v90 = vpack.c.b16 %v76, %v75
  %v91 = vpack.c.b16 %v78, %v77
  %v92 = vpack.c.b16 %v80, %v79
  %v93 = vpack.c.b16 %v82, %v81
  %v94 = vpack.c.b16 %v84, %v83
  %v95 = vpack.c.b16 %v86, %v85
  %v96 = vpack.c.b16 %v88, %v87
  %v101 = vunpack.c.l.b16 %v46
  %v102 = vunpack.c.l.b16 %v47
  %v103 = vunpack.c.l.b16 %v48
  %v104 = vunpack.c.l.b16 %v49
  %v105 = vpack.c.b16 %v102, %v101
  %v106 = vpack.c.b16 %v104, %v103
  %vm109 = vcmask 261120
  %v111 = vsel %vm109, %v89, 0
  %v114 = vsel %vm109, %v90, 0
  %v117 = vsel %vm109, %v91, 0
  %v120 = vsel %vm109, %v92, 0
  %v123 = vsel %vm109, %v93, 0
  %v126 = vsel %vm109, %v94, 0
  %v129 = vsel %vm109, %v95, 0
  %v132 = vsel %vm109, %v96, 0
  %134 = vmatprep.subr.bf16.mxu0 0
  %135 = vmatpush1.bf16.msra.mxu0 %v105
  %136 = vmatprep.subr.bf16.mxu0 0
  %137 = vmatpush1.bf16.msra.mxu0 %v106
  %138 = vmatprep.subr.bf16.mxu0 0
  %139 = vmatpush1.bf16.msra.mxu0 0
  %140 = vmatprep.subr.bf16.mxu0 0
  %141 = vmatpush1.bf16.msra.mxu0 0
  %142 = vmatprep.subr.bf16.mxu0 0
  %143 = vmatpush1.bf16.msra.mxu0 0
  %144 = vmatprep.subr.bf16.mxu0 0
  %145 = vmatpush1.bf16.msra.mxu0 0
  %146 = vmatprep.subr.bf16.mxu0 0
  %147 = vmatpush1.bf16.msra.mxu0 0
  %148 = vmatprep.subr.bf16.mxu0 0
  %149 = vmatpush1.bf16.msra.mxu0 0
  %150 = vmatprep.subr.bf16.mxu0 0
  %151 = vmatpush1.bf16.msra.mxu0 0
  %152 = vmatprep.subr.bf16.mxu0 0
  %153 = vmatpush1.bf16.msra.mxu0 0
  %154 = vmatprep.subr.bf16.mxu0 0
  %155 = vmatpush1.bf16.msra.mxu0 0
  %156 = vmatprep.subr.bf16.mxu0 0
  %157 = vmatpush1.bf16.msra.mxu0 0
  %158 = vmatprep.subr.bf16.mxu0 0
  %159 = vmatpush1.bf16.msra.mxu0 0
  %160 = vmatprep.subr.bf16.mxu0 0
  %161 = vmatpush1.bf16.msra.mxu0 0
  %162 = vmatprep.subr.bf16.mxu0 0
  %163 = vmatpush1.bf16.msra.mxu0 0
  %164 = vmatprep.subr.bf16.mxu0 0
  %165 = vmatpush1.bf16.msra.mxu0 0
  %166 = vmatprep.mubr.bf16.mxu0 0
  %167 = vmatmul.mubr.bf16.gmra.mrb[0].mxu0 %v111
  %v168 = vpop.f32.mrb[0].mxu0
  %v169 = vadd.f32 %v55, %v168
  %v170 = vpop.f32.mrb[0].mxu0
  %v171 = vpop.f32.mrb[0].mxu0
  %v172 = vadd.f32 %v55, %v171
  %v173 = vpop.f32.mrb[0].mxu0
  %174 = vmatprep.mubr.bf16.mxu0 0
  %175 = vmatmul.mubr.bf16.gmra.mrb[0].mxu0 %v114
  %v176 = vpop.f32.mrb[0].mxu0
  %v177 = vadd.f32 %v55, %v176
  %v178 = vpop.f32.mrb[0].mxu0
  %v179 = vpop.f32.mrb[0].mxu0
  %v180 = vadd.f32 %v55, %v179
  %v181 = vpop.f32.mrb[0].mxu0
  %182 = vmatprep.mubr.bf16.mxu0 0
  %183 = vmatmul.mubr.bf16.gmra.mrb[0].mxu0 %v117
  %v184 = vpop.f32.mrb[0].mxu0
  %v185 = vadd.f32 %v55, %v184
  %v186 = vpop.f32.mrb[0].mxu0
  %v187 = vpop.f32.mrb[0].mxu0
  %v188 = vadd.f32 %v55, %v187
  %v189 = vpop.f32.mrb[0].mxu0
  %190 = vmatprep.mubr.bf16.mxu0 0
  %191 = vmatmul.mubr.bf16.gmra.mrb[0].mxu0 %v120
  %v192 = vpop.f32.mrb[0].mxu0
  %v193 = vadd.f32 %v55, %v192
  %v194 = vpop.f32.mrb[0].mxu0
  %v195 = vpop.f32.mrb[0].mxu0
  %v196 = vadd.f32 %v55, %v195
  %v197 = vpop.f32.mrb[0].mxu0
  %198 = vmatprep.mubr.bf16.mxu0 0
  %199 = vmatmul.mubr.bf16.gmra.mrb[0].mxu0 %v123
  %v200 = vpop.f32.mrb[0].mxu0
  %v201 = vadd.f32 %v55, %v200
  %v202 = vpop.f32.mrb[0].mxu0
  %v203 = vpop.f32.mrb[0].mxu0
  %v204 = vadd.f32 %v55, %v203
  %v205 = vpop.f32.mrb[0].mxu0
  %206 = vmatprep.mubr.bf16.mxu0 0
  %207 = vmatmul.mubr.bf16.gmra.mrb[0].mxu0 %v126
  %v208 = vpop.f32.mrb[0].mxu0
  %v209 = vadd.f32 %v55, %v208
  %v210 = vpop.f32.mrb[0].mxu0
  %v211 = vpop.f32.mrb[0].mxu0
  %v212 = vadd.f32 %v55, %v211
  %v213 = vpop.f32.mrb[0].mxu0
  %214 = vmatprep.mubr.bf16.mxu0 0
  %215 = vmatmul.mubr.bf16.gmra.mrb[0].mxu0 %v129
  %v216 = vpop.f32.mrb[0].mxu0
  %v217 = vadd.f32 %v55, %v216
  %v218 = vpop.f32.mrb[0].mxu0
  %v219 = vpop.f32.mrb[0].mxu0
  %v220 = vadd.f32 %v55, %v219
  %v221 = vpop.f32.mrb[0].mxu0
  %222 = vmatprep.mubr.bf16.mxu0 0
  %223 = vmatmul.mubr.bf16.gmra.mrb[0].mxu0 %v132
  %v224 = vpop.f32.mrb[0].mxu0
  %v225 = vadd.f32 %v55, %v224
  %v226 = vpop.f32.mrb[0].mxu0
  %v227 = vpop.f32.mrb[0].mxu0
  %v228 = vadd.f32 %v55, %v227
  %v229 = vpop.f32.mrb[0].mxu0
  %230 = vdwg.mxu0
  %231 = vst [vmem:[#allocation4] sm:$0xff] %v169
  %232 = vst [vmem:[#allocation4 + $0x8] sm:$0xff] %v172
  %233 = vst [vmem:[#allocation4 + $0x10] sm:$0xff] %v177
  %234 = vst [vmem:[#allocation4 + $0x18] sm:$0xff] %v180
  %235 = vst [vmem:[#allocation4 + $0x20] sm:$0xff] %v185
  %236 = vst [vmem:[#allocation4 + $0x28] sm:$0xff] %v188
  %237 = vst [vmem:[#allocation4 + $0x30] sm:$0xff] %v193
  %238 = vst [vmem:[#allocation4 + $0x38] sm:$0xff] %v196
  %239 = vst [vmem:[#allocation4 + $0x40] sm:$0xff] %v201
  %240 = vst [vmem:[#allocation4 + $0x48] sm:$0xff] %v204
  %241 = vst [vmem:[#allocation4 + $0x50] sm:$0xff] %v209
  %242 = vst [vmem:[#allocation4 + $0x58] sm:$0xff] %v212
  %243 = vst [vmem:[#allocation4 + $0x60] sm:$0xff] %v217
  %244 = vst [vmem:[#allocation4 + $0x68] sm:$0xff] %v220
  %245 = vst [vmem:[#allocation4 + $0x70] sm:$0xff] %v225
  %246 = vst [vmem:[#allocation4 + $0x78] sm:$0xff] %v228
  %v247 = vld [vmem:[#allocation2] sm:$0xff]
  %v248 = vld [vmem:[#allocation2 + $0x8] sm:$0xff]
  %v249 = vld [vmem:[#allocation3] sm:$0xff]
  %v250 = vld [vmem:[#allocation3 + $0x8] sm:$0xff]
  %v251 = vld [vmem:[#allocation4] sm:$0xff]
  %v252 = vld [vmem:[#allocation4 + $0x8] sm:$0xff]
  %v253 = vpack.c.bf16 %v248, %v247
  %v254 = vld [vmem:[%s2] sm:$0xf]
  %v255 = vld [vmem:[%s2 + $0x4] sm:$0xf]
  %v256 = vld [vmem:[%s2 + $0x8] sm:$0xf]
  %v257 = vld [vmem:[%s2 + $0xc] sm:$0xf]
  %v262 = vunpack.c.l.b16 %v254
  %v263 = vunpack.c.l.b16 %v255
  %v264 = vunpack.c.l.b16 %v256
  %v265 = vunpack.c.l.b16 %v257
  %v266 = vpack.c.b16 %v263, %v262
  %v267 = vpack.c.b16 %v265, %v264
  %v271 = vsel %vm109, %v253, 0
  %273 = vmatprep.subr.bf16.mxu0 0
  %274 = vmatpush1.bf16.msra.mxu0 %v266
  %275 = vmatprep.subr.bf16.mxu0 0
  %276 = vmatpush1.bf16.msra.mxu0 %v267
  %277 = vmatprep.subr.bf16.mxu0 0
  %278 = vmatpush1.bf16.msra.mxu0 0
  %279 = vmatprep.subr.bf16.mxu0 0
  %280 = vmatpush1.bf16.msra.mxu0 0
  %281 = vmatprep.subr.bf16.mxu0 0
  %282 = vmatpush1.bf16.msra.mxu0 0
  %283 = vmatprep.subr.bf16.mxu0 0
  %284 = vmatpush1.bf16.msra.mxu0 0
  %285 = vmatprep.subr.bf16.mxu0 0
  %286 = vmatpush1.bf16.msra.mxu0 0
  %287 = vmatprep.subr.bf16.mxu0 0
  %288 = vmatpush1.bf16.msra.mxu0 0
  %289 = vmatprep.subr.bf16.mxu0 0
  %290 = vmatpush1.bf16.msra.mxu0 0
  %291 = vmatprep.subr.bf16.mxu0 0
  %292 = vmatpush1.bf16.msra.mxu0 0
  %293 = vmatprep.subr.bf16.mxu0 0
  %294 = vmatpush1.bf16.msra.mxu0 0
  %295 = vmatprep.subr.bf16.mxu0 0
  %296 = vmatpush1.bf16.msra.mxu0 0
  %297 = vmatprep.subr.bf16.mxu0 0
  %298 = vmatpush1.bf16.msra.mxu0 0
  %299 = vmatprep.subr.bf16.mxu0 0
  %300 = vmatpush1.bf16.msra.mxu0 0
  %301 = vmatprep.subr.bf16.mxu0 0
  %302 = vmatpush1.bf16.msra.mxu0 0
  %303 = vmatprep.subr.bf16.mxu0 0
  %304 = vmatpush1.bf16.msra.mxu0 0
  %305 = vmatprep.mubr.bf16.mxu0 0
  %306 = vmatmul.mubr.bf16.gmra.mrb[0].mxu0 %v271
  %v307 = vpop.f32.mrb[0].mxu0
  %v308 = vadd.f32 0.0, %v307
  %v309 = vpop.f32.mrb[0].mxu0
  %v310 = vpop.f32.mrb[0].mxu0
  %v311 = vadd.f32 0.0, %v310
  %v312 = vpop.f32.mrb[0].mxu0
  %313 = vdwg.mxu0
  %v314 = vadd.f32 %v251, %v308
  %v315 = vadd.f32 %v252, %v311
  %v316 = vxor.u32 %v314, 2147483648
  %v317 = vxor.u32 %v315, 2147483648
  %v318 = vmul.f32 %v316, 1.442695
  %v319 = vpow.pop %v318
  %v320 = vmul.f32 %v317, 1.442695
  %v321 = vpow.pop %v320
  %v322 = vadd.f32 %v319, 1.0
  %v323 = vadd.f32 %v321, 1.0
  %v324 = vrcp.pop %v322
  %v325 = vmul.f32 1.0, %v324
  %v326 = vrcp.pop %v323
  %v327 = vmul.f32 1.0, %v326
  %v328 = vtanh.pop %v314
  %v329 = vtanh.pop %v315
  %332 = vrot.lane.b32.xlu0 %v249, 32
  %v333 = vpop.permute.xlu0 %332
  %334 = vrot.lane.b32.xlu0 %v250, 32
  %v335 = vpop.permute.xlu0 %334
  %v338 = vmul.f32 %v325, %v333
  %v339 = vmul.f32 %v327, %v335
  %342 = vrot.lane.b32.xlu0 %v328, 64
  %v343 = vpop.permute.xlu0 %342
  %344 = vrot.lane.b32.xlu0 %v329, 64
  %v345 = vpop.permute.xlu0 %344
  %v348 = vmul.f32 %v325, %v343
  %v349 = vmul.f32 %v327, %v345
  %352 = vrot.lane.b32.xlu0 %v348, 32
  %v353 = vpop.permute.xlu0 %352
  %354 = vrot.lane.b32.xlu0 %v349, 32
  %v355 = vpop.permute.xlu0 %354
  %v358 = vadd.f32 %v338, %v353
  %v359 = vadd.f32 %v339, %v355
  %v360 = vtanh.pop %v358
  %v361 = vtanh.pop %v359
  %364 = vrot.lane.b32.xlu0 %v360, 64
  %v365 = vpop.permute.xlu0 %364
  %366 = vrot.lane.b32.xlu0 %v361, 64
  %v367 = vpop.permute.xlu0 %366
  %v370 = vmul.f32 %v325, %v365
  %v371 = vmul.f32 %v327, %v367
  %374 = vrot.lane.b32.xlu0 %v370, 32
  %v375 = vpop.permute.xlu0 %374
  %376 = vrot.lane.b32.xlu0 %v371, 32
  %v377 = vpop.permute.xlu0 %376
  %380 = vst.msk [vmem:[#allocation2] sm:$0xff] %vm109, %v375
  %381 = vst.msk [vmem:[#allocation2 + $0x8] sm:$0xff] %vm109, %v377
  %384 = vrot.lane.b32.xlu0 %v358, 96
  %v385 = vpop.permute.xlu0 %384
  %386 = vrot.lane.b32.xlu0 %v359, 96
  %v387 = vpop.permute.xlu0 %386
  %390 = vst.msk [vmem:[#allocation3] sm:$0xff] %vm109, %v385
  %391 = vst.msk [vmem:[#allocation3 + $0x8] sm:$0xff] %vm109, %v387
  %392 = vst.msk [vmem:[%s4] sm:$0xff] %vm109, %v375
  %393 = vst.msk [vmem:[%s4 + $0x8] sm:$0xff] %vm109, %v377
  %v394 = vld [vmem:[#allocation2] sm:$0xff]
  %v395 = vld [vmem:[#allocation2 + $0x8] sm:$0xff]
  %v396 = vld [vmem:[#allocation3] sm:$0xff]
  %v397 = vld [vmem:[#allocation3 + $0x8] sm:$0xff]
  %s398 = scalar_lea.vmem [#allocation4], 16
  %v399 = vld [vmem:[%s398] sm:$0xff]
  %v400 = vld [vmem:[%s398 + $0x8] sm:$0xff]
  %v401 = vpack.c.bf16 %v395, %v394
  %v402 = vld [vmem:[%s2] sm:$0xf]
  %v403 = vld [vmem:[%s2 + $0x4] sm:$0xf]
  %v404 = vld [vmem:[%s2 + $0x8] sm:$0xf]
  %v405 = vld [vmem:[%s2 + $0xc] sm:$0xf]
  %v410 = vunpack.c.l.b16 %v402
  %v411 = vunpack.c.l.b16 %v403
  %v412 = vunpack.c.l.b16 %v404
  %v413 = vunpack.c.l.b16 %v405
  %v414 = vpack.c.b16 %v411, %v410
  %v415 = vpack.c.b16 %v413, %v412
  %v419 = vsel %vm109, %v401, 0
  %421 = vmatprep.subr.bf16.mxu0 0
  %422 = vmatpush1.bf16.msra.mxu0 %v414
  %423 = vmatprep.subr.bf16.mxu0 0
  %424 = vmatpush1.bf16.msra.mxu0 %v415
  %425 = vmatprep.subr.bf16.mxu0 0
  %426 = vmatpush1.bf16.msra.mxu0 0
  %427 = vmatprep.subr.bf16.mxu0 0
  %428 = vmatpush1.bf16.msra.mxu0 0
  %429 = vmatprep.subr.bf16.mxu0 0
  %430 = vmatpush1.bf16.msra.mxu0 0
  %431 = vmatprep.subr.bf16.mxu0 0
  %432 = vmatpush1.bf16.msra.mxu0 0
  %433 = vmatprep.subr.bf16.mxu0 0
  %434 = vmatpush1.bf16.msra.mxu0 0
  %435 = vmatprep.subr.bf16.mxu0 0
  %436 = vmatpush1.bf16.msra.mxu0 0
  %437 = vmatprep.subr.bf16.mxu0 0
  %438 = vmatpush1.bf16.msra.mxu0 0
  %439 = vmatprep.subr.bf16.mxu0 0
  %440 = vmatpush1.bf16.msra.mxu0 0
  %441 = vmatprep.subr.bf16.mxu0 0
  %442 = vmatpush1.bf16.msra.mxu0 0
  %443 = vmatprep.subr.bf16.mxu0 0
  %444 = vmatpush1.bf16.msra.mxu0 0
  %445 = vmatprep.subr.bf16.mxu0 0
  %446 = vmatpush1.bf16.msra.mxu0 0
  %447 = vmatprep.subr.bf16.mxu0 0
  %448 = vmatpush1.bf16.msra.mxu0 0
  %449 = vmatprep.subr.bf16.mxu0 0
  %450 = vmatpush1.bf16.msra.mxu0 0
  %451 = vmatprep.subr.bf16.mxu0 0
  %452 = vmatpush1.bf16.msra.mxu0 0
  %453 = vmatprep.mubr.bf16.mxu0 0
  %454 = vmatmul.mubr.bf16.gmra.mrb[0].mxu0 %v419
  %v455 = vpop.f32.mrb[0].mxu0
  %v456 = vadd.f32 0.0, %v455
  %v457 = vpop.f32.mrb[0].mxu0
  %v458 = vpop.f32.mrb[0].mxu0
  %v459 = vadd.f32 0.0, %v458
  %v460 = vpop.f32.mrb[0].mxu0
  %461 = vdwg.mxu0
  %v462 = vadd.f32 %v399, %v456
  %v463 = vadd.f32 %v400, %v459
  %v464 = vxor.u32 %v462, 2147483648
  %v465 = vxor.u32 %v463, 2147483648
  %v466 = vmul.f32 %v464, 1.442695
  %v467 = vpow.pop %v466
  %v468 = vmul.f32 %v465, 1.442695
  %v469 = vpow.pop %v468
  %v470 = vadd.f32 %v467, 1.0
  %v471 = vadd.f32 %v469, 1.0
  %v472 = vrcp.pop %v470
  %v473 = vmul.f32 1.0, %v472
  %v474 = vrcp.pop %v471
  %v475 = vmul.f32 1.0, %v474
  %v476 = vtanh.pop %v462
  %v477 = vtanh.pop %v463
  %480 = vrot.lane.b32.xlu0 %v396, 32
  %v481 = vpop.permute.xlu0 %480
  %482 = vrot.lane.b32.xlu0 %v397, 32
  %v483 = vpop.permute.xlu0 %482
  %v486 = vmul.f32 %v473, %v481
  %v487 = vmul.f32 %v475, %v483
  %490 = vrot.lane.b32.xlu0 %v476, 64
  %v491 = vpop.permute.xlu0 %490
  %492 = vrot.lane.b32.xlu0 %v477, 64
  %v493 = vpop.permute.xlu0 %492
  %v496 = vmul.f32 %v473, %v491
  %v497 = vmul.f32 %v475, %v493
  %500 = vrot.lane.b32.xlu0 %v496, 32
  %v501 = vpop.permute.xlu0 %500
  %502 = vrot.lane.b32.xlu0 %v497, 32
  %v503 = vpop.permute.xlu0 %502
  %v506 = vadd.f32 %v486, %v501
  %v507 = vadd.f32 %v487, %v503
  %v508 = vtanh.pop %v506
  %v509 = vtanh.pop %v507
  %512 = vrot.lane.b32.xlu0 %v508, 64
  %v513 = vpop.permute.xlu0 %512
  %514 = vrot.lane.b32.xlu0 %v509, 64
  %v515 = vpop.permute.xlu0 %514
  %v518 = vmul.f32 %v473, %v513
  %v519 = vmul.f32 %v475, %v515
  %522 = vrot.lane.b32.xlu0 %v518, 32
  %v523 = vpop.permute.xlu0 %522
  %524 = vrot.lane.b32.xlu0 %v519, 32
  %v525 = vpop.permute.xlu0 %524
  %528 = vst.msk [vmem:[#allocation2] sm:$0xff] %vm109, %v523
  %529 = vst.msk [vmem:[#allocation2 + $0x8] sm:$0xff] %vm109, %v525
  %532 = vrot.lane.b32.xlu0 %v506, 96
  %v533 = vpop.permute.xlu0 %532
  %534 = vrot.lane.b32.xlu0 %v507, 96
  %v535 = vpop.permute.xlu0 %534
  %538 = vst.msk [vmem:[#allocation3] sm:$0xff] %vm109, %v533
  %539 = vst.msk [vmem:[#allocation3 + $0x8] sm:$0xff] %vm109, %v535
  %s540 = scalar_lea.vmem %s4, 16
  %541 = vst.msk [vmem:[%s540] sm:$0xff] %vm109, %v523
  %542 = vst.msk [vmem:[%s540 + $0x8] sm:$0xff] %vm109, %v525
  %v543 = vld [vmem:[#allocation2] sm:$0xff]
  %v544 = vld [vmem:[#allocation2 + $0x8] sm:$0xff]
  %v545 = vld [vmem:[#allocation3] sm:$0xff]
  %v546 = vld [vmem:[#allocation3 + $0x8] sm:$0xff]
  %s547 = scalar_lea.vmem [#allocation4], 32
  %v548 = vld [vmem:[%s547] sm:$0xff]
  %v549 = vld [vmem:[%s547 + $0x8] sm:$0xff]
  %v550 = vpack.c.bf16 %v544, %v543
  %v551 = vld [vmem:[%s2] sm:$0xf]
  %v552 = vld [vmem:[%s2 + $0x4] sm:$0xf]
  %v553 = vld [vmem:[%s2 + $0x8] sm:$0xf]
  %v554 = vld [vmem:[%s2 + $0xc] sm:$0xf]
  %v559 = vunpack.c.l.b16 %v551
  %v560 = vunpack.c.l.b16 %v552
  %v561 = vunpack.c.l.b16 %v553
  %v562 = vunpack.c.l.b16 %v554
  %v563 = vpack.c.b16 %v560, %v559
  %v564 = vpack.c.b16 %v562, %v561
  %v568 = vsel %vm109, %v550, 0
  %570 = vmatprep.subr.bf16.mxu0 0
  %571 = vmatpush1.bf16.msra.mxu0 %v563
  %572 = vmatprep.subr.bf16.mxu0 0
  %573 = vmatpush1.bf16.msra.mxu0 %v564
  %574 = vmatprep.subr.bf16.mxu0 0
  %575 = vmatpush1.bf16.msra.mxu0 0
  %576 = vmatprep.subr.bf16.mxu0 0
  %577 = vmatpush1.bf16.msra.mxu0 0
  %578 = vmatprep.subr.bf16.mxu0 0
  %579 = vmatpush1.bf16.msra.mxu0 0
  %580 = vmatprep.subr.bf16.mxu0 0
  %581 = vmatpush1.bf16.msra.mxu0 0
  %582 = vmatprep.subr.bf16.mxu0 0
  %583 = vmatpush1.bf16.msra.mxu0 0
  %584 = vmatprep.subr.bf16.mxu0 0
  %585 = vmatpush1.bf16.msra.mxu0 0
  %586 = vmatprep.subr.bf16.mxu0 0
  %587 = vmatpush1.bf16.msra.mxu0 0
  %588 = vmatprep.subr.bf16.mxu0 0
  %589 = vmatpush1.bf16.msra.mxu0 0
  %590 = vmatprep.subr.bf16.mxu0 0
  %591 = vmatpush1.bf16.msra.mxu0 0
  %592 = vmatprep.subr.bf16.mxu0 0
  %593 = vmatpush1.bf16.msra.mxu0 0
  %594 = vmatprep.subr.bf16.mxu0 0
  %595 = vmatpush1.bf16.msra.mxu0 0
  %596 = vmatprep.subr.bf16.mxu0 0
  %597 = vmatpush1.bf16.msra.mxu0 0
  %598 = vmatprep.subr.bf16.mxu0 0
  %599 = vmatpush1.bf16.msra.mxu0 0
  %600 = vmatprep.subr.bf16.mxu0 0
  %601 = vmatpush1.bf16.msra.mxu0 0
  %602 = vmatprep.mubr.bf16.mxu0 0
  %603 = vmatmul.mubr.bf16.gmra.mrb[0].mxu0 %v568
  %v604 = vpop.f32.mrb[0].mxu0
  %v605 = vadd.f32 0.0, %v604
  %v606 = vpop.f32.mrb[0].mxu0
  %v607 = vpop.f32.mrb[0].mxu0
  %v608 = vadd.f32 0.0, %v607
  %v609 = vpop.f32.mrb[0].mxu0
  %610 = vdwg.mxu0
  %v611 = vadd.f32 %v548, %v605
  %v612 = vadd.f32 %v549, %v608
  %v613 = vxor.u32 %v611, 2147483648
  %v614 = vxor.u32 %v612, 2147483648
  %v615 = vmul.f32 %v613, 1.442695
  %v616 = vpow.pop %v615
  %v617 = vmul.f32 %v614, 1.442695
  %v618 = vpow.pop %v617
  %v619 = vadd.f32 %v616, 1.0
  %v620 = vadd.f32 %v618, 1.0
  %v621 = vrcp.pop %v619
  %v622 = vmul.f32 1.0, %v621
  %v623 = vrcp.pop %v620
  %v624 = vmul.f32 1.0, %v623
  %v625 = vtanh.pop %v611
  %v626 = vtanh.pop %v612
  %629 = vrot.lane.b32.xlu0 %v545, 32
  %v630 = vpop.permute.xlu0 %629
  %631 = vrot.lane.b32.xlu0 %v546, 32
  %v632 = vpop.permute.xlu0 %631
  %v635 = vmul.f32 %v622, %v630
  %v636 = vmul.f32 %v624, %v632
  %639 = vrot.lane.b32.xlu0 %v625, 64
  %v640 = vpop.permute.xlu0 %639
  %641 = vrot.lane.b32.xlu0 %v626, 64
  %v642 = vpop.permute.xlu0 %641
  %v645 = vmul.f32 %v622, %v640
  %v646 = vmul.f32 %v624, %v642
  %649 = vrot.lane.b32.xlu0 %v645, 32
  %v650 = vpop.permute.xlu0 %649
  %651 = vrot.lane.b32.xlu0 %v646, 32
  %v652 = vpop.permute.xlu0 %651
  %v655 = vadd.f32 %v635, %v650
  %v656 = vadd.f32 %v636, %v652
  %v657 = vtanh.pop %v655
  %v658 = vtanh.pop %v656
  %661 = vrot.lane.b32.xlu0 %v657, 64
  %v662 = vpop.permute.xlu0 %661
  %663 = vrot.lane.b32.xlu0 %v658, 64
  %v664 = vpop.permute.xlu0 %663
  %v667 = vmul.f32 %v622, %v662
  %v668 = vmul.f32 %v624, %v664
  %671 = vrot.lane.b32.xlu0 %v667, 32
  %v672 = vpop.permute.xlu0 %671
  %673 = vrot.lane.b32.xlu0 %v668, 32
  %v674 = vpop.permute.xlu0 %673
  %677 = vst.msk [vmem:[#allocation2] sm:$0xff] %vm109, %v672
  %678 = vst.msk [vmem:[#allocation2 + $0x8] sm:$0xff] %vm109, %v674
  %681 = vrot.lane.b32.xlu0 %v655, 96
  %v682 = vpop.permute.xlu0 %681
  %683 = vrot.lane.b32.xlu0 %v656, 96
  %v684 = vpop.permute.xlu0 %683
  %687 = vst.msk [vmem:[#allocation3] sm:$0xff] %vm109, %v682
  %688 = vst.msk [vmem:[#allocation3 + $0x8] sm:$0xff] %vm109, %v684
  %s689 = scalar_lea.vmem %s4, 32
  %690 = vst.msk [vmem:[%s689] sm:$0xff] %vm109, %v672
  %691 = vst.msk [vmem:[%s689 + $0x8] sm:$0xff] %vm109, %v674
  %v692 = vld [vmem:[#allocation2] sm:$0xff]
  %v693 = vld [vmem:[#allocation2 + $0x8] sm:$0xff]
  %v694 = vld [vmem:[#allocation3] sm:$0xff]
  %v695 = vld [vmem:[#allocation3 + $0x8] sm:$0xff]
  %s696 = scalar_lea.vmem [#allocation4], 48
  %v697 = vld [vmem:[%s696] sm:$0xff]
  %v698 = vld [vmem:[%s696 + $0x8] sm:$0xff]
  %v699 = vpack.c.bf16 %v693, %v692
  %v700 = vld [vmem:[%s2] sm:$0xf]
  %v701 = vld [vmem:[%s2 + $0x4] sm:$0xf]
  %v702 = vld [vmem:[%s2 + $0x8] sm:$0xf]
  %v703 = vld [vmem:[%s2 + $0xc] sm:$0xf]
  %v708 = vunpack.c.l.b16 %v700
  %v709 = vunpack.c.l.b16 %v701
  %v710 = vunpack.c.l.b16 %v702
  %v711 = vunpack.c.l.b16 %v703
  %v712 = vpack.c.b16 %v709, %v708
  %v713 = vpack.c.b16 %v711, %v710
  %v717 = vsel %vm109, %v699, 0
  %719 = vmatprep.subr.bf16.mxu0 0
  %720 = vmatpush1.bf16.msra.mxu0 %v712
  %721 = vmatprep.subr.bf16.mxu0 0
  %722 = vmatpush1.bf16.msra.mxu0 %v713
  %723 = vmatprep.subr.bf16.mxu0 0
  %724 = vmatpush1.bf16.msra.mxu0 0
  %725 = vmatprep.subr.bf16.mxu0 0
  %726 = vmatpush1.bf16.msra.mxu0 0
  %727 = vmatprep.subr.bf16.mxu0 0
  %728 = vmatpush1.bf16.msra.mxu0 0
  %729 = vmatprep.subr.bf16.mxu0 0
  %730 = vmatpush1.bf16.msra.mxu0 0
  %731 = vmatprep.subr.bf16.mxu0 0
  %732 = vmatpush1.bf16.msra.mxu0 0
  %733 = vmatprep.subr.bf16.mxu0 0
  %734 = vmatpush1.bf16.msra.mxu0 0
  %735 = vmatprep.subr.bf16.mxu0 0
  %736 = vmatpush1.bf16.msra.mxu0 0
  %737 = vmatprep.subr.bf16.mxu0 0
  %738 = vmatpush1.bf16.msra.mxu0 0
  %739 = vmatprep.subr.bf16.mxu0 0
  %740 = vmatpush1.bf16.msra.mxu0 0
  %741 = vmatprep.subr.bf16.mxu0 0
  %742 = vmatpush1.bf16.msra.mxu0 0
  %743 = vmatprep.subr.bf16.mxu0 0
  %744 = vmatpush1.bf16.msra.mxu0 0
  %745 = vmatprep.subr.bf16.mxu0 0
  %746 = vmatpush1.bf16.msra.mxu0 0
  %747 = vmatprep.subr.bf16.mxu0 0
  %748 = vmatpush1.bf16.msra.mxu0 0
  %749 = vmatprep.subr.bf16.mxu0 0
  %750 = vmatpush1.bf16.msra.mxu0 0
  %751 = vmatprep.mubr.bf16.mxu0 0
  %752 = vmatmul.mubr.bf16.gmra.mrb[0].mxu0 %v717
  %v753 = vpop.f32.mrb[0].mxu0
  %v754 = vadd.f32 0.0, %v753
  %v755 = vpop.f32.mrb[0].mxu0
  %v756 = vpop.f32.mrb[0].mxu0
  %v757 = vadd.f32 0.0, %v756
  %v758 = vpop.f32.mrb[0].mxu0
  %759 = vdwg.mxu0
  %v760 = vadd.f32 %v697, %v754
  %v761 = vadd.f32 %v698, %v757
  %v762 = vxor.u32 %v760, 2147483648
  %v763 = vxor.u32 %v761, 2147483648
  %v764 = vmul.f32 %v762, 1.442695
  %v765 = vpow.pop %v764
  %v766 = vmul.f32 %v763, 1.442695
  %v767 = vpow.pop %v766
  %v768 = vadd.f32 %v765, 1.0
  %v769 = vadd.f32 %v767, 1.0
  %v770 = vrcp.pop %v768
  %v771 = vmul.f32 1.0, %v770
  %v772 = vrcp.pop %v769
  %v773 = vmul.f32 1.0, %v772
  %v774 = vtanh.pop %v760
  %v775 = vtanh.pop %v761
  %778 = vrot.lane.b32.xlu0 %v694, 32
  %v779 = vpop.permute.xlu0 %778
  %780 = vrot.lane.b32.xlu0 %v695, 32
  %v781 = vpop.permute.xlu0 %780
  %v784 = vmul.f32 %v771, %v779
  %v785 = vmul.f32 %v773, %v781
  %788 = vrot.lane.b32.xlu0 %v774, 64
  %v789 = vpop.permute.xlu0 %788
  %790 = vrot.lane.b32.xlu0 %v775, 64
  %v791 = vpop.permute.xlu0 %790
  %v794 = vmul.f32 %v771, %v789
  %v795 = vmul.f32 %v773, %v791
  %798 = vrot.lane.b32.xlu0 %v794, 32
  %v799 = vpop.permute.xlu0 %798
  %800 = vrot.lane.b32.xlu0 %v795, 32
  %v801 = vpop.permute.xlu0 %800
  %v804 = vadd.f32 %v784, %v799
  %v805 = vadd.f32 %v785, %v801
  %v806 = vtanh.pop %v804
  %v807 = vtanh.pop %v805
  %810 = vrot.lane.b32.xlu0 %v806, 64
  %v811 = vpop.permute.xlu0 %810
  %812 = vrot.lane.b32.xlu0 %v807, 64
  %v813 = vpop.permute.xlu0 %812
  %v816 = vmul.f32 %v771, %v811
  %v817 = vmul.f32 %v773, %v813
  %820 = vrot.lane.b32.xlu0 %v816, 32
  %v821 = vpop.permute.xlu0 %820
  %822 = vrot.lane.b32.xlu0 %v817, 32
  %v823 = vpop.permute.xlu0 %822
  %826 = vst.msk [vmem:[#allocation2] sm:$0xff] %vm109, %v821
  %827 = vst.msk [vmem:[#allocation2 + $0x8] sm:$0xff] %vm109, %v823
  %830 = vrot.lane.b32.xlu0 %v804, 96
  %v831 = vpop.permute.xlu0 %830
  %832 = vrot.lane.b32.xlu0 %v805, 96
  %v833 = vpop.permute.xlu0 %832
  %836 = vst.msk [vmem:[#allocation3] sm:$0xff] %vm109, %v831
  %837 = vst.msk [vmem:[#allocation3 + $0x8] sm:$0xff] %vm109, %v833
  %s838 = scalar_lea.vmem %s4, 48
  %839 = vst.msk [vmem:[%s838] sm:$0xff] %vm109, %v821
  %840 = vst.msk [vmem:[%s838 + $0x8] sm:$0xff] %vm109, %v823
  %v841 = vld [vmem:[#allocation2] sm:$0xff]
  %v842 = vld [vmem:[#allocation2 + $0x8] sm:$0xff]
  %v843 = vld [vmem:[#allocation3] sm:$0xff]
  %v844 = vld [vmem:[#allocation3 + $0x8] sm:$0xff]
  %s845 = scalar_lea.vmem [#allocation4], 64
  %v846 = vld [vmem:[%s845] sm:$0xff]
  %v847 = vld [vmem:[%s845 + $0x8] sm:$0xff]
  %v848 = vpack.c.bf16 %v842, %v841
  %v849 = vld [vmem:[%s2] sm:$0xf]
  %v850 = vld [vmem:[%s2 + $0x4] sm:$0xf]
  %v851 = vld [vmem:[%s2 + $0x8] sm:$0xf]
  %v852 = vld [vmem:[%s2 + $0xc] sm:$0xf]
  %v857 = vunpack.c.l.b16 %v849
  %v858 = vunpack.c.l.b16 %v850
  %v859 = vunpack.c.l.b16 %v851
  %v860 = vunpack.c.l.b16 %v852
  %v861 = vpack.c.b16 %v858, %v857
  %v862 = vpack.c.b16 %v860, %v859
  %v866 = vsel %vm109, %v848, 0
  %868 = vmatprep.subr.bf16.mxu0 0
  %869 = vmatpush1.bf16.msra.mxu0 %v861
  %870 = vmatprep.subr.bf16.mxu0 0
  %871 = vmatpush1.bf16.msra.mxu0 %v862
  %872 = vmatprep.subr.bf16.mxu0 0
  %873 = vmatpush1.bf16.msra.mxu0 0
  %874 = vmatprep.subr.bf16.mxu0 0
  %875 = vmatpush1.bf16.msra.mxu0 0
  %876 = vmatprep.subr.bf16.mxu0 0
  %877 = vmatpush1.bf16.msra.mxu0 0
  %878 = vmatprep.subr.bf16.mxu0 0
  %879 = vmatpush1.bf16.msra.mxu0 0
  %880 = vmatprep.subr.bf16.mxu0 0
  %881 = vmatpush1.bf16.msra.mxu0 0
  %882 = vmatprep.subr.bf16.mxu0 0
  %883 = vmatpush1.bf16.msra.mxu0 0
  %884 = vmatprep.subr.bf16.mxu0 0
  %885 = vmatpush1.bf16.msra.mxu0 0
  %886 = vmatprep.subr.bf16.mxu0 0
  %887 = vmatpush1.bf16.msra.mxu0 0
  %888 = vmatprep.subr.bf16.mxu0 0
  %889 = vmatpush1.bf16.msra.mxu0 0
  %890 = vmatprep.subr.bf16.mxu0 0
  %891 = vmatpush1.bf16.msra.mxu0 0
  %892 = vmatprep.subr.bf16.mxu0 0
  %893 = vmatpush1.bf16.msra.mxu0 0
  %894 = vmatprep.subr.bf16.mxu0 0
  %895 = vmatpush1.bf16.msra.mxu0 0
  %896 = vmatprep.subr.bf16.mxu0 0
  %897 = vmatpush1.bf16.msra.mxu0 0
  %898 = vmatprep.subr.bf16.mxu0 0
  %899 = vmatpush1.bf16.msra.mxu0 0
  %900 = vmatprep.mubr.bf16.mxu0 0
  %901 = vmatmul.mubr.bf16.gmra.mrb[0].mxu0 %v866
  %v902 = vpop.f32.mrb[0].mxu0
  %v903 = vadd.f32 0.0, %v902
  %v904 = vpop.f32.mrb[0].mxu0
  %v905 = vpop.f32.mrb[0].mxu0
  %v906 = vadd.f32 0.0, %v905
  %v907 = vpop.f32.mrb[0].mxu0
  %908 = vdwg.mxu0
  %v909 = vadd.f32 %v846, %v903
  %v910 = vadd.f32 %v847, %v906
  %v911 = vxor.u32 %v909, 2147483648
  %v912 = vxor.u32 %v910, 2147483648
  %v913 = vmul.f32 %v911, 1.442695
  %v914 = vpow.pop %v913
  %v915 = vmul.f32 %v912, 1.442695
  %v916 = vpow.pop %v915
  %v917 = vadd.f32 %v914, 1.0
  %v918 = vadd.f32 %v916, 1.0
  %v919 = vrcp.pop %v917
  %v920 = vmul.f32 1.0, %v919
  %v921 = vrcp.pop %v918
  %v922 = vmul.f32 1.0, %v921
  %v923 = vtanh.pop %v909
  %v924 = vtanh.pop %v910
  %927 = vrot.lane.b32.xlu0 %v843, 32
  %v928 = vpop.permute.xlu0 %927
  %929 = vrot.lane.b32.xlu0 %v844, 32
  %v930 = vpop.permute.xlu0 %929
  %v933 = vmul.f32 %v920, %v928
  %v934 = vmul.f32 %v922, %v930
  %937 = vrot.lane.b32.xlu0 %v923, 64
  %v938 = vpop.permute.xlu0 %937
  %939 = vrot.lane.b32.xlu0 %v924, 64
  %v940 = vpop.permute.xlu0 %939
  %v943 = vmul.f32 %v920, %v938
  %v944 = vmul.f32 %v922, %v940
  %947 = vrot.lane.b32.xlu0 %v943, 32
  %v948 = vpop.permute.xlu0 %947
  %949 = vrot.lane.b32.xlu0 %v944, 32
  %v950 = vpop.permute.xlu0 %949
  %v953 = vadd.f32 %v933, %v948
  %v954 = vadd.f32 %v934, %v950
  %v955 = vtanh.pop %v953
  %v956 = vtanh.pop %v954
  %959 = vrot.lane.b32.xlu0 %v955, 64
  %v960 = vpop.permute.xlu0 %959
  %961 = vrot.lane.b32.xlu0 %v956, 64
  %v962 = vpop.permute.xlu0 %961
  %v965 = vmul.f32 %v920, %v960
  %v966 = vmul.f32 %v922, %v962
  %969 = vrot.lane.b32.xlu0 %v965, 32
  %v970 = vpop.permute.xlu0 %969
  %971 = vrot.lane.b32.xlu0 %v966, 32
  %v972 = vpop.permute.xlu0 %971
  %975 = vst.msk [vmem:[#allocation2] sm:$0xff] %vm109, %v970
  %976 = vst.msk [vmem:[#allocation2 + $0x8] sm:$0xff] %vm109, %v972
  %979 = vrot.lane.b32.xlu0 %v953, 96
  %v980 = vpop.permute.xlu0 %979
  %981 = vrot.lane.b32.xlu0 %v954, 96
  %v982 = vpop.permute.xlu0 %981
  %985 = vst.msk [vmem:[#allocation3] sm:$0xff] %vm109, %v980
  %986 = vst.msk [vmem:[#allocation3 + $0x8] sm:$0xff] %vm109, %v982
  %s987 = scalar_lea.vmem %s4, 64
  %988 = vst.msk [vmem:[%s987] sm:$0xff] %vm109, %v970
  %989 = vst.msk [vmem:[%s987 + $0x8] sm:$0xff] %vm109, %v972
  %v990 = vld [vmem:[#allocation2] sm:$0xff]
  %v991 = vld [vmem:[#allocation2 + $0x8] sm:$0xff]
  %v992 = vld [vmem:[#allocation3] sm:$0xff]
  %v993 = vld [vmem:[#allocation3 + $0x8] sm:$0xff]
  %s994 = scalar_lea.vmem [#allocation4], 80
  %v995 = vld [vmem:[%s994] sm:$0xff]
  %v996 = vld [vmem:[%s994 + $0x8] sm:$0xff]
  %v997 = vpack.c.bf16 %v991, %v990
  %v998 = vld [vmem:[%s2] sm:$0xf]
  %v999 = vld [vmem:[%s2 + $0x4] sm:$0xf]
  %v1000 = vld [vmem:[%s2 + $0x8] sm:$0xf]
  %v1001 = vld [vmem:[%s2 + $0xc] sm:$0xf]
  %v1006 = vunpack.c.l.b16 %v998
  %v1007 = vunpack.c.l.b16 %v999
  %v1008 = vunpack.c.l.b16 %v1000
  %v1009 = vunpack.c.l.b16 %v1001
  %v1010 = vpack.c.b16 %v1007, %v1006
  %v1011 = vpack.c.b16 %v1009, %v1008
  %v1015 = vsel %vm109, %v997, 0
  %1017 = vmatprep.subr.bf16.mxu0 0
  %1018 = vmatpush1.bf16.msra.mxu0 %v1010
  %1019 = vmatprep.subr.bf16.mxu0 0
  %1020 = vmatpush1.bf16.msra.mxu0 %v1011
  %1021 = vmatprep.subr.bf16.mxu0 0
  %1022 = vmatpush1.bf16.msra.mxu0 0
  %1023 = vmatprep.subr.bf16.mxu0 0
  %1024 = vmatpush1.bf16.msra.mxu0 0
  %1025 = vmatprep.subr.bf16.mxu0 0
  %1026 = vmatpush1.bf16.msra.mxu0 0
  %1027 = vmatprep.subr.bf16.mxu0 0
  %1028 = vmatpush1.bf16.msra.mxu0 0
  %1029 = vmatprep.subr.bf16.mxu0 0
  %1030 = vmatpush1.bf16.msra.mxu0 0
  %1031 = vmatprep.subr.bf16.mxu0 0
  %1032 = vmatpush1.bf16.msra.mxu0 0
  %1033 = vmatprep.subr.bf16.mxu0 0
  %1034 = vmatpush1.bf16.msra.mxu0 0
  %1035 = vmatprep.subr.bf16.mxu0 0
  %1036 = vmatpush1.bf16.msra.mxu0 0
  %1037 = vmatprep.subr.bf16.mxu0 0
  %1038 = vmatpush1.bf16.msra.mxu0 0
  %1039 = vmatprep.subr.bf16.mxu0 0
  %1040 = vmatpush1.bf16.msra.mxu0 0
  %1041 = vmatprep.subr.bf16.mxu0 0
  %1042 = vmatpush1.bf16.msra.mxu0 0
  %1043 = vmatprep.subr.bf16.mxu0 0
  %1044 = vmatpush1.bf16.msra.mxu0 0
  %1045 = vmatprep.subr.bf16.mxu0 0
  %1046 = vmatpush1.bf16.msra.mxu0 0
  %1047 = vmatprep.subr.bf16.mxu0 0
  %1048 = vmatpush1.bf16.msra.mxu0 0
  %1049 = vmatprep.mubr.bf16.mxu0 0
  %1050 = vmatmul.mubr.bf16.gmra.mrb[0].mxu0 %v1015
  %v1051 = vpop.f32.mrb[0].mxu0
  %v1052 = vadd.f32 0.0, %v1051
  %v1053 = vpop.f32.mrb[0].mxu0
  %v1054 = vpop.f32.mrb[0].mxu0
  %v1055 = vadd.f32 0.0, %v1054
  %v1056 = vpop.f32.mrb[0].mxu0
  %1057 = vdwg.mxu0
  %v1058 = vadd.f32 %v995, %v1052
  %v1059 = vadd.f32 %v996, %v1055
  %v1060 = vxor.u32 %v1058, 2147483648
  %v1061 = vxor.u32 %v1059, 2147483648
  %v1062 = vmul.f32 %v1060, 1.442695
  %v1063 = vpow.pop %v1062
  %v1064 = vmul.f32 %v1061, 1.442695
  %v1065 = vpow.pop %v1064
  %v1066 = vadd.f32 %v1063, 1.0
  %v1067 = vadd.f32 %v1065, 1.0
  %v1068 = vrcp.pop %v1066
  %v1069 = vmul.f32 1.0, %v1068
  %v1070 = vrcp.pop %v1067
  %v1071 = vmul.f32 1.0, %v1070
  %v1072 = vtanh.pop %v1058
  %v1073 = vtanh.pop %v1059
  %1076 = vrot.lane.b32.xlu0 %v992, 32
  %v1077 = vpop.permute.xlu0 %1076
  %1078 = vrot.lane.b32.xlu0 %v993, 32
  %v1079 = vpop.permute.xlu0 %1078
  %v1082 = vmul.f32 %v1069, %v1077
  %v1083 = vmul.f32 %v1071, %v1079
  %1086 = vrot.lane.b32.xlu0 %v1072, 64
  %v1087 = vpop.permute.xlu0 %1086
  %1088 = vrot.lane.b32.xlu0 %v1073, 64
  %v1089 = vpop.permute.xlu0 %1088
  %v1092 = vmul.f32 %v1069, %v1087
  %v1093 = vmul.f32 %v1071, %v1089
  %1096 = vrot.lane.b32.xlu0 %v1092, 32
  %v1097 = vpop.permute.xlu0 %1096
  %1098 = vrot.lane.b32.xlu0 %v1093, 32
  %v1099 = vpop.permute.xlu0 %1098
  %v1102 = vadd.f32 %v1082, %v1097
  %v1103 = vadd.f32 %v1083, %v1099
  %v1104 = vtanh.pop %v1102
  %v1105 = vtanh.pop %v1103
  %1108 = vrot.lane.b32.xlu0 %v1104, 64
  %v1109 = vpop.permute.xlu0 %1108
  %1110 = vrot.lane.b32.xlu0 %v1105, 64
  %v1111 = vpop.permute.xlu0 %1110
  %v1114 = vmul.f32 %v1069, %v1109
  %v1115 = vmul.f32 %v1071, %v1111
  %1118 = vrot.lane.b32.xlu0 %v1114, 32
  %v1119 = vpop.permute.xlu0 %1118
  %1120 = vrot.lane.b32.xlu0 %v1115, 32
  %v1121 = vpop.permute.xlu0 %1120
  %1124 = vst.msk [vmem:[#allocation2] sm:$0xff] %vm109, %v1119
  %1125 = vst.msk [vmem:[#allocation2 + $0x8] sm:$0xff] %vm109, %v1121
  %1128 = vrot.lane.b32.xlu0 %v1102, 96
  %v1129 = vpop.permute.xlu0 %1128
  %1130 = vrot.lane.b32.xlu0 %v1103, 96
  %v1131 = vpop.permute.xlu0 %1130
  %1134 = vst.msk [vmem:[#allocation3] sm:$0xff] %vm109, %v1129
  %1135 = vst.msk [vmem:[#allocation3 + $0x8] sm:$0xff] %vm109, %v1131
  %s1136 = scalar_lea.vmem %s4, 80
  %1137 = vst.msk [vmem:[%s1136] sm:$0xff] %vm109, %v1119
  %1138 = vst.msk [vmem:[%s1136 + $0x8] sm:$0xff] %vm109, %v1121
  %v1139 = vld [vmem:[#allocation2] sm:$0xff]
  %v1140 = vld [vmem:[#allocation2 + $0x8] sm:$0xff]
  %v1141 = vld [vmem:[#allocation3] sm:$0xff]
  %v1142 = vld [vmem:[#allocation3 + $0x8] sm:$0xff]
  %s1143 = scalar_lea.vmem [#allocation4], 96
  %v1144 = vld [vmem:[%s1143] sm:$0xff]
  %v1145 = vld [vmem:[%s1143 + $0x8] sm:$0xff]
  %v1146 = vpack.c.bf16 %v1140, %v1139
  %v1147 = vld [vmem:[%s2] sm:$0xf]
  %v1148 = vld [vmem:[%s2 + $0x4] sm:$0xf]
  %v1149 = vld [vmem:[%s2 + $0x8] sm:$0xf]
  %v1150 = vld [vmem:[%s2 + $0xc] sm:$0xf]
  %v1155 = vunpack.c.l.b16 %v1147
  %v1156 = vunpack.c.l.b16 %v1148
  %v1157 = vunpack.c.l.b16 %v1149
  %v1158 = vunpack.c.l.b16 %v1150
  %v1159 = vpack.c.b16 %v1156, %v1155
  %v1160 = vpack.c.b16 %v1158, %v1157
  %v1164 = vsel %vm109, %v1146, 0
  %1166 = vmatprep.subr.bf16.mxu0 0
  %1167 = vmatpush1.bf16.msra.mxu0 %v1159
  %1168 = vmatprep.subr.bf16.mxu0 0
  %1169 = vmatpush1.bf16.msra.mxu0 %v1160
  %1170 = vmatprep.subr.bf16.mxu0 0
  %1171 = vmatpush1.bf16.msra.mxu0 0
  %1172 = vmatprep.subr.bf16.mxu0 0
  %1173 = vmatpush1.bf16.msra.mxu0 0
  %1174 = vmatprep.subr.bf16.mxu0 0
  %1175 = vmatpush1.bf16.msra.mxu0 0
  %1176 = vmatprep.subr.bf16.mxu0 0
  %1177 = vmatpush1.bf16.msra.mxu0 0
  %1178 = vmatprep.subr.bf16.mxu0 0
  %1179 = vmatpush1.bf16.msra.mxu0 0
  %1180 = vmatprep.subr.bf16.mxu0 0
  %1181 = vmatpush1.bf16.msra.mxu0 0
  %1182 = vmatprep.subr.bf16.mxu0 0
  %1183 = vmatpush1.bf16.msra.mxu0 0
  %1184 = vmatprep.subr.bf16.mxu0 0
  %1185 = vmatpush1.bf16.msra.mxu0 0
  %1186 = vmatprep.subr.bf16.mxu0 0
  %1187 = vmatpush1.bf16.msra.mxu0 0
  %1188 = vmatprep.subr.bf16.mxu0 0
  %1189 = vmatpush1.bf16.msra.mxu0 0
  %1190 = vmatprep.subr.bf16.mxu0 0
  %1191 = vmatpush1.bf16.msra.mxu0 0
  %1192 = vmatprep.subr.bf16.mxu0 0
  %1193 = vmatpush1.bf16.msra.mxu0 0
  %1194 = vmatprep.subr.bf16.mxu0 0
  %1195 = vmatpush1.bf16.msra.mxu0 0
  %1196 = vmatprep.subr.bf16.mxu0 0
  %1197 = vmatpush1.bf16.msra.mxu0 0
  %1198 = vmatprep.mubr.bf16.mxu0 0
  %1199 = vmatmul.mubr.bf16.gmra.mrb[0].mxu0 %v1164
  %v1200 = vpop.f32.mrb[0].mxu0
  %v1201 = vadd.f32 0.0, %v1200
  %v1202 = vpop.f32.mrb[0].mxu0
  %v1203 = vpop.f32.mrb[0].mxu0
  %v1204 = vadd.f32 0.0, %v1203
  %v1205 = vpop.f32.mrb[0].mxu0
  %1206 = vdwg.mxu0
  %v1207 = vadd.f32 %v1144, %v1201
  %v1208 = vadd.f32 %v1145, %v1204
  %v1209 = vxor.u32 %v1207, 2147483648
  %v1210 = vxor.u32 %v1208, 2147483648
  %v1211 = vmul.f32 %v1209, 1.442695
  %v1212 = vpow.pop %v1211
  %v1213 = vmul.f32 %v1210, 1.442695
  %v1214 = vpow.pop %v1213
  %v1215 = vadd.f32 %v1212, 1.0
  %v1216 = vadd.f32 %v1214, 1.0
  %v1217 = vrcp.pop %v1215
  %v1218 = vmul.f32 1.0, %v1217
  %v1219 = vrcp.pop %v1216
  %v1220 = vmul.f32 1.0, %v1219
  %v1221 = vtanh.pop %v1207
  %v1222 = vtanh.pop %v1208
  %1225 = vrot.lane.b32.xlu0 %v1141, 32
  %v1226 = vpop.permute.xlu0 %1225
  %1227 = vrot.lane.b32.xlu0 %v1142, 32
  %v1228 = vpop.permute.xlu0 %1227
  %v1231 = vmul.f32 %v1218, %v1226
  %v1232 = vmul.f32 %v1220, %v1228
  %1235 = vrot.lane.b32.xlu0 %v1221, 64
  %v1236 = vpop.permute.xlu0 %1235
  %1237 = vrot.lane.b32.xlu0 %v1222, 64
  %v1238 = vpop.permute.xlu0 %1237
  %v1241 = vmul.f32 %v1218, %v1236
  %v1242 = vmul.f32 %v1220, %v1238
  %1245 = vrot.lane.b32.xlu0 %v1241, 32
  %v1246 = vpop.permute.xlu0 %1245
  %1247 = vrot.lane.b32.xlu0 %v1242, 32
  %v1248 = vpop.permute.xlu0 %1247
  %v1251 = vadd.f32 %v1231, %v1246
  %v1252 = vadd.f32 %v1232, %v1248
  %v1253 = vtanh.pop %v1251
  %v1254 = vtanh.pop %v1252
  %1257 = vrot.lane.b32.xlu0 %v1253, 64
  %v1258 = vpop.permute.xlu0 %1257
  %1259 = vrot.lane.b32.xlu0 %v1254, 64
  %v1260 = vpop.permute.xlu0 %1259
  %v1263 = vmul.f32 %v1218, %v1258
  %v1264 = vmul.f32 %v1220, %v1260
  %1267 = vrot.lane.b32.xlu0 %v1263, 32
  %v1268 = vpop.permute.xlu0 %1267
  %1269 = vrot.lane.b32.xlu0 %v1264, 32
  %v1270 = vpop.permute.xlu0 %1269
  %1273 = vst.msk [vmem:[#allocation2] sm:$0xff] %vm109, %v1268
  %1274 = vst.msk [vmem:[#allocation2 + $0x8] sm:$0xff] %vm109, %v1270
  %1277 = vrot.lane.b32.xlu0 %v1251, 96
  %v1278 = vpop.permute.xlu0 %1277
  %1279 = vrot.lane.b32.xlu0 %v1252, 96
  %v1280 = vpop.permute.xlu0 %1279
  %1283 = vst.msk [vmem:[#allocation3] sm:$0xff] %vm109, %v1278
  %1284 = vst.msk [vmem:[#allocation3 + $0x8] sm:$0xff] %vm109, %v1280
  %s1285 = scalar_lea.vmem %s4, 96
  %1286 = vst.msk [vmem:[%s1285] sm:$0xff] %vm109, %v1268
  %1287 = vst.msk [vmem:[%s1285 + $0x8] sm:$0xff] %vm109, %v1270
  %v1288 = vld [vmem:[#allocation2] sm:$0xff]
  %v1289 = vld [vmem:[#allocation2 + $0x8] sm:$0xff]
  %v1290 = vld [vmem:[#allocation3] sm:$0xff]
  %v1291 = vld [vmem:[#allocation3 + $0x8] sm:$0xff]
  %s1292 = scalar_lea.vmem [#allocation4], 112
  %v1293 = vld [vmem:[%s1292] sm:$0xff]
  %v1294 = vld [vmem:[%s1292 + $0x8] sm:$0xff]
  %v1295 = vpack.c.bf16 %v1289, %v1288
  %v1296 = vld [vmem:[%s2] sm:$0xf]
  %v1297 = vld [vmem:[%s2 + $0x4] sm:$0xf]
  %v1298 = vld [vmem:[%s2 + $0x8] sm:$0xf]
  %v1299 = vld [vmem:[%s2 + $0xc] sm:$0xf]
  %v1304 = vunpack.c.l.b16 %v1296
  %v1305 = vunpack.c.l.b16 %v1297
  %v1306 = vunpack.c.l.b16 %v1298
  %v1307 = vunpack.c.l.b16 %v1299
  %v1308 = vpack.c.b16 %v1305, %v1304
  %v1309 = vpack.c.b16 %v1307, %v1306
  %v1313 = vsel %vm109, %v1295, 0
  %1315 = vmatprep.subr.bf16.mxu0 0
  %1316 = vmatpush1.bf16.msra.mxu0 %v1308
  %1317 = vmatprep.subr.bf16.mxu0 0
  %1318 = vmatpush1.bf16.msra.mxu0 %v1309
  %1319 = vmatprep.subr.bf16.mxu0 0
  %1320 = vmatpush1.bf16.msra.mxu0 0
  %1321 = vmatprep.subr.bf16.mxu0 0
  %1322 = vmatpush1.bf16.msra.mxu0 0
  %1323 = vmatprep.subr.bf16.mxu0 0
  %1324 = vmatpush1.bf16.msra.mxu0 0
  %1325 = vmatprep.subr.bf16.mxu0 0
  %1326 = vmatpush1.bf16.msra.mxu0 0
  %1327 = vmatprep.subr.bf16.mxu0 0
  %1328 = vmatpush1.bf16.msra.mxu0 0
  %1329 = vmatprep.subr.bf16.mxu0 0
  %1330 = vmatpush1.bf16.msra.mxu0 0
  %1331 = vmatprep.subr.bf16.mxu0 0
  %1332 = vmatpush1.bf16.msra.mxu0 0
  %1333 = vmatprep.subr.bf16.mxu0 0
  %1334 = vmatpush1.bf16.msra.mxu0 0
  %1335 = vmatprep.subr.bf16.mxu0 0
  %1336 = vmatpush1.bf16.msra.mxu0 0
  %1337 = vmatprep.subr.bf16.mxu0 0
  %1338 = vmatpush1.bf16.msra.mxu0 0
  %1339 = vmatprep.subr.bf16.mxu0 0
  %1340 = vmatpush1.bf16.msra.mxu0 0
  %1341 = vmatprep.subr.bf16.mxu0 0
  %1342 = vmatpush1.bf16.msra.mxu0 0
  %1343 = vmatprep.subr.bf16.mxu0 0
  %1344 = vmatpush1.bf16.msra.mxu0 0
  %1345 = vmatprep.subr.bf16.mxu0 0
  %1346 = vmatpush1.bf16.msra.mxu0 0
  %1347 = vmatprep.mubr.bf16.mxu0 0
  %1348 = vmatmul.mubr.bf16.gmra.mrb[0].mxu0 %v1313
  %v1349 = vpop.f32.mrb[0].mxu0
  %v1350 = vadd.f32 0.0, %v1349
  %v1351 = vpop.f32.mrb[0].mxu0
  %v1352 = vpop.f32.mrb[0].mxu0
  %v1353 = vadd.f32 0.0, %v1352
  %v1354 = vpop.f32.mrb[0].mxu0
  %1355 = vdwg.mxu0
  %v1356 = vadd.f32 %v1293, %v1350
  %v1357 = vadd.f32 %v1294, %v1353
  %v1358 = vxor.u32 %v1356, 2147483648
  %v1359 = vxor.u32 %v1357, 2147483648
  %v1360 = vmul.f32 %v1358, 1.442695
  %v1361 = vpow.pop %v1360
  %v1362 = vmul.f32 %v1359, 1.442695
  %v1363 = vpow.pop %v1362
  %v1364 = vadd.f32 %v1361, 1.0
  %v1365 = vadd.f32 %v1363, 1.0
  %v1366 = vrcp.pop %v1364
  %v1367 = vmul.f32 1.0, %v1366
  %v1368 = vrcp.pop %v1365
  %v1369 = vmul.f32 1.0, %v1368
  %v1370 = vtanh.pop %v1356
  %v1371 = vtanh.pop %v1357
  %1374 = vrot.lane.b32.xlu0 %v1290, 32
  %v1375 = vpop.permute.xlu0 %1374
  %1376 = vrot.lane.b32.xlu0 %v1291, 32
  %v1377 = vpop.permute.xlu0 %1376
  %v1380 = vmul.f32 %v1367, %v1375
  %v1381 = vmul.f32 %v1369, %v1377
  %1384 = vrot.lane.b32.xlu0 %v1370, 64
  %v1385 = vpop.permute.xlu0 %1384
  %1386 = vrot.lane.b32.xlu0 %v1371, 64
  %v1387 = vpop.permute.xlu0 %1386
  %v1390 = vmul.f32 %v1367, %v1385
  %v1391 = vmul.f32 %v1369, %v1387
  %1394 = vrot.lane.b32.xlu0 %v1390, 32
  %v1395 = vpop.permute.xlu0 %1394
  %1396 = vrot.lane.b32.xlu0 %v1391, 32
  %v1397 = vpop.permute.xlu0 %1396
  %v1400 = vadd.f32 %v1380, %v1395
  %v1401 = vadd.f32 %v1381, %v1397
  %v1402 = vtanh.pop %v1400
  %v1403 = vtanh.pop %v1401
  %1406 = vrot.lane.b32.xlu0 %v1402, 64
  %v1407 = vpop.permute.xlu0 %1406
  %1408 = vrot.lane.b32.xlu0 %v1403, 64
  %v1409 = vpop.permute.xlu0 %1408
  %v1412 = vmul.f32 %v1367, %v1407
  %v1413 = vmul.f32 %v1369, %v1409
  %1416 = vrot.lane.b32.xlu0 %v1412, 32
  %v1417 = vpop.permute.xlu0 %1416
  %1418 = vrot.lane.b32.xlu0 %v1413, 32
  %v1419 = vpop.permute.xlu0 %1418
  %1422 = vst.msk [vmem:[#allocation2] sm:$0xff] %vm109, %v1417
  %1423 = vst.msk [vmem:[#allocation2 + $0x8] sm:$0xff] %vm109, %v1419
  %1426 = vrot.lane.b32.xlu0 %v1400, 96
  %v1427 = vpop.permute.xlu0 %1426
  %1428 = vrot.lane.b32.xlu0 %v1401, 96
  %v1429 = vpop.permute.xlu0 %1428
  %1432 = vst.msk [vmem:[#allocation3] sm:$0xff] %vm109, %v1427
  %1433 = vst.msk [vmem:[#allocation3 + $0x8] sm:$0xff] %vm109, %v1429
  %s1434 = scalar_lea.vmem %s4, 112
  %1435 = vst.msk [vmem:[%s1434] sm:$0xff] %vm109, %v1417
  %1436 = vst.msk [vmem:[%s1434 + $0x8] sm:$0xff] %vm109, %v1419
  // Predicated region
  $region22: #{encoder_forward.3} parent=0 // pred_check
    %p1437 = pneg %p21
  $region23: #{encoder_forward.3} parent=0 // pred_check_branch
    %1439 = sbr.rel (%p1437) target = $region25
  $region24: #{encoder_forward.3} parent=0 // pred_region
    %v1440 = vld [vmem:[#allocation2] sm:$0xff]
    %v1441 = vld [vmem:[#allocation2 + $0x8] sm:$0xff]
    %1442 = vst.msk [vmem:[%s5] sm:$0xff] %vm109, %v1440
    %1443 = vst.msk [vmem:[%s5 + $0x8] sm:$0xff] %vm109, %v1441
    %v1444 = vld [vmem:[#allocation3] sm:$0xff]
    %v1445 = vld [vmem:[#allocation3 + $0x8] sm:$0xff]
    %1446 = vst.msk [vmem:[%s6] sm:$0xff] %vm109, %v1444
    %1447 = vst.msk [vmem:[%s6 + $0x8] sm:$0xff] %vm109, %v1445
  $region25: #{encoder_forward.3} parent=0 // pred_fallthru
    _
  // Predicated region
  $region26: #{encoder_forward.3} parent=0 // pred_check
    _
  $region27: #{encoder_forward.3} parent=0 // pred_check_branch
    %1449 = sbr.rel (0) target = $region29
  $region28: #{encoder_forward.3} parent=0 // pred_region
    _
  $region29: #{encoder_forward.3} parent=0 // pred_fallthru
    _
  // Predicated region
  $region30: #{encoder_forward.3} parent=0 // pred_check
    _
  $region31: #{encoder_forward.3} parent=0 // pred_check_branch
    %1451 = sbr.rel (0) target = $region33
  $region32: #{encoder_forward.3} parent=0 // pred_region
    _
  $region33: #{encoder_forward.3} parent=0 // pred_fallthru
    _
  // Predicated region
  $region34: #{encoder_forward.3} parent=0 // pred_check
    _
  $region35: #{encoder_forward.3} parent=0 // pred_check_branch
    %1453 = sbr.rel (0) target = $region37
  $region36: #{encoder_forward.3} parent=0 // pred_region
    _
  $region37: #{encoder_forward.3} parent=0 // pred_fallthru
    _
  // Predicated region
  $region38: #{encoder_forward.3} parent=0 // pred_check
    _
  $region39: #{encoder_forward.3} parent=0 // pred_check_branch
    %1455 = sbr.rel (0) target = $region41
  $region40: #{encoder_forward.3} parent=0 // pred_region
    _
  $region41: #{encoder_forward.3} parent=0 // pred_fallthru
    _
  // Predicated region
  $region42: #{encoder_forward.3} parent=0 // pred_check
    _
  $region43: #{encoder_forward.3} parent=0 // pred_check_branch
    %1457 = sbr.rel (0) target = $region45
  $region44: #{encoder_forward.3} parent=0 // pred_region
    _
  $region45: #{encoder_forward.3} parent=0 // pred_fallthru
    _
  // Predicated region
  $region46: #{encoder_forward.3} parent=0 // pred_check
    _
  $region47: #{encoder_forward.3} parent=0 // pred_check_branch
    %1459 = sbr.rel (0) target = $region49
  $region48: #{encoder_forward.3} parent=0 // pred_region
    _
  $region49: #{encoder_forward.3} parent=0 // pred_fallthru
    _

// kernel: encoder_forward.2
$region0: #{encoder_forward.2}
  #allocation0 [shape = 'u32[]', space=smem, size = 0x4, offset = 0x4, fixed_abs, tag = 'smem constant byte address 0x4 - core index']
  #allocation1 [shape = 'u32[144,128]{1,0:T(1,128)}', space=vmem, size = 0x12000, scoped, tag = 'internal scratch']
  #allocation2 [shape = 'f32[16,32]{1,0:T(8,128)}', space=vmem, size = 0x2000, scoped, tag = 'scratch operand']
  #allocation3 [shape = 'f32[16,32]{1,0:T(8,128)}', space=vmem, size = 0x2000, scoped, tag = 'scratch operand']
  #allocation4 [shape = 'f32[8,16,128]{2,1,0:T(8,128)}', space=vmem, size = 0x10000, scoped, tag = 'scratch operand']
  %s0 = inlined_call_operand.vmem [shape: bf16[8,16,16], index: 0, kind: input, shape index: {}]
  %s1 = inlined_call_operand.vmem [shape: bf16[16,128], index: 1, kind: input, shape index: {}]
  %s2 = inlined_call_operand.vmem [shape: bf16[32,128], index: 2, kind: input, shape index: {}]
  %s3 = inlined_call_operand.vmem [shape: f32[1,128], index: 3, kind: input, shape index: {}]
  %s4 = inlined_call_operand.vmem [shape: bf16[8,16,32], index: 4, kind: output, shape index: {0}]
  %s5 = inlined_call_operand.vmem [shape: f32[16,32], index: 5, kind: output, shape index: {1}]
  %s6 = inlined_call_operand.vmem [shape: f32[16,32], index: 6, kind: output, shape index: {2}]
  %7 = xla_tuple %s4, %s5, %s6
  %s8 = sld [smem:[#allocation0]]
  $region50: #{encoder_forward.2} parent=0
    _
  %s10 = ssub.s32 1, %s8
  %s11 = scalar_select 0, %s10, %s8
  // Predicated region
  $region2: #{encoder_forward.2} parent=0 // pred_check
    _
  $region3: #{encoder_forward.2} parent=0 // pred_check_branch
    %13 = sbr.rel (0) target = $region5
  $region4: #{encoder_forward.2} parent=0 // pred_region
    _
  $region5: #{encoder_forward.2} parent=0 // pred_fallthru
    _
  // Predicated region
  $region6: #{encoder_forward.2} parent=0 // pred_check
    _
  $region7: #{encoder_forward.2} parent=0 // pred_check_branch
    %15 = sbr.rel (0) target = $region9
  $region8: #{encoder_forward.2} parent=0 // pred_region
    _
  $region9: #{encoder_forward.2} parent=0 // pred_fallthru
    _
  // Predicated region
  $region10: #{encoder_forward.2} parent=0 // pred_check
    _
  $region11: #{encoder_forward.2} parent=0 // pred_check_branch
    %17 = sbr.rel (0) target = $region13
  $region12: #{encoder_forward.2} parent=0 // pred_region
    _
  $region13: #{encoder_forward.2} parent=0 // pred_fallthru
    _
  // Predicated region
  $region14: #{encoder_forward.2} parent=0 // pred_check
    _
  $region15: #{encoder_forward.2} parent=0 // pred_check_branch
    %19 = sbr.rel (0) target = $region17
  $region16: #{encoder_forward.2} parent=0 // pred_region
    _
  $region17: #{encoder_forward.2} parent=0 // pred_fallthru
    _
  %p21 = scmp.eq.s32.totalorder 0, 0
  // Predicated region
  $region18: #{encoder_forward.2} parent=0 // pred_check
    %p22 = pneg %p21
  $region19: #{encoder_forward.2} parent=0 // pred_check_branch
    %24 = sbr.rel (%p22) target = $region21
  $region20: #{encoder_forward.2} parent=0 // pred_region
    %vm25 = vcmask 261120
    %26 = vst.msk [vmem:[#allocation2] sm:$0xff] %vm25, 0.0
    %27 = vst.msk [vmem:[#allocation2 + $0x8] sm:$0xff] %vm25, 0.0
    %28 = vst.msk [vmem:[#allocation3] sm:$0xff] %vm25, 0.0
    %29 = vst.msk [vmem:[#allocation3 + $0x8] sm:$0xff] %vm25, 0.0
  $region21: #{encoder_forward.2} parent=0 // pred_fallthru
    _
  %v30 = vld [vmem:[%s0] sm:$0xf]
  %v31 = vld [vmem:[%s0 + $0x4] sm:$0xf]
  %v32 = vld [vmem:[%s0 + $0x8] sm:$0xf]
  %v33 = vld [vmem:[%s0 + $0xc] sm:$0xf]
  %v34 = vld [vmem:[%s0 + $0x10] sm:$0xf]
  %v35 = vld [vmem:[%s0 + $0x14] sm:$0xf]
  %v36 = vld [vmem:[%s0 + $0x18] sm:$0xf]
  %v37 = vld [vmem:[%s0 + $0x1c] sm:$0xf]
  %v38 = vld [vmem:[%s0 + $0x20] sm:$0xf]
  %v39 = vld [vmem:[%s0 + $0x24] sm:$0xf]
  %v40 = vld [vmem:[%s0 + $0x28] sm:$0xf]
  %v41 = vld [vmem:[%s0 + $0x2c] sm:$0xf]
  %v42 = vld [vmem:[%s0 + $0x30] sm:$0xf]
  %v43 = vld [vmem:[%s0 + $0x34] sm:$0xf]
  %v44 = vld [vmem:[%s0 + $0x38] sm:$0xf]
  %v45 = vld [vmem:[%s0 + $0x3c] sm:$0xf]
  %v46 = vld [vmem:[%s1] sm:$0xf]
  %v47 = vld [vmem:[%s1 + $0x4] sm:$0xf]
  %v48 = vld [vmem:[%s3] sm:$0x1]
  %v50 = vlaneseq
  %v51 = vshrl.u32 %v50, 7
  %v52 = vsub.s32 0, %v51
  %v53 = vrot.slane %v48, %v52
  %v71 = vunpack.c.l.b16 %v30
  %v72 = vunpack.c.l.b16 %v31
  %v73 = vunpack.c.l.b16 %v32
  %v74 = vunpack.c.l.b16 %v33
  %v75 = vunpack.c.l.b16 %v34
  %v76 = vunpack.c.l.b16 %v35
  %v77 = vunpack.c.l.b16 %v36
  %v78 = vunpack.c.l.b16 %v37
  %v79 = vunpack.c.l.b16 %v38
  %v80 = vunpack.c.l.b16 %v39
  %v81 = vunpack.c.l.b16 %v40
  %v82 = vunpack.c.l.b16 %v41
  %v83 = vunpack.c.l.b16 %v42
  %v84 = vunpack.c.l.b16 %v43
  %v85 = vunpack.c.l.b16 %v44
  %v86 = vunpack.c.l.b16 %v45
  %v87 = vpack.c.b16 %v72, %v71
  %v88 = vpack.c.b16 %v74, %v73
  %v89 = vpack.c.b16 %v76, %v75
  %v90 = vpack.c.b16 %v78, %v77
  %v91 = vpack.c.b16 %v80, %v79
  %v92 = vpack.c.b16 %v82, %v81
  %v93 = vpack.c.b16 %v84, %v83
  %v94 = vpack.c.b16 %v86, %v85
  %v97 = vunpack.c.l.b16 %v46
  %v98 = vunpack.c.l.b16 %v47
  %v99 = vpack.c.b16 %v98, %v97
  %vm101 = vcmask 130048
  %v103 = vsel %vm101, %v87, 0
  %v106 = vsel %vm101, %v88, 0
  %v109 = vsel %vm101, %v89, 0
  %v112 = vsel %vm101, %v90, 0
  %v115 = vsel %vm101, %v91, 0
  %v118 = vsel %vm101, %v92, 0
  %v121 = vsel %vm101, %v93, 0
  %v124 = vsel %vm101, %v94, 0
  %126 = vmatprep.subr.bf16.mxu0 0
  %127 = vmatpush1.bf16.msra.mxu0 %v99
  %128 = vmatprep.subr.bf16.mxu0 0
  %129 = vmatpush1.bf16.msra.mxu0 0
  %130 = vmatprep.subr.bf16.mxu0 0
  %131 = vmatpush1.bf16.msra.mxu0 0
  %132 = vmatprep.subr.bf16.mxu0 0
  %133 = vmatpush1.bf16.msra.mxu0 0
  %134 = vmatprep.subr.bf16.mxu0 0
  %135 = vmatpush1.bf16.msra.mxu0 0
  %136 = vmatprep.subr.bf16.mxu0 0
  %137 = vmatpush1.bf16.msra.mxu0 0
  %138 = vmatprep.subr.bf16.mxu0 0
  %139 = vmatpush1.bf16.msra.mxu0 0
  %140 = vmatprep.subr.bf16.mxu0 0
  %141 = vmatpush1.bf16.msra.mxu0 0
  %142 = vmatprep.subr.bf16.mxu0 0
  %143 = vmatpush1.bf16.msra.mxu0 0
  %144 = vmatprep.subr.bf16.mxu0 0
  %145 = vmatpush1.bf16.msra.mxu0 0
  %146 = vmatprep.subr.bf16.mxu0 0
  %147 = vmatpush1.bf16.msra.mxu0 0
  %148 = vmatprep.subr.bf16.mxu0 0
  %149 = vmatpush1.bf16.msra.mxu0 0
  %150 = vmatprep.subr.bf16.mxu0 0
  %151 = vmatpush1.bf16.msra.mxu0 0
  %152 = vmatprep.subr.bf16.mxu0 0
  %153 = vmatpush1.bf16.msra.mxu0 0
  %154 = vmatprep.subr.bf16.mxu0 0
  %155 = vmatpush1.bf16.msra.mxu0 0
  %156 = vmatprep.subr.bf16.mxu0 0
  %157 = vmatpush1.bf16.msra.mxu0 0
  %158 = vmatprep.mubr.bf16.mxu0 0
  %159 = vmatmul.mubr.bf16.gmra.mrb[0].mxu0 %v103
  %v160 = vpop.f32.mrb[0].mxu0
  %v161 = vadd.f32 %v53, %v160
  %v162 = vpop.f32.mrb[0].mxu0
  %v163 = vpop.f32.mrb[0].mxu0
  %v164 = vadd.f32 %v53, %v163
  %v165 = vpop.f32.mrb[0].mxu0
  %166 = vmatprep.mubr.bf16.mxu0 0
  %167 = vmatmul.mubr.bf16.gmra.mrb[0].mxu0 %v106
  %v168 = vpop.f32.mrb[0].mxu0
  %v169 = vadd.f32 %v53, %v168
  %v170 = vpop.f32.mrb[0].mxu0
  %v171 = vpop.f32.mrb[0].mxu0
  %v172 = vadd.f32 %v53, %v171
  %v173 = vpop.f32.mrb[0].mxu0
  %174 = vmatprep.mubr.bf16.mxu0 0
  %175 = vmatmul.mubr.bf16.gmra.mrb[0].mxu0 %v109
  %v176 = vpop.f32.mrb[0].mxu0
  %v177 = vadd.f32 %v53, %v176
  %v178 = vpop.f32.mrb[0].mxu0
  %v179 = vpop.f32.mrb[0].mxu0
  %v180 = vadd.f32 %v53, %v179
  %v181 = vpop.f32.mrb[0].mxu0
  %182 = vmatprep.mubr.bf16.mxu0 0
  %183 = vmatmul.mubr.bf16.gmra.mrb[0].mxu0 %v112
  %v184 = vpop.f32.mrb[0].mxu0
  %v185 = vadd.f32 %v53, %v184
  %v186 = vpop.f32.mrb[0].mxu0
  %v187 = vpop.f32.mrb[0].mxu0
  %v188 = vadd.f32 %v53, %v187
  %v189 = vpop.f32.mrb[0].mxu0
  %190 = vmatprep.mubr.bf16.mxu0 0
  %191 = vmatmul.mubr.bf16.gmra.mrb[0].mxu0 %v115
  %v192 = vpop.f32.mrb[0].mxu0
  %v193 = vadd.f32 %v53, %v192
  %v194 = vpop.f32.mrb[0].mxu0
  %v195 = vpop.f32.mrb[0].mxu0
  %v196 = vadd.f32 %v53, %v195
  %v197 = vpop.f32.mrb[0].mxu0
  %198 = vmatprep.mubr.bf16.mxu0 0
  %199 = vmatmul.mubr.bf16.gmra.mrb[0].mxu0 %v118
  %v200 = vpop.f32.mrb[0].mxu0
  %v201 = vadd.f32 %v53, %v200
  %v202 = vpop.f32.mrb[0].mxu0
  %v203 = vpop.f32.mrb[0].mxu0
  %v204 = vadd.f32 %v53, %v203
  %v205 = vpop.f32.mrb[0].mxu0
  %206 = vmatprep.mubr.bf16.mxu0 0
  %207 = vmatmul.mubr.bf16.gmra.mrb[0].mxu0 %v121
  %v208 = vpop.f32.mrb[0].mxu0
  %v209 = vadd.f32 %v53, %v208
  %v210 = vpop.f32.mrb[0].mxu0
  %v211 = vpop.f32.mrb[0].mxu0
  %v212 = vadd.f32 %v53, %v211
  %v213 = vpop.f32.mrb[0].mxu0
  %214 = vmatprep.mubr.bf16.mxu0 0
  %215 = vmatmul.mubr.bf16.gmra.mrb[0].mxu0 %v124
  %v216 = vpop.f32.mrb[0].mxu0
  %v217 = vadd.f32 %v53, %v216
  %v218 = vpop.f32.mrb[0].mxu0
  %v219 = vpop.f32.mrb[0].mxu0
  %v220 = vadd.f32 %v53, %v219
  %v221 = vpop.f32.mrb[0].mxu0
  %222 = vdwg.mxu0
  %223 = vst [vmem:[#allocation4] sm:$0xff] %v161
  %224 = vst [vmem:[#allocation4 + $0x8] sm:$0xff] %v164
  %225 = vst [vmem:[#allocation4 + $0x10] sm:$0xff] %v169
  %226 = vst [vmem:[#allocation4 + $0x18] sm:$0xff] %v172
  %227 = vst [vmem:[#allocation4 + $0x20] sm:$0xff] %v177
  %228 = vst [vmem:[#allocation4 + $0x28] sm:$0xff] %v180
  %229 = vst [vmem:[#allocation4 + $0x30] sm:$0xff] %v185
  %230 = vst [vmem:[#allocation4 + $0x38] sm:$0xff] %v188
  %231 = vst [vmem:[#allocation4 + $0x40] sm:$0xff] %v193
  %232 = vst [vmem:[#allocation4 + $0x48] sm:$0xff] %v196
  %233 = vst [vmem:[#allocation4 + $0x50] sm:$0xff] %v201
  %234 = vst [vmem:[#allocation4 + $0x58] sm:$0xff] %v204
  %235 = vst [vmem:[#allocation4 + $0x60] sm:$0xff] %v209
  %236 = vst [vmem:[#allocation4 + $0x68] sm:$0xff] %v212
  %237 = vst [vmem:[#allocation4 + $0x70] sm:$0xff] %v217
  %238 = vst [vmem:[#allocation4 + $0x78] sm:$0xff] %v220
  %v239 = vld [vmem:[#allocation2] sm:$0xff]
  %v240 = vld [vmem:[#allocation2 + $0x8] sm:$0xff]
  %v241 = vld [vmem:[#allocation3] sm:$0xff]
  %v242 = vld [vmem:[#allocation3 + $0x8] sm:$0xff]
  %v243 = vld [vmem:[#allocation4] sm:$0xff]
  %v244 = vld [vmem:[#allocation4 + $0x8] sm:$0xff]
  %v245 = vpack.c.bf16 %v240, %v239
  %v246 = vld [vmem:[%s2] sm:$0xf]
  %v247 = vld [vmem:[%s2 + $0x4] sm:$0xf]
  %v248 = vld [vmem:[%s2 + $0x8] sm:$0xf]
  %v249 = vld [vmem:[%s2 + $0xc] sm:$0xf]
  %v254 = vunpack.c.l.b16 %v246
  %v255 = vunpack.c.l.b16 %v247
  %v256 = vunpack.c.l.b16 %v248
  %v257 = vunpack.c.l.b16 %v249
  %v258 = vpack.c.b16 %v255, %v254
  %v259 = vpack.c.b16 %v257, %v256
  %vm262 = vcmask 261120
  %v264 = vsel %vm262, %v245, 0
  %266 = vmatprep.subr.bf16.mxu0 0
  %267 = vmatpush1.bf16.msra.mxu0 %v258
  %268 = vmatprep.subr.bf16.mxu0 0
  %269 = vmatpush1.bf16.msra.mxu0 %v259
  %270 = vmatprep.subr.bf16.mxu0 0
  %271 = vmatpush1.bf16.msra.mxu0 0
  %272 = vmatprep.subr.bf16.mxu0 0
  %273 = vmatpush1.bf16.msra.mxu0 0
  %274 = vmatprep.subr.bf16.mxu0 0
  %275 = vmatpush1.bf16.msra.mxu0 0
  %276 = vmatprep.subr.bf16.mxu0 0
  %277 = vmatpush1.bf16.msra.mxu0 0
  %278 = vmatprep.subr.bf16.mxu0 0
  %279 = vmatpush1.bf16.msra.mxu0 0
  %280 = vmatprep.subr.bf16.mxu0 0
  %281 = vmatpush1.bf16.msra.mxu0 0
  %282 = vmatprep.subr.bf16.mxu0 0
  %283 = vmatpush1.bf16.msra.mxu0 0
  %284 = vmatprep.subr.bf16.mxu0 0
  %285 = vmatpush1.bf16.msra.mxu0 0
  %286 = vmatprep.subr.bf16.mxu0 0
  %287 = vmatpush1.bf16.msra.mxu0 0
  %288 = vmatprep.subr.bf16.mxu0 0
  %289 = vmatpush1.bf16.msra.mxu0 0
  %290 = vmatprep.subr.bf16.mxu0 0
  %291 = vmatpush1.bf16.msra.mxu0 0
  %292 = vmatprep.subr.bf16.mxu0 0
  %293 = vmatpush1.bf16.msra.mxu0 0
  %294 = vmatprep.subr.bf16.mxu0 0
  %295 = vmatpush1.bf16.msra.mxu0 0
  %296 = vmatprep.subr.bf16.mxu0 0
  %297 = vmatpush1.bf16.msra.mxu0 0
  %298 = vmatprep.mubr.bf16.mxu0 0
  %299 = vmatmul.mubr.bf16.gmra.mrb[0].mxu0 %v264
  %v300 = vpop.f32.mrb[0].mxu0
  %v301 = vadd.f32 0.0, %v300
  %v302 = vpop.f32.mrb[0].mxu0
  %v303 = vpop.f32.mrb[0].mxu0
  %v304 = vadd.f32 0.0, %v303
  %v305 = vpop.f32.mrb[0].mxu0
  %306 = vdwg.mxu0
  %v307 = vadd.f32 %v243, %v301
  %v308 = vadd.f32 %v244, %v304
  %v309 = vxor.u32 %v307, 2147483648
  %v310 = vxor.u32 %v308, 2147483648
  %v311 = vmul.f32 %v309, 1.442695
  %v312 = vpow.pop %v311
  %v313 = vmul.f32 %v310, 1.442695
  %v314 = vpow.pop %v313
  %v315 = vadd.f32 %v312, 1.0
  %v316 = vadd.f32 %v314, 1.0
  %v317 = vrcp.pop %v315
  %v318 = vmul.f32 1.0, %v317
  %v319 = vrcp.pop %v316
  %v320 = vmul.f32 1.0, %v319
  %v321 = vtanh.pop %v307
  %v322 = vtanh.pop %v308
  %325 = vrot.lane.b32.xlu0 %v241, 32
  %v326 = vpop.permute.xlu0 %325
  %327 = vrot.lane.b32.xlu0 %v242, 32
  %v328 = vpop.permute.xlu0 %327
  %v331 = vmul.f32 %v318, %v326
  %v332 = vmul.f32 %v320, %v328
  %335 = vrot.lane.b32.xlu0 %v321, 64
  %v336 = vpop.permute.xlu0 %335
  %337 = vrot.lane.b32.xlu0 %v322, 64
  %v338 = vpop.permute.xlu0 %337
  %v341 = vmul.f32 %v318, %v336
  %v342 = vmul.f32 %v320, %v338
  %345 = vrot.lane.b32.xlu0 %v341, 32
  %v346 = vpop.permute.xlu0 %345
  %347 = vrot.lane.b32.xlu0 %v342, 32
  %v348 = vpop.permute.xlu0 %347
  %v351 = vadd.f32 %v331, %v346
  %v352 = vadd.f32 %v332, %v348
  %v353 = vtanh.pop %v351
  %v354 = vtanh.pop %v352
  %357 = vrot.lane.b32.xlu0 %v353, 64
  %v358 = vpop.permute.xlu0 %357
  %359 = vrot.lane.b32.xlu0 %v354, 64
  %v360 = vpop.permute.xlu0 %359
  %v363 = vmul.f32 %v318, %v358
  %v364 = vmul.f32 %v320, %v360
  %367 = vrot.lane.b32.xlu0 %v363, 32
  %v368 = vpop.permute.xlu0 %367
  %369 = vrot.lane.b32.xlu0 %v364, 32
  %v370 = vpop.permute.xlu0 %369
  %373 = vst.msk [vmem:[#allocation2] sm:$0xff] %vm262, %v368
  %374 = vst.msk [vmem:[#allocation2 + $0x8] sm:$0xff] %vm262, %v370
  %377 = vrot.lane.b32.xlu0 %v351, 96
  %v378 = vpop.permute.xlu0 %377
  %379 = vrot.lane.b32.xlu0 %v352, 96
  %v380 = vpop.permute.xlu0 %379
  %383 = vst.msk [vmem:[#allocation3] sm:$0xff] %vm262, %v378
  %384 = vst.msk [vmem:[#allocation3 + $0x8] sm:$0xff] %vm262, %v380
  %v385 = vpack.c.bf16 %v364, %v363
  %v387 = vunpack.c.l.b16 %v385
  %v388 = vunpack.c.h.b16 %v385
  %v389 = vpack.c.b16 %v387, %v387
  %v390 = vpack.c.b16 %v388, %v388
  %391 = vrot.lane.b32.xlu0 %v389, 32
  %v392 = vpop.permute.xlu0 %391
  %393 = vrot.lane.b32.xlu0 %v390, 32
  %v394 = vpop.permute.xlu0 %393
  %vm397 = vcmask 257024
  %398 = vst.msk [vmem:[%s4] sm:$0xf] %vm397, %v392
  %399 = vst.msk [vmem:[%s4 + $0x4] sm:$0xf] %vm397, %v394
  %v400 = vld [vmem:[#allocation2] sm:$0xff]
  %v401 = vld [vmem:[#allocation2 + $0x8] sm:$0xff]
  %v402 = vld [vmem:[#allocation3] sm:$0xff]
  %v403 = vld [vmem:[#allocation3 + $0x8] sm:$0xff]
  %s404 = scalar_lea.vmem [#allocation4], 16
  %v405 = vld [vmem:[%s404] sm:$0xff]
  %v406 = vld [vmem:[%s404 + $0x8] sm:$0xff]
  %v407 = vpack.c.bf16 %v401, %v400
  %v408 = vld [vmem:[%s2] sm:$0xf]
  %v409 = vld [vmem:[%s2 + $0x4] sm:$0xf]
  %v410 = vld [vmem:[%s2 + $0x8] sm:$0xf]
  %v411 = vld [vmem:[%s2 + $0xc] sm:$0xf]
  %v416 = vunpack.c.l.b16 %v408
  %v417 = vunpack.c.l.b16 %v409
  %v418 = vunpack.c.l.b16 %v410
  %v419 = vunpack.c.l.b16 %v411
  %v420 = vpack.c.b16 %v417, %v416
  %v421 = vpack.c.b16 %v419, %v418
  %v425 = vsel %vm262, %v407, 0
  %427 = vmatprep.subr.bf16.mxu0 0
  %428 = vmatpush1.bf16.msra.mxu0 %v420
  %429 = vmatprep.subr.bf16.mxu0 0
  %430 = vmatpush1.bf16.msra.mxu0 %v421
  %431 = vmatprep.subr.bf16.mxu0 0
  %432 = vmatpush1.bf16.msra.mxu0 0
  %433 = vmatprep.subr.bf16.mxu0 0
  %434 = vmatpush1.bf16.msra.mxu0 0
  %435 = vmatprep.subr.bf16.mxu0 0
  %436 = vmatpush1.bf16.msra.mxu0 0
  %437 = vmatprep.subr.bf16.mxu0 0
  %438 = vmatpush1.bf16.msra.mxu0 0
  %439 = vmatprep.subr.bf16.mxu0 0
  %440 = vmatpush1.bf16.msra.mxu0 0
  %441 = vmatprep.subr.bf16.mxu0 0
  %442 = vmatpush1.bf16.msra.mxu0 0
  %443 = vmatprep.subr.bf16.mxu0 0
  %444 = vmatpush1.bf16.msra.mxu0 0
  %445 = vmatprep.subr.bf16.mxu0 0
  %446 = vmatpush1.bf16.msra.mxu0 0
  %447 = vmatprep.subr.bf16.mxu0 0
  %448 = vmatpush1.bf16.msra.mxu0 0
  %449 = vmatprep.subr.bf16.mxu0 0
  %450 = vmatpush1.bf16.msra.mxu0 0
  %451 = vmatprep.subr.bf16.mxu0 0
  %452 = vmatpush1.bf16.msra.mxu0 0
  %453 = vmatprep.subr.bf16.mxu0 0
  %454 = vmatpush1.bf16.msra.mxu0 0
  %455 = vmatprep.subr.bf16.mxu0 0
  %456 = vmatpush1.bf16.msra.mxu0 0
  %457 = vmatprep.subr.bf16.mxu0 0
  %458 = vmatpush1.bf16.msra.mxu0 0
  %459 = vmatprep.mubr.bf16.mxu0 0
  %460 = vmatmul.mubr.bf16.gmra.mrb[0].mxu0 %v425
  %v461 = vpop.f32.mrb[0].mxu0
  %v462 = vadd.f32 0.0, %v461
  %v463 = vpop.f32.mrb[0].mxu0
  %v464 = vpop.f32.mrb[0].mxu0
  %v465 = vadd.f32 0.0, %v464
  %v466 = vpop.f32.mrb[0].mxu0
  %467 = vdwg.mxu0
  %v468 = vadd.f32 %v405, %v462
  %v469 = vadd.f32 %v406, %v465
  %v470 = vxor.u32 %v468, 2147483648
  %v471 = vxor.u32 %v469, 2147483648
  %v472 = vmul.f32 %v470, 1.442695
  %v473 = vpow.pop %v472
  %v474 = vmul.f32 %v471, 1.442695
  %v475 = vpow.pop %v474
  %v476 = vadd.f32 %v473, 1.0
  %v477 = vadd.f32 %v475, 1.0
  %v478 = vrcp.pop %v476
  %v479 = vmul.f32 1.0, %v478
  %v480 = vrcp.pop %v477
  %v481 = vmul.f32 1.0, %v480
  %v482 = vtanh.pop %v468
  %v483 = vtanh.pop %v469
  %486 = vrot.lane.b32.xlu0 %v402, 32
  %v487 = vpop.permute.xlu0 %486
  %488 = vrot.lane.b32.xlu0 %v403, 32
  %v489 = vpop.permute.xlu0 %488
  %v492 = vmul.f32 %v479, %v487
  %v493 = vmul.f32 %v481, %v489
  %496 = vrot.lane.b32.xlu0 %v482, 64
  %v497 = vpop.permute.xlu0 %496
  %498 = vrot.lane.b32.xlu0 %v483, 64
  %v499 = vpop.permute.xlu0 %498
  %v502 = vmul.f32 %v479, %v497
  %v503 = vmul.f32 %v481, %v499
  %506 = vrot.lane.b32.xlu0 %v502, 32
  %v507 = vpop.permute.xlu0 %506
  %508 = vrot.lane.b32.xlu0 %v503, 32
  %v509 = vpop.permute.xlu0 %508
  %v512 = vadd.f32 %v492, %v507
  %v513 = vadd.f32 %v493, %v509
  %v514 = vtanh.pop %v512
  %v515 = vtanh.pop %v513
  %518 = vrot.lane.b32.xlu0 %v514, 64
  %v519 = vpop.permute.xlu0 %518
  %520 = vrot.lane.b32.xlu0 %v515, 64
  %v521 = vpop.permute.xlu0 %520
  %v524 = vmul.f32 %v479, %v519
  %v525 = vmul.f32 %v481, %v521
  %528 = vrot.lane.b32.xlu0 %v524, 32
  %v529 = vpop.permute.xlu0 %528
  %530 = vrot.lane.b32.xlu0 %v525, 32
  %v531 = vpop.permute.xlu0 %530
  %534 = vst.msk [vmem:[#allocation2] sm:$0xff] %vm262, %v529
  %535 = vst.msk [vmem:[#allocation2 + $0x8] sm:$0xff] %vm262, %v531
  %538 = vrot.lane.b32.xlu0 %v512, 96
  %v539 = vpop.permute.xlu0 %538
  %540 = vrot.lane.b32.xlu0 %v513, 96
  %v541 = vpop.permute.xlu0 %540
  %544 = vst.msk [vmem:[#allocation3] sm:$0xff] %vm262, %v539
  %545 = vst.msk [vmem:[#allocation3 + $0x8] sm:$0xff] %vm262, %v541
  %v546 = vpack.c.bf16 %v525, %v524
  %v548 = vunpack.c.l.b16 %v546
  %v549 = vunpack.c.h.b16 %v546
  %v550 = vpack.c.b16 %v548, %v548
  %v551 = vpack.c.b16 %v549, %v549
  %552 = vrot.lane.b32.xlu0 %v550, 32
  %v553 = vpop.permute.xlu0 %552
  %554 = vrot.lane.b32.xlu0 %v551, 32
  %v555 = vpop.permute.xlu0 %554
  %s558 = scalar_lea.vmem %s4, 8
  %559 = vst.msk [vmem:[%s558] sm:$0xf] %vm397, %v553
  %560 = vst.msk [vmem:[%s558 + $0x4] sm:$0xf] %vm397, %v555
  %v561 = vld [vmem:[#allocation2] sm:$0xff]
  %v562 = vld [vmem:[#allocation2 + $0x8] sm:$0xff]
  %v563 = vld [vmem:[#allocation3] sm:$0xff]
  %v564 = vld [vmem:[#allocation3 + $0x8] sm:$0xff]
  %s565 = scalar_lea.vmem [#allocation4], 32
  %v566 = vld [vmem:[%s565] sm:$0xff]
  %v567 = vld [vmem:[%s565 + $0x8] sm:$0xff]
  %v568 = vpack.c.bf16 %v562, %v561
  %v569 = vld [vmem:[%s2] sm:$0xf]
  %v570 = vld [vmem:[%s2 + $0x4] sm:$0xf]
  %v571 = vld [vmem:[%s2 + $0x8] sm:$0xf]
  %v572 = vld [vmem:[%s2 + $0xc] sm:$0xf]
  %v577 = vunpack.c.l.b16 %v569
  %v578 = vunpack.c.l.b16 %v570
  %v579 = vunpack.c.l.b16 %v571
  %v580 = vunpack.c.l.b16 %v572
  %v581 = vpack.c.b16 %v578, %v577
  %v582 = vpack.c.b16 %v580, %v579
  %v586 = vsel %vm262, %v568, 0
  %588 = vmatprep.subr.bf16.mxu0 0
  %589 = vmatpush1.bf16.msra.mxu0 %v581
  %590 = vmatprep.subr.bf16.mxu0 0
  %591 = vmatpush1.bf16.msra.mxu0 %v582
  %592 = vmatprep.subr.bf16.mxu0 0
  %593 = vmatpush1.bf16.msra.mxu0 0
  %594 = vmatprep.subr.bf16.mxu0 0
  %595 = vmatpush1.bf16.msra.mxu0 0
  %596 = vmatprep.subr.bf16.mxu0 0
  %597 = vmatpush1.bf16.msra.mxu0 0
  %598 = vmatprep.subr.bf16.mxu0 0
  %599 = vmatpush1.bf16.msra.mxu0 0
  %600 = vmatprep.subr.bf16.mxu0 0
  %601 = vmatpush1.bf16.msra.mxu0 0
  %602 = vmatprep.subr.bf16.mxu0 0
  %603 = vmatpush1.bf16.msra.mxu0 0
  %604 = vmatprep.subr.bf16.mxu0 0
  %605 = vmatpush1.bf16.msra.mxu0 0
  %606 = vmatprep.subr.bf16.mxu0 0
  %607 = vmatpush1.bf16.msra.mxu0 0
  %608 = vmatprep.subr.bf16.mxu0 0
  %609 = vmatpush1.bf16.msra.mxu0 0
  %610 = vmatprep.subr.bf16.mxu0 0
  %611 = vmatpush1.bf16.msra.mxu0 0
  %612 = vmatprep.subr.bf16.mxu0 0
  %613 = vmatpush1.bf16.msra.mxu0 0
  %614 = vmatprep.subr.bf16.mxu0 0
  %615 = vmatpush1.bf16.msra.mxu0 0
  %616 = vmatprep.subr.bf16.mxu0 0
  %617 = vmatpush1.bf16.msra.mxu0 0
  %618 = vmatprep.subr.bf16.mxu0 0
  %619 = vmatpush1.bf16.msra.mxu0 0
  %620 = vmatprep.mubr.bf16.mxu0 0
  %621 = vmatmul.mubr.bf16.gmra.mrb[0].mxu0 %v586
  %v622 = vpop.f32.mrb[0].mxu0
  %v623 = vadd.f32 0.0, %v622
  %v624 = vpop.f32.mrb[0].mxu0
  %v625 = vpop.f32.mrb[0].mxu0
  %v626 = vadd.f32 0.0, %v625
  %v627 = vpop.f32.mrb[0].mxu0
  %628 = vdwg.mxu0
  %v629 = vadd.f32 %v566, %v623
  %v630 = vadd.f32 %v567, %v626
  %v631 = vxor.u32 %v629, 2147483648
  %v632 = vxor.u32 %v630, 2147483648
  %v633 = vmul.f32 %v631, 1.442695
  %v634 = vpow.pop %v633
  %v635 = vmul.f32 %v632, 1.442695
  %v636 = vpow.pop %v635
  %v637 = vadd.f32 %v634, 1.0
  %v638 = vadd.f32 %v636, 1.0
  %v639 = vrcp.pop %v637
  %v640 = vmul.f32 1.0, %v639
  %v641 = vrcp.pop %v638
  %v642 = vmul.f32 1.0, %v641
  %v643 = vtanh.pop %v629
  %v644 = vtanh.pop %v630
  %647 = vrot.lane.b32.xlu0 %v563, 32
  %v648 = vpop.permute.xlu0 %647
  %649 = vrot.lane.b32.xlu0 %v564, 32
  %v650 = vpop.permute.xlu0 %649
  %v653 = vmul.f32 %v640, %v648
  %v654 = vmul.f32 %v642, %v650
  %657 = vrot.lane.b32.xlu0 %v643, 64
  %v658 = vpop.permute.xlu0 %657
  %659 = vrot.lane.b32.xlu0 %v644, 64
  %v660 = vpop.permute.xlu0 %659
  %v663 = vmul.f32 %v640, %v658
  %v664 = vmul.f32 %v642, %v660
  %667 = vrot.lane.b32.xlu0 %v663, 32
  %v668 = vpop.permute.xlu0 %667
  %669 = vrot.lane.b32.xlu0 %v664, 32
  %v670 = vpop.permute.xlu0 %669
  %v673 = vadd.f32 %v653, %v668
  %v674 = vadd.f32 %v654, %v670
  %v675 = vtanh.pop %v673
  %v676 = vtanh.pop %v674
  %679 = vrot.lane.b32.xlu0 %v675, 64
  %v680 = vpop.permute.xlu0 %679
  %681 = vrot.lane.b32.xlu0 %v676, 64
  %v682 = vpop.permute.xlu0 %681
  %v685 = vmul.f32 %v640, %v680
  %v686 = vmul.f32 %v642, %v682
  %689 = vrot.lane.b32.xlu0 %v685, 32
  %v690 = vpop.permute.xlu0 %689
  %691 = vrot.lane.b32.xlu0 %v686, 32
  %v692 = vpop.permute.xlu0 %691
  %695 = vst.msk [vmem:[#allocation2] sm:$0xff] %vm262, %v690
  %696 = vst.msk [vmem:[#allocation2 + $0x8] sm:$0xff] %vm262, %v692
  %699 = vrot.lane.b32.xlu0 %v673, 96
  %v700 = vpop.permute.xlu0 %699
  %701 = vrot.lane.b32.xlu0 %v674, 96
  %v702 = vpop.permute.xlu0 %701
  %705 = vst.msk [vmem:[#allocation3] sm:$0xff] %vm262, %v700
  %706 = vst.msk [vmem:[#allocation3 + $0x8] sm:$0xff] %vm262, %v702
  %v707 = vpack.c.bf16 %v686, %v685
  %v709 = vunpack.c.l.b16 %v707
  %v710 = vunpack.c.h.b16 %v707
  %v711 = vpack.c.b16 %v709, %v709
  %v712 = vpack.c.b16 %v710, %v710
  %713 = vrot.lane.b32.xlu0 %v711, 32
  %v714 = vpop.permute.xlu0 %713
  %715 = vrot.lane.b32.xlu0 %v712, 32
  %v716 = vpop.permute.xlu0 %715
  %s719 = scalar_lea.vmem %s4, 16
  %720 = vst.msk [vmem:[%s719] sm:$0xf] %vm397, %v714
  %721 = vst.msk [vmem:[%s719 + $0x4] sm:$0xf] %vm397, %v716
  %v722 = vld [vmem:[#allocation2] sm:$0xff]
  %v723 = vld [vmem:[#allocation2 + $0x8] sm:$0xff]
  %v724 = vld [vmem:[#allocation3] sm:$0xff]
  %v725 = vld [vmem:[#allocation3 + $0x8] sm:$0xff]
  %s726 = scalar_lea.vmem [#allocation4], 48
  %v727 = vld [vmem:[%s726] sm:$0xff]
  %v728 = vld [vmem:[%s726 + $0x8] sm:$0xff]
  %v729 = vpack.c.bf16 %v723, %v722
  %v730 = vld [vmem:[%s2] sm:$0xf]
  %v731 = vld [vmem:[%s2 + $0x4] sm:$0xf]
  %v732 = vld [vmem:[%s2 + $0x8] sm:$0xf]
  %v733 = vld [vmem:[%s2 + $0xc] sm:$0xf]
  %v738 = vunpack.c.l.b16 %v730
  %v739 = vunpack.c.l.b16 %v731
  %v740 = vunpack.c.l.b16 %v732
  %v741 = vunpack.c.l.b16 %v733
  %v742 = vpack.c.b16 %v739, %v738
  %v743 = vpack.c.b16 %v741, %v740
  %v747 = vsel %vm262, %v729, 0
  %749 = vmatprep.subr.bf16.mxu0 0
  %750 = vmatpush1.bf16.msra.mxu0 %v742
  %751 = vmatprep.subr.bf16.mxu0 0
  %752 = vmatpush1.bf16.msra.mxu0 %v743
  %753 = vmatprep.subr.bf16.mxu0 0
  %754 = vmatpush1.bf16.msra.mxu0 0
  %755 = vmatprep.subr.bf16.mxu0 0
  %756 = vmatpush1.bf16.msra.mxu0 0
  %757 = vmatprep.subr.bf16.mxu0 0
  %758 = vmatpush1.bf16.msra.mxu0 0
  %759 = vmatprep.subr.bf16.mxu0 0
  %760 = vmatpush1.bf16.msra.mxu0 0
  %761 = vmatprep.subr.bf16.mxu0 0
  %762 = vmatpush1.bf16.msra.mxu0 0
  %763 = vmatprep.subr.bf16.mxu0 0
  %764 = vmatpush1.bf16.msra.mxu0 0
  %765 = vmatprep.subr.bf16.mxu0 0
  %766 = vmatpush1.bf16.msra.mxu0 0
  %767 = vmatprep.subr.bf16.mxu0 0
  %768 = vmatpush1.bf16.msra.mxu0 0
  %769 = vmatprep.subr.bf16.mxu0 0
  %770 = vmatpush1.bf16.msra.mxu0 0
  %771 = vmatprep.subr.bf16.mxu0 0
  %772 = vmatpush1.bf16.msra.mxu0 0
  %773 = vmatprep.subr.bf16.mxu0 0
  %774 = vmatpush1.bf16.msra.mxu0 0
  %775 = vmatprep.subr.bf16.mxu0 0
  %776 = vmatpush1.bf16.msra.mxu0 0
  %777 = vmatprep.subr.bf16.mxu0 0
  %778 = vmatpush1.bf16.msra.mxu0 0
  %779 = vmatprep.subr.bf16.mxu0 0
  %780 = vmatpush1.bf16.msra.mxu0 0
  %781 = vmatprep.mubr.bf16.mxu0 0
  %782 = vmatmul.mubr.bf16.gmra.mrb[0].mxu0 %v747
  %v783 = vpop.f32.mrb[0].mxu0
  %v784 = vadd.f32 0.0, %v783
  %v785 = vpop.f32.mrb[0].mxu0
  %v786 = vpop.f32.mrb[0].mxu0
  %v787 = vadd.f32 0.0, %v786
  %v788 = vpop.f32.mrb[0].mxu0
  %789 = vdwg.mxu0
  %v790 = vadd.f32 %v727, %v784
  %v791 = vadd.f32 %v728, %v787
  %v792 = vxor.u32 %v790, 2147483648
  %v793 = vxor.u32 %v791, 2147483648
  %v794 = vmul.f32 %v792, 1.442695
  %v795 = vpow.pop %v794
  %v796 = vmul.f32 %v793, 1.442695
  %v797 = vpow.pop %v796
  %v798 = vadd.f32 %v795, 1.0
  %v799 = vadd.f32 %v797, 1.0
  %v800 = vrcp.pop %v798
  %v801 = vmul.f32 1.0, %v800
  %v802 = vrcp.pop %v799
  %v803 = vmul.f32 1.0, %v802
  %v804 = vtanh.pop %v790
  %v805 = vtanh.pop %v791
  %808 = vrot.lane.b32.xlu0 %v724, 32
  %v809 = vpop.permute.xlu0 %808
  %810 = vrot.lane.b32.xlu0 %v725, 32
  %v811 = vpop.permute.xlu0 %810
  %v814 = vmul.f32 %v801, %v809
  %v815 = vmul.f32 %v803, %v811
  %818 = vrot.lane.b32.xlu0 %v804, 64
  %v819 = vpop.permute.xlu0 %818
  %820 = vrot.lane.b32.xlu0 %v805, 64
  %v821 = vpop.permute.xlu0 %820
  %v824 = vmul.f32 %v801, %v819
  %v825 = vmul.f32 %v803, %v821
  %828 = vrot.lane.b32.xlu0 %v824, 32
  %v829 = vpop.permute.xlu0 %828
  %830 = vrot.lane.b32.xlu0 %v825, 32
  %v831 = vpop.permute.xlu0 %830
  %v834 = vadd.f32 %v814, %v829
  %v835 = vadd.f32 %v815, %v831
  %v836 = vtanh.pop %v834
  %v837 = vtanh.pop %v835
  %840 = vrot.lane.b32.xlu0 %v836, 64
  %v841 = vpop.permute.xlu0 %840
  %842 = vrot.lane.b32.xlu0 %v837, 64
  %v843 = vpop.permute.xlu0 %842
  %v846 = vmul.f32 %v801, %v841
  %v847 = vmul.f32 %v803, %v843
  %850 = vrot.lane.b32.xlu0 %v846, 32
  %v851 = vpop.permute.xlu0 %850
  %852 = vrot.lane.b32.xlu0 %v847, 32
  %v853 = vpop.permute.xlu0 %852
  %856 = vst.msk [vmem:[#allocation2] sm:$0xff] %vm262, %v851
  %857 = vst.msk [vmem:[#allocation2 + $0x8] sm:$0xff] %vm262, %v853
  %860 = vrot.lane.b32.xlu0 %v834, 96
  %v861 = vpop.permute.xlu0 %860
  %862 = vrot.lane.b32.xlu0 %v835, 96
  %v863 = vpop.permute.xlu0 %862
  %866 = vst.msk [vmem:[#allocation3] sm:$0xff] %vm262, %v861
  %867 = vst.msk [vmem:[#allocation3 + $0x8] sm:$0xff] %vm262, %v863
  %v868 = vpack.c.bf16 %v847, %v846
  %v870 = vunpack.c.l.b16 %v868
  %v871 = vunpack.c.h.b16 %v868
  %v872 = vpack.c.b16 %v870, %v870
  %v873 = vpack.c.b16 %v871, %v871
  %874 = vrot.lane.b32.xlu0 %v872, 32
  %v875 = vpop.permute.xlu0 %874
  %876 = vrot.lane.b32.xlu0 %v873, 32
  %v877 = vpop.permute.xlu0 %876
  %s880 = scalar_lea.vmem %s4, 24
  %881 = vst.msk [vmem:[%s880] sm:$0xf] %vm397, %v875
  %882 = vst.msk [vmem:[%s880 + $0x4] sm:$0xf] %vm397, %v877
  %v883 = vld [vmem:[#allocation2] sm:$0xff]
  %v884 = vld [vmem:[#allocation2 + $0x8] sm:$0xff]
  %v885 = vld [vmem:[#allocation3] sm:$0xff]
  %v886 = vld [vmem:[#allocation3 + $0x8] sm:$0xff]
  %s887 = scalar_lea.vmem [#allocation4], 64
  %v888 = vld [vmem:[%s887] sm:$0xff]
  %v889 = vld [vmem:[%s887 + $0x8] sm:$0xff]
  %v890 = vpack.c.bf16 %v884, %v883
  %v891 = vld [vmem:[%s2] sm:$0xf]
  %v892 = vld [vmem:[%s2 + $0x4] sm:$0xf]
  %v893 = vld [vmem:[%s2 + $0x8] sm:$0xf]
  %v894 = vld [vmem:[%s2 + $0xc] sm:$0xf]
  %v899 = vunpack.c.l.b16 %v891
  %v900 = vunpack.c.l.b16 %v892
  %v901 = vunpack.c.l.b16 %v893
  %v902 = vunpack.c.l.b16 %v894
  %v903 = vpack.c.b16 %v900, %v899
  %v904 = vpack.c.b16 %v902, %v901
  %v908 = vsel %vm262, %v890, 0
  %910 = vmatprep.subr.bf16.mxu0 0
  %911 = vmatpush1.bf16.msra.mxu0 %v903
  %912 = vmatprep.subr.bf16.mxu0 0
  %913 = vmatpush1.bf16.msra.mxu0 %v904
  %914 = vmatprep.subr.bf16.mxu0 0
  %915 = vmatpush1.bf16.msra.mxu0 0
  %916 = vmatprep.subr.bf16.mxu0 0
  %917 = vmatpush1.bf16.msra.mxu0 0
  %918 = vmatprep.subr.bf16.mxu0 0
  %919 = vmatpush1.bf16.msra.mxu0 0
  %920 = vmatprep.subr.bf16.mxu0 0
  %921 = vmatpush1.bf16.msra.mxu0 0
  %922 = vmatprep.subr.bf16.mxu0 0
  %923 = vmatpush1.bf16.msra.mxu0 0
  %924 = vmatprep.subr.bf16.mxu0 0
  %925 = vmatpush1.bf16.msra.mxu0 0
  %926 = vmatprep.subr.bf16.mxu0 0
  %927 = vmatpush1.bf16.msra.mxu0 0
  %928 = vmatprep.subr.bf16.mxu0 0
  %929 = vmatpush1.bf16.msra.mxu0 0
  %930 = vmatprep.subr.bf16.mxu0 0
  %931 = vmatpush1.bf16.msra.mxu0 0
  %932 = vmatprep.subr.bf16.mxu0 0
  %933 = vmatpush1.bf16.msra.mxu0 0
  %934 = vmatprep.subr.bf16.mxu0 0
  %935 = vmatpush1.bf16.msra.mxu0 0
  %936 = vmatprep.subr.bf16.mxu0 0
  %937 = vmatpush1.bf16.msra.mxu0 0
  %938 = vmatprep.subr.bf16.mxu0 0
  %939 = vmatpush1.bf16.msra.mxu0 0
  %940 = vmatprep.subr.bf16.mxu0 0
  %941 = vmatpush1.bf16.msra.mxu0 0
  %942 = vmatprep.mubr.bf16.mxu0 0
  %943 = vmatmul.mubr.bf16.gmra.mrb[0].mxu0 %v908
  %v944 = vpop.f32.mrb[0].mxu0
  %v945 = vadd.f32 0.0, %v944
  %v946 = vpop.f32.mrb[0].mxu0
  %v947 = vpop.f32.mrb[0].mxu0
  %v948 = vadd.f32 0.0, %v947
  %v949 = vpop.f32.mrb[0].mxu0
  %950 = vdwg.mxu0
  %v951 = vadd.f32 %v888, %v945
  %v952 = vadd.f32 %v889, %v948
  %v953 = vxor.u32 %v951, 2147483648
  %v954 = vxor.u32 %v952, 2147483648
  %v955 = vmul.f32 %v953, 1.442695
  %v956 = vpow.pop %v955
  %v957 = vmul.f32 %v954, 1.442695
  %v958 = vpow.pop %v957
  %v959 = vadd.f32 %v956, 1.0
  %v960 = vadd.f32 %v958, 1.0
  %v961 = vrcp.pop %v959
  %v962 = vmul.f32 1.0, %v961
  %v963 = vrcp.pop %v960
  %v964 = vmul.f32 1.0, %v963
  %v965 = vtanh.pop %v951
  %v966 = vtanh.pop %v952
  %969 = vrot.lane.b32.xlu0 %v885, 32
  %v970 = vpop.permute.xlu0 %969
  %971 = vrot.lane.b32.xlu0 %v886, 32
  %v972 = vpop.permute.xlu0 %971
  %v975 = vmul.f32 %v962, %v970
  %v976 = vmul.f32 %v964, %v972
  %979 = vrot.lane.b32.xlu0 %v965, 64
  %v980 = vpop.permute.xlu0 %979
  %981 = vrot.lane.b32.xlu0 %v966, 64
  %v982 = vpop.permute.xlu0 %981
  %v985 = vmul.f32 %v962, %v980
  %v986 = vmul.f32 %v964, %v982
  %989 = vrot.lane.b32.xlu0 %v985, 32
  %v990 = vpop.permute.xlu0 %989
  %991 = vrot.lane.b32.xlu0 %v986, 32
  %v992 = vpop.permute.xlu0 %991
  %v995 = vadd.f32 %v975, %v990
  %v996 = vadd.f32 %v976, %v992
  %v997 = vtanh.pop %v995
  %v998 = vtanh.pop %v996
  %1001 = vrot.lane.b32.xlu0 %v997, 64
  %v1002 = vpop.permute.xlu0 %1001
  %1003 = vrot.lane.b32.xlu0 %v998, 64
  %v1004 = vpop.permute.xlu0 %1003
  %v1007 = vmul.f32 %v962, %v1002
  %v1008 = vmul.f32 %v964, %v1004
  %1011 = vrot.lane.b32.xlu0 %v1007, 32
  %v1012 = vpop.permute.xlu0 %1011
  %1013 = vrot.lane.b32.xlu0 %v1008, 32
  %v1014 = vpop.permute.xlu0 %1013
  %1017 = vst.msk [vmem:[#allocation2] sm:$0xff] %vm262, %v1012
  %1018 = vst.msk [vmem:[#allocation2 + $0x8] sm:$0xff] %vm262, %v1014
  %1021 = vrot.lane.b32.xlu0 %v995, 96
  %v1022 = vpop.permute.xlu0 %1021
  %1023 = vrot.lane.b32.xlu0 %v996, 96
  %v1024 = vpop.permute.xlu0 %1023
  %1027 = vst.msk [vmem:[#allocation3] sm:$0xff] %vm262, %v1022
  %1028 = vst.msk [vmem:[#allocation3 + $0x8] sm:$0xff] %vm262, %v1024
  %v1029 = vpack.c.bf16 %v1008, %v1007
  %v1031 = vunpack.c.l.b16 %v1029
  %v1032 = vunpack.c.h.b16 %v1029
  %v1033 = vpack.c.b16 %v1031, %v1031
  %v1034 = vpack.c.b16 %v1032, %v1032
  %1035 = vrot.lane.b32.xlu0 %v1033, 32
  %v1036 = vpop.permute.xlu0 %1035
  %1037 = vrot.lane.b32.xlu0 %v1034, 32
  %v1038 = vpop.permute.xlu0 %1037
  %s1041 = scalar_lea.vmem %s4, 32
  %1042 = vst.msk [vmem:[%s1041] sm:$0xf] %vm397, %v1036
  %1043 = vst.msk [vmem:[%s1041 + $0x4] sm:$0xf] %vm397, %v1038
  %v1044 = vld [vmem:[#allocation2] sm:$0xff]
  %v1045 = vld [vmem:[#allocation2 + $0x8] sm:$0xff]
  %v1046 = vld [vmem:[#allocation3] sm:$0xff]
  %v1047 = vld [vmem:[#allocation3 + $0x8] sm:$0xff]
  %s1048 = scalar_lea.vmem [#allocation4], 80
  %v1049 = vld [vmem:[%s1048] sm:$0xff]
  %v1050 = vld [vmem:[%s1048 + $0x8] sm:$0xff]
  %v1051 = vpack.c.bf16 %v1045, %v1044
  %v1052 = vld [vmem:[%s2] sm:$0xf]
  %v1053 = vld [vmem:[%s2 + $0x4] sm:$0xf]
  %v1054 = vld [vmem:[%s2 + $0x8] sm:$0xf]
  %v1055 = vld [vmem:[%s2 + $0xc] sm:$0xf]
  %v1060 = vunpack.c.l.b16 %v1052
  %v1061 = vunpack.c.l.b16 %v1053
  %v1062 = vunpack.c.l.b16 %v1054
  %v1063 = vunpack.c.l.b16 %v1055
  %v1064 = vpack.c.b16 %v1061, %v1060
  %v1065 = vpack.c.b16 %v1063, %v1062
  %v1069 = vsel %vm262, %v1051, 0
  %1071 = vmatprep.subr.bf16.mxu0 0
  %1072 = vmatpush1.bf16.msra.mxu0 %v1064
  %1073 = vmatprep.subr.bf16.mxu0 0
  %1074 = vmatpush1.bf16.msra.mxu0 %v1065
  %1075 = vmatprep.subr.bf16.mxu0 0
  %1076 = vmatpush1.bf16.msra.mxu0 0
  %1077 = vmatprep.subr.bf16.mxu0 0
  %1078 = vmatpush1.bf16.msra.mxu0 0
  %1079 = vmatprep.subr.bf16.mxu0 0
  %1080 = vmatpush1.bf16.msra.mxu0 0
  %1081 = vmatprep.subr.bf16.mxu0 0
  %1082 = vmatpush1.bf16.msra.mxu0 0
  %1083 = vmatprep.subr.bf16.mxu0 0
  %1084 = vmatpush1.bf16.msra.mxu0 0
  %1085 = vmatprep.subr.bf16.mxu0 0
  %1086 = vmatpush1.bf16.msra.mxu0 0
  %1087 = vmatprep.subr.bf16.mxu0 0
  %1088 = vmatpush1.bf16.msra.mxu0 0
  %1089 = vmatprep.subr.bf16.mxu0 0
  %1090 = vmatpush1.bf16.msra.mxu0 0
  %1091 = vmatprep.subr.bf16.mxu0 0
  %1092 = vmatpush1.bf16.msra.mxu0 0
  %1093 = vmatprep.subr.bf16.mxu0 0
  %1094 = vmatpush1.bf16.msra.mxu0 0
  %1095 = vmatprep.subr.bf16.mxu0 0
  %1096 = vmatpush1.bf16.msra.mxu0 0
  %1097 = vmatprep.subr.bf16.mxu0 0
  %1098 = vmatpush1.bf16.msra.mxu0 0
  %1099 = vmatprep.subr.bf16.mxu0 0
  %1100 = vmatpush1.bf16.msra.mxu0 0
  %1101 = vmatprep.subr.bf16.mxu0 0
  %1102 = vmatpush1.bf16.msra.mxu0 0
  %1103 = vmatprep.mubr.bf16.mxu0 0
  %1104 = vmatmul.mubr.bf16.gmra.mrb[0].mxu0 %v1069
  %v1105 = vpop.f32.mrb[0].mxu0
  %v1106 = vadd.f32 0.0, %v1105
  %v1107 = vpop.f32.mrb[0].mxu0
  %v1108 = vpop.f32.mrb[0].mxu0
  %v1109 = vadd.f32 0.0, %v1108
  %v1110 = vpop.f32.mrb[0].mxu0
  %1111 = vdwg.mxu0
  %v1112 = vadd.f32 %v1049, %v1106
  %v1113 = vadd.f32 %v1050, %v1109
  %v1114 = vxor.u32 %v1112, 2147483648
  %v1115 = vxor.u32 %v1113, 2147483648
  %v1116 = vmul.f32 %v1114, 1.442695
  %v1117 = vpow.pop %v1116
  %v1118 = vmul.f32 %v1115, 1.442695
  %v1119 = vpow.pop %v1118
  %v1120 = vadd.f32 %v1117, 1.0
  %v1121 = vadd.f32 %v1119, 1.0
  %v1122 = vrcp.pop %v1120
  %v1123 = vmul.f32 1.0, %v1122
  %v1124 = vrcp.pop %v1121
  %v1125 = vmul.f32 1.0, %v1124
  %v1126 = vtanh.pop %v1112
  %v1127 = vtanh.pop %v1113
  %1130 = vrot.lane.b32.xlu0 %v1046, 32
  %v1131 = vpop.permute.xlu0 %1130
  %1132 = vrot.lane.b32.xlu0 %v1047, 32
  %v1133 = vpop.permute.xlu0 %1132
  %v1136 = vmul.f32 %v1123, %v1131
  %v1137 = vmul.f32 %v1125, %v1133
  %1140 = vrot.lane.b32.xlu0 %v1126, 64
  %v1141 = vpop.permute.xlu0 %1140
  %1142 = vrot.lane.b32.xlu0 %v1127, 64
  %v1143 = vpop.permute.xlu0 %1142
  %v1146 = vmul.f32 %v1123, %v1141
  %v1147 = vmul.f32 %v1125, %v1143
  %1150 = vrot.lane.b32.xlu0 %v1146, 32
  %v1151 = vpop.permute.xlu0 %1150
  %1152 = vrot.lane.b32.xlu0 %v1147, 32
  %v1153 = vpop.permute.xlu0 %1152
  %v1156 = vadd.f32 %v1136, %v1151
  %v1157 = vadd.f32 %v1137, %v1153
  %v1158 = vtanh.pop %v1156
  %v1159 = vtanh.pop %v1157
  %1162 = vrot.lane.b32.xlu0 %v1158, 64
  %v1163 = vpop.permute.xlu0 %1162
  %1164 = vrot.lane.b32.xlu0 %v1159, 64
  %v1165 = vpop.permute.xlu0 %1164
  %v1168 = vmul.f32 %v1123, %v1163
  %v1169 = vmul.f32 %v1125, %v1165
  %1172 = vrot.lane.b32.xlu0 %v1168, 32
  %v1173 = vpop.permute.xlu0 %1172
  %1174 = vrot.lane.b32.xlu0 %v1169, 32
  %v1175 = vpop.permute.xlu0 %1174
  %1178 = vst.msk [vmem:[#allocation2] sm:$0xff] %vm262, %v1173
  %1179 = vst.msk [vmem:[#allocation2 + $0x8] sm:$0xff] %vm262, %v1175
  %1182 = vrot.lane.b32.xlu0 %v1156, 96
  %v1183 = vpop.permute.xlu0 %1182
  %1184 = vrot.lane.b32.xlu0 %v1157, 96
  %v1185 = vpop.permute.xlu0 %1184
  %1188 = vst.msk [vmem:[#allocation3] sm:$0xff] %vm262, %v1183
  %1189 = vst.msk [vmem:[#allocation3 + $0x8] sm:$0xff] %vm262, %v1185
  %v1190 = vpack.c.bf16 %v1169, %v1168
  %v1192 = vunpack.c.l.b16 %v1190
  %v1193 = vunpack.c.h.b16 %v1190
  %v1194 = vpack.c.b16 %v1192, %v1192
  %v1195 = vpack.c.b16 %v1193, %v1193
  %1196 = vrot.lane.b32.xlu0 %v1194, 32
  %v1197 = vpop.permute.xlu0 %1196
  %1198 = vrot.lane.b32.xlu0 %v1195, 32
  %v1199 = vpop.permute.xlu0 %1198
  %s1202 = scalar_lea.vmem %s4, 40
  %1203 = vst.msk [vmem:[%s1202] sm:$0xf] %vm397, %v1197
  %1204 = vst.msk [vmem:[%s1202 + $0x4] sm:$0xf] %vm397, %v1199
  %v1205 = vld [vmem:[#allocation2] sm:$0xff]
  %v1206 = vld [vmem:[#allocation2 + $0x8] sm:$0xff]
  %v1207 = vld [vmem:[#allocation3] sm:$0xff]
  %v1208 = vld [vmem:[#allocation3 + $0x8] sm:$0xff]
  %s1209 = scalar_lea.vmem [#allocation4], 96
  %v1210 = vld [vmem:[%s1209] sm:$0xff]
  %v1211 = vld [vmem:[%s1209 + $0x8] sm:$0xff]
  %v1212 = vpack.c.bf16 %v1206, %v1205
  %v1213 = vld [vmem:[%s2] sm:$0xf]
  %v1214 = vld [vmem:[%s2 + $0x4] sm:$0xf]
  %v1215 = vld [vmem:[%s2 + $0x8] sm:$0xf]
  %v1216 = vld [vmem:[%s2 + $0xc] sm:$0xf]
  %v1221 = vunpack.c.l.b16 %v1213
  %v1222 = vunpack.c.l.b16 %v1214
  %v1223 = vunpack.c.l.b16 %v1215
  %v1224 = vunpack.c.l.b16 %v1216
  %v1225 = vpack.c.b16 %v1222, %v1221
  %v1226 = vpack.c.b16 %v1224, %v1223
  %v1230 = vsel %vm262, %v1212, 0
  %1232 = vmatprep.subr.bf16.mxu0 0
  %1233 = vmatpush1.bf16.msra.mxu0 %v1225
  %1234 = vmatprep.subr.bf16.mxu0 0
  %1235 = vmatpush1.bf16.msra.mxu0 %v1226
  %1236 = vmatprep.subr.bf16.mxu0 0
  %1237 = vmatpush1.bf16.msra.mxu0 0
  %1238 = vmatprep.subr.bf16.mxu0 0
  %1239 = vmatpush1.bf16.msra.mxu0 0
  %1240 = vmatprep.subr.bf16.mxu0 0
  %1241 = vmatpush1.bf16.msra.mxu0 0
  %1242 = vmatprep.subr.bf16.mxu0 0
  %1243 = vmatpush1.bf16.msra.mxu0 0
  %1244 = vmatprep.subr.bf16.mxu0 0
  %1245 = vmatpush1.bf16.msra.mxu0 0
  %1246 = vmatprep.subr.bf16.mxu0 0
  %1247 = vmatpush1.bf16.msra.mxu0 0
  %1248 = vmatprep.subr.bf16.mxu0 0
  %1249 = vmatpush1.bf16.msra.mxu0 0
  %1250 = vmatprep.subr.bf16.mxu0 0
  %1251 = vmatpush1.bf16.msra.mxu0 0
  %1252 = vmatprep.subr.bf16.mxu0 0
  %1253 = vmatpush1.bf16.msra.mxu0 0
  %1254 = vmatprep.subr.bf16.mxu0 0
  %1255 = vmatpush1.bf16.msra.mxu0 0
  %1256 = vmatprep.subr.bf16.mxu0 0
  %1257 = vmatpush1.bf16.msra.mxu0 0
  %1258 = vmatprep.subr.bf16.mxu0 0
  %1259 = vmatpush1.bf16.msra.mxu0 0
  %1260 = vmatprep.subr.bf16.mxu0 0
  %1261 = vmatpush1.bf16.msra.mxu0 0
  %1262 = vmatprep.subr.bf16.mxu0 0
  %1263 = vmatpush1.bf16.msra.mxu0 0
  %1264 = vmatprep.mubr.bf16.mxu0 0
  %1265 = vmatmul.mubr.bf16.gmra.mrb[0].mxu0 %v1230
  %v1266 = vpop.f32.mrb[0].mxu0
  %v1267 = vadd.f32 0.0, %v1266
  %v1268 = vpop.f32.mrb[0].mxu0
  %v1269 = vpop.f32.mrb[0].mxu0
  %v1270 = vadd.f32 0.0, %v1269
  %v1271 = vpop.f32.mrb[0].mxu0
  %1272 = vdwg.mxu0
  %v1273 = vadd.f32 %v1210, %v1267
  %v1274 = vadd.f32 %v1211, %v1270
  %v1275 = vxor.u32 %v1273, 2147483648
  %v1276 = vxor.u32 %v1274, 2147483648
  %v1277 = vmul.f32 %v1275, 1.442695
  %v1278 = vpow.pop %v1277
  %v1279 = vmul.f32 %v1276, 1.442695
  %v1280 = vpow.pop %v1279
  %v1281 = vadd.f32 %v1278, 1.0
  %v1282 = vadd.f32 %v1280, 1.0
  %v1283 = vrcp.pop %v1281
  %v1284 = vmul.f32 1.0, %v1283
  %v1285 = vrcp.pop %v1282
  %v1286 = vmul.f32 1.0, %v1285
  %v1287 = vtanh.pop %v1273
  %v1288 = vtanh.pop %v1274
  %1291 = vrot.lane.b32.xlu0 %v1207, 32
  %v1292 = vpop.permute.xlu0 %1291
  %1293 = vrot.lane.b32.xlu0 %v1208, 32
  %v1294 = vpop.permute.xlu0 %1293
  %v1297 = vmul.f32 %v1284, %v1292
  %v1298 = vmul.f32 %v1286, %v1294
  %1301 = vrot.lane.b32.xlu0 %v1287, 64
  %v1302 = vpop.permute.xlu0 %1301
  %1303 = vrot.lane.b32.xlu0 %v1288, 64
  %v1304 = vpop.permute.xlu0 %1303
  %v1307 = vmul.f32 %v1284, %v1302
  %v1308 = vmul.f32 %v1286, %v1304
  %1311 = vrot.lane.b32.xlu0 %v1307, 32
  %v1312 = vpop.permute.xlu0 %1311
  %1313 = vrot.lane.b32.xlu0 %v1308, 32
  %v1314 = vpop.permute.xlu0 %1313
  %v1317 = vadd.f32 %v1297, %v1312
  %v1318 = vadd.f32 %v1298, %v1314
  %v1319 = vtanh.pop %v1317
  %v1320 = vtanh.pop %v1318
  %1323 = vrot.lane.b32.xlu0 %v1319, 64
  %v1324 = vpop.permute.xlu0 %1323
  %1325 = vrot.lane.b32.xlu0 %v1320, 64
  %v1326 = vpop.permute.xlu0 %1325
  %v1329 = vmul.f32 %v1284, %v1324
  %v1330 = vmul.f32 %v1286, %v1326
  %1333 = vrot.lane.b32.xlu0 %v1329, 32
  %v1334 = vpop.permute.xlu0 %1333
  %1335 = vrot.lane.b32.xlu0 %v1330, 32
  %v1336 = vpop.permute.xlu0 %1335
  %1339 = vst.msk [vmem:[#allocation2] sm:$0xff] %vm262, %v1334
  %1340 = vst.msk [vmem:[#allocation2 + $0x8] sm:$0xff] %vm262, %v1336
  %1343 = vrot.lane.b32.xlu0 %v1317, 96
  %v1344 = vpop.permute.xlu0 %1343
  %1345 = vrot.lane.b32.xlu0 %v1318, 96
  %v1346 = vpop.permute.xlu0 %1345
  %1349 = vst.msk [vmem:[#allocation3] sm:$0xff] %vm262, %v1344
  %1350 = vst.msk [vmem:[#allocation3 + $0x8] sm:$0xff] %vm262, %v1346
  %v1351 = vpack.c.bf16 %v1330, %v1329
  %v1353 = vunpack.c.l.b16 %v1351
  %v1354 = vunpack.c.h.b16 %v1351
  %v1355 = vpack.c.b16 %v1353, %v1353
  %v1356 = vpack.c.b16 %v1354, %v1354
  %1357 = vrot.lane.b32.xlu0 %v1355, 32
  %v1358 = vpop.permute.xlu0 %1357
  %1359 = vrot.lane.b32.xlu0 %v1356, 32
  %v1360 = vpop.permute.xlu0 %1359
  %s1363 = scalar_lea.vmem %s4, 48
  %1364 = vst.msk [vmem:[%s1363] sm:$0xf] %vm397, %v1358
  %1365 = vst.msk [vmem:[%s1363 + $0x4] sm:$0xf] %vm397, %v1360
  %v1366 = vld [vmem:[#allocation2] sm:$0xff]
  %v1367 = vld [vmem:[#allocation2 + $0x8] sm:$0xff]
  %v1368 = vld [vmem:[#allocation3] sm:$0xff]
  %v1369 = vld [vmem:[#allocation3 + $0x8] sm:$0xff]
  %s1370 = scalar_lea.vmem [#allocation4], 112
  %v1371 = vld [vmem:[%s1370] sm:$0xff]
  %v1372 = vld [vmem:[%s1370 + $0x8] sm:$0xff]
  %v1373 = vpack.c.bf16 %v1367, %v1366
  %v1374 = vld [vmem:[%s2] sm:$0xf]
  %v1375 = vld [vmem:[%s2 + $0x4] sm:$0xf]
  %v1376 = vld [vmem:[%s2 + $0x8] sm:$0xf]
  %v1377 = vld [vmem:[%s2 + $0xc] sm:$0xf]
  %v1382 = vunpack.c.l.b16 %v1374
  %v1383 = vunpack.c.l.b16 %v1375
  %v1384 = vunpack.c.l.b16 %v1376
  %v1385 = vunpack.c.l.b16 %v1377
  %v1386 = vpack.c.b16 %v1383, %v1382
  %v1387 = vpack.c.b16 %v1385, %v1384
  %v1391 = vsel %vm262, %v1373, 0
  %1393 = vmatprep.subr.bf16.mxu0 0
  %1394 = vmatpush1.bf16.msra.mxu0 %v1386
  %1395 = vmatprep.subr.bf16.mxu0 0
  %1396 = vmatpush1.bf16.msra.mxu0 %v1387
  %1397 = vmatprep.subr.bf16.mxu0 0
  %1398 = vmatpush1.bf16.msra.mxu0 0
  %1399 = vmatprep.subr.bf16.mxu0 0
  %1400 = vmatpush1.bf16.msra.mxu0 0
  %1401 = vmatprep.subr.bf16.mxu0 0
  %1402 = vmatpush1.bf16.msra.mxu0 0
  %1403 = vmatprep.subr.bf16.mxu0 0
  %1404 = vmatpush1.bf16.msra.mxu0 0
  %1405 = vmatprep.subr.bf16.mxu0 0
  %1406 = vmatpush1.bf16.msra.mxu0 0
  %1407 = vmatprep.subr.bf16.mxu0 0
  %1408 = vmatpush1.bf16.msra.mxu0 0
  %1409 = vmatprep.subr.bf16.mxu0 0
  %1410 = vmatpush1.bf16.msra.mxu0 0
  %1411 = vmatprep.subr.bf16.mxu0 0
  %1412 = vmatpush1.bf16.msra.mxu0 0
  %1413 = vmatprep.subr.bf16.mxu0 0
  %1414 = vmatpush1.bf16.msra.mxu0 0
  %1415 = vmatprep.subr.bf16.mxu0 0
  %1416 = vmatpush1.bf16.msra.mxu0 0
  %1417 = vmatprep.subr.bf16.mxu0 0
  %1418 = vmatpush1.bf16.msra.mxu0 0
  %1419 = vmatprep.subr.bf16.mxu0 0
  %1420 = vmatpush1.bf16.msra.mxu0 0
  %1421 = vmatprep.subr.bf16.mxu0 0
  %1422 = vmatpush1.bf16.msra.mxu0 0
  %1423 = vmatprep.subr.bf16.mxu0 0
  %1424 = vmatpush1.bf16.msra.mxu0 0
  %1425 = vmatprep.mubr.bf16.mxu0 0
  %1426 = vmatmul.mubr.bf16.gmra.mrb[0].mxu0 %v1391
  %v1427 = vpop.f32.mrb[0].mxu0
  %v1428 = vadd.f32 0.0, %v1427
  %v1429 = vpop.f32.mrb[0].mxu0
  %v1430 = vpop.f32.mrb[0].mxu0
  %v1431 = vadd.f32 0.0, %v1430
  %v1432 = vpop.f32.mrb[0].mxu0
  %1433 = vdwg.mxu0
  %v1434 = vadd.f32 %v1371, %v1428
  %v1435 = vadd.f32 %v1372, %v1431
  %v1436 = vxor.u32 %v1434, 2147483648
  %v1437 = vxor.u32 %v1435, 2147483648
  %v1438 = vmul.f32 %v1436, 1.442695
  %v1439 = vpow.pop %v1438
  %v1440 = vmul.f32 %v1437, 1.442695
  %v1441 = vpow.pop %v1440
  %v1442 = vadd.f32 %v1439, 1.0
  %v1443 = vadd.f32 %v1441, 1.0
  %v1444 = vrcp.pop %v1442
  %v1445 = vmul.f32 1.0, %v1444
  %v1446 = vrcp.pop %v1443
  %v1447 = vmul.f32 1.0, %v1446
  %v1448 = vtanh.pop %v1434
  %v1449 = vtanh.pop %v1435
  %1452 = vrot.lane.b32.xlu0 %v1368, 32
  %v1453 = vpop.permute.xlu0 %1452
  %1454 = vrot.lane.b32.xlu0 %v1369, 32
  %v1455 = vpop.permute.xlu0 %1454
  %v1458 = vmul.f32 %v1445, %v1453
  %v1459 = vmul.f32 %v1447, %v1455
  %1462 = vrot.lane.b32.xlu0 %v1448, 64
  %v1463 = vpop.permute.xlu0 %1462
  %1464 = vrot.lane.b32.xlu0 %v1449, 64
  %v1465 = vpop.permute.xlu0 %1464
  %v1468 = vmul.f32 %v1445, %v1463
  %v1469 = vmul.f32 %v1447, %v1465
  %1472 = vrot.lane.b32.xlu0 %v1468, 32
  %v1473 = vpop.permute.xlu0 %1472
  %1474 = vrot.lane.b32.xlu0 %v1469, 32
  %v1475 = vpop.permute.xlu0 %1474
  %v1478 = vadd.f32 %v1458, %v1473
  %v1479 = vadd.f32 %v1459, %v1475
  %v1480 = vtanh.pop %v1478
  %v1481 = vtanh.pop %v1479
  %1484 = vrot.lane.b32.xlu0 %v1480, 64
  %v1485 = vpop.permute.xlu0 %1484
  %1486 = vrot.lane.b32.xlu0 %v1481, 64
  %v1487 = vpop.permute.xlu0 %1486
  %v1490 = vmul.f32 %v1445, %v1485
  %v1491 = vmul.f32 %v1447, %v1487
  %1494 = vrot.lane.b32.xlu0 %v1490, 32
  %v1495 = vpop.permute.xlu0 %1494
  %1496 = vrot.lane.b32.xlu0 %v1491, 32
  %v1497 = vpop.permute.xlu0 %1496
  %1500 = vst.msk [vmem:[#allocation2] sm:$0xff] %vm262, %v1495
  %1501 = vst.msk [vmem:[#allocation2 + $0x8] sm:$0xff] %vm262, %v1497
  %1504 = vrot.lane.b32.xlu0 %v1478, 96
  %v1505 = vpop.permute.xlu0 %1504
  %1506 = vrot.lane.b32.xlu0 %v1479, 96
  %v1507 = vpop.permute.xlu0 %1506
  %1510 = vst.msk [vmem:[#allocation3] sm:$0xff] %vm262, %v1505
  %1511 = vst.msk [vmem:[#allocation3 + $0x8] sm:$0xff] %vm262, %v1507
  %v1512 = vpack.c.bf16 %v1491, %v1490
  %v1514 = vunpack.c.l.b16 %v1512
  %v1515 = vunpack.c.h.b16 %v1512
  %v1516 = vpack.c.b16 %v1514, %v1514
  %v1517 = vpack.c.b16 %v1515, %v1515
  %1518 = vrot.lane.b32.xlu0 %v1516, 32
  %v1519 = vpop.permute.xlu0 %1518
  %1520 = vrot.lane.b32.xlu0 %v1517, 32
  %v1521 = vpop.permute.xlu0 %1520
  %s1524 = scalar_lea.vmem %s4, 56
  %1525 = vst.msk [vmem:[%s1524] sm:$0xf] %vm397, %v1519
  %1526 = vst.msk [vmem:[%s1524 + $0x4] sm:$0xf] %vm397, %v1521
  // Predicated region
  $region22: #{encoder_forward.2} parent=0 // pred_check
    %p1527 = pneg %p21
  $region23: #{encoder_forward.2} parent=0 // pred_check_branch
    %1529 = sbr.rel (%p1527) target = $region25
  $region24: #{encoder_forward.2} parent=0 // pred_region
    %v1530 = vld [vmem:[#allocation2] sm:$0xff]
    %v1531 = vld [vmem:[#allocation2 + $0x8] sm:$0xff]
    %1532 = vst.msk [vmem:[%s5] sm:$0xff] %vm262, %v1530
    %1533 = vst.msk [vmem:[%s5 + $0x8] sm:$0xff] %vm262, %v1531
    %v1534 = vld [vmem:[#allocation3] sm:$0xff]
    %v1535 = vld [vmem:[#allocation3 + $0x8] sm:$0xff]
    %1536 = vst.msk [vmem:[%s6] sm:$0xff] %vm262, %v1534
    %1537 = vst.msk [vmem:[%s6 + $0x8] sm:$0xff] %vm262, %v1535
  $region25: #{encoder_forward.2} parent=0 // pred_fallthru
    _
  // Predicated region
  $region26: #{encoder_forward.2} parent=0 // pred_check
    _
  $region27: #{encoder_forward.2} parent=0 // pred_check_branch
    %1539 = sbr.rel (0) target = $region29
  $region28: #{encoder_forward.2} parent=0 // pred_region
    _
  $region29: #{encoder_forward.2} parent=0 // pred_fallthru
    _
  // Predicated region
  $region30: #{encoder_forward.2} parent=0 // pred_check
    _
  $region31: #{encoder_forward.2} parent=0 // pred_check_branch
    %1541 = sbr.rel (0) target = $region33
  $region32: #{encoder_forward.2} parent=0 // pred_region
    _
  $region33: #{encoder_forward.2} parent=0 // pred_fallthru
    _
  // Predicated region
  $region34: #{encoder_forward.2} parent=0 // pred_check
    _
  $region35: #{encoder_forward.2} parent=0 // pred_check_branch
    %1543 = sbr.rel (0) target = $region37
  $region36: #{encoder_forward.2} parent=0 // pred_region
    _
  $region37: #{encoder_forward.2} parent=0 // pred_fallthru
    _
  // Predicated region
  $region38: #{encoder_forward.2} parent=0 // pred_check
    _
  $region39: #{encoder_forward.2} parent=0 // pred_check_branch
    %1545 = sbr.rel (0) target = $region41
  $region40: #{encoder_forward.2} parent=0 // pred_region
    _
  $region41: #{encoder_forward.2} parent=0 // pred_fallthru
    _
  // Predicated region
  $region42: #{encoder_forward.2} parent=0 // pred_check
    _
  $region43: #{encoder_forward.2} parent=0 // pred_check_branch
    %1547 = sbr.rel (0) target = $region45
  $region44: #{encoder_forward.2} parent=0 // pred_region
    _
  $region45: #{encoder_forward.2} parent=0 // pred_fallthru
    _
  // Predicated region
  $region46: #{encoder_forward.2} parent=0 // pred_check
    _
  $region47: #{encoder_forward.2} parent=0 // pred_check_branch
    %1549 = sbr.rel (0) target = $region49
  $region48: #{encoder_forward.2} parent=0 // pred_region
    _
  $region49: #{encoder_forward.2} parent=0 // pred_fallthru
    _

</llo_original>
